<compile_context>
chip_gen: v6e
topology: v6e:2x2x1
jax: 0.10.0
libtpu: 0.0.40
codegen_flags: <defaults>
</compile_context>

<pallas_src>
import functools

import jax
import jax.numpy as jnp
from jax.experimental import pallas as pl
from jax.experimental.pallas import tpu as pltpu


# --------------------------- tiling helpers ----------------------------------

def _spatial_tiling(hw):
    """Pad H*W up to a multiple of 128 and pick a lane tile (up to 1024)."""
    hwp = ((hw + 127) // 128) * 128
    for tile in (1024, 512, 256, 128):
        if hwp % tile == 0:
            return hwp, tile
    return hwp, 128


def _pad_hw(x, hwp):
    hw = x.shape[-1]
    if hw == hwp:
        return x
    return jnp.pad(x, ((0, 0), (0, 0), (0, hwp - hw)))


_CPARAMS2 = pltpu.CompilerParams(dimension_semantics=("parallel", "parallel"))
_CPARAMS1 = pltpu.CompilerParams(dimension_semantics=("parallel",))


# --------------------------- Pallas kernels ----------------------------------

def _conv_kernel(w_ref, b_ref, a_ref, o_ref, *, act):
    """out(O, T) = act( W(O,K) @ patches(K,T) + b(O,1) )."""
    acc = jnp.dot(w_ref[...], a_ref[0], preferred_element_type=jnp.float32)
    acc = acc + b_ref[...]
    if act == "relu":
        acc = jnp.maximum(acc, 0.0)
    elif act == "leaky":                      # nn.LeakyReLU(0.2) in the reference
        acc = jnp.where(acc >= 0.0, acc, 0.2 * acc)
    o_ref[0] = acc


def _saab_gate_kernel(wm_ref, bm_ref, wa_ref, ba_ref, am_ref, aa_ref, x_ref, o_ref):
    """mul_conv2 + add_conv2 + SAAB gate  x*sigmoid(mul)+add  in one kernel."""
    mul = jnp.dot(wm_ref[...], am_ref[0], preferred_element_type=jnp.float32) + bm_ref[...]
    add = jnp.dot(wa_ref[...], aa_ref[0], preferred_element_type=jnp.float32) + ba_ref[...]
    o_ref[0] = x_ref[0] * jax.nn.sigmoid(mul) + add


def _esab_front_kernel(wfl_ref, wfg_ref, bf_ref, wn_ref, bn_ref,
                       loc_ref, glo_ref, fus_ref, rnl_ref, rng_ref):
    """conv_1x1(cat[loc, glo]) + norm_layer(loc) + norm_layer(glo) fused."""
    loc = loc_ref[0].astype(jnp.bfloat16)
    glo = glo_ref[0].astype(jnp.bfloat16)
    fus = (jnp.dot(wfl_ref[...], loc, preferred_element_type=jnp.float32)
           + jnp.dot(wfg_ref[...], glo, preferred_element_type=jnp.float32)
           + bf_ref[...])
    fus_ref[0] = fus
    rnl_ref[0] = jnp.dot(wn_ref[...], loc, preferred_element_type=jnp.float32) + bn_ref[...]
    rng_ref[0] = jnp.dot(wn_ref[...], glo, preferred_element_type=jnp.float32) + bn_ref[...]


def _esab_mod_kernel(wg_ref, bg_ref, wb_ref, bb_ref, a_ref, rn_ref,
                     mean_ref, std_ref, o_ref):
    """conv_gamma + conv_beta + ESAB modulation  rn*sigmoid(gamma+std)+(beta+mean)."""
    g = jnp.dot(wg_ref[...], a_ref[0], preferred_element_type=jnp.float32)
    b = jnp.dot(wb_ref[...], a_ref[0], preferred_element_type=jnp.float32)
    gamma = g + bg_ref[...] + std_ref[0]
    beta = b + bb_ref[...] + mean_ref[0]
    o_ref[0] = rn_ref[0] * jax.nn.sigmoid(gamma) + beta


def _stats_kernel(f_ref, mean_ref, std_ref, *, hw):
    """Per-(b, c) spatial mean and unbiased std (torch.std default)."""
    f = f_ref[0]                                        # (C, HW), HW on lanes
    mean = jnp.sum(f, axis=-1, keepdims=True) / hw
    var = jnp.sum((f - mean) ** 2, axis=-1, keepdims=True) / (hw - 1)
    mean_ref[0] = mean
    std_ref[0] = jnp.sqrt(var)


def _tail_kernel(w_ref, b_ref, mvec_ref, a_ref, s_ref, o_ref):
    """tail conv + skip add + de-normalization (pre pixel-shuffle)."""
    acc = jnp.dot(w_ref[...], a_ref[0], preferred_element_type=jnp.float32) + b_ref[...]
    o_ref[0] = (acc + s_ref[0]) * 127.5 + mvec_ref[...]


# --------------------------- Pallas wrappers ----------------------------------

def conv_mm(a, w, b, act=None):
    """a: (B, K, HW) bf16 patches, w: (O, K) bf16, b: (O, 1) f32 -> (B, O, HW) f32."""
    B, K, HW = a.shape
    O = w.shape[0]
    hwp, tile = _spatial_tiling(HW)
    a = _pad_hw(a, hwp)
    out = pl.pallas_call(
        functools.partial(_conv_kernel, act=act),
        out_shape=jax.ShapeDtypeStruct((B, O, hwp), jnp.float32),
        grid=(B, hwp // tile),
        in_specs=[
            pl.BlockSpec((O, K), lambda bb, t: (0, 0)),
            pl.BlockSpec((O, 1), lambda bb, t: (0, 0)),
            pl.BlockSpec((1, K, tile), lambda bb, t: (bb, 0, t)),
        ],
        out_specs=pl.BlockSpec((1, O, tile), lambda bb, t: (bb, 0, t)),
        compiler_params=_CPARAMS2,
    )(w, b, a)
    return out[:, :, :HW] if hwp != HW else out


def saab_gate(am, aa, x, wm, bm, wa, ba):
    """Fused mul_conv2 / add_conv2 / gate.  am, aa: (B, K, HW) bf16; x: (B, C, HW) f32."""
    B, K, HW = am.shape
    C = x.shape[1]
    hwp, tile = _spatial_tiling(HW)
    am, aa, x = _pad_hw(am, hwp), _pad_hw(aa, hwp), _pad_hw(x, hwp)
    out = pl.pallas_call(
        _saab_gate_kernel,
        out_shape=jax.ShapeDtypeStruct((B, C, hwp), jnp.float32),
        grid=(B, hwp // tile),
        in_specs=[
            pl.BlockSpec((C, K), lambda bb, t: (0, 0)),
            pl.BlockSpec((C, 1), lambda bb, t: (0, 0)),
            pl.BlockSpec((C, K), lambda bb, t: (0, 0)),
            pl.BlockSpec((C, 1), lambda bb, t: (0, 0)),
            pl.BlockSpec((1, K, tile), lambda bb, t: (bb, 0, t)),
            pl.BlockSpec((1, K, tile), lambda bb, t: (bb, 0, t)),
            pl.BlockSpec((1, C, tile), lambda bb, t: (bb, 0, t)),
        ],
        out_specs=pl.BlockSpec((1, C, tile), lambda bb, t: (bb, 0, t)),
        compiler_params=_CPARAMS2,
    )(wm, bm, wa, ba, am, aa, x)
    return out[:, :, :HW] if hwp != HW else out


def esab_front(loc, glo, wfl, wfg, bf, wn, bn):
    """Fused conv_1x1 + norm(loc) + norm(glo).  loc, glo: (B, C, HW) f32."""
    B, C, HW = loc.shape
    hwp, tile = _spatial_tiling(HW)
    loc_p, glo_p = _pad_hw(loc, hwp), _pad_hw(glo, hwp)
    shp = jax.ShapeDtypeStruct((B, C, hwp), jnp.float32)
    data_spec = pl.BlockSpec((1, C, tile), lambda bb, t: (bb, 0, t))
    fus, rnl, rng = pl.pallas_call(
        _esab_front_kernel,
        out_shape=(shp, shp, shp),
        grid=(B, hwp // tile),
        in_specs=[
            pl.BlockSpec((C, C), lambda bb, t: (0, 0)),
            pl.BlockSpec((C, C), lambda bb, t: (0, 0)),
            pl.BlockSpec((C, 1), lambda bb, t: (0, 0)),
            pl.BlockSpec((C, C), lambda bb, t: (0, 0)),
            pl.BlockSpec((C, 1), lambda bb, t: (0, 0)),
            data_spec,
            data_spec,
        ],
        out_specs=(data_spec, data_spec, data_spec),
        compiler_params=_CPARAMS2,
    )(wfl, wfg, bf, wn, bn, loc_p, glo_p)
    if hwp != HW:
        fus, rnl, rng = fus[..., :HW], rnl[..., :HW], rng[..., :HW]
    return fus, rnl, rng


def esab_modulate(a, rn, mean, std, wg, bg, wb, bb):
    """Fused conv_gamma / conv_beta / modulation.  a: (B, K, HW) bf16 patches."""
    B, K, HW = a.shape
    C = rn.shape[1]
    hwp, tile = _spatial_tiling(HW)
    a, rn = _pad_hw(a, hwp), _pad_hw(rn, hwp)
    out = pl.pallas_call(
        _esab_mod_kernel,
        out_shape=jax.ShapeDtypeStruct((B, C, hwp), jnp.float32),
        grid=(B, hwp // tile),
        in_specs=[
            pl.BlockSpec((C, K), lambda bb, t: (0, 0)),
            pl.BlockSpec((C, 1), lambda bb, t: (0, 0)),
            pl.BlockSpec((C, K), lambda bb, t: (0, 0)),
            pl.BlockSpec((C, 1), lambda bb, t: (0, 0)),
            pl.BlockSpec((1, K, tile), lambda bb, t: (bb, 0, t)),
            pl.BlockSpec((1, C, tile), lambda bb, t: (bb, 0, t)),
            pl.BlockSpec((1, C, 1), lambda bb, t: (bb, 0, 0)),
            pl.BlockSpec((1, C, 1), lambda bb, t: (bb, 0, 0)),
        ],
        out_specs=pl.BlockSpec((1, C, tile), lambda bb, t: (bb, 0, t)),
        compiler_params=_CPARAMS2,
    )(wg, bg, wb, bb, a, rn, mean, std)
    return out[:, :, :HW] if hwp != HW else out


def spatial_stats(f):
    """f: (B, C, HW) f32 -> (mean, std) each (B, C, 1) f32 (unbiased std)."""
    B, C, HW = f.shape
    in_spec = pl.BlockSpec((1, C, HW), lambda bb: (bb, 0, 0))
    out_spec = pl.BlockSpec((1, C, 1), lambda bb: (bb, 0, 0))
    return pl.pallas_call(
        functools.partial(_stats_kernel, hw=HW),
        out_shape=(jax.ShapeDtypeStruct((B, C, 1), jnp.float32),
                   jax.ShapeDtypeStruct((B, C, 1), jnp.float32)),
        grid=(B,),
        in_specs=[in_spec],
        out_specs=(out_spec, out_spec),
        compiler_params=_CPARAMS1,
    )(f)


def tail_fused(a, s, w, b, mvec):
    """tail conv + skip add + de-normalization.  a: (B, K, HW) bf16, s: (B, O, HW) f32."""
    B, K, HW = a.shape
    O = w.shape[0]
    hwp, tile = _spatial_tiling(HW)
    a, s = _pad_hw(a, hwp), _pad_hw(s, hwp)
    out = pl.pallas_call(
        _tail_kernel,
        out_shape=jax.ShapeDtypeStruct((B, O, hwp), jnp.float32),
        grid=(B, hwp // tile),
        in_specs=[
            pl.BlockSpec((O, K), lambda bb, t: (0, 0)),
            pl.BlockSpec((O, 1), lambda bb, t: (0, 0)),
            pl.BlockSpec((O, 1), lambda bb, t: (0, 0)),
            pl.BlockSpec((1, K, tile), lambda bb, t: (bb, 0, t)),
            pl.BlockSpec((1, O, tile), lambda bb, t: (bb, 0, t)),
        ],
        out_specs=pl.BlockSpec((1, O, tile), lambda bb, t: (bb, 0, t)),
        compiler_params=_CPARAMS2,
    )(w, b, mvec, a, s)
    return out[:, :, :HW] if hwp != HW else out


# --------------------------- conv glue (im2col, bf16) -------------------------

def im2col(x, H, W, kh, kw, ph, pw):
    """x: (B, C, H*W) f32 -> (B, kh*kw*C, H*W) bf16, tap-major / channel-minor."""
    B, C, _ = x.shape
    xi = x.reshape(B, C, H, W).astype(jnp.bfloat16)
    xp = jnp.pad(xi, ((0, 0), (0, 0), (ph, ph), (pw, pw)))
    taps = [xp[:, :, i:i + H, j:j + W] for i in range(kh) for j in range(kw)]
    return jnp.concatenate(taps, axis=1).reshape(B, kh * kw * C, H * W)


def conv(x, w, b, H, W, kh, kw, ph, pw, act=None):
    if (kh, kw) == (1, 1):
        a = x.astype(jnp.bfloat16)
    else:
        a = im2col(x, H, W, kh, kw, ph, pw)
    return conv_mm(a, w, b, act)


def pixel_shuffle(x, H, W, r):
    """(B, C*r*r, H*W) -> (B, C, H*r, W*r), matches torch.nn.PixelShuffle."""
    B, Crr, _ = x.shape
    C = Crr // (r * r)
    xi = x.reshape(B, C, r, r, H, W)
    xi = jnp.transpose(xi, (0, 1, 4, 2, 5, 3))
    return xi.reshape(B, C, H * r, W * r)


# --------------------------- parameter init (pre-packed) ----------------------

def _raw_conv(key, cout, cin, kh, kw, w_scale=0.05):
    kw_, kb_ = jax.random.split(key)
    w = jax.random.normal(kw_, (cout, cin, kh, kw), jnp.float32) * w_scale
    b = jax.random.normal(kb_, (cout,), jnp.float32) * 0.01
    return w, b


def pack_w(w):
    """PyTorch OIHW -> (O, kh*kw*I) bf16, tap-major / channel-minor (matches im2col)."""
    O, I, kh, kw = w.shape
    return jnp.transpose(w, (0, 2, 3, 1)).reshape(O, kh * kw * I).astype(jnp.bfloat16)


def pack_b(b):
    return b.reshape(-1, 1).astype(jnp.float32)


def init_params(key, in_ch=3, out_ch=3, nf=20, upscale=2, reduction=5):
    out_feats = upscale * upscale * out_ch
    nr = nf // reduction
    keys = iter(jax.random.split(key, 128))

    def packed(cout, cin, kh, kw):
        w, b = _raw_conv(next(keys), cout, cin, kh, kw)
        return pack_w(w), pack_b(b)

    p = {}
    p["head_w"], p["head_b"] = packed(nf, in_ch, 3, 3)
    p["tail_w"], p["tail_b"] = packed(out_feats, nf, 3, 3)
    p["skip_w"], p["skip_b"] = packed(out_feats, in_ch, 5, 5)
    for i in range(5):
        sa = {}
        wA, bA = _raw_conv(next(keys), nf, nf, 3, 1)
        wB, bB = _raw_conv(next(keys), nf, nf, 1, 3)
        sa["ab_w"] = jnp.concatenate([pack_w(wA), pack_w(wB)], axis=1)   # (nf, 6*nf)
        sa["ab_b"] = pack_b(bA + bB)
        sa["adafm_w"], sa["adafm_b"] = packed(nf, nf, 3, 3)
        wm1, bm1 = _raw_conv(next(keys), nf, nf, 3, 3)
        wa1, ba1 = _raw_conv(next(keys), nf, nf, 3, 3)
        sa["ma1_w"] = jnp.concatenate([pack_w(wm1), pack_w(wa1)], axis=0)  # (2nf, 9nf)
        sa["ma1_b"] = jnp.concatenate([pack_b(bm1), pack_b(ba1)], axis=0)
        sa["mul2_w"], sa["mul2_b"] = packed(nf, nf, 3, 3)
        sa["add2_w"], sa["add2_b"] = packed(nf, nf, 3, 3)
        p[f"saab{i}"] = sa

        es = {}
        es["norm_w"], es["norm_b"] = packed(nf, nf, 1, 1)
        wc, bc = _raw_conv(next(keys), nf, 2 * nf, 1, 1)
        wcp = pack_w(wc)                                   # (nf, 2nf): [loc | glo]
        es["c1l_w"], es["c1g_w"] = wcp[:, :nf], wcp[:, nf:]
        es["c1_b"] = pack_b(bc)
        es["sh_w"], es["sh_b"] = packed(nr, nf, 3, 3)
        # conv_gamma / conv_beta zero-initialized per the reference __init__
        es["g_w"] = jnp.zeros((nf, 9 * nr), jnp.bfloat16)
        es["g_b"] = jnp.zeros((nf, 1), jnp.float32)
        es["b_w"] = jnp.zeros((nf, 9 * nr), jnp.bfloat16)
        es["b_b"] = jnp.zeros((nf, 1), jnp.float32)
        p[f"esab{i}"] = es
    return p


# --------------------------- module forwards ----------------------------------

def saab_forward(p, x, H, W):
    """x: (B, nf, H*W) f32."""
    C = x.shape[1]
    # x1 = relu(conv3_1_A(x) + conv3_1_B(x))  -> one matmul (K-concat)
    aA = im2col(x, H, W, 3, 1, 1, 0)
    aB = im2col(x, H, W, 1, 3, 0, 1)
    x1 = conv_mm(jnp.concatenate([aA, aB], axis=1), p["ab_w"], p["ab_b"], act="relu")
    x1 = conv(x1, p["adafm_w"], p["adafm_b"], H, W, 3, 3, 1, 1)
    # mul_conv1 + add_conv1 share input x1 -> one matmul (O-concat) + leaky(0.2)
    ma = conv(x1, p["ma1_w"], p["ma1_b"], H, W, 3, 3, 1, 1, act="leaky")   # (B, 2C, HW)
    am = im2col(ma[:, :C], H, W, 3, 3, 1, 1)
    aa = im2col(ma[:, C:], H, W, 3, 3, 1, 1)
    # mul_conv2 + add_conv2 + x*sigmoid(mul)+add fused into one kernel
    return saab_gate(am, aa, x, p["mul2_w"], p["mul2_b"], p["add2_w"], p["add2_b"])


def esab_forward(p, loc, glo, H, W):
    """loc, glo: (B, nf, H*W) f32."""
    # conv_1x1(cat[loc, glo]) + norm(loc) + norm(glo) fused in one kernel
    fusion, rn_l, rn_g = esab_front(loc, glo, p["c1l_w"], p["c1g_w"], p["c1_b"],
                                    p["norm_w"], p["norm_b"])

    mean, std = spatial_stats(fusion)
    style = conv(fusion, p["sh_w"], p["sh_b"], H, W, 3, 3, 1, 1, act="relu")
    out_l = esab_modulate(im2col(style, H, W, 3, 3, 1, 1), rn_l, mean, std,
                          p["g_w"], p["g_b"], p["b_w"], p["b_b"])

    mean_f, std_f = spatial_stats(out_l)
    style_f = conv(out_l, p["sh_w"], p["sh_b"], H, W, 3, 3, 1, 1, act="relu")
    # NOTE: the reference ESAB.forward lacks a `return`; we return `out`.
    return esab_modulate(im2col(style_f, H, W, 3, 3, 1, 1), rn_g, mean_f, std_f,
                         p["g_w"], p["g_b"], p["b_w"], p["b_b"])


def ifin_forward(params, x_nchw, upscale=2):
    B, Cin, H, W = x_nchw.shape
    x = x_nchw.reshape(B, Cin, H * W).astype(jnp.float32)
    rgb_mean = jnp.array([0.4488, 0.4371, 0.404], jnp.float32)
    x = (x - rgb_mean.reshape(1, 3, 1) * 255.0) / 127.5

    s_pre = conv(x, params["skip_w"], params["skip_b"], H, W, 5, 5, 2, 2)  # (B, 12, HW)

    f = conv(x, params["head_w"], params["head_b"], H, W, 3, 3, 1, 1)      # o0
    for i in range(5):
        a = saab_forward(params[f"saab{i}"], f, H, W)
        t = f   # TODO(synk): SwinT.SwinT unavailable -> identity stand-in.
        f = esab_forward(params[f"esab{i}"], a, t, H, W)

    # tail conv + skip add + de-normalization fused; pixel shuffle is a pure
    # permutation so the add and per-channel affine commute with it.
    mvec = (jnp.repeat(rgb_mean, upscale * upscale) * 255.0).reshape(-1, 1)
    a_tail = im2col(f, H, W, 3, 3, 1, 1)
    y_pre = tail_fused(a_tail, s_pre, params["tail_w"], params["tail_b"], mvec)
    return pixel_shuffle(y_pre, H, W, upscale)                              # NCHW


# --------------------------- main ---------------------------------------------

if __name__ == "__main__":
    key = jax.random.PRNGKey(0)
    k_param, k_x = jax.random.split(key)

    B, C_IN, H, W = 2, 3, 16, 16
    NF, UPSCALE = 20, 2

    params = init_params(k_param, in_ch=C_IN, out_ch=3, nf=NF,
                         upscale=UPSCALE, reduction=5)
    x = jax.random.uniform(k_x, (B, C_IN, H, W), jnp.float32) * 255.0

    fwd = jax.jit(functools.partial(ifin_forward, upscale=UPSCALE))
    out = jax.block_until_ready(fwd(params, x))

    assert out.shape == (B, 3, H * UPSCALE, W * UPSCALE), out.shape
    assert jnp.all(jnp.isfinite(out))
    print("KERNEL_OK")
</pallas_src>

<mosaic_0001>
module attributes {stable_mosaic.version = 11 : i64} {
  func.func @_conv_kernel(%arg0: i32, %arg1: i32, %arg2: memref<12x75xbf16, #tpu.memory_space<vmem>>, %arg3: memref<12x1xf32, #tpu.memory_space<vmem>>, %arg4: memref<1x75x256xbf16, #tpu.memory_space<vmem>>, %arg5: memref<1x12x256xf32, #tpu.memory_space<vmem>>) attributes {dimension_semantics = [#tpu.dimension_semantics<parallel>, #tpu.dimension_semantics<parallel>], iteration_bounds = array<i64: 2, 1>, scalar_prefetch = 0 : i64, scratch_operands = 0 : i64, tpu.core_type = #tpu.core_type<tc>, window_params = [{pipeline_mode = #tpu.pipeline_mode<synchronous>, transform_indices = @transform_0, window_bounds = array<i64: 12, 75>}, {pipeline_mode = #tpu.pipeline_mode<synchronous>, transform_indices = @transform_1, window_bounds = array<i64: 12, 1>}, {transform_indices = @transform_2, window_bounds = array<i64: 1, 75, 256>}, {transform_indices = @transform_3, window_bounds = array<i64: 1, 12, 256>}]} {
    %c0 = arith.constant 0 : index
    %c0_0 = arith.constant 0 : index
    %0 = vector.load %arg2[%c0, %c0_0] : memref<12x75xbf16, #tpu.memory_space<vmem>>, vector<12x75xbf16>
    %c0_1 = arith.constant 0 : index
    %c0_2 = arith.constant 0 : index
    %c0_3 = arith.constant 0 : index
    %1 = vector.load %arg4[%c0_1, %c0_2, %c0_3] : memref<1x75x256xbf16, #tpu.memory_space<vmem>>, vector<1x75x256xbf16>
    %2 = vector.shape_cast %1 : vector<1x75x256xbf16> to vector<75x256xbf16>
    %cst = arith.constant dense<0.000000e+00> : vector<12x256xf32>
    %3 = tpu.matmul %0, %2, %cst {dimension_numbers = #tpu.dot_dimension_numbers<[1], [0], [0], [1], [0, 0, 1, 1], [], []>} : vector<12x75xbf16>, vector<75x256xbf16>, vector<12x256xf32> -> vector<12x256xf32>
    %c0_4 = arith.constant 0 : index
    %c0_5 = arith.constant 0 : index
    %4 = vector.load %arg3[%c0_4, %c0_5] : memref<12x1xf32, #tpu.memory_space<vmem>>, vector<12x1xf32>
    %5 = vector.broadcast %4 : vector<12x1xf32> to vector<12x256xf32>
    %6 = arith.addf %3, %5 : vector<12x256xf32>
    %c0_6 = arith.constant 0 : index
    %c0_7 = arith.constant 0 : index
    %c0_8 = arith.constant 0 : index
    %7 = vector.load %arg5[%c0_6, %c0_7, %c0_8] : memref<1x12x256xf32, #tpu.memory_space<vmem>>, vector<1x12x256xf32>
    %8 = vector.shape_cast %7 : vector<1x12x256xf32> to vector<12x256xf32>
    %9 = vector.shape_cast %6 : vector<12x256xf32> to vector<1x12x256xf32>
    tpu.vector_store %arg5[%c0_6, %c0_7, %c0_8], %9 {strides = array<i32>} : memref<1x12x256xf32, #tpu.memory_space<vmem>>, vector<1x12x256xf32>,
    return
  }
  func.func @transform_0(%arg0: i32, %arg1: i32) -> (i32, i32) {
    %c0_i32 = arith.constant 0 : i32
    %c0_i32_0 = arith.constant 0 : i32
    %c0_i32_1 = arith.constant 0 : i32
    return %c0_i32, %c0_i32_0 : i32, i32
  }
  func.func @transform_1(%arg0: i32, %arg1: i32) -> (i32, i32) {
    %c0_i32 = arith.constant 0 : i32
    %c0_i32_0 = arith.constant 0 : i32
    %c0_i32_1 = arith.constant 0 : i32
    return %c0_i32, %c0_i32_0 : i32, i32
  }
  func.func @transform_2(%arg0: i32, %arg1: i32) -> (i32, i32, i32) {
    %c0_i32 = arith.constant 0 : i32
    %c0_i32_0 = arith.constant 0 : i32
    return %arg0, %c0_i32, %arg1 : i32, i32, i32
  }
  func.func @transform_3(%arg0: i32, %arg1: i32) -> (i32, i32, i32) {
    %c0_i32 = arith.constant 0 : i32
    %c0_i32_0 = arith.constant 0 : i32
    return %arg0, %c0_i32, %arg1 : i32, i32, i32
  }
}

module attributes {stable_mosaic.version = 11 : i64} {
  func.func @_conv_kernel(%arg0: i32, %arg1: i32, %arg2: memref<20x27xbf16, #tpu.memory_space<vmem>>, %arg3: memref<20x1xf32, #tpu.memory_space<vmem>>, %arg4: memref<1x27x256xbf16, #tpu.memory_space<vmem>>, %arg5: memref<1x20x256xf32, #tpu.memory_space<vmem>>) attributes {dimension_semantics = [#tpu.dimension_semantics<parallel>, #tpu.dimension_semantics<parallel>], iteration_bounds = array<i64: 2, 1>, scalar_prefetch = 0 : i64, scratch_operands = 0 : i64, tpu.core_type = #tpu.core_type<tc>, window_params = [{pipeline_mode = #tpu.pipeline_mode<synchronous>, transform_indices = @transform_0, window_bounds = array<i64: 20, 27>}, {pipeline_mode = #tpu.pipeline_mode<synchronous>, transform_indices = @transform_1, window_bounds = array<i64: 20, 1>}, {transform_indices = @transform_2, window_bounds = array<i64: 1, 27, 256>}, {transform_indices = @transform_3, window_bounds = array<i64: 1, 20, 256>}]} {
    %c0 = arith.constant 0 : index
    %c0_0 = arith.constant 0 : index
    %0 = vector.load %arg2[%c0, %c0_0] : memref<20x27xbf16, #tpu.memory_space<vmem>>, vector<20x27xbf16>
    %c0_1 = arith.constant 0 : index
    %c0_2 = arith.constant 0 : index
    %c0_3 = arith.constant 0 : index
    %1 = vector.load %arg4[%c0_1, %c0_2, %c0_3] : memref<1x27x256xbf16, #tpu.memory_space<vmem>>, vector<1x27x256xbf16>
    %2 = vector.shape_cast %1 : vector<1x27x256xbf16> to vector<27x256xbf16>
    %cst = arith.constant dense<0.000000e+00> : vector<20x256xf32>
    %3 = tpu.matmul %0, %2, %cst {dimension_numbers = #tpu.dot_dimension_numbers<[1], [0], [0], [1], [0, 0, 1, 1], [], []>} : vector<20x27xbf16>, vector<27x256xbf16>, vector<20x256xf32> -> vector<20x256xf32>
    %c0_4 = arith.constant 0 : index
    %c0_5 = arith.constant 0 : index
    %4 = vector.load %arg3[%c0_4, %c0_5] : memref<20x1xf32, #tpu.memory_space<vmem>>, vector<20x1xf32>
    %5 = vector.broadcast %4 : vector<20x1xf32> to vector<20x256xf32>
    %6 = arith.addf %3, %5 : vector<20x256xf32>
    %c0_6 = arith.constant 0 : index
    %c0_7 = arith.constant 0 : index
    %c0_8 = arith.constant 0 : index
    %7 = vector.load %arg5[%c0_6, %c0_7, %c0_8] : memref<1x20x256xf32, #tpu.memory_space<vmem>>, vector<1x20x256xf32>
    %8 = vector.shape_cast %7 : vector<1x20x256xf32> to vector<20x256xf32>
    %9 = vector.shape_cast %6 : vector<20x256xf32> to vector<1x20x256xf32>
    tpu.vector_store %arg5[%c0_6, %c0_7, %c0_8], %9 {strides = array<i32>} : memref<1x20x256xf32, #tpu.memory_space<vmem>>, vector<1x20x256xf32>,
    return
  }
  func.func @transform_0(%arg0: i32, %arg1: i32) -> (i32, i32) {
    %c0_i32 = arith.constant 0 : i32
    %c0_i32_0 = arith.constant 0 : i32
    %c0_i32_1 = arith.constant 0 : i32
    return %c0_i32, %c0_i32_0 : i32, i32
  }
  func.func @transform_1(%arg0: i32, %arg1: i32) -> (i32, i32) {
    %c0_i32 = arith.constant 0 : i32
    %c0_i32_0 = arith.constant 0 : i32
    %c0_i32_1 = arith.constant 0 : i32
    return %c0_i32, %c0_i32_0 : i32, i32
  }
  func.func @transform_2(%arg0: i32, %arg1: i32) -> (i32, i32, i32) {
    %c0_i32 = arith.constant 0 : i32
    %c0_i32_0 = arith.constant 0 : i32
    return %arg0, %c0_i32, %arg1 : i32, i32, i32
  }
  func.func @transform_3(%arg0: i32, %arg1: i32) -> (i32, i32, i32) {
    %c0_i32 = arith.constant 0 : i32
    %c0_i32_0 = arith.constant 0 : i32
    return %arg0, %c0_i32, %arg1 : i32, i32, i32
  }
}

module attributes {stable_mosaic.version = 11 : i64} {
  func.func @_conv_kernel(%arg0: i32, %arg1: i32, %arg2: memref<20x120xbf16, #tpu.memory_space<vmem>>, %arg3: memref<20x1xf32, #tpu.memory_space<vmem>>, %arg4: memref<1x120x256xbf16, #tpu.memory_space<vmem>>, %arg5: memref<1x20x256xf32, #tpu.memory_space<vmem>>) attributes {dimension_semantics = [#tpu.dimension_semantics<parallel>, #tpu.dimension_semantics<parallel>], iteration_bounds = array<i64: 2, 1>, scalar_prefetch = 0 : i64, scratch_operands = 0 : i64, tpu.core_type = #tpu.core_type<tc>, window_params = [{pipeline_mode = #tpu.pipeline_mode<synchronous>, transform_indices = @transform_0, window_bounds = array<i64: 20, 120>}, {pipeline_mode = #tpu.pipeline_mode<synchronous>, transform_indices = @transform_1, window_bounds = array<i64: 20, 1>}, {transform_indices = @transform_2, window_bounds = array<i64: 1, 120, 256>}, {transform_indices = @transform_3, window_bounds = array<i64: 1, 20, 256>}]} {
    %c0 = arith.constant 0 : index
    %c0_0 = arith.constant 0 : index
    %0 = vector.load %arg2[%c0, %c0_0] : memref<20x120xbf16, #tpu.memory_space<vmem>>, vector<20x120xbf16>
    %c0_1 = arith.constant 0 : index
    %c0_2 = arith.constant 0 : index
    %c0_3 = arith.constant 0 : index
    %1 = vector.load %arg4[%c0_1, %c0_2, %c0_3] : memref<1x120x256xbf16, #tpu.memory_space<vmem>>, vector<1x120x256xbf16>
    %2 = vector.shape_cast %1 : vector<1x120x256xbf16> to vector<120x256xbf16>
    %cst = arith.constant dense<0.000000e+00> : vector<20x256xf32>
    %3 = tpu.matmul %0, %2, %cst {dimension_numbers = #tpu.dot_dimension_numbers<[1], [0], [0], [1], [0, 0, 1, 1], [], []>} : vector<20x120xbf16>, vector<120x256xbf16>, vector<20x256xf32> -> vector<20x256xf32>
    %c0_4 = arith.constant 0 : index
    %c0_5 = arith.constant 0 : index
    %4 = vector.load %arg3[%c0_4, %c0_5] : memref<20x1xf32, #tpu.memory_space<vmem>>, vector<20x1xf32>
    %5 = vector.broadcast %4 : vector<20x1xf32> to vector<20x256xf32>
    %6 = arith.addf %3, %5 : vector<20x256xf32>
    %cst_6 = arith.constant 0.000000e+00 : f32
    %7 = vector.broadcast %cst_6 : f32 to vector<20x256xf32>
    %8 = arith.maximumf %6, %7 : vector<20x256xf32>
    %c0_7 = arith.constant 0 : index
    %c0_8 = arith.constant 0 : index
    %c0_9 = arith.constant 0 : index
    %9 = vector.load %arg5[%c0_7, %c0_8, %c0_9] : memref<1x20x256xf32, #tpu.memory_space<vmem>>, vector<1x20x256xf32>
    %10 = vector.shape_cast %9 : vector<1x20x256xf32> to vector<20x256xf32>
    %11 = vector.shape_cast %8 : vector<20x256xf32> to vector<1x20x256xf32>
    tpu.vector_store %arg5[%c0_7, %c0_8, %c0_9], %11 {strides = array<i32>} : memref<1x20x256xf32, #tpu.memory_space<vmem>>, vector<1x20x256xf32>,
    return
  }
  func.func @transform_0(%arg0: i32, %arg1: i32) -> (i32, i32) {
    %c0_i32 = arith.constant 0 : i32
    %c0_i32_0 = arith.constant 0 : i32
    %c0_i32_1 = arith.constant 0 : i32
    return %c0_i32, %c0_i32_0 : i32, i32
  }
  func.func @transform_1(%arg0: i32, %arg1: i32) -> (i32, i32) {
    %c0_i32 = arith.constant 0 : i32
    %c0_i32_0 = arith.constant 0 : i32
    %c0_i32_1 = arith.constant 0 : i32
    return %c0_i32, %c0_i32_0 : i32, i32
  }
  func.func @transform_2(%arg0: i32, %arg1: i32) -> (i32, i32, i32) {
    %c0_i32 = arith.constant 0 : i32
    %c0_i32_0 = arith.constant 0 : i32
    return %arg0, %c0_i32, %arg1 : i32, i32, i32
  }
  func.func @transform_3(%arg0: i32, %arg1: i32) -> (i32, i32, i32) {
    %c0_i32 = arith.constant 0 : i32
    %c0_i32_0 = arith.constant 0 : i32
    return %arg0, %c0_i32, %arg1 : i32, i32, i32
  }
}

module attributes {stable_mosaic.version = 11 : i64} {
  func.func @_conv_kernel(%arg0: i32, %arg1: i32, %arg2: memref<20x180xbf16, #tpu.memory_space<vmem>>, %arg3: memref<20x1xf32, #tpu.memory_space<vmem>>, %arg4: memref<1x180x256xbf16, #tpu.memory_space<vmem>>, %arg5: memref<1x20x256xf32, #tpu.memory_space<vmem>>) attributes {dimension_semantics = [#tpu.dimension_semantics<parallel>, #tpu.dimension_semantics<parallel>], iteration_bounds = array<i64: 2, 1>, scalar_prefetch = 0 : i64, scratch_operands = 0 : i64, tpu.core_type = #tpu.core_type<tc>, window_params = [{pipeline_mode = #tpu.pipeline_mode<synchronous>, transform_indices = @transform_0, window_bounds = array<i64: 20, 180>}, {pipeline_mode = #tpu.pipeline_mode<synchronous>, transform_indices = @transform_1, window_bounds = array<i64: 20, 1>}, {transform_indices = @transform_2, window_bounds = array<i64: 1, 180, 256>}, {transform_indices = @transform_3, window_bounds = array<i64: 1, 20, 256>}]} {
    %c0 = arith.constant 0 : index
    %c0_0 = arith.constant 0 : index
    %0 = vector.load %arg2[%c0, %c0_0] : memref<20x180xbf16, #tpu.memory_space<vmem>>, vector<20x180xbf16>
    %c0_1 = arith.constant 0 : index
    %c0_2 = arith.constant 0 : index
    %c0_3 = arith.constant 0 : index
    %1 = vector.load %arg4[%c0_1, %c0_2, %c0_3] : memref<1x180x256xbf16, #tpu.memory_space<vmem>>, vector<1x180x256xbf16>
    %2 = vector.shape_cast %1 : vector<1x180x256xbf16> to vector<180x256xbf16>
    %cst = arith.constant dense<0.000000e+00> : vector<20x256xf32>
    %3 = tpu.matmul %0, %2, %cst {dimension_numbers = #tpu.dot_dimension_numbers<[1], [0], [0], [1], [0, 0, 1, 1], [], []>} : vector<20x180xbf16>, vector<180x256xbf16>, vector<20x256xf32> -> vector<20x256xf32>
    %c0_4 = arith.constant 0 : index
    %c0_5 = arith.constant 0 : index
    %4 = vector.load %arg3[%c0_4, %c0_5] : memref<20x1xf32, #tpu.memory_space<vmem>>, vector<20x1xf32>
    %5 = vector.broadcast %4 : vector<20x1xf32> to vector<20x256xf32>
    %6 = arith.addf %3, %5 : vector<20x256xf32>
    %c0_6 = arith.constant 0 : index
    %c0_7 = arith.constant 0 : index
    %c0_8 = arith.constant 0 : index
    %7 = vector.load %arg5[%c0_6, %c0_7, %c0_8] : memref<1x20x256xf32, #tpu.memory_space<vmem>>, vector<1x20x256xf32>
    %8 = vector.shape_cast %7 : vector<1x20x256xf32> to vector<20x256xf32>
    %9 = vector.shape_cast %6 : vector<20x256xf32> to vector<1x20x256xf32>
    tpu.vector_store %arg5[%c0_6, %c0_7, %c0_8], %9 {strides = array<i32>} : memref<1x20x256xf32, #tpu.memory_space<vmem>>, vector<1x20x256xf32>,
    return
  }
  func.func @transform_0(%arg0: i32, %arg1: i32) -> (i32, i32) {
    %c0_i32 = arith.constant 0 : i32
    %c0_i32_0 = arith.constant 0 : i32
    %c0_i32_1 = arith.constant 0 : i32
    return %c0_i32, %c0_i32_0 : i32, i32
  }
  func.func @transform_1(%arg0: i32, %arg1: i32) -> (i32, i32) {
    %c0_i32 = arith.constant 0 : i32
    %c0_i32_0 = arith.constant 0 : i32
    %c0_i32_1 = arith.constant 0 : i32
    return %c0_i32, %c0_i32_0 : i32, i32
  }
  func.func @transform_2(%arg0: i32, %arg1: i32) -> (i32, i32, i32) {
    %c0_i32 = arith.constant 0 : i32
    %c0_i32_0 = arith.constant 0 : i32
    return %arg0, %c0_i32, %arg1 : i32, i32, i32
  }
  func.func @transform_3(%arg0: i32, %arg1: i32) -> (i32, i32, i32) {
    %c0_i32 = arith.constant 0 : i32
    %c0_i32_0 = arith.constant 0 : i32
    return %arg0, %c0_i32, %arg1 : i32, i32, i32
  }
}

module attributes {stable_mosaic.version = 11 : i64} {
  func.func @_saab_gate_kernel(%arg0: i32, %arg1: i32, %arg2: memref<20x180xbf16, #tpu.memory_space<vmem>>, %arg3: memref<20x1xf32, #tpu.memory_space<vmem>>, %arg4: memref<20x180xbf16, #tpu.memory_space<vmem>>, %arg5: memref<20x1xf32, #tpu.memory_space<vmem>>, %arg6: memref<1x180x256xbf16, #tpu.memory_space<vmem>>, %arg7: memref<1x180x256xbf16, #tpu.memory_space<vmem>>, %arg8: memref<1x20x256xf32, #tpu.memory_space<vmem>>, %arg9: memref<1x20x256xf32, #tpu.memory_space<vmem>>) attributes {dimension_semantics = [#tpu.dimension_semantics<parallel>, #tpu.dimension_semantics<parallel>], iteration_bounds = array<i64: 2, 1>, scalar_prefetch = 0 : i64, scratch_operands = 0 : i64, tpu.core_type = #tpu.core_type<tc>, window_params = [{pipeline_mode = #tpu.pipeline_mode<synchronous>, transform_indices = @transform_0, window_bounds = array<i64: 20, 180>}, {pipeline_mode = #tpu.pipeline_mode<synchronous>, transform_indices = @transform_1, window_bounds = array<i64: 20, 1>}, {pipeline_mode = #tpu.pipeline_mode<synchronous>, transform_indices = @transform_2, window_bounds = array<i64: 20, 180>}, {pipeline_mode = #tpu.pipeline_mode<synchronous>, transform_indices = @transform_3, window_bounds = array<i64: 20, 1>}, {transform_indices = @transform_4, window_bounds = array<i64: 1, 180, 256>}, {transform_indices = @transform_5, window_bounds = array<i64: 1, 180, 256>}, {transform_indices = @transform_6, window_bounds = array<i64: 1, 20, 256>}, {transform_indices = @transform_7, window_bounds = array<i64: 1, 20, 256>}]} {
    %c0 = arith.constant 0 : index
    %c0_0 = arith.constant 0 : index
    %0 = vector.load %arg2[%c0, %c0_0] : memref<20x180xbf16, #tpu.memory_space<vmem>>, vector<20x180xbf16>
    %c0_1 = arith.constant 0 : index
    %c0_2 = arith.constant 0 : index
    %c0_3 = arith.constant 0 : index
    %1 = vector.load %arg6[%c0_1, %c0_2, %c0_3] : memref<1x180x256xbf16, #tpu.memory_space<vmem>>, vector<1x180x256xbf16>
    %2 = vector.shape_cast %1 : vector<1x180x256xbf16> to vector<180x256xbf16>
    %cst = arith.constant dense<0.000000e+00> : vector<20x256xf32>
    %3 = tpu.matmul %0, %2, %cst {dimension_numbers = #tpu.dot_dimension_numbers<[1], [0], [0], [1], [0, 0, 1, 1], [], []>} : vector<20x180xbf16>, vector<180x256xbf16>, vector<20x256xf32> -> vector<20x256xf32>
    %c0_4 = arith.constant 0 : index
    %c0_5 = arith.constant 0 : index
    %4 = vector.load %arg3[%c0_4, %c0_5] : memref<20x1xf32, #tpu.memory_space<vmem>>, vector<20x1xf32>
    %5 = vector.broadcast %4 : vector<20x1xf32> to vector<20x256xf32>
    %6 = arith.addf %3, %5 : vector<20x256xf32>
    %c0_6 = arith.constant 0 : index
    %c0_7 = arith.constant 0 : index
    %7 = vector.load %arg4[%c0_6, %c0_7] : memref<20x180xbf16, #tpu.memory_space<vmem>>, vector<20x180xbf16>
    %c0_8 = arith.constant 0 : index
    %c0_9 = arith.constant 0 : index
    %c0_10 = arith.constant 0 : index
    %8 = vector.load %arg7[%c0_8, %c0_9, %c0_10] : memref<1x180x256xbf16, #tpu.memory_space<vmem>>, vector<1x180x256xbf16>
    %9 = vector.shape_cast %8 : vector<1x180x256xbf16> to vector<180x256xbf16>
    %cst_11 = arith.constant dense<0.000000e+00> : vector<20x256xf32>
    %10 = tpu.matmul %7, %9, %cst_11 {dimension_numbers = #tpu.dot_dimension_numbers<[1], [0], [0], [1], [0, 0, 1, 1], [], []>} : vector<20x180xbf16>, vector<180x256xbf16>, vector<20x256xf32> -> vector<20x256xf32>
    %c0_12 = arith.constant 0 : index
    %c0_13 = arith.constant 0 : index
    %11 = vector.load %arg5[%c0_12, %c0_13] : memref<20x1xf32, #tpu.memory_space<vmem>>, vector<20x1xf32>
    %12 = vector.broadcast %11 : vector<20x1xf32> to vector<20x256xf32>
    %13 = arith.addf %10, %12 : vector<20x256xf32>
    %c0_14 = arith.constant 0 : index
    %c0_15 = arith.constant 0 : index
    %c0_16 = arith.constant 0 : index
    %14 = vector.load %arg8[%c0_14, %c0_15, %c0_16] : memref<1x20x256xf32, #tpu.memory_space<vmem>>, vector<1x20x256xf32>
    %15 = vector.shape_cast %14 : vector<1x20x256xf32> to vector<20x256xf32>
    %16 = arith.negf %6 : vector<20x256xf32>
    %17 = math.exp %16 : vector<20x256xf32>
    %cst_17 = arith.constant 1.000000e+00 : f32
    %18 = vector.broadcast %cst_17 : f32 to vector<20x256xf32>
    %19 = arith.addf %18, %17 : vector<20x256xf32>
    %20 = arith.divf %18, %19 : vector<20x256xf32>
    %21 = arith.mulf %15, %20 : vector<20x256xf32>
    %22 = arith.addf %21, %13 : vector<20x256xf32>
    %c0_18 = arith.constant 0 : index
    %c0_19 = arith.constant 0 : index
    %c0_20 = arith.constant 0 : index
    %23 = vector.load %arg9[%c0_18, %c0_19, %c0_20] : memref<1x20x256xf32, #tpu.memory_space<vmem>>, vector<1x20x256xf32>
    %24 = vector.shape_cast %23 : vector<1x20x256xf32> to vector<20x256xf32>
    %25 = vector.shape_cast %22 : vector<20x256xf32> to vector<1x20x256xf32>
    tpu.vector_store %arg9[%c0_18, %c0_19, %c0_20], %25 {strides = array<i32>} : memref<1x20x256xf32, #tpu.memory_space<vmem>>, vector<1x20x256xf32>,
    return
  }
  func.func @transform_0(%arg0: i32, %arg1: i32) -> (i32, i32) {
    %c0_i32 = arith.constant 0 : i32
    %c0_i32_0 = arith.constant 0 : i32
    %c0_i32_1 = arith.constant 0 : i32
    return %c0_i32, %c0_i32_0 : i32, i32
  }
  func.func @transform_1(%arg0: i32, %arg1: i32) -> (i32, i32) {
    %c0_i32 = arith.constant 0 : i32
    %c0_i32_0 = arith.constant 0 : i32
    %c0_i32_1 = arith.constant 0 : i32
    return %c0_i32, %c0_i32_0 : i32, i32
  }
  func.func @transform_2(%arg0: i32, %arg1: i32) -> (i32, i32) {
    %c0_i32 = arith.constant 0 : i32
    %c0_i32_0 = arith.constant 0 : i32
    %c0_i32_1 = arith.constant 0 : i32
    return %c0_i32, %c0_i32_0 : i32, i32
  }
  func.func @transform_3(%arg0: i32, %arg1: i32) -> (i32, i32) {
    %c0_i32 = arith.constant 0 : i32
    %c0_i32_0 = arith.constant 0 : i32
    %c0_i32_1 = arith.constant 0 : i32
    return %c0_i32, %c0_i32_0 : i32, i32
  }
  func.func @transform_4(%arg0: i32, %arg1: i32) -> (i32, i32, i32) {
    %c0_i32 = arith.constant 0 : i32
    %c0_i32_0 = arith.constant 0 : i32
    return %arg0, %c0_i32, %arg1 : i32, i32, i32
  }
  func.func @transform_5(%arg0: i32, %arg1: i32) -> (i32, i32, i32) {
    %c0_i32 = arith.constant 0 : i32
    %c0_i32_0 = arith.constant 0 : i32
    return %arg0, %c0_i32, %arg1 : i32, i32, i32
  }
  func.func @transform_6(%arg0: i32, %arg1: i32) -> (i32, i32, i32) {
    %c0_i32 = arith.constant 0 : i32
    %c0_i32_0 = arith.constant 0 : i32
    return %arg0, %c0_i32, %arg1 : i32, i32, i32
  }
  func.func @transform_7(%arg0: i32, %arg1: i32) -> (i32, i32, i32) {
    %c0_i32 = arith.constant 0 : i32
    %c0_i32_0 = arith.constant 0 : i32
    return %arg0, %c0_i32, %arg1 : i32, i32, i32
  }
}

module attributes {stable_mosaic.version = 11 : i64} {
  func.func @_esab_front_kernel(%arg0: i32, %arg1: i32, %arg2: memref<20x20xbf16, #tpu.memory_space<vmem>>, %arg3: memref<20x20xbf16, #tpu.memory_space<vmem>>, %arg4: memref<20x1xf32, #tpu.memory_space<vmem>>, %arg5: memref<20x20xbf16, #tpu.memory_space<vmem>>, %arg6: memref<20x1xf32, #tpu.memory_space<vmem>>, %arg7: memref<1x20x256xf32, #tpu.memory_space<vmem>>, %arg8: memref<1x20x256xf32, #tpu.memory_space<vmem>>, %arg9: memref<1x20x256xf32, #tpu.memory_space<vmem>>, %arg10: memref<1x20x256xf32, #tpu.memory_space<vmem>>, %arg11: memref<1x20x256xf32, #tpu.memory_space<vmem>>) attributes {dimension_semantics = [#tpu.dimension_semantics<parallel>, #tpu.dimension_semantics<parallel>], iteration_bounds = array<i64: 2, 1>, scalar_prefetch = 0 : i64, scratch_operands = 0 : i64, tpu.core_type = #tpu.core_type<tc>, window_params = [{pipeline_mode = #tpu.pipeline_mode<synchronous>, transform_indices = @transform_0, window_bounds = array<i64: 20, 20>}, {pipeline_mode = #tpu.pipeline_mode<synchronous>, transform_indices = @transform_1, window_bounds = array<i64: 20, 20>}, {pipeline_mode = #tpu.pipeline_mode<synchronous>, transform_indices = @transform_2, window_bounds = array<i64: 20, 1>}, {pipeline_mode = #tpu.pipeline_mode<synchronous>, transform_indices = @transform_3, window_bounds = array<i64: 20, 20>}, {pipeline_mode = #tpu.pipeline_mode<synchronous>, transform_indices = @transform_4, window_bounds = array<i64: 20, 1>}, {transform_indices = @transform_5, window_bounds = array<i64: 1, 20, 256>}, {transform_indices = @transform_6, window_bounds = array<i64: 1, 20, 256>}, {transform_indices = @transform_7, window_bounds = array<i64: 1, 20, 256>}, {transform_indices = @transform_8, window_bounds = array<i64: 1, 20, 256>}, {transform_indices = @transform_9, window_bounds = array<i64: 1, 20, 256>}]} {
    %c0 = arith.constant 0 : index
    %c0_0 = arith.constant 0 : index
    %c0_1 = arith.constant 0 : index
    %0 = vector.load %arg7[%c0, %c0_0, %c0_1] : memref<1x20x256xf32, #tpu.memory_space<vmem>>, vector<1x20x256xf32>
    %1 = vector.shape_cast %0 : vector<1x20x256xf32> to vector<20x256xf32>
    %2 = arith.truncf %1 : vector<20x256xf32> to vector<20x256xbf16>
    %c0_2 = arith.constant 0 : index
    %c0_3 = arith.constant 0 : index
    %c0_4 = arith.constant 0 : index
    %3 = vector.load %arg8[%c0_2, %c0_3, %c0_4] : memref<1x20x256xf32, #tpu.memory_space<vmem>>, vector<1x20x256xf32>
    %4 = vector.shape_cast %3 : vector<1x20x256xf32> to vector<20x256xf32>
    %5 = arith.truncf %4 : vector<20x256xf32> to vector<20x256xbf16>
    %c0_5 = arith.constant 0 : index
    %c0_6 = arith.constant 0 : index
    %6 = vector.load %arg2[%c0_5, %c0_6] : memref<20x20xbf16, #tpu.memory_space<vmem>>, vector<20x20xbf16>
    %cst = arith.constant dense<0.000000e+00> : vector<20x256xf32>
    %7 = tpu.matmul %6, %2, %cst {dimension_numbers = #tpu.dot_dimension_numbers<[1], [0], [0], [1], [0, 0, 1, 1], [], []>} : vector<20x20xbf16>, vector<20x256xbf16>, vector<20x256xf32> -> vector<20x256xf32>
    %c0_7 = arith.constant 0 : index
    %c0_8 = arith.constant 0 : index
    %8 = vector.load %arg3[%c0_7, %c0_8] : memref<20x20xbf16, #tpu.memory_space<vmem>>, vector<20x20xbf16>
    %cst_9 = arith.constant dense<0.000000e+00> : vector<20x256xf32>
    %9 = tpu.matmul %8, %5, %cst_9 {dimension_numbers = #tpu.dot_dimension_numbers<[1], [0], [0], [1], [0, 0, 1, 1], [], []>} : vector<20x20xbf16>, vector<20x256xbf16>, vector<20x256xf32> -> vector<20x256xf32>
    %10 = arith.addf %7, %9 : vector<20x256xf32>
    %c0_10 = arith.constant 0 : index
    %c0_11 = arith.constant 0 : index
    %11 = vector.load %arg4[%c0_10, %c0_11] : memref<20x1xf32, #tpu.memory_space<vmem>>, vector<20x1xf32>
    %12 = vector.broadcast %11 : vector<20x1xf32> to vector<20x256xf32>
    %13 = arith.addf %10, %12 : vector<20x256xf32>
    %c0_12 = arith.constant 0 : index
    %c0_13 = arith.constant 0 : index
    %c0_14 = arith.constant 0 : index
    %14 = vector.load %arg9[%c0_12, %c0_13, %c0_14] : memref<1x20x256xf32, #tpu.memory_space<vmem>>, vector<1x20x256xf32>
    %15 = vector.shape_cast %14 : vector<1x20x256xf32> to vector<20x256xf32>
    %16 = vector.shape_cast %13 : vector<20x256xf32> to vector<1x20x256xf32>
    tpu.vector_store %arg9[%c0_12, %c0_13, %c0_14], %16 {strides = array<i32>} : memref<1x20x256xf32, #tpu.memory_space<vmem>>, vector<1x20x256xf32>,
    %c0_15 = arith.constant 0 : index
    %c0_16 = arith.constant 0 : index
    %17 = vector.load %arg5[%c0_15, %c0_16] : memref<20x20xbf16, #tpu.memory_space<vmem>>, vector<20x20xbf16>
    %cst_17 = arith.constant dense<0.000000e+00> : vector<20x256xf32>
    %18 = tpu.matmul %17, %2, %cst_17 {dimension_numbers = #tpu.dot_dimension_numbers<[1], [0], [0], [1], [0, 0, 1, 1], [], []>} : vector<20x20xbf16>, vector<20x256xbf16>, vector<20x256xf32> -> vector<20x256xf32>
    %c0_18 = arith.constant 0 : index
    %c0_19 = arith.constant 0 : index
    %19 = vector.load %arg6[%c0_18, %c0_19] : memref<20x1xf32, #tpu.memory_space<vmem>>, vector<20x1xf32>
    %20 = vector.broadcast %19 : vector<20x1xf32> to vector<20x256xf32>
    %21 = arith.addf %18, %20 : vector<20x256xf32>
    %c0_20 = arith.constant 0 : index
    %c0_21 = arith.constant 0 : index
    %c0_22 = arith.constant 0 : index
    %22 = vector.load %arg10[%c0_20, %c0_21, %c0_22] : memref<1x20x256xf32, #tpu.memory_space<vmem>>, vector<1x20x256xf32>
    %23 = vector.shape_cast %22 : vector<1x20x256xf32> to vector<20x256xf32>
    %24 = vector.shape_cast %21 : vector<20x256xf32> to vector<1x20x256xf32>
    tpu.vector_store %arg10[%c0_20, %c0_21, %c0_22], %24 {strides = array<i32>} : memref<1x20x256xf32, #tpu.memory_space<vmem>>, vector<1x20x256xf32>,
    %c0_23 = arith.constant 0 : index
    %c0_24 = arith.constant 0 : index
    %25 = vector.load %arg5[%c0_23, %c0_24] : memref<20x20xbf16, #tpu.memory_space<vmem>>, vector<20x20xbf16>
    %cst_25 = arith.constant dense<0.000000e+00> : vector<20x256xf32>
    %26 = tpu.matmul %25, %5, %cst_25 {dimension_numbers = #tpu.dot_dimension_numbers<[1], [0], [0], [1], [0, 0, 1, 1], [], []>} : vector<20x20xbf16>, vector<20x256xbf16>, vector<20x256xf32> -> vector<20x256xf32>
    %c0_26 = arith.constant 0 : index
    %c0_27 = arith.constant 0 : index
    %27 = vector.load %arg6[%c0_26, %c0_27] : memref<20x1xf32, #tpu.memory_space<vmem>>, vector<20x1xf32>
    %28 = vector.broadcast %27 : vector<20x1xf32> to vector<20x256xf32>
    %29 = arith.addf %26, %28 : vector<20x256xf32>
    %c0_28 = arith.constant 0 : index
    %c0_29 = arith.constant 0 : index
    %c0_30 = arith.constant 0 : index
    %30 = vector.load %arg11[%c0_28, %c0_29, %c0_30] : memref<1x20x256xf32, #tpu.memory_space<vmem>>, vector<1x20x256xf32>
    %31 = vector.shape_cast %30 : vector<1x20x256xf32> to vector<20x256xf32>
    %32 = vector.shape_cast %29 : vector<20x256xf32> to vector<1x20x256xf32>
    tpu.vector_store %arg11[%c0_28, %c0_29, %c0_30], %32 {strides = array<i32>} : memref<1x20x256xf32, #tpu.memory_space<vmem>>, vector<1x20x256xf32>,
    return
  }
  func.func @transform_0(%arg0: i32, %arg1: i32) -> (i32, i32) {
    %c0_i32 = arith.constant 0 : i32
    %c0_i32_0 = arith.constant 0 : i32
    %c0_i32_1 = arith.constant 0 : i32
    return %c0_i32, %c0_i32_0 : i32, i32
  }
  func.func @transform_1(%arg0: i32, %arg1: i32) -> (i32, i32) {
    %c0_i32 = arith.constant 0 : i32
    %c0_i32_0 = arith.constant 0 : i32
    %c0_i32_1 = arith.constant 0 : i32
    return %c0_i32, %c0_i32_0 : i32, i32
  }
  func.func @transform_2(%arg0: i32, %arg1: i32) -> (i32, i32) {
    %c0_i32 = arith.constant 0 : i32
    %c0_i32_0 = arith.constant 0 : i32
    %c0_i32_1 = arith.constant 0 : i32
    return %c0_i32, %c0_i32_0 : i32, i32
  }
  func.func @transform_3(%arg0: i32, %arg1: i32) -> (i32, i32) {
    %c0_i32 = arith.constant 0 : i32
    %c0_i32_0 = arith.constant 0 : i32
    %c0_i32_1 = arith.constant 0 : i32
    return %c0_i32, %c0_i32_0 : i32, i32
  }
  func.func @transform_4(%arg0: i32, %arg1: i32) -> (i32, i32) {
    %c0_i32 = arith.constant 0 : i32
    %c0_i32_0 = arith.constant 0 : i32
    %c0_i32_1 = arith.constant 0 : i32
    return %c0_i32, %c0_i32_0 : i32, i32
  }
  func.func @transform_5(%arg0: i32, %arg1: i32) -> (i32, i32, i32) {
    %c0_i32 = arith.constant 0 : i32
    %c0_i32_0 = arith.constant 0 : i32
    return %arg0, %c0_i32, %arg1 : i32, i32, i32
  }
  func.func @transform_6(%arg0: i32, %arg1: i32) -> (i32, i32, i32) {
    %c0_i32 = arith.constant 0 : i32
    %c0_i32_0 = arith.constant 0 : i32
    return %arg0, %c0_i32, %arg1 : i32, i32, i32
  }
  func.func @transform_7(%arg0: i32, %arg1: i32) -> (i32, i32, i32) {
    %c0_i32 = arith.constant 0 : i32
    %c0_i32_0 = arith.constant 0 : i32
    return %arg0, %c0_i32, %arg1 : i32, i32, i32
  }
  func.func @transform_8(%arg0: i32, %arg1: i32) -> (i32, i32, i32) {
    %c0_i32 = arith.constant 0 : i32
    %c0_i32_0 = arith.constant 0 : i32
    return %arg0, %c0_i32, %arg1 : i32, i32, i32
  }
  func.func @transform_9(%arg0: i32, %arg1: i32) -> (i32, i32, i32) {
    %c0_i32 = arith.constant 0 : i32
    %c0_i32_0 = arith.constant 0 : i32
    return %arg0, %c0_i32, %arg1 : i32, i32, i32
  }
}

module attributes {stable_mosaic.version = 11 : i64} {
  func.func @_conv_kernel(%arg0: i32, %arg1: i32, %arg2: memref<40x180xbf16, #tpu.memory_space<vmem>>, %arg3: memref<40x1xf32, #tpu.memory_space<vmem>>, %arg4: memref<1x180x256xbf16, #tpu.memory_space<vmem>>, %arg5: memref<1x40x256xf32, #tpu.memory_space<vmem>>) attributes {dimension_semantics = [#tpu.dimension_semantics<parallel>, #tpu.dimension_semantics<parallel>], iteration_bounds = array<i64: 2, 1>, scalar_prefetch = 0 : i64, scratch_operands = 0 : i64, tpu.core_type = #tpu.core_type<tc>, window_params = [{pipeline_mode = #tpu.pipeline_mode<synchronous>, transform_indices = @transform_0, window_bounds = array<i64: 40, 180>}, {pipeline_mode = #tpu.pipeline_mode<synchronous>, transform_indices = @transform_1, window_bounds = array<i64: 40, 1>}, {transform_indices = @transform_2, window_bounds = array<i64: 1, 180, 256>}, {transform_indices = @transform_3, window_bounds = array<i64: 1, 40, 256>}]} {
    %c0 = arith.constant 0 : index
    %c0_0 = arith.constant 0 : index
    %0 = vector.load %arg2[%c0, %c0_0] : memref<40x180xbf16, #tpu.memory_space<vmem>>, vector<40x180xbf16>
    %c0_1 = arith.constant 0 : index
    %c0_2 = arith.constant 0 : index
    %c0_3 = arith.constant 0 : index
    %1 = vector.load %arg4[%c0_1, %c0_2, %c0_3] : memref<1x180x256xbf16, #tpu.memory_space<vmem>>, vector<1x180x256xbf16>
    %2 = vector.shape_cast %1 : vector<1x180x256xbf16> to vector<180x256xbf16>
    %cst = arith.constant dense<0.000000e+00> : vector<40x256xf32>
    %3 = tpu.matmul %0, %2, %cst {dimension_numbers = #tpu.dot_dimension_numbers<[1], [0], [0], [1], [0, 0, 1, 1], [], []>} : vector<40x180xbf16>, vector<180x256xbf16>, vector<40x256xf32> -> vector<40x256xf32>
    %c0_4 = arith.constant 0 : index
    %c0_5 = arith.constant 0 : index
    %4 = vector.load %arg3[%c0_4, %c0_5] : memref<40x1xf32, #tpu.memory_space<vmem>>, vector<40x1xf32>
    %5 = vector.broadcast %4 : vector<40x1xf32> to vector<40x256xf32>
    %6 = arith.addf %3, %5 : vector<40x256xf32>
    %cst_6 = arith.constant 0.000000e+00 : f32
    %7 = vector.broadcast %cst_6 : f32 to vector<40x256xf32>
    %8 = arith.cmpf oge, %6, %7 : vector<40x256xf32>
    %cst_7 = arith.constant 2.000000e-01 : f32
    %9 = vector.broadcast %cst_7 : f32 to vector<40x256xf32>
    %10 = arith.mulf %9, %6 : vector<40x256xf32>
    %11 = arith.select %8, %6, %10 : vector<40x256xi1>, vector<40x256xf32>
    %c0_8 = arith.constant 0 : index
    %c0_9 = arith.constant 0 : index
    %c0_10 = arith.constant 0 : index
    %12 = vector.load %arg5[%c0_8, %c0_9, %c0_10] : memref<1x40x256xf32, #tpu.memory_space<vmem>>, vector<1x40x256xf32>
    %13 = vector.shape_cast %12 : vector<1x40x256xf32> to vector<40x256xf32>
    %14 = vector.shape_cast %11 : vector<40x256xf32> to vector<1x40x256xf32>
    tpu.vector_store %arg5[%c0_8, %c0_9, %c0_10], %14 {strides = array<i32>} : memref<1x40x256xf32, #tpu.memory_space<vmem>>, vector<1x40x256xf32>,
    return
  }
  func.func @transform_0(%arg0: i32, %arg1: i32) -> (i32, i32) {
    %c0_i32 = arith.constant 0 : i32
    %c0_i32_0 = arith.constant 0 : i32
    %c0_i32_1 = arith.constant 0 : i32
    return %c0_i32, %c0_i32_0 : i32, i32
  }
  func.func @transform_1(%arg0: i32, %arg1: i32) -> (i32, i32) {
    %c0_i32 = arith.constant 0 : i32
    %c0_i32_0 = arith.constant 0 : i32
    %c0_i32_1 = arith.constant 0 : i32
    return %c0_i32, %c0_i32_0 : i32, i32
  }
  func.func @transform_2(%arg0: i32, %arg1: i32) -> (i32, i32, i32) {
    %c0_i32 = arith.constant 0 : i32
    %c0_i32_0 = arith.constant 0 : i32
    return %arg0, %c0_i32, %arg1 : i32, i32, i32
  }
  func.func @transform_3(%arg0: i32, %arg1: i32) -> (i32, i32, i32) {
    %c0_i32 = arith.constant 0 : i32
    %c0_i32_0 = arith.constant 0 : i32
    return %arg0, %c0_i32, %arg1 : i32, i32, i32
  }
}

module attributes {stable_mosaic.version = 11 : i64} {
  func.func @_conv_kernel(%arg0: i32, %arg1: i32, %arg2: memref<4x180xbf16, #tpu.memory_space<vmem>>, %arg3: memref<4x1xf32, #tpu.memory_space<vmem>>, %arg4: memref<1x180x256xbf16, #tpu.memory_space<vmem>>, %arg5: memref<1x4x256xf32, #tpu.memory_space<vmem>>) attributes {dimension_semantics = [#tpu.dimension_semantics<parallel>, #tpu.dimension_semantics<parallel>], iteration_bounds = array<i64: 2, 1>, scalar_prefetch = 0 : i64, scratch_operands = 0 : i64, tpu.core_type = #tpu.core_type<tc>, window_params = [{pipeline_mode = #tpu.pipeline_mode<synchronous>, transform_indices = @transform_0, window_bounds = array<i64: 4, 180>}, {pipeline_mode = #tpu.pipeline_mode<synchronous>, transform_indices = @transform_1, window_bounds = array<i64: 4, 1>}, {transform_indices = @transform_2, window_bounds = array<i64: 1, 180, 256>}, {transform_indices = @transform_3, window_bounds = array<i64: 1, 4, 256>}]} {
    %c0 = arith.constant 0 : index
    %c0_0 = arith.constant 0 : index
    %0 = vector.load %arg2[%c0, %c0_0] : memref<4x180xbf16, #tpu.memory_space<vmem>>, vector<4x180xbf16>
    %c0_1 = arith.constant 0 : index
    %c0_2 = arith.constant 0 : index
    %c0_3 = arith.constant 0 : index
    %1 = vector.load %arg4[%c0_1, %c0_2, %c0_3] : memref<1x180x256xbf16, #tpu.memory_space<vmem>>, vector<1x180x256xbf16>
    %2 = vector.shape_cast %1 : vector<1x180x256xbf16> to vector<180x256xbf16>
    %cst = arith.constant dense<0.000000e+00> : vector<4x256xf32>
    %3 = tpu.matmul %0, %2, %cst {dimension_numbers = #tpu.dot_dimension_numbers<[1], [0], [0], [1], [0, 0, 1, 1], [], []>} : vector<4x180xbf16>, vector<180x256xbf16>, vector<4x256xf32> -> vector<4x256xf32>
    %c0_4 = arith.constant 0 : index
    %c0_5 = arith.constant 0 : index
    %4 = vector.load %arg3[%c0_4, %c0_5] : memref<4x1xf32, #tpu.memory_space<vmem>>, vector<4x1xf32>
    %5 = vector.broadcast %4 : vector<4x1xf32> to vector<4x256xf32>
    %6 = arith.addf %3, %5 : vector<4x256xf32>
    %cst_6 = arith.constant 0.000000e+00 : f32
    %7 = vector.broadcast %cst_6 : f32 to vector<4x256xf32>
    %8 = arith.maximumf %6, %7 : vector<4x256xf32>
    %c0_7 = arith.constant 0 : index
    %c0_8 = arith.constant 0 : index
    %c0_9 = arith.constant 0 : index
    %9 = vector.load %arg5[%c0_7, %c0_8, %c0_9] : memref<1x4x256xf32, #tpu.memory_space<vmem>>, vector<1x4x256xf32>
    %10 = vector.shape_cast %9 : vector<1x4x256xf32> to vector<4x256xf32>
    %11 = vector.shape_cast %8 : vector<4x256xf32> to vector<1x4x256xf32>
    tpu.vector_store %arg5[%c0_7, %c0_8, %c0_9], %11 {strides = array<i32>} : memref<1x4x256xf32, #tpu.memory_space<vmem>>, vector<1x4x256xf32>,
    return
  }
  func.func @transform_0(%arg0: i32, %arg1: i32) -> (i32, i32) {
    %c0_i32 = arith.constant 0 : i32
    %c0_i32_0 = arith.constant 0 : i32
    %c0_i32_1 = arith.constant 0 : i32
    return %c0_i32, %c0_i32_0 : i32, i32
  }
  func.func @transform_1(%arg0: i32, %arg1: i32) -> (i32, i32) {
    %c0_i32 = arith.constant 0 : i32
    %c0_i32_0 = arith.constant 0 : i32
    %c0_i32_1 = arith.constant 0 : i32
    return %c0_i32, %c0_i32_0 : i32, i32
  }
  func.func @transform_2(%arg0: i32, %arg1: i32) -> (i32, i32, i32) {
    %c0_i32 = arith.constant 0 : i32
    %c0_i32_0 = arith.constant 0 : i32
    return %arg0, %c0_i32, %arg1 : i32, i32, i32
  }
  func.func @transform_3(%arg0: i32, %arg1: i32) -> (i32, i32, i32) {
    %c0_i32 = arith.constant 0 : i32
    %c0_i32_0 = arith.constant 0 : i32
    return %arg0, %c0_i32, %arg1 : i32, i32, i32
  }
}

module attributes {stable_mosaic.version = 11 : i64} {
  func.func @_stats_kernel(%arg0: i32, %arg1: memref<1x20x256xf32, #tpu.memory_space<vmem>>, %arg2: memref<1x20x1xf32, #tpu.memory_space<vmem>>, %arg3: memref<1x20x1xf32, #tpu.memory_space<vmem>>) attributes {dimension_semantics = [#tpu.dimension_semantics<parallel>], iteration_bounds = array<i64: 2>, scalar_prefetch = 0 : i64, scratch_operands = 0 : i64, tpu.core_type = #tpu.core_type<tc>, window_params = [{transform_indices = @transform_0, window_bounds = array<i64: 1, 20, 256>}, {transform_indices = @transform_1, window_bounds = array<i64: 1, 20, 1>}, {transform_indices = @transform_2, window_bounds = array<i64: 1, 20, 1>}]} {
    %c0 = arith.constant 0 : index
    %c0_0 = arith.constant 0 : index
    %c0_1 = arith.constant 0 : index
    %0 = vector.load %arg1[%c0, %c0_0, %c0_1] : memref<1x20x256xf32, #tpu.memory_space<vmem>>, vector<1x20x256xf32>
    %1 = vector.shape_cast %0 : vector<1x20x256xf32> to vector<20x256xf32>
    %cst = arith.constant dense<0.000000e+00> : vector<20xf32>
    %2 = vector.multi_reduction <add>, %1, %cst [1] : vector<20x256xf32> to vector<20xf32>
    %3 = vector.shape_cast %2 : vector<20xf32> to vector<20x1xf32>
    %cst_2 = arith.constant 2.560000e+02 : f32
    %4 = vector.broadcast %cst_2 : f32 to vector<20x1xf32>
    %5 = arith.divf %3, %4 : vector<20x1xf32>
    %6 = vector.broadcast %5 : vector<20x1xf32> to vector<20x256xf32>
    %7 = arith.subf %1, %6 : vector<20x256xf32>
    %8 = arith.mulf %7, %7 : vector<20x256xf32>
    %cst_3 = arith.constant dense<0.000000e+00> : vector<20xf32>
    %9 = vector.multi_reduction <add>, %8, %cst_3 [1] : vector<20x256xf32> to vector<20xf32>
    %10 = vector.shape_cast %9 : vector<20xf32> to vector<20x1xf32>
    %cst_4 = arith.constant 2.550000e+02 : f32
    %11 = vector.broadcast %cst_4 : f32 to vector<20x1xf32>
    %12 = arith.divf %10, %11 : vector<20x1xf32>
    %c0_5 = arith.constant 0 : index
    %c0_6 = arith.constant 0 : index
    %c0_7 = arith.constant 0 : index
    %13 = vector.load %arg2[%c0_5, %c0_6, %c0_7] : memref<1x20x1xf32, #tpu.memory_space<vmem>>, vector<1x20x1xf32>
    %14 = vector.shape_cast %13 : vector<1x20x1xf32> to vector<20x1xf32>
    %15 = vector.shape_cast %5 : vector<20x1xf32> to vector<1x20x1xf32>
    tpu.vector_store %arg2[%c0_5, %c0_6, %c0_7], %15 {strides = array<i32>} : memref<1x20x1xf32, #tpu.memory_space<vmem>>, vector<1x20x1xf32>,
    %16 = math.sqrt %12 : vector<20x1xf32>
    %c0_8 = arith.constant 0 : index
    %c0_9 = arith.constant 0 : index
    %c0_10 = arith.constant 0 : index
    %17 = vector.load %arg3[%c0_8, %c0_9, %c0_10] : memref<1x20x1xf32, #tpu.memory_space<vmem>>, vector<1x20x1xf32>
    %18 = vector.shape_cast %17 : vector<1x20x1xf32> to vector<20x1xf32>
    %19 = vector.shape_cast %16 : vector<20x1xf32> to vector<1x20x1xf32>
    tpu.vector_store %arg3[%c0_8, %c0_9, %c0_10], %19 {strides = array<i32>} : memref<1x20x1xf32, #tpu.memory_space<vmem>>, vector<1x20x1xf32>,
    return
  }
  func.func @transform_0(%arg0: i32) -> (i32, i32, i32) {
    %c0_i32 = arith.constant 0 : i32
    %c0_i32_0 = arith.constant 0 : i32
    %c0_i32_1 = arith.constant 0 : i32
    return %arg0, %c0_i32, %c0_i32_0 : i32, i32, i32
  }
  func.func @transform_1(%arg0: i32) -> (i32, i32, i32) {
    %c0_i32 = arith.constant 0 : i32
    %c0_i32_0 = arith.constant 0 : i32
    %c0_i32_1 = arith.constant 0 : i32
    return %arg0, %c0_i32, %c0_i32_0 : i32, i32, i32
  }
  func.func @transform_2(%arg0: i32) -> (i32, i32, i32) {
    %c0_i32 = arith.constant 0 : i32
    %c0_i32_0 = arith.constant 0 : i32
    %c0_i32_1 = arith.constant 0 : i32
    return %arg0, %c0_i32, %c0_i32_0 : i32, i32, i32
  }
}

module attributes {stable_mosaic.version = 11 : i64} {
  func.func @_esab_mod_kernel(%arg0: i32, %arg1: i32, %arg2: memref<20x36xbf16, #tpu.memory_space<vmem>>, %arg3: memref<20x1xf32, #tpu.memory_space<vmem>>, %arg4: memref<20x36xbf16, #tpu.memory_space<vmem>>, %arg5: memref<20x1xf32, #tpu.memory_space<vmem>>, %arg6: memref<1x36x256xbf16, #tpu.memory_space<vmem>>, %arg7: memref<1x20x256xf32, #tpu.memory_space<vmem>>, %arg8: memref<1x20x1xf32, #tpu.memory_space<vmem>>, %arg9: memref<1x20x1xf32, #tpu.memory_space<vmem>>, %arg10: memref<1x20x256xf32, #tpu.memory_space<vmem>>) attributes {dimension_semantics = [#tpu.dimension_semantics<parallel>, #tpu.dimension_semantics<parallel>], iteration_bounds = array<i64: 2, 1>, scalar_prefetch = 0 : i64, scratch_operands = 0 : i64, tpu.core_type = #tpu.core_type<tc>, window_params = [{pipeline_mode = #tpu.pipeline_mode<synchronous>, transform_indices = @transform_0, window_bounds = array<i64: 20, 36>}, {pipeline_mode = #tpu.pipeline_mode<synchronous>, transform_indices = @transform_1, window_bounds = array<i64: 20, 1>}, {pipeline_mode = #tpu.pipeline_mode<synchronous>, transform_indices = @transform_2, window_bounds = array<i64: 20, 36>}, {pipeline_mode = #tpu.pipeline_mode<synchronous>, transform_indices = @transform_3, window_bounds = array<i64: 20, 1>}, {transform_indices = @transform_4, window_bounds = array<i64: 1, 36, 256>}, {transform_indices = @transform_5, window_bounds = array<i64: 1, 20, 256>}, {transform_indices = @transform_6, window_bounds = array<i64: 1, 20, 1>}, {transform_indices = @transform_7, window_bounds = array<i64: 1, 20, 1>}, {transform_indices = @transform_8, window_bounds = array<i64: 1, 20, 256>}]} {
    %c0 = arith.constant 0 : index
    %c0_0 = arith.constant 0 : index
    %0 = vector.load %arg2[%c0, %c0_0] : memref<20x36xbf16, #tpu.memory_space<vmem>>, vector<20x36xbf16>
    %c0_1 = arith.constant 0 : index
    %c0_2 = arith.constant 0 : index
    %c0_3 = arith.constant 0 : index
    %1 = vector.load %arg6[%c0_1, %c0_2, %c0_3] : memref<1x36x256xbf16, #tpu.memory_space<vmem>>, vector<1x36x256xbf16>
    %2 = vector.shape_cast %1 : vector<1x36x256xbf16> to vector<36x256xbf16>
    %cst = arith.constant dense<0.000000e+00> : vector<20x256xf32>
    %3 = tpu.matmul %0, %2, %cst {dimension_numbers = #tpu.dot_dimension_numbers<[1], [0], [0], [1], [0, 0, 1, 1], [], []>} : vector<20x36xbf16>, vector<36x256xbf16>, vector<20x256xf32> -> vector<20x256xf32>
    %c0_4 = arith.constant 0 : index
    %c0_5 = arith.constant 0 : index
    %4 = vector.load %arg4[%c0_4, %c0_5] : memref<20x36xbf16, #tpu.memory_space<vmem>>, vector<20x36xbf16>
    %c0_6 = arith.constant 0 : index
    %c0_7 = arith.constant 0 : index
    %c0_8 = arith.constant 0 : index
    %5 = vector.load %arg6[%c0_6, %c0_7, %c0_8] : memref<1x36x256xbf16, #tpu.memory_space<vmem>>, vector<1x36x256xbf16>
    %6 = vector.shape_cast %5 : vector<1x36x256xbf16> to vector<36x256xbf16>
    %cst_9 = arith.constant dense<0.000000e+00> : vector<20x256xf32>
    %7 = tpu.matmul %4, %6, %cst_9 {dimension_numbers = #tpu.dot_dimension_numbers<[1], [0], [0], [1], [0, 0, 1, 1], [], []>} : vector<20x36xbf16>, vector<36x256xbf16>, vector<20x256xf32> -> vector<20x256xf32>
    %c0_10 = arith.constant 0 : index
    %c0_11 = arith.constant 0 : index
    %8 = vector.load %arg3[%c0_10, %c0_11] : memref<20x1xf32, #tpu.memory_space<vmem>>, vector<20x1xf32>
    %9 = vector.broadcast %8 : vector<20x1xf32> to vector<20x256xf32>
    %10 = arith.addf %3, %9 : vector<20x256xf32>
    %c0_12 = arith.constant 0 : index
    %c0_13 = arith.constant 0 : index
    %c0_14 = arith.constant 0 : index
    %11 = vector.load %arg9[%c0_12, %c0_13, %c0_14] : memref<1x20x1xf32, #tpu.memory_space<vmem>>, vector<1x20x1xf32>
    %12 = vector.shape_cast %11 : vector<1x20x1xf32> to vector<20x1xf32>
    %13 = vector.broadcast %12 : vector<20x1xf32> to vector<20x256xf32>
    %14 = arith.addf %10, %13 : vector<20x256xf32>
    %c0_15 = arith.constant 0 : index
    %c0_16 = arith.constant 0 : index
    %15 = vector.load %arg5[%c0_15, %c0_16] : memref<20x1xf32, #tpu.memory_space<vmem>>, vector<20x1xf32>
    %16 = vector.broadcast %15 : vector<20x1xf32> to vector<20x256xf32>
    %17 = arith.addf %7, %16 : vector<20x256xf32>
    %c0_17 = arith.constant 0 : index
    %c0_18 = arith.constant 0 : index
    %c0_19 = arith.constant 0 : index
    %18 = vector.load %arg8[%c0_17, %c0_18, %c0_19] : memref<1x20x1xf32, #tpu.memory_space<vmem>>, vector<1x20x1xf32>
    %19 = vector.shape_cast %18 : vector<1x20x1xf32> to vector<20x1xf32>
    %20 = vector.broadcast %19 : vector<20x1xf32> to vector<20x256xf32>
    %21 = arith.addf %17, %20 : vector<20x256xf32>
    %c0_20 = arith.constant 0 : index
    %c0_21 = arith.constant 0 : index
    %c0_22 = arith.constant 0 : index
    %22 = vector.load %arg7[%c0_20, %c0_21, %c0_22] : memref<1x20x256xf32, #tpu.memory_space<vmem>>, vector<1x20x256xf32>
    %23 = vector.shape_cast %22 : vector<1x20x256xf32> to vector<20x256xf32>
    %24 = arith.negf %14 : vector<20x256xf32>
    %25 = math.exp %24 : vector<20x256xf32>
    %cst_23 = arith.constant 1.000000e+00 : f32
    %26 = vector.broadcast %cst_23 : f32 to vector<20x256xf32>
    %27 = arith.addf %26, %25 : vector<20x256xf32>
    %28 = arith.divf %26, %27 : vector<20x256xf32>
    %29 = arith.mulf %23, %28 : vector<20x256xf32>
    %30 = arith.addf %29, %21 : vector<20x256xf32>
    %c0_24 = arith.constant 0 : index
    %c0_25 = arith.constant 0 : index
    %c0_26 = arith.constant 0 : index
    %31 = vector.load %arg10[%c0_24, %c0_25, %c0_26] : memref<1x20x256xf32, #tpu.memory_space<vmem>>, vector<1x20x256xf32>
    %32 = vector.shape_cast %31 : vector<1x20x256xf32> to vector<20x256xf32>
    %33 = vector.shape_cast %30 : vector<20x256xf32> to vector<1x20x256xf32>
    tpu.vector_store %arg10[%c0_24, %c0_25, %c0_26], %33 {strides = array<i32>} : memref<1x20x256xf32, #tpu.memory_space<vmem>>, vector<1x20x256xf32>,
    return
  }
  func.func @transform_0(%arg0: i32, %arg1: i32) -> (i32, i32) {
    %c0_i32 = arith.constant 0 : i32
    %c0_i32_0 = arith.constant 0 : i32
    %c0_i32_1 = arith.constant 0 : i32
    return %c0_i32, %c0_i32_0 : i32, i32
  }
  func.func @transform_1(%arg0: i32, %arg1: i32) -> (i32, i32) {
    %c0_i32 = arith.constant 0 : i32
    %c0_i32_0 = arith.constant 0 : i32
    %c0_i32_1 = arith.constant 0 : i32
    return %c0_i32, %c0_i32_0 : i32, i32
  }
  func.func @transform_2(%arg0: i32, %arg1: i32) -> (i32, i32) {
    %c0_i32 = arith.constant 0 : i32
    %c0_i32_0 = arith.constant 0 : i32
    %c0_i32_1 = arith.constant 0 : i32
    return %c0_i32, %c0_i32_0 : i32, i32
  }
  func.func @transform_3(%arg0: i32, %arg1: i32) -> (i32, i32) {
    %c0_i32 = arith.constant 0 : i32
    %c0_i32_0 = arith.constant 0 : i32
    %c0_i32_1 = arith.constant 0 : i32
    return %c0_i32, %c0_i32_0 : i32, i32
  }
  func.func @transform_4(%arg0: i32, %arg1: i32) -> (i32, i32, i32) {
    %c0_i32 = arith.constant 0 : i32
    %c0_i32_0 = arith.constant 0 : i32
    return %arg0, %c0_i32, %arg1 : i32, i32, i32
  }
  func.func @transform_5(%arg0: i32, %arg1: i32) -> (i32, i32, i32) {
    %c0_i32 = arith.constant 0 : i32
    %c0_i32_0 = arith.constant 0 : i32
    return %arg0, %c0_i32, %arg1 : i32, i32, i32
  }
  func.func @transform_6(%arg0: i32, %arg1: i32) -> (i32, i32, i32) {
    %c0_i32 = arith.constant 0 : i32
    %c0_i32_0 = arith.constant 0 : i32
    %c0_i32_1 = arith.constant 0 : i32
    return %arg0, %c0_i32, %c0_i32_0 : i32, i32, i32
  }
  func.func @transform_7(%arg0: i32, %arg1: i32) -> (i32, i32, i32) {
    %c0_i32 = arith.constant 0 : i32
    %c0_i32_0 = arith.constant 0 : i32
    %c0_i32_1 = arith.constant 0 : i32
    return %arg0, %c0_i32, %c0_i32_0 : i32, i32, i32
  }
  func.func @transform_8(%arg0: i32, %arg1: i32) -> (i32, i32, i32) {
    %c0_i32 = arith.constant 0 : i32
    %c0_i32_0 = arith.constant 0 : i32
    return %arg0, %c0_i32, %arg1 : i32, i32, i32
  }
}

module attributes {stable_mosaic.version = 11 : i64} {
  func.func @_tail_kernel(%arg0: i32, %arg1: i32, %arg2: memref<12x180xbf16, #tpu.memory_space<vmem>>, %arg3: memref<12x1xf32, #tpu.memory_space<vmem>>, %arg4: memref<12x1xf32, #tpu.memory_space<vmem>>, %arg5: memref<1x180x256xbf16, #tpu.memory_space<vmem>>, %arg6: memref<1x12x256xf32, #tpu.memory_space<vmem>>, %arg7: memref<1x12x256xf32, #tpu.memory_space<vmem>>) attributes {dimension_semantics = [#tpu.dimension_semantics<parallel>, #tpu.dimension_semantics<parallel>], iteration_bounds = array<i64: 2, 1>, scalar_prefetch = 0 : i64, scratch_operands = 0 : i64, tpu.core_type = #tpu.core_type<tc>, window_params = [{pipeline_mode = #tpu.pipeline_mode<synchronous>, transform_indices = @transform_0, window_bounds = array<i64: 12, 180>}, {pipeline_mode = #tpu.pipeline_mode<synchronous>, transform_indices = @transform_1, window_bounds = array<i64: 12, 1>}, {pipeline_mode = #tpu.pipeline_mode<synchronous>, transform_indices = @transform_2, window_bounds = array<i64: 12, 1>}, {transform_indices = @transform_3, window_bounds = array<i64: 1, 180, 256>}, {transform_indices = @transform_4, window_bounds = array<i64: 1, 12, 256>}, {transform_indices = @transform_5, window_bounds = array<i64: 1, 12, 256>}]} {
    %c0 = arith.constant 0 : index
    %c0_0 = arith.constant 0 : index
    %0 = vector.load %arg2[%c0, %c0_0] : memref<12x180xbf16, #tpu.memory_space<vmem>>, vector<12x180xbf16>
    %c0_1 = arith.constant 0 : index
    %c0_2 = arith.constant 0 : index
    %c0_3 = arith.constant 0 : index
    %1 = vector.load %arg5[%c0_1, %c0_2, %c0_3] : memref<1x180x256xbf16, #tpu.memory_space<vmem>>, vector<1x180x256xbf16>
    %2 = vector.shape_cast %1 : vector<1x180x256xbf16> to vector<180x256xbf16>
    %cst = arith.constant dense<0.000000e+00> : vector<12x256xf32>
    %3 = tpu.matmul %0, %2, %cst {dimension_numbers = #tpu.dot_dimension_numbers<[1], [0], [0], [1], [0, 0, 1, 1], [], []>} : vector<12x180xbf16>, vector<180x256xbf16>, vector<12x256xf32> -> vector<12x256xf32>
    %c0_4 = arith.constant 0 : index
    %c0_5 = arith.constant 0 : index
    %4 = vector.load %arg3[%c0_4, %c0_5] : memref<12x1xf32, #tpu.memory_space<vmem>>, vector<12x1xf32>
    %5 = vector.broadcast %4 : vector<12x1xf32> to vector<12x256xf32>
    %6 = arith.addf %3, %5 : vector<12x256xf32>
    %c0_6 = arith.constant 0 : index
    %c0_7 = arith.constant 0 : index
    %c0_8 = arith.constant 0 : index
    %7 = vector.load %arg6[%c0_6, %c0_7, %c0_8] : memref<1x12x256xf32, #tpu.memory_space<vmem>>, vector<1x12x256xf32>
    %8 = vector.shape_cast %7 : vector<1x12x256xf32> to vector<12x256xf32>
    %9 = arith.addf %6, %8 : vector<12x256xf32>
    %cst_9 = arith.constant 1.275000e+02 : f32
    %10 = vector.broadcast %cst_9 : f32 to vector<12x256xf32>
    %11 = arith.mulf %9, %10 : vector<12x256xf32>
    %c0_10 = arith.constant 0 : index
    %c0_11 = arith.constant 0 : index
    %12 = vector.load %arg4[%c0_10, %c0_11] : memref<12x1xf32, #tpu.memory_space<vmem>>, vector<12x1xf32>
    %13 = vector.broadcast %12 : vector<12x1xf32> to vector<12x256xf32>
    %14 = arith.addf %11, %13 : vector<12x256xf32>
    %c0_12 = arith.constant 0 : index
    %c0_13 = arith.constant 0 : index
    %c0_14 = arith.constant 0 : index
    %15 = vector.load %arg7[%c0_12, %c0_13, %c0_14] : memref<1x12x256xf32, #tpu.memory_space<vmem>>, vector<1x12x256xf32>
    %16 = vector.shape_cast %15 : vector<1x12x256xf32> to vector<12x256xf32>
    %17 = vector.shape_cast %14 : vector<12x256xf32> to vector<1x12x256xf32>
    tpu.vector_store %arg7[%c0_12, %c0_13, %c0_14], %17 {strides = array<i32>} : memref<1x12x256xf32, #tpu.memory_space<vmem>>, vector<1x12x256xf32>,
    return
  }
  func.func @transform_0(%arg0: i32, %arg1: i32) -> (i32, i32) {
    %c0_i32 = arith.constant 0 : i32
    %c0_i32_0 = arith.constant 0 : i32
    %c0_i32_1 = arith.constant 0 : i32
    return %c0_i32, %c0_i32_0 : i32, i32
  }
  func.func @transform_1(%arg0: i32, %arg1: i32) -> (i32, i32) {
    %c0_i32 = arith.constant 0 : i32
    %c0_i32_0 = arith.constant 0 : i32
    %c0_i32_1 = arith.constant 0 : i32
    return %c0_i32, %c0_i32_0 : i32, i32
  }
  func.func @transform_2(%arg0: i32, %arg1: i32) -> (i32, i32) {
    %c0_i32 = arith.constant 0 : i32
    %c0_i32_0 = arith.constant 0 : i32
    %c0_i32_1 = arith.constant 0 : i32
    return %c0_i32, %c0_i32_0 : i32, i32
  }
  func.func @transform_3(%arg0: i32, %arg1: i32) -> (i32, i32, i32) {
    %c0_i32 = arith.constant 0 : i32
    %c0_i32_0 = arith.constant 0 : i32
    return %arg0, %c0_i32, %arg1 : i32, i32, i32
  }
  func.func @transform_4(%arg0: i32, %arg1: i32) -> (i32, i32, i32) {
    %c0_i32 = arith.constant 0 : i32
    %c0_i32_0 = arith.constant 0 : i32
    return %arg0, %c0_i32, %arg1 : i32, i32, i32
  }
  func.func @transform_5(%arg0: i32, %arg1: i32) -> (i32, i32, i32) {
    %c0_i32 = arith.constant 0 : i32
    %c0_i32_0 = arith.constant 0 : i32
    return %arg0, %c0_i32, %arg1 : i32, i32, i32
  }
}

</mosaic_0001>

<llo_original>
// kernel: ifin_forward.58
$region0: #{ifin_forward.58}
  #allocation0 [shape = 'u32[]', space=smem, size = 0x4, offset = 0x4, fixed_abs, tag = 'smem constant byte address 0x4 - core index']
  #allocation1 [shape = 'u32[144,128]{1,0:T(1,128)}', space=vmem, size = 0x12000, scoped, tag = 'internal scratch']
  %s0 = inlined_call_operand.vmem [shape: bf16[12,75], index: 0, kind: input, shape index: {}]
  %s1 = inlined_call_operand.vmem [shape: f32[12,1], index: 1, kind: input, shape index: {}]
  %s2 = inlined_call_operand.vmem [shape: bf16[2,75,256], index: 2, kind: input, shape index: {}]
  %s3 = inlined_call_operand.vmem [shape: f32[2,12,256], index: 3, kind: output, shape index: {}]
  %s4 = sld [smem:[#allocation0]]
  $region45: #{ifin_forward.58} parent=0
    _
  %s6 = ssub.s32 1, %s4
  %s7 = scalar_select 0, %s6, %s4
  loop: start=0, step=1, limit=4
  $region2: #{ifin_forward.58} parent=0 // loop_pre_header
    _
  $region3: #{ifin_forward.58} parent=0 // loop_header
    %s9 = sphi 0, %s13
    %p10 = scmp.ge.s32.totalorder %s9, 4
    %s16 = sphi 0, %s28
    %s17 = sphi 0, %s24
    %s18 = sphi 0, %s16
    %s19 = sphi 0, %s17
    %s20 = sphi 0, %s18
    %s21 = sphi 0, %s19
    %s29 = sphi 0, %s29
    %s31 = sphi 0, %s29
    %s32 = sphi 0, %s31
    %s46 = sphi 0, %s32
    %s50 = sphi 0, %s50
    %s52 = sphi 0, %s50
    %s53 = sphi 0, %s52
    %s67 = sphi 0, %s53
    %s75 = sphi 0, %s77
    %s78 = sphi 0, %s75
    %s79 = sphi 0, %s78
    %s95 = sphi 0, %s79
    %s103 = sphi 0, %s105
    %s106 = sphi 0, %s103
    %s107 = sphi 0, %s106
    %s123 = sphi 0, %s107
  $region4: #{ifin_forward.58} parent=0 // loop_header_branch
    %12 = sbr.rel (%p10) target = $region8
  $region5: #{ifin_forward.58} parent=0 // loop_body
    %s14 = ssub.s32 %s9, 1
    %s15 = ssub.s32 %s9, 2
    %s22 = sadd.s32 1, %s17
    %p23 = scmp.ge.s32.totalorder %s22, 1
    %s24 = scalar_select %p23, 0, %s22
    %s25 = sadd.s32 1, %s16
    %s26 = scalar_select %p23, %s25, %s16
    %p27 = scmp.ge.s32.totalorder %s26, 2
    %s28 = scalar_select %p27, 0, %s26
    %s30 = sadd.s32 %s29, 1
    %p33 = scmp.eq.s32.totalorder %s9, 1
    %p34 = scmp.ne.s32.totalorder %s29, %s31
    %p35 = scmp.eq.s32.totalorder %s9, 0
    %p36 = por %p34, %p35
    %p37 = scmp.ne.s32.totalorder %s29, %s31
    %p38 = scmp.eq.s32.totalorder %s14, 1
    %p39 = por %p37, %p38
    %p40 = scmp.ne.s32.totalorder %s31, %s32
    %p41 = scmp.eq.s32.totalorder %s14, 0
    %p42 = por %p40, %p41
    %p43 = scmp.ne.s32.totalorder %s31, %s32
    %p44 = scmp.eq.s32.totalorder %s15, 1
    %p45 = por %p43, %p44
    %p47 = scmp.ne.s32.totalorder %s32, %s46
    %p48 = scmp.eq.s32.totalorder %s15, 0
    %p49 = por %p47, %p48
    %s51 = sadd.s32 %s50, 1
    %p54 = scmp.eq.s32.totalorder %s9, 1
    %p55 = scmp.ne.s32.totalorder %s50, %s52
    %p56 = scmp.eq.s32.totalorder %s9, 0
    %p57 = por %p55, %p56
    %p58 = scmp.ne.s32.totalorder %s50, %s52
    %p59 = scmp.eq.s32.totalorder %s14, 1
    %p60 = por %p58, %p59
    %p61 = scmp.ne.s32.totalorder %s52, %s53
    %p62 = scmp.eq.s32.totalorder %s14, 0
    %p63 = por %p61, %p62
    %p64 = scmp.ne.s32.totalorder %s52, %s53
    %p65 = scmp.eq.s32.totalorder %s15, 1
    %p66 = por %p64, %p65
    %p68 = scmp.ne.s32.totalorder %s53, %s67
    %p69 = scmp.eq.s32.totalorder %s15, 0
    %p70 = por %p68, %p69
    %s71 = ssub.s32 %s16, %s28
    %s72 = ssub.s32 %s17, %s24
    %s73 = sor.u32 %s71, %s72
    %p74 = scmp.eq.s32.totalorder %s73, 0
    %s76 = sadd.s32 %s75, 1
    %s77 = scalar_select %p74, %s75, %s76
    %p80 = pneg %p74
    %p81 = scmp.eq.s32.totalorder %s9, 1
    %p82 = por %p80, %p81
    %p83 = scmp.ne.s32.totalorder %s75, %s78
    %p84 = scmp.eq.s32.totalorder %s9, 0
    %p85 = por %p83, %p84
    %p86 = scmp.ne.s32.totalorder %s75, %s78
    %p87 = scmp.eq.s32.totalorder %s14, 1
    %p88 = por %p86, %p87
    %p89 = scmp.ne.s32.totalorder %s78, %s79
    %p90 = scmp.eq.s32.totalorder %s14, 0
    %p91 = por %p89, %p90
    %p92 = scmp.ne.s32.totalorder %s78, %s79
    %p93 = scmp.eq.s32.totalorder %s15, 1
    %p94 = por %p92, %p93
    %p96 = scmp.ne.s32.totalorder %s79, %s95
    %p97 = scmp.eq.s32.totalorder %s15, 0
    %p98 = por %p96, %p97
    %s99 = ssub.s32 %s16, %s28
    %s100 = ssub.s32 %s17, %s24
    %s101 = sor.u32 %s99, %s100
    %p102 = scmp.eq.s32.totalorder %s101, 0
    %s104 = sadd.s32 %s103, 1
    %s105 = scalar_select %p102, %s103, %s104
    %p108 = pneg %p102
    %p109 = scmp.eq.s32.totalorder %s9, 1
    %p110 = por %p108, %p109
    %p111 = scmp.ne.s32.totalorder %s103, %s106
    %p112 = scmp.eq.s32.totalorder %s9, 0
    %p113 = por %p111, %p112
    %p114 = scmp.ne.s32.totalorder %s103, %s106
    %p115 = scmp.eq.s32.totalorder %s14, 1
    %p116 = por %p114, %p115
    %p117 = scmp.ne.s32.totalorder %s106, %s107
    %p118 = scmp.eq.s32.totalorder %s14, 0
    %p119 = por %p117, %p118
    %p120 = scmp.ne.s32.totalorder %s106, %s107
    %p121 = scmp.eq.s32.totalorder %s15, 1
    %p122 = por %p120, %p121
    %p124 = scmp.ne.s32.totalorder %s107, %s123
    %p125 = scmp.eq.s32.totalorder %s15, 0
    %p126 = por %p124, %p125
    %p127 = scmp.le.s32.totalorder 1, %s9
    %p128 = scmp.lt.s32.totalorder %s9, 3
    %p129 = pnand %p127, %p128
    %p130 = pneg %p129
    // Predicated region
    $region9: #{ifin_forward.58} parent=5 // pred_check
      _
    $region10: #{ifin_forward.58} parent=5 // pred_check_branch
      %132 = sbr.rel (%p129) target = $region12
    $region11: #{ifin_forward.58} parent=5 // pred_region
      %s133 = ssub.s32 %s9, 1
      // Predicated region
      $region13: #{ifin_forward.58} parent=11 // pred_check
        %p134 = pneg %p42
      $region14: #{ifin_forward.58} parent=11 // pred_check_branch
        %136 = sbr.rel (%p134) target = $region16
      $region15: #{ifin_forward.58} parent=11 // pred_region
        _
      $region16: #{ifin_forward.58} parent=11 // pred_fallthru
        _
      // Predicated region
      $region17: #{ifin_forward.58} parent=11 // pred_check
        %p137 = pneg %p63
      $region18: #{ifin_forward.58} parent=11 // pred_check_branch
        %139 = sbr.rel (%p137) target = $region20
      $region19: #{ifin_forward.58} parent=11 // pred_region
        _
      $region20: #{ifin_forward.58} parent=11 // pred_fallthru
        _
    $region12: #{ifin_forward.58} parent=5 // pred_fallthru
      _
    %p140 = scmp.lt.s32.totalorder %s9, 2
    // Predicated region
    $region21: #{ifin_forward.58} parent=5 // pred_check
      %p141 = pneg %p140
    $region22: #{ifin_forward.58} parent=5 // pred_check_branch
      %143 = sbr.rel (%p141) target = $region24
    $region23: #{ifin_forward.58} parent=5 // pred_region
      // Predicated region
      $region25: #{ifin_forward.58} parent=23 // pred_check
        %p144 = pneg %p85
      $region26: #{ifin_forward.58} parent=23 // pred_check_branch
        %146 = sbr.rel (%p144) target = $region28
      $region27: #{ifin_forward.58} parent=23 // pred_region
        %s147 = smul.u32 2, %s17
        %p148 = scmp.lt.s32.totalorder %s16, 1
        %s149 = scalar_select %p148, %s16, 1
        %p150 = scmp.lt.s32.totalorder %s147, 1
        %s151 = scalar_select %p150, %s147, 1
        %s152 = smul.addr %s149, 20
        %s153 = sadd.s32 %s151, %s152
        %s154 = smul.addr %s153, 4
        %s155 = scalar_lea.vmem %s2, %s154
        %s156 = smul.u32 2, %s17
      $region28: #{ifin_forward.58} parent=23 // pred_fallthru
        _
    $region24: #{ifin_forward.58} parent=5 // pred_fallthru
      _
    %p157 = scmp.le.s32.totalorder 1, %s9
    %p158 = scmp.lt.s32.totalorder %s9, 3
    %p159 = pnand %p157, %p158
    %p160 = pneg %p159
    // Predicated region
    $region29: #{ifin_forward.58} parent=5 // pred_check
      _
    $region30: #{ifin_forward.58} parent=5 // pred_check_branch
      %162 = sbr.rel (%p159) target = $region32
    $region31: #{ifin_forward.58} parent=5 // pred_region
      %s163 = ssub.s32 %s9, 1
      %p164 = pneg %p42
      %p165 = pneg %p39
      %p166 = pneg %p63
      %p167 = pneg %p60
      %s168 = smul.u32 2, %s19
      %p169 = scmp.lt.s32.totalorder %s18, 1
      %s170 = scalar_select %p169, %s18, 1
      %p171 = scmp.lt.s32.totalorder %s168, 1
      %s172 = scalar_select %p171, %s168, 1
      %s173 = smul.addr %s170, 20
      %s174 = sadd.s32 %s172, %s173
      %s175 = smul.addr %s174, 4
      %s176 = scalar_lea.vmem %s2, %s175
      %p177 = pneg %p91
      %p178 = pneg %p88
      %p179 = pneg %p119
      %p180 = pneg %p116
      %s181 = smul.u32 2, %s19
      %p182 = scmp.lt.s32.totalorder %s18, 1
      %s183 = scalar_select %p182, %s18, 1
      %p184 = scmp.lt.s32.totalorder %s181, 1
      %s185 = scalar_select %p184, %s181, 1
      %s186 = smul.addr %s183, 4
      %s187 = sadd.s32 %s185, %s186
      %s188 = smul.addr %s187, 8
      %s189 = scalar_lea.vmem %s3, %s188
      %s190 = smul.u32 2, %s19
      %p191 = scmp.lt.s32.totalorder %s18, 1
      %s192 = scalar_select %p191, %s18, 1
      %p193 = scmp.lt.s32.totalorder %s190, 1
      %s194 = scalar_select %p193, %s190, 1
      %s195 = smul.addr %s192, 20
      %s196 = sadd.s32 %s194, %s195
      %s197 = smul.addr %s196, 4
      %s198 = scalar_lea.vmem %s2, %s197
      %s199 = smul.u32 2, %s19
      %s200 = smul.u32 2, %s19
      %p201 = scmp.lt.s32.totalorder %s18, 1
      %s202 = scalar_select %p201, %s18, 1
      %p203 = scmp.lt.s32.totalorder %s200, 1
      %s204 = scalar_select %p203, %s200, 1
      %s205 = smul.addr %s202, 4
      %s206 = sadd.s32 %s204, %s205
      %s207 = smul.addr %s206, 8
      %s208 = scalar_lea.vmem %s3, %s207
      %s209 = smul.u32 2, %s19
      %v211 = vld [vmem:[%s0] sm:$0xf]
      %v212 = vld [vmem:[%s0 + $0x4] sm:$0x3]
      %v213 = vld [vmem:[%s198] sm:$0xff]
      %v214 = vld [vmem:[%s198 + $0x8] sm:$0xff]
      %v215 = vld [vmem:[%s198 + $0x10] sm:$0xff]
      %v216 = vld [vmem:[%s198 + $0x18] sm:$0xff]
      %v217 = vld [vmem:[%s198 + $0x20] sm:$0xff]
      %v218 = vld [vmem:[%s198 + $0x28] sm:$0xff]
      %v219 = vld [vmem:[%s198 + $0x30] sm:$0xff]
      %v220 = vld [vmem:[%s198 + $0x38] sm:$0xff]
      %v221 = vld [vmem:[%s198 + $0x40] sm:$0xff]
      %v222 = vld [vmem:[%s198 + $0x48] sm:$0x33]
      %v223 = vld [vmem:[%s1] sm:$0xff]
      %v224 = vld [vmem:[%s1 + $0x8] sm:$0xf]
      %226 = vset.pattern.permute.xlu0 0
      %227 = vperm.xlu0 %226, %v223
      %v228 = vpop.permute.xlu0 %227
      %231 = vset.pattern.permute.xlu0 0
      %232 = vperm.xlu0 %231, %v224
      %v233 = vpop.permute.xlu0 %232
      %v237 = vunpack.c.l.b16 %v211
      %v238 = vunpack.c.l.b16 %v212
      %v239 = vpack.c.b16 %v238, %v237
      %v250 = vunpack.c.l.b16 %v213
      %v251 = vunpack.c.h.b16 %v213
      %v252 = vunpack.c.l.b16 %v214
      %v253 = vunpack.c.h.b16 %v214
      %v254 = vunpack.c.l.b16 %v215
      %v255 = vunpack.c.h.b16 %v215
      %v256 = vunpack.c.l.b16 %v216
      %v257 = vunpack.c.h.b16 %v216
      %v258 = vunpack.c.l.b16 %v217
      %v259 = vunpack.c.h.b16 %v217
      %v260 = vunpack.c.l.b16 %v218
      %v261 = vunpack.c.h.b16 %v218
      %v262 = vunpack.c.l.b16 %v219
      %v263 = vunpack.c.h.b16 %v219
      %v264 = vunpack.c.l.b16 %v220
      %v265 = vunpack.c.h.b16 %v220
      %v266 = vunpack.c.l.b16 %v221
      %v267 = vunpack.c.h.b16 %v221
      %v268 = vunpack.c.l.b16 %v222
      %v269 = vunpack.c.h.b16 %v222
      %v270 = vpack.c.b16 %v252, %v250
      %v271 = vpack.c.b16 %v253, %v251
      %v272 = vpack.c.b16 %v256, %v254
      %v273 = vpack.c.b16 %v257, %v255
      %v274 = vpack.c.b16 %v260, %v258
      %v275 = vpack.c.b16 %v261, %v259
      %v276 = vpack.c.b16 %v264, %v262
      %v277 = vpack.c.b16 %v265, %v263
      %v278 = vpack.c.b16 %v268, %v266
      %v279 = vpack.c.b16 %v269, %v267
      %vm288 = vcmask 613376
      %v290 = vsel %vm288, %v239, 0
      %vm292 = vcmask 1044480
      %vm293 = vcmask 1045504
      %v294 = vsel %vm292, 4294967295, 65535
      %v295 = vsel %vm293, %v294, 0
      %v297 = vand.u32 %v278, %v295
      %v300 = vand.u32 %v279, %v295
      %302 = vmatprep.subr.bf16.mxu0 0
      %303 = vmatpush1.bf16.msra.mxu0 0
      %304 = vmatprep.subr.bf16.mxu0 0
      %305 = vmatpush1.bf16.msra.mxu0 0
      %306 = vmatprep.subr.bf16.mxu0 0
      %307 = vmatpush1.bf16.msra.mxu0 0
      %308 = vmatprep.subr.bf16.mxu0 %v300
      %309 = vmatpush1.bf16.msra.mxu0 %v297
      %310 = vmatprep.subr.bf16.mxu0 %v277
      %311 = vmatpush1.bf16.msra.mxu0 %v276
      %312 = vmatprep.subr.bf16.mxu0 %v275
      %313 = vmatpush1.bf16.msra.mxu0 %v274
      %314 = vmatprep.subr.bf16.mxu0 %v273
      %315 = vmatpush1.bf16.msra.mxu0 %v272
      %316 = vmatprep.subr.bf16.mxu0 %v271
      %317 = vmatpush1.bf16.msra.mxu0 %v270
      %318 = vmatprep.subr.bf16.mxu0 0
      %319 = vmatpush2.bf16.msra.mxu0 0
      %320 = vmatprep.subr.bf16.mxu0 0
      %321 = vmatpush2.bf16.msra.mxu0 0
      %322 = vmatprep.subr.bf16.mxu0 0
      %323 = vmatpush2.bf16.msra.mxu0 0
      %324 = vmatprep.subr.bf16.mxu0 0
      %325 = vmatpush2.bf16.msra.mxu0 0
      %326 = vmatprep.subr.bf16.mxu0 0
      %327 = vmatpush2.bf16.msra.mxu0 0
      %328 = vmatprep.subr.bf16.mxu0 0
      %329 = vmatpush2.bf16.msra.mxu0 0
      %330 = vmatprep.subr.bf16.mxu0 0
      %331 = vmatpush2.bf16.msra.mxu0 0
      %332 = vmatprep.subr.bf16.mxu0 0
      %333 = vmatpush2.bf16.msra.mxu0 0
      %334 = vmatprep.mubr.bf16.mxu0 0
      %335 = vmatmul.mubr.bf16.gmra.mxu0 %v290
      %v336 = vpop.f32.mrf.mxu0
      %v337 = vadd.f32 %v228, %v336
      %v338 = vpop.f32.mrf.mxu0
      %v339 = vadd.f32 %v228, %v338
      %v340 = vpop.f32.mrf.mxu0
      %v341 = vadd.f32 %v233, %v340
      %v342 = vpop.f32.mrf.mxu0
      %v343 = vadd.f32 %v233, %v342
      %344 = vdwg.mxu0
      %345 = vst [vmem:[%s208] sm:$0xff] %v337
      %346 = vst [vmem:[%s208 + $0x8] sm:$0xff] %v339
      %347 = vst [vmem:[%s208 + $0x10] sm:$0xf] %v341
      %348 = vst [vmem:[%s208 + $0x18] sm:$0xf] %v343
      %s349 = smul.u32 2, %s19
      %p350 = scmp.lt.s32.totalorder %s18, 1
      %s351 = scalar_select %p350, %s18, 1
      %p352 = scmp.lt.s32.totalorder %s349, 1
      %s353 = scalar_select %p352, %s349, 1
      %s354 = smul.addr %s351, 4
      %s355 = sadd.s32 %s353, %s354
      %s356 = smul.addr %s355, 8
      %s357 = scalar_lea.vmem %s3, %s356
      // Predicated region
      $region33: #{ifin_forward.58} parent=31 // pred_check
        %p358 = pneg %p116
      $region34: #{ifin_forward.58} parent=31 // pred_check_branch
        %360 = sbr.rel (%p358) target = $region36
      $region35: #{ifin_forward.58} parent=31 // pred_region
        %s361 = smul.u32 2, %s19
      $region36: #{ifin_forward.58} parent=31 // pred_fallthru
        _
    $region32: #{ifin_forward.58} parent=5 // pred_fallthru
      _
    %p362 = scmp.le.s32.totalorder 2, %s9
    // Predicated region
    $region37: #{ifin_forward.58} parent=5 // pred_check
      %p363 = pneg %p362
    $region38: #{ifin_forward.58} parent=5 // pred_check_branch
      %365 = sbr.rel (%p363) target = $region40
    $region39: #{ifin_forward.58} parent=5 // pred_region
      %s366 = ssub.s32 %s9, 2
      // Predicated region
      $region41: #{ifin_forward.58} parent=39 // pred_check
        %p367 = pneg %p122
      $region42: #{ifin_forward.58} parent=39 // pred_check_branch
        %369 = sbr.rel (%p367) target = $region44
      $region43: #{ifin_forward.58} parent=39 // pred_region
        %s370 = smul.u32 2, %s21
        %p371 = scmp.lt.s32.totalorder %s20, 1
        %s372 = scalar_select %p371, %s20, 1
        %p373 = scmp.lt.s32.totalorder %s370, 1
        %s374 = scalar_select %p373, %s370, 1
        %s375 = smul.addr %s372, 4
        %s376 = sadd.s32 %s374, %s375
        %s377 = smul.addr %s376, 8
        %s378 = scalar_lea.vmem %s3, %s377
      $region44: #{ifin_forward.58} parent=39 // pred_fallthru
        _
    $region40: #{ifin_forward.58} parent=5 // pred_fallthru
      _
  $region6: #{ifin_forward.58} parent=0 // loop_footer
    %s13 = sadd.s32 1, %s9
  $region7: #{ifin_forward.58} parent=0 // loop_footer_branch
    %8 = sbr.rel target = $region3
  $region8: #{ifin_forward.58} parent=0 // loop_exit
    _

// kernel: ifin_forward.59
$region0: #{ifin_forward.59}
  #allocation0 [shape = 'u32[]', space=smem, size = 0x4, offset = 0x4, fixed_abs, tag = 'smem constant byte address 0x4 - core index']
  #allocation1 [shape = 'u32[144,128]{1,0:T(1,128)}', space=vmem, size = 0x12000, scoped, tag = 'internal scratch']
  %s0 = inlined_call_operand.vmem [shape: bf16[20,27], index: 0, kind: input, shape index: {}]
  %s1 = inlined_call_operand.vmem [shape: f32[20,1], index: 1, kind: input, shape index: {}]
  %s2 = inlined_call_operand.vmem [shape: bf16[2,27,256], index: 2, kind: input, shape index: {}]
  %s3 = inlined_call_operand.vmem [shape: f32[2,20,256], index: 3, kind: output, shape index: {}]
  %s4 = sld [smem:[#allocation0]]
  $region45: #{ifin_forward.59} parent=0
    _
  %s6 = ssub.s32 1, %s4
  %s7 = scalar_select 0, %s6, %s4
  loop: start=0, step=1, limit=4
  $region2: #{ifin_forward.59} parent=0 // loop_pre_header
    _
  $region3: #{ifin_forward.59} parent=0 // loop_header
    %s9 = sphi 0, %s13
    %p10 = scmp.ge.s32.totalorder %s9, 4
    %s16 = sphi 0, %s28
    %s17 = sphi 0, %s24
    %s18 = sphi 0, %s16
    %s19 = sphi 0, %s17
    %s20 = sphi 0, %s18
    %s21 = sphi 0, %s19
    %s29 = sphi 0, %s29
    %s31 = sphi 0, %s29
    %s32 = sphi 0, %s31
    %s46 = sphi 0, %s32
    %s50 = sphi 0, %s50
    %s52 = sphi 0, %s50
    %s53 = sphi 0, %s52
    %s67 = sphi 0, %s53
    %s75 = sphi 0, %s77
    %s78 = sphi 0, %s75
    %s79 = sphi 0, %s78
    %s95 = sphi 0, %s79
    %s103 = sphi 0, %s105
    %s106 = sphi 0, %s103
    %s107 = sphi 0, %s106
    %s123 = sphi 0, %s107
  $region4: #{ifin_forward.59} parent=0 // loop_header_branch
    %12 = sbr.rel (%p10) target = $region8
  $region5: #{ifin_forward.59} parent=0 // loop_body
    %s14 = ssub.s32 %s9, 1
    %s15 = ssub.s32 %s9, 2
    %s22 = sadd.s32 1, %s17
    %p23 = scmp.ge.s32.totalorder %s22, 1
    %s24 = scalar_select %p23, 0, %s22
    %s25 = sadd.s32 1, %s16
    %s26 = scalar_select %p23, %s25, %s16
    %p27 = scmp.ge.s32.totalorder %s26, 2
    %s28 = scalar_select %p27, 0, %s26
    %s30 = sadd.s32 %s29, 1
    %p33 = scmp.eq.s32.totalorder %s9, 1
    %p34 = scmp.ne.s32.totalorder %s29, %s31
    %p35 = scmp.eq.s32.totalorder %s9, 0
    %p36 = por %p34, %p35
    %p37 = scmp.ne.s32.totalorder %s29, %s31
    %p38 = scmp.eq.s32.totalorder %s14, 1
    %p39 = por %p37, %p38
    %p40 = scmp.ne.s32.totalorder %s31, %s32
    %p41 = scmp.eq.s32.totalorder %s14, 0
    %p42 = por %p40, %p41
    %p43 = scmp.ne.s32.totalorder %s31, %s32
    %p44 = scmp.eq.s32.totalorder %s15, 1
    %p45 = por %p43, %p44
    %p47 = scmp.ne.s32.totalorder %s32, %s46
    %p48 = scmp.eq.s32.totalorder %s15, 0
    %p49 = por %p47, %p48
    %s51 = sadd.s32 %s50, 1
    %p54 = scmp.eq.s32.totalorder %s9, 1
    %p55 = scmp.ne.s32.totalorder %s50, %s52
    %p56 = scmp.eq.s32.totalorder %s9, 0
    %p57 = por %p55, %p56
    %p58 = scmp.ne.s32.totalorder %s50, %s52
    %p59 = scmp.eq.s32.totalorder %s14, 1
    %p60 = por %p58, %p59
    %p61 = scmp.ne.s32.totalorder %s52, %s53
    %p62 = scmp.eq.s32.totalorder %s14, 0
    %p63 = por %p61, %p62
    %p64 = scmp.ne.s32.totalorder %s52, %s53
    %p65 = scmp.eq.s32.totalorder %s15, 1
    %p66 = por %p64, %p65
    %p68 = scmp.ne.s32.totalorder %s53, %s67
    %p69 = scmp.eq.s32.totalorder %s15, 0
    %p70 = por %p68, %p69
    %s71 = ssub.s32 %s16, %s28
    %s72 = ssub.s32 %s17, %s24
    %s73 = sor.u32 %s71, %s72
    %p74 = scmp.eq.s32.totalorder %s73, 0
    %s76 = sadd.s32 %s75, 1
    %s77 = scalar_select %p74, %s75, %s76
    %p80 = pneg %p74
    %p81 = scmp.eq.s32.totalorder %s9, 1
    %p82 = por %p80, %p81
    %p83 = scmp.ne.s32.totalorder %s75, %s78
    %p84 = scmp.eq.s32.totalorder %s9, 0
    %p85 = por %p83, %p84
    %p86 = scmp.ne.s32.totalorder %s75, %s78
    %p87 = scmp.eq.s32.totalorder %s14, 1
    %p88 = por %p86, %p87
    %p89 = scmp.ne.s32.totalorder %s78, %s79
    %p90 = scmp.eq.s32.totalorder %s14, 0
    %p91 = por %p89, %p90
    %p92 = scmp.ne.s32.totalorder %s78, %s79
    %p93 = scmp.eq.s32.totalorder %s15, 1
    %p94 = por %p92, %p93
    %p96 = scmp.ne.s32.totalorder %s79, %s95
    %p97 = scmp.eq.s32.totalorder %s15, 0
    %p98 = por %p96, %p97
    %s99 = ssub.s32 %s16, %s28
    %s100 = ssub.s32 %s17, %s24
    %s101 = sor.u32 %s99, %s100
    %p102 = scmp.eq.s32.totalorder %s101, 0
    %s104 = sadd.s32 %s103, 1
    %s105 = scalar_select %p102, %s103, %s104
    %p108 = pneg %p102
    %p109 = scmp.eq.s32.totalorder %s9, 1
    %p110 = por %p108, %p109
    %p111 = scmp.ne.s32.totalorder %s103, %s106
    %p112 = scmp.eq.s32.totalorder %s9, 0
    %p113 = por %p111, %p112
    %p114 = scmp.ne.s32.totalorder %s103, %s106
    %p115 = scmp.eq.s32.totalorder %s14, 1
    %p116 = por %p114, %p115
    %p117 = scmp.ne.s32.totalorder %s106, %s107
    %p118 = scmp.eq.s32.totalorder %s14, 0
    %p119 = por %p117, %p118
    %p120 = scmp.ne.s32.totalorder %s106, %s107
    %p121 = scmp.eq.s32.totalorder %s15, 1
    %p122 = por %p120, %p121
    %p124 = scmp.ne.s32.totalorder %s107, %s123
    %p125 = scmp.eq.s32.totalorder %s15, 0
    %p126 = por %p124, %p125
    %p127 = scmp.le.s32.totalorder 1, %s9
    %p128 = scmp.lt.s32.totalorder %s9, 3
    %p129 = pnand %p127, %p128
    %p130 = pneg %p129
    // Predicated region
    $region9: #{ifin_forward.59} parent=5 // pred_check
      _
    $region10: #{ifin_forward.59} parent=5 // pred_check_branch
      %132 = sbr.rel (%p129) target = $region12
    $region11: #{ifin_forward.59} parent=5 // pred_region
      %s133 = ssub.s32 %s9, 1
      // Predicated region
      $region13: #{ifin_forward.59} parent=11 // pred_check
        %p134 = pneg %p42
      $region14: #{ifin_forward.59} parent=11 // pred_check_branch
        %136 = sbr.rel (%p134) target = $region16
      $region15: #{ifin_forward.59} parent=11 // pred_region
        _
      $region16: #{ifin_forward.59} parent=11 // pred_fallthru
        _
      // Predicated region
      $region17: #{ifin_forward.59} parent=11 // pred_check
        %p137 = pneg %p63
      $region18: #{ifin_forward.59} parent=11 // pred_check_branch
        %139 = sbr.rel (%p137) target = $region20
      $region19: #{ifin_forward.59} parent=11 // pred_region
        _
      $region20: #{ifin_forward.59} parent=11 // pred_fallthru
        _
    $region12: #{ifin_forward.59} parent=5 // pred_fallthru
      _
    %p140 = scmp.lt.s32.totalorder %s9, 2
    // Predicated region
    $region21: #{ifin_forward.59} parent=5 // pred_check
      %p141 = pneg %p140
    $region22: #{ifin_forward.59} parent=5 // pred_check_branch
      %143 = sbr.rel (%p141) target = $region24
    $region23: #{ifin_forward.59} parent=5 // pred_region
      // Predicated region
      $region25: #{ifin_forward.59} parent=23 // pred_check
        %p144 = pneg %p85
      $region26: #{ifin_forward.59} parent=23 // pred_check_branch
        %146 = sbr.rel (%p144) target = $region28
      $region27: #{ifin_forward.59} parent=23 // pred_region
        %s147 = smul.u32 2, %s17
        %p148 = scmp.lt.s32.totalorder %s16, 1
        %s149 = scalar_select %p148, %s16, 1
        %p150 = scmp.lt.s32.totalorder %s147, 1
        %s151 = scalar_select %p150, %s147, 1
        %s152 = smul.addr %s149, 8
        %s153 = sadd.s32 %s151, %s152
        %s154 = smul.addr %s153, 4
        %s155 = scalar_lea.vmem %s2, %s154
        %s156 = smul.u32 2, %s17
      $region28: #{ifin_forward.59} parent=23 // pred_fallthru
        _
    $region24: #{ifin_forward.59} parent=5 // pred_fallthru
      _
    %p157 = scmp.le.s32.totalorder 1, %s9
    %p158 = scmp.lt.s32.totalorder %s9, 3
    %p159 = pnand %p157, %p158
    %p160 = pneg %p159
    // Predicated region
    $region29: #{ifin_forward.59} parent=5 // pred_check
      _
    $region30: #{ifin_forward.59} parent=5 // pred_check_branch
      %162 = sbr.rel (%p159) target = $region32
    $region31: #{ifin_forward.59} parent=5 // pred_region
      %s163 = ssub.s32 %s9, 1
      %p164 = pneg %p42
      %p165 = pneg %p39
      %p166 = pneg %p63
      %p167 = pneg %p60
      %s168 = smul.u32 2, %s19
      %p169 = scmp.lt.s32.totalorder %s18, 1
      %s170 = scalar_select %p169, %s18, 1
      %p171 = scmp.lt.s32.totalorder %s168, 1
      %s172 = scalar_select %p171, %s168, 1
      %s173 = smul.addr %s170, 8
      %s174 = sadd.s32 %s172, %s173
      %s175 = smul.addr %s174, 4
      %s176 = scalar_lea.vmem %s2, %s175
      %p177 = pneg %p91
      %p178 = pneg %p88
      %p179 = pneg %p119
      %p180 = pneg %p116
      %s181 = smul.u32 2, %s19
      %p182 = scmp.lt.s32.totalorder %s18, 1
      %s183 = scalar_select %p182, %s18, 1
      %p184 = scmp.lt.s32.totalorder %s181, 1
      %s185 = scalar_select %p184, %s181, 1
      %s186 = smul.addr %s183, 6
      %s187 = sadd.s32 %s185, %s186
      %s188 = smul.addr %s187, 8
      %s189 = scalar_lea.vmem %s3, %s188
      %s190 = smul.u32 2, %s19
      %p191 = scmp.lt.s32.totalorder %s18, 1
      %s192 = scalar_select %p191, %s18, 1
      %p193 = scmp.lt.s32.totalorder %s190, 1
      %s194 = scalar_select %p193, %s190, 1
      %s195 = smul.addr %s192, 8
      %s196 = sadd.s32 %s194, %s195
      %s197 = smul.addr %s196, 4
      %s198 = scalar_lea.vmem %s2, %s197
      %s199 = smul.u32 2, %s19
      %s200 = smul.u32 2, %s19
      %p201 = scmp.lt.s32.totalorder %s18, 1
      %s202 = scalar_select %p201, %s18, 1
      %p203 = scmp.lt.s32.totalorder %s200, 1
      %s204 = scalar_select %p203, %s200, 1
      %s205 = smul.addr %s202, 6
      %s206 = sadd.s32 %s204, %s205
      %s207 = smul.addr %s206, 8
      %s208 = scalar_lea.vmem %s3, %s207
      %s209 = smul.u32 2, %s19
      %v211 = vld [vmem:[%s0] sm:$0xf]
      %v212 = vld [vmem:[%s0 + $0x4] sm:$0xf]
      %v213 = vld [vmem:[%s0 + $0x8] sm:$0x3]
      %v214 = vld [vmem:[%s198] sm:$0xff]
      %v215 = vld [vmem:[%s198 + $0x8] sm:$0xff]
      %v216 = vld [vmem:[%s198 + $0x10] sm:$0xff]
      %v217 = vld [vmem:[%s198 + $0x18] sm:$0x33]
      %v218 = vld [vmem:[%s1] sm:$0xff]
      %v219 = vld [vmem:[%s1 + $0x8] sm:$0xff]
      %v220 = vld [vmem:[%s1 + $0x10] sm:$0xf]
      %222 = vset.pattern.permute.xlu0 0
      %223 = vperm.xlu0 %222, %v218
      %v224 = vpop.permute.xlu0 %223
      %227 = vset.pattern.permute.xlu0 0
      %228 = vperm.xlu0 %227, %v219
      %v229 = vpop.permute.xlu0 %228
      %232 = vset.pattern.permute.xlu0 0
      %233 = vperm.xlu0 %232, %v220
      %v234 = vpop.permute.xlu0 %233
      %v239 = vunpack.c.l.b16 %v211
      %v240 = vunpack.c.l.b16 %v212
      %v241 = vunpack.c.l.b16 %v213
      %v242 = vpack.c.b16 %v240, %v239
      %v243 = vpack.c.b16 %v241, %v241
      %v248 = vunpack.c.l.b16 %v214
      %v249 = vunpack.c.h.b16 %v214
      %v250 = vunpack.c.l.b16 %v215
      %v251 = vunpack.c.h.b16 %v215
      %v252 = vunpack.c.l.b16 %v216
      %v253 = vunpack.c.h.b16 %v216
      %v254 = vunpack.c.l.b16 %v217
      %v255 = vunpack.c.h.b16 %v217
      %v256 = vpack.c.b16 %v250, %v248
      %v257 = vpack.c.b16 %v251, %v249
      %v258 = vpack.c.b16 %v254, %v252
      %v259 = vpack.c.b16 %v255, %v253
      %vm262 = vcmask 220160
      %v264 = vsel %vm262, %v242, 0
      %v267 = vsel %vm262, %v243, 0
      %vm269 = vcmask 1044480
      %vm270 = vcmask 1045504
      %v271 = vsel %vm269, 4294967295, 65535
      %v272 = vsel %vm270, %v271, 0
      %v274 = vand.u32 %v258, %v272
      %v277 = vand.u32 %v259, %v272
      %279 = vmatprep.subr.bf16.mxu0 0
      %280 = vmatpush1.bf16.msra.mxu0 0
      %281 = vmatprep.subr.bf16.mxu0 0
      %282 = vmatpush1.bf16.msra.mxu0 0
      %283 = vmatprep.subr.bf16.mxu0 0
      %284 = vmatpush1.bf16.msra.mxu0 0
      %285 = vmatprep.subr.bf16.mxu0 0
      %286 = vmatpush1.bf16.msra.mxu0 0
      %287 = vmatprep.subr.bf16.mxu0 0
      %288 = vmatpush1.bf16.msra.mxu0 0
      %289 = vmatprep.subr.bf16.mxu0 0
      %290 = vmatpush1.bf16.msra.mxu0 0
      %291 = vmatprep.subr.bf16.mxu0 %v277
      %292 = vmatpush1.bf16.msra.mxu0 %v274
      %293 = vmatprep.subr.bf16.mxu0 %v257
      %294 = vmatpush1.bf16.msra.mxu0 %v256
      %295 = vmatprep.subr.bf16.mxu0 0
      %296 = vmatpush2.bf16.msra.mxu0 0
      %297 = vmatprep.subr.bf16.mxu0 0
      %298 = vmatpush2.bf16.msra.mxu0 0
      %299 = vmatprep.subr.bf16.mxu0 0
      %300 = vmatpush2.bf16.msra.mxu0 0
      %301 = vmatprep.subr.bf16.mxu0 0
      %302 = vmatpush2.bf16.msra.mxu0 0
      %303 = vmatprep.subr.bf16.mxu0 0
      %304 = vmatpush2.bf16.msra.mxu0 0
      %305 = vmatprep.subr.bf16.mxu0 0
      %306 = vmatpush2.bf16.msra.mxu0 0
      %307 = vmatprep.subr.bf16.mxu0 0
      %308 = vmatpush2.bf16.msra.mxu0 0
      %309 = vmatprep.subr.bf16.mxu0 0
      %310 = vmatpush2.bf16.msra.mxu0 0
      %311 = vmatprep.mubr.bf16.mxu0 0
      %312 = vmatmul.mubr.bf16.gmra.mxu0 %v264
      %v313 = vpop.f32.mrf.mxu0
      %v314 = vadd.f32 %v224, %v313
      %v315 = vpop.f32.mrf.mxu0
      %v316 = vadd.f32 %v224, %v315
      %v317 = vpop.f32.mrf.mxu0
      %v318 = vadd.f32 %v229, %v317
      %v319 = vpop.f32.mrf.mxu0
      %v320 = vadd.f32 %v229, %v319
      %321 = vmatprep.mubr.bf16.mxu0 0
      %322 = vmatmul.mubr.bf16.gmra.mxu0 %v267
      %v323 = vpop.f32.mrf.mxu0
      %v324 = vadd.f32 %v234, %v323
      %v325 = vpop.f32.mrf.mxu0
      %v326 = vadd.f32 %v234, %v325
      %v327 = vpop.f32.mrf.mxu0
      %v328 = vpop.f32.mrf.mxu0
      %329 = vdwg.mxu0
      %330 = vst [vmem:[%s208] sm:$0xff] %v314
      %331 = vst [vmem:[%s208 + $0x8] sm:$0xff] %v316
      %332 = vst [vmem:[%s208 + $0x10] sm:$0xff] %v318
      %333 = vst [vmem:[%s208 + $0x18] sm:$0xff] %v320
      %334 = vst [vmem:[%s208 + $0x20] sm:$0xf] %v324
      %335 = vst [vmem:[%s208 + $0x28] sm:$0xf] %v326
      %s336 = smul.u32 2, %s19
      %p337 = scmp.lt.s32.totalorder %s18, 1
      %s338 = scalar_select %p337, %s18, 1
      %p339 = scmp.lt.s32.totalorder %s336, 1
      %s340 = scalar_select %p339, %s336, 1
      %s341 = smul.addr %s338, 6
      %s342 = sadd.s32 %s340, %s341
      %s343 = smul.addr %s342, 8
      %s344 = scalar_lea.vmem %s3, %s343
      // Predicated region
      $region33: #{ifin_forward.59} parent=31 // pred_check
        %p345 = pneg %p116
      $region34: #{ifin_forward.59} parent=31 // pred_check_branch
        %347 = sbr.rel (%p345) target = $region36
      $region35: #{ifin_forward.59} parent=31 // pred_region
        %s348 = smul.u32 2, %s19
      $region36: #{ifin_forward.59} parent=31 // pred_fallthru
        _
    $region32: #{ifin_forward.59} parent=5 // pred_fallthru
      _
    %p349 = scmp.le.s32.totalorder 2, %s9
    // Predicated region
    $region37: #{ifin_forward.59} parent=5 // pred_check
      %p350 = pneg %p349
    $region38: #{ifin_forward.59} parent=5 // pred_check_branch
      %352 = sbr.rel (%p350) target = $region40
    $region39: #{ifin_forward.59} parent=5 // pred_region
      %s353 = ssub.s32 %s9, 2
      // Predicated region
      $region41: #{ifin_forward.59} parent=39 // pred_check
        %p354 = pneg %p122
      $region42: #{ifin_forward.59} parent=39 // pred_check_branch
        %356 = sbr.rel (%p354) target = $region44
      $region43: #{ifin_forward.59} parent=39 // pred_region
        %s357 = smul.u32 2, %s21
        %p358 = scmp.lt.s32.totalorder %s20, 1
        %s359 = scalar_select %p358, %s20, 1
        %p360 = scmp.lt.s32.totalorder %s357, 1
        %s361 = scalar_select %p360, %s357, 1
        %s362 = smul.addr %s359, 6
        %s363 = sadd.s32 %s361, %s362
        %s364 = smul.addr %s363, 8
        %s365 = scalar_lea.vmem %s3, %s364
      $region44: #{ifin_forward.59} parent=39 // pred_fallthru
        _
    $region40: #{ifin_forward.59} parent=5 // pred_fallthru
      _
  $region6: #{ifin_forward.59} parent=0 // loop_footer
    %s13 = sadd.s32 1, %s9
  $region7: #{ifin_forward.59} parent=0 // loop_footer_branch
    %8 = sbr.rel target = $region3
  $region8: #{ifin_forward.59} parent=0 // loop_exit
    _

// kernel: ifin_forward.60
$region0: #{ifin_forward.60}
  #allocation0 [shape = 'u32[]', space=smem, size = 0x4, offset = 0x4, fixed_abs, tag = 'smem constant byte address 0x4 - core index']
  #allocation1 [shape = 'u32[144,128]{1,0:T(1,128)}', space=vmem, size = 0x12000, scoped, tag = 'internal scratch']
  %s0 = inlined_call_operand.vmem [shape: bf16[20,120], index: 0, kind: input, shape index: {}]
  %s1 = inlined_call_operand.vmem [shape: f32[20,1], index: 1, kind: input, shape index: {}]
  %s2 = inlined_call_operand.vmem [shape: bf16[2,120,256], index: 2, kind: input, shape index: {}]
  %s3 = inlined_call_operand.vmem [shape: f32[2,20,256], index: 3, kind: output, shape index: {}]
  %s4 = sld [smem:[#allocation0]]
  $region45: #{ifin_forward.60} parent=0
    _
  %s6 = ssub.s32 1, %s4
  %s7 = scalar_select 0, %s6, %s4
  loop: start=0, step=1, limit=4
  $region2: #{ifin_forward.60} parent=0 // loop_pre_header
    _
  $region3: #{ifin_forward.60} parent=0 // loop_header
    %s9 = sphi 0, %s13
    %p10 = scmp.ge.s32.totalorder %s9, 4
    %s16 = sphi 0, %s28
    %s17 = sphi 0, %s24
    %s18 = sphi 0, %s16
    %s19 = sphi 0, %s17
    %s20 = sphi 0, %s18
    %s21 = sphi 0, %s19
    %s29 = sphi 0, %s29
    %s31 = sphi 0, %s29
    %s32 = sphi 0, %s31
    %s46 = sphi 0, %s32
    %s50 = sphi 0, %s50
    %s52 = sphi 0, %s50
    %s53 = sphi 0, %s52
    %s67 = sphi 0, %s53
    %s75 = sphi 0, %s77
    %s78 = sphi 0, %s75
    %s79 = sphi 0, %s78
    %s95 = sphi 0, %s79
    %s103 = sphi 0, %s105
    %s106 = sphi 0, %s103
    %s107 = sphi 0, %s106
    %s123 = sphi 0, %s107
  $region4: #{ifin_forward.60} parent=0 // loop_header_branch
    %12 = sbr.rel (%p10) target = $region8
  $region5: #{ifin_forward.60} parent=0 // loop_body
    %s14 = ssub.s32 %s9, 1
    %s15 = ssub.s32 %s9, 2
    %s22 = sadd.s32 1, %s17
    %p23 = scmp.ge.s32.totalorder %s22, 1
    %s24 = scalar_select %p23, 0, %s22
    %s25 = sadd.s32 1, %s16
    %s26 = scalar_select %p23, %s25, %s16
    %p27 = scmp.ge.s32.totalorder %s26, 2
    %s28 = scalar_select %p27, 0, %s26
    %s30 = sadd.s32 %s29, 1
    %p33 = scmp.eq.s32.totalorder %s9, 1
    %p34 = scmp.ne.s32.totalorder %s29, %s31
    %p35 = scmp.eq.s32.totalorder %s9, 0
    %p36 = por %p34, %p35
    %p37 = scmp.ne.s32.totalorder %s29, %s31
    %p38 = scmp.eq.s32.totalorder %s14, 1
    %p39 = por %p37, %p38
    %p40 = scmp.ne.s32.totalorder %s31, %s32
    %p41 = scmp.eq.s32.totalorder %s14, 0
    %p42 = por %p40, %p41
    %p43 = scmp.ne.s32.totalorder %s31, %s32
    %p44 = scmp.eq.s32.totalorder %s15, 1
    %p45 = por %p43, %p44
    %p47 = scmp.ne.s32.totalorder %s32, %s46
    %p48 = scmp.eq.s32.totalorder %s15, 0
    %p49 = por %p47, %p48
    %s51 = sadd.s32 %s50, 1
    %p54 = scmp.eq.s32.totalorder %s9, 1
    %p55 = scmp.ne.s32.totalorder %s50, %s52
    %p56 = scmp.eq.s32.totalorder %s9, 0
    %p57 = por %p55, %p56
    %p58 = scmp.ne.s32.totalorder %s50, %s52
    %p59 = scmp.eq.s32.totalorder %s14, 1
    %p60 = por %p58, %p59
    %p61 = scmp.ne.s32.totalorder %s52, %s53
    %p62 = scmp.eq.s32.totalorder %s14, 0
    %p63 = por %p61, %p62
    %p64 = scmp.ne.s32.totalorder %s52, %s53
    %p65 = scmp.eq.s32.totalorder %s15, 1
    %p66 = por %p64, %p65
    %p68 = scmp.ne.s32.totalorder %s53, %s67
    %p69 = scmp.eq.s32.totalorder %s15, 0
    %p70 = por %p68, %p69
    %s71 = ssub.s32 %s16, %s28
    %s72 = ssub.s32 %s17, %s24
    %s73 = sor.u32 %s71, %s72
    %p74 = scmp.eq.s32.totalorder %s73, 0
    %s76 = sadd.s32 %s75, 1
    %s77 = scalar_select %p74, %s75, %s76
    %p80 = pneg %p74
    %p81 = scmp.eq.s32.totalorder %s9, 1
    %p82 = por %p80, %p81
    %p83 = scmp.ne.s32.totalorder %s75, %s78
    %p84 = scmp.eq.s32.totalorder %s9, 0
    %p85 = por %p83, %p84
    %p86 = scmp.ne.s32.totalorder %s75, %s78
    %p87 = scmp.eq.s32.totalorder %s14, 1
    %p88 = por %p86, %p87
    %p89 = scmp.ne.s32.totalorder %s78, %s79
    %p90 = scmp.eq.s32.totalorder %s14, 0
    %p91 = por %p89, %p90
    %p92 = scmp.ne.s32.totalorder %s78, %s79
    %p93 = scmp.eq.s32.totalorder %s15, 1
    %p94 = por %p92, %p93
    %p96 = scmp.ne.s32.totalorder %s79, %s95
    %p97 = scmp.eq.s32.totalorder %s15, 0
    %p98 = por %p96, %p97
    %s99 = ssub.s32 %s16, %s28
    %s100 = ssub.s32 %s17, %s24
    %s101 = sor.u32 %s99, %s100
    %p102 = scmp.eq.s32.totalorder %s101, 0
    %s104 = sadd.s32 %s103, 1
    %s105 = scalar_select %p102, %s103, %s104
    %p108 = pneg %p102
    %p109 = scmp.eq.s32.totalorder %s9, 1
    %p110 = por %p108, %p109
    %p111 = scmp.ne.s32.totalorder %s103, %s106
    %p112 = scmp.eq.s32.totalorder %s9, 0
    %p113 = por %p111, %p112
    %p114 = scmp.ne.s32.totalorder %s103, %s106
    %p115 = scmp.eq.s32.totalorder %s14, 1
    %p116 = por %p114, %p115
    %p117 = scmp.ne.s32.totalorder %s106, %s107
    %p118 = scmp.eq.s32.totalorder %s14, 0
    %p119 = por %p117, %p118
    %p120 = scmp.ne.s32.totalorder %s106, %s107
    %p121 = scmp.eq.s32.totalorder %s15, 1
    %p122 = por %p120, %p121
    %p124 = scmp.ne.s32.totalorder %s107, %s123
    %p125 = scmp.eq.s32.totalorder %s15, 0
    %p126 = por %p124, %p125
    %p127 = scmp.le.s32.totalorder 1, %s9
    %p128 = scmp.lt.s32.totalorder %s9, 3
    %p129 = pnand %p127, %p128
    %p130 = pneg %p129
    // Predicated region
    $region9: #{ifin_forward.60} parent=5 // pred_check
      _
    $region10: #{ifin_forward.60} parent=5 // pred_check_branch
      %132 = sbr.rel (%p129) target = $region12
    $region11: #{ifin_forward.60} parent=5 // pred_region
      %s133 = ssub.s32 %s9, 1
      // Predicated region
      $region13: #{ifin_forward.60} parent=11 // pred_check
        %p134 = pneg %p42
      $region14: #{ifin_forward.60} parent=11 // pred_check_branch
        %136 = sbr.rel (%p134) target = $region16
      $region15: #{ifin_forward.60} parent=11 // pred_region
        _
      $region16: #{ifin_forward.60} parent=11 // pred_fallthru
        _
      // Predicated region
      $region17: #{ifin_forward.60} parent=11 // pred_check
        %p137 = pneg %p63
      $region18: #{ifin_forward.60} parent=11 // pred_check_branch
        %139 = sbr.rel (%p137) target = $region20
      $region19: #{ifin_forward.60} parent=11 // pred_region
        _
      $region20: #{ifin_forward.60} parent=11 // pred_fallthru
        _
    $region12: #{ifin_forward.60} parent=5 // pred_fallthru
      _
    %p140 = scmp.lt.s32.totalorder %s9, 2
    // Predicated region
    $region21: #{ifin_forward.60} parent=5 // pred_check
      %p141 = pneg %p140
    $region22: #{ifin_forward.60} parent=5 // pred_check_branch
      %143 = sbr.rel (%p141) target = $region24
    $region23: #{ifin_forward.60} parent=5 // pred_region
      // Predicated region
      $region25: #{ifin_forward.60} parent=23 // pred_check
        %p144 = pneg %p85
      $region26: #{ifin_forward.60} parent=23 // pred_check_branch
        %146 = sbr.rel (%p144) target = $region28
      $region27: #{ifin_forward.60} parent=23 // pred_region
        %s147 = smul.u32 2, %s17
        %p148 = scmp.lt.s32.totalorder %s16, 1
        %s149 = scalar_select %p148, %s16, 1
        %p150 = scmp.lt.s32.totalorder %s147, 1
        %s151 = scalar_select %p150, %s147, 1
        %s152 = smul.addr %s149, 30
        %s153 = sadd.s32 %s151, %s152
        %s154 = smul.addr %s153, 4
        %s155 = scalar_lea.vmem %s2, %s154
        %s156 = smul.u32 2, %s17
      $region28: #{ifin_forward.60} parent=23 // pred_fallthru
        _
    $region24: #{ifin_forward.60} parent=5 // pred_fallthru
      _
    %p157 = scmp.le.s32.totalorder 1, %s9
    %p158 = scmp.lt.s32.totalorder %s9, 3
    %p159 = pnand %p157, %p158
    %p160 = pneg %p159
    // Predicated region
    $region29: #{ifin_forward.60} parent=5 // pred_check
      _
    $region30: #{ifin_forward.60} parent=5 // pred_check_branch
      %162 = sbr.rel (%p159) target = $region32
    $region31: #{ifin_forward.60} parent=5 // pred_region
      %s163 = ssub.s32 %s9, 1
      %p164 = pneg %p42
      %p165 = pneg %p39
      %p166 = pneg %p63
      %p167 = pneg %p60
      %s168 = smul.u32 2, %s19
      %p169 = scmp.lt.s32.totalorder %s18, 1
      %s170 = scalar_select %p169, %s18, 1
      %p171 = scmp.lt.s32.totalorder %s168, 1
      %s172 = scalar_select %p171, %s168, 1
      %s173 = smul.addr %s170, 30
      %s174 = sadd.s32 %s172, %s173
      %s175 = smul.addr %s174, 4
      %s176 = scalar_lea.vmem %s2, %s175
      %p177 = pneg %p91
      %p178 = pneg %p88
      %p179 = pneg %p119
      %p180 = pneg %p116
      %s181 = smul.u32 2, %s19
      %p182 = scmp.lt.s32.totalorder %s18, 1
      %s183 = scalar_select %p182, %s18, 1
      %p184 = scmp.lt.s32.totalorder %s181, 1
      %s185 = scalar_select %p184, %s181, 1
      %s186 = smul.addr %s183, 6
      %s187 = sadd.s32 %s185, %s186
      %s188 = smul.addr %s187, 8
      %s189 = scalar_lea.vmem %s3, %s188
      %s190 = smul.u32 2, %s19
      %p191 = scmp.lt.s32.totalorder %s18, 1
      %s192 = scalar_select %p191, %s18, 1
      %p193 = scmp.lt.s32.totalorder %s190, 1
      %s194 = scalar_select %p193, %s190, 1
      %s195 = smul.addr %s192, 30
      %s196 = sadd.s32 %s194, %s195
      %s197 = smul.addr %s196, 4
      %s198 = scalar_lea.vmem %s2, %s197
      %s199 = smul.u32 2, %s19
      %s200 = smul.u32 2, %s19
      %p201 = scmp.lt.s32.totalorder %s18, 1
      %s202 = scalar_select %p201, %s18, 1
      %p203 = scmp.lt.s32.totalorder %s200, 1
      %s204 = scalar_select %p203, %s200, 1
      %s205 = smul.addr %s202, 6
      %s206 = sadd.s32 %s204, %s205
      %s207 = smul.addr %s206, 8
      %s208 = scalar_lea.vmem %s3, %s207
      %s209 = smul.u32 2, %s19
      %v211 = vld [vmem:[%s0] sm:$0xf]
      %v212 = vld [vmem:[%s0 + $0x4] sm:$0xf]
      %v213 = vld [vmem:[%s0 + $0x8] sm:$0x3]
      %v214 = vld [vmem:[%s198] sm:$0xff]
      %v215 = vld [vmem:[%s198 + $0x8] sm:$0xff]
      %v216 = vld [vmem:[%s198 + $0x10] sm:$0xff]
      %v217 = vld [vmem:[%s198 + $0x18] sm:$0xff]
      %v218 = vld [vmem:[%s198 + $0x20] sm:$0xff]
      %v219 = vld [vmem:[%s198 + $0x28] sm:$0xff]
      %v220 = vld [vmem:[%s198 + $0x30] sm:$0xff]
      %v221 = vld [vmem:[%s198 + $0x38] sm:$0xff]
      %v222 = vld [vmem:[%s198 + $0x40] sm:$0xff]
      %v223 = vld [vmem:[%s198 + $0x48] sm:$0xff]
      %v224 = vld [vmem:[%s198 + $0x50] sm:$0xff]
      %v225 = vld [vmem:[%s198 + $0x58] sm:$0xff]
      %v226 = vld [vmem:[%s198 + $0x60] sm:$0xff]
      %v227 = vld [vmem:[%s198 + $0x68] sm:$0xff]
      %v228 = vld [vmem:[%s198 + $0x70] sm:$0xff]
      %v229 = vld [vmem:[%s1] sm:$0xff]
      %v230 = vld [vmem:[%s1 + $0x8] sm:$0xff]
      %v231 = vld [vmem:[%s1 + $0x10] sm:$0xf]
      %233 = vset.pattern.permute.xlu0 0
      %234 = vperm.xlu0 %233, %v229
      %v235 = vpop.permute.xlu0 %234
      %238 = vset.pattern.permute.xlu0 0
      %239 = vperm.xlu0 %238, %v230
      %v240 = vpop.permute.xlu0 %239
      %243 = vset.pattern.permute.xlu0 0
      %244 = vperm.xlu0 %243, %v231
      %v245 = vpop.permute.xlu0 %244
      %v250 = vunpack.c.l.b16 %v211
      %v251 = vunpack.c.l.b16 %v212
      %v252 = vunpack.c.l.b16 %v213
      %v253 = vpack.c.b16 %v251, %v250
      %v254 = vpack.c.b16 %v252, %v252
      %v270 = vunpack.c.l.b16 %v214
      %v271 = vunpack.c.h.b16 %v214
      %v272 = vunpack.c.l.b16 %v215
      %v273 = vunpack.c.h.b16 %v215
      %v274 = vunpack.c.l.b16 %v216
      %v275 = vunpack.c.h.b16 %v216
      %v276 = vunpack.c.l.b16 %v217
      %v277 = vunpack.c.h.b16 %v217
      %v278 = vunpack.c.l.b16 %v218
      %v279 = vunpack.c.h.b16 %v218
      %v280 = vunpack.c.l.b16 %v219
      %v281 = vunpack.c.h.b16 %v219
      %v282 = vunpack.c.l.b16 %v220
      %v283 = vunpack.c.h.b16 %v220
      %v284 = vunpack.c.l.b16 %v221
      %v285 = vunpack.c.h.b16 %v221
      %v286 = vunpack.c.l.b16 %v222
      %v287 = vunpack.c.h.b16 %v222
      %v288 = vunpack.c.l.b16 %v223
      %v289 = vunpack.c.h.b16 %v223
      %v290 = vunpack.c.l.b16 %v224
      %v291 = vunpack.c.h.b16 %v224
      %v292 = vunpack.c.l.b16 %v225
      %v293 = vunpack.c.h.b16 %v225
      %v294 = vunpack.c.l.b16 %v226
      %v295 = vunpack.c.h.b16 %v226
      %v296 = vunpack.c.l.b16 %v227
      %v297 = vunpack.c.h.b16 %v227
      %v298 = vunpack.c.l.b16 %v228
      %v299 = vunpack.c.h.b16 %v228
      %v300 = vpack.c.b16 %v272, %v270
      %v301 = vpack.c.b16 %v273, %v271
      %v302 = vpack.c.b16 %v276, %v274
      %v303 = vpack.c.b16 %v277, %v275
      %v304 = vpack.c.b16 %v280, %v278
      %v305 = vpack.c.b16 %v281, %v279
      %v306 = vpack.c.b16 %v284, %v282
      %v307 = vpack.c.b16 %v285, %v283
      %v308 = vpack.c.b16 %v288, %v286
      %v309 = vpack.c.b16 %v289, %v287
      %v310 = vpack.c.b16 %v292, %v290
      %v311 = vpack.c.b16 %v293, %v291
      %v312 = vpack.c.b16 %v296, %v294
      %v313 = vpack.c.b16 %v297, %v295
      %v314 = vpack.c.b16 %v298, %v298
      %v315 = vpack.c.b16 %v299, %v299
      %vm330 = vcmask 982016
      %v332 = vsel %vm330, %v253, 0
      %v335 = vsel %vm330, %v254, 0
      %vm337 = vcmask 1043456
      %v339 = vsel %vm337, %v314, 0
      %v342 = vsel %vm337, %v315, 0
      %344 = vmatprep.subr.bf16.mxu0 %v342
      %345 = vmatpush1.bf16.msra.mxu0 %v339
      %346 = vmatprep.subr.bf16.mxu0 %v313
      %347 = vmatpush1.bf16.msra.mxu0 %v312
      %348 = vmatprep.subr.bf16.mxu0 %v311
      %349 = vmatpush1.bf16.msra.mxu0 %v310
      %350 = vmatprep.subr.bf16.mxu0 %v309
      %351 = vmatpush1.bf16.msra.mxu0 %v308
      %352 = vmatprep.subr.bf16.mxu0 %v307
      %353 = vmatpush1.bf16.msra.mxu0 %v306
      %354 = vmatprep.subr.bf16.mxu0 %v305
      %355 = vmatpush1.bf16.msra.mxu0 %v304
      %356 = vmatprep.subr.bf16.mxu0 %v303
      %357 = vmatpush1.bf16.msra.mxu0 %v302
      %358 = vmatprep.subr.bf16.mxu0 %v301
      %359 = vmatpush1.bf16.msra.mxu0 %v300
      %360 = vmatprep.subr.bf16.mxu0 0
      %361 = vmatpush2.bf16.msra.mxu0 0
      %362 = vmatprep.subr.bf16.mxu0 0
      %363 = vmatpush2.bf16.msra.mxu0 0
      %364 = vmatprep.subr.bf16.mxu0 0
      %365 = vmatpush2.bf16.msra.mxu0 0
      %366 = vmatprep.subr.bf16.mxu0 0
      %367 = vmatpush2.bf16.msra.mxu0 0
      %368 = vmatprep.subr.bf16.mxu0 0
      %369 = vmatpush2.bf16.msra.mxu0 0
      %370 = vmatprep.subr.bf16.mxu0 0
      %371 = vmatpush2.bf16.msra.mxu0 0
      %372 = vmatprep.subr.bf16.mxu0 0
      %373 = vmatpush2.bf16.msra.mxu0 0
      %374 = vmatprep.subr.bf16.mxu0 0
      %375 = vmatpush2.bf16.msra.mxu0 0
      %376 = vmatprep.mubr.bf16.mxu0 0
      %377 = vmatmul.mubr.bf16.gmra.mxu0 %v332
      %v378 = vpop.f32.mrf.mxu0
      %v379 = vadd.f32 %v235, %v378
      %v380 = vpop.f32.mrf.mxu0
      %v381 = vadd.f32 %v235, %v380
      %v382 = vpop.f32.mrf.mxu0
      %v383 = vadd.f32 %v240, %v382
      %v384 = vpop.f32.mrf.mxu0
      %v385 = vadd.f32 %v240, %v384
      %386 = vmatprep.mubr.bf16.mxu0 0
      %387 = vmatmul.mubr.bf16.gmra.mxu0 %v335
      %v388 = vpop.f32.mrf.mxu0
      %v389 = vadd.f32 %v245, %v388
      %v390 = vpop.f32.mrf.mxu0
      %v391 = vadd.f32 %v245, %v390
      %v392 = vpop.f32.mrf.mxu0
      %v393 = vpop.f32.mrf.mxu0
      %394 = vdwg.mxu0
      %v395 = vmax.f32 %v379, 0.0
      %v396 = vmax.f32 %v381, 0.0
      %v397 = vmax.f32 %v383, 0.0
      %v398 = vmax.f32 %v385, 0.0
      %v399 = vmax.f32 %v389, 0.0
      %v400 = vmax.f32 %v391, 0.0
      %401 = vst [vmem:[%s208] sm:$0xff] %v395
      %402 = vst [vmem:[%s208 + $0x8] sm:$0xff] %v396
      %403 = vst [vmem:[%s208 + $0x10] sm:$0xff] %v397
      %404 = vst [vmem:[%s208 + $0x18] sm:$0xff] %v398
      %405 = vst [vmem:[%s208 + $0x20] sm:$0xf] %v399
      %406 = vst [vmem:[%s208 + $0x28] sm:$0xf] %v400
      %s407 = smul.u32 2, %s19
      %p408 = scmp.lt.s32.totalorder %s18, 1
      %s409 = scalar_select %p408, %s18, 1
      %p410 = scmp.lt.s32.totalorder %s407, 1
      %s411 = scalar_select %p410, %s407, 1
      %s412 = smul.addr %s409, 6
      %s413 = sadd.s32 %s411, %s412
      %s414 = smul.addr %s413, 8
      %s415 = scalar_lea.vmem %s3, %s414
      // Predicated region
      $region33: #{ifin_forward.60} parent=31 // pred_check
        %p416 = pneg %p116
      $region34: #{ifin_forward.60} parent=31 // pred_check_branch
        %418 = sbr.rel (%p416) target = $region36
      $region35: #{ifin_forward.60} parent=31 // pred_region
        %s419 = smul.u32 2, %s19
      $region36: #{ifin_forward.60} parent=31 // pred_fallthru
        _
    $region32: #{ifin_forward.60} parent=5 // pred_fallthru
      _
    %p420 = scmp.le.s32.totalorder 2, %s9
    // Predicated region
    $region37: #{ifin_forward.60} parent=5 // pred_check
      %p421 = pneg %p420
    $region38: #{ifin_forward.60} parent=5 // pred_check_branch
      %423 = sbr.rel (%p421) target = $region40
    $region39: #{ifin_forward.60} parent=5 // pred_region
      %s424 = ssub.s32 %s9, 2
      // Predicated region
      $region41: #{ifin_forward.60} parent=39 // pred_check
        %p425 = pneg %p122
      $region42: #{ifin_forward.60} parent=39 // pred_check_branch
        %427 = sbr.rel (%p425) target = $region44
      $region43: #{ifin_forward.60} parent=39 // pred_region
        %s428 = smul.u32 2, %s21
        %p429 = scmp.lt.s32.totalorder %s20, 1
        %s430 = scalar_select %p429, %s20, 1
        %p431 = scmp.lt.s32.totalorder %s428, 1
        %s432 = scalar_select %p431, %s428, 1
        %s433 = smul.addr %s430, 6
        %s434 = sadd.s32 %s432, %s433
        %s435 = smul.addr %s434, 8
        %s436 = scalar_lea.vmem %s3, %s435
      $region44: #{ifin_forward.60} parent=39 // pred_fallthru
        _
    $region40: #{ifin_forward.60} parent=5 // pred_fallthru
      _
  $region6: #{ifin_forward.60} parent=0 // loop_footer
    %s13 = sadd.s32 1, %s9
  $region7: #{ifin_forward.60} parent=0 // loop_footer_branch
    %8 = sbr.rel target = $region3
  $region8: #{ifin_forward.60} parent=0 // loop_exit
    _

// kernel: ifin_forward.61
$region0: #{ifin_forward.61}
  #allocation0 [shape = 'u32[]', space=smem, size = 0x4, offset = 0x4, fixed_abs, tag = 'smem constant byte address 0x4 - core index']
  #allocation1 [shape = 'u32[144,128]{1,0:T(1,128)}', space=vmem, size = 0x12000, scoped, tag = 'internal scratch']
  %s0 = inlined_call_operand.vmem [shape: bf16[20,180], index: 0, kind: input, shape index: {}]
  %s1 = inlined_call_operand.vmem [shape: f32[20,1], index: 1, kind: input, shape index: {}]
  %s2 = inlined_call_operand.vmem [shape: bf16[2,180,256], index: 2, kind: input, shape index: {}]
  %s3 = inlined_call_operand.vmem [shape: f32[2,20,256], index: 3, kind: output, shape index: {}]
  %s4 = sld [smem:[#allocation0]]
  $region45: #{ifin_forward.61} parent=0
    _
  %s6 = ssub.s32 1, %s4
  %s7 = scalar_select 0, %s6, %s4
  loop: start=0, step=1, limit=4
  $region2: #{ifin_forward.61} parent=0 // loop_pre_header
    _
  $region3: #{ifin_forward.61} parent=0 // loop_header
    %s9 = sphi 0, %s13
    %p10 = scmp.ge.s32.totalorder %s9, 4
    %s16 = sphi 0, %s28
    %s17 = sphi 0, %s24
    %s18 = sphi 0, %s16
    %s19 = sphi 0, %s17
    %s20 = sphi 0, %s18
    %s21 = sphi 0, %s19
    %s29 = sphi 0, %s29
    %s31 = sphi 0, %s29
    %s32 = sphi 0, %s31
    %s46 = sphi 0, %s32
    %s50 = sphi 0, %s50
    %s52 = sphi 0, %s50
    %s53 = sphi 0, %s52
    %s67 = sphi 0, %s53
    %s75 = sphi 0, %s77
    %s78 = sphi 0, %s75
    %s79 = sphi 0, %s78
    %s95 = sphi 0, %s79
    %s103 = sphi 0, %s105
    %s106 = sphi 0, %s103
    %s107 = sphi 0, %s106
    %s123 = sphi 0, %s107
  $region4: #{ifin_forward.61} parent=0 // loop_header_branch
    %12 = sbr.rel (%p10) target = $region8
  $region5: #{ifin_forward.61} parent=0 // loop_body
    %s14 = ssub.s32 %s9, 1
    %s15 = ssub.s32 %s9, 2
    %s22 = sadd.s32 1, %s17
    %p23 = scmp.ge.s32.totalorder %s22, 1
    %s24 = scalar_select %p23, 0, %s22
    %s25 = sadd.s32 1, %s16
    %s26 = scalar_select %p23, %s25, %s16
    %p27 = scmp.ge.s32.totalorder %s26, 2
    %s28 = scalar_select %p27, 0, %s26
    %s30 = sadd.s32 %s29, 1
    %p33 = scmp.eq.s32.totalorder %s9, 1
    %p34 = scmp.ne.s32.totalorder %s29, %s31
    %p35 = scmp.eq.s32.totalorder %s9, 0
    %p36 = por %p34, %p35
    %p37 = scmp.ne.s32.totalorder %s29, %s31
    %p38 = scmp.eq.s32.totalorder %s14, 1
    %p39 = por %p37, %p38
    %p40 = scmp.ne.s32.totalorder %s31, %s32
    %p41 = scmp.eq.s32.totalorder %s14, 0
    %p42 = por %p40, %p41
    %p43 = scmp.ne.s32.totalorder %s31, %s32
    %p44 = scmp.eq.s32.totalorder %s15, 1
    %p45 = por %p43, %p44
    %p47 = scmp.ne.s32.totalorder %s32, %s46
    %p48 = scmp.eq.s32.totalorder %s15, 0
    %p49 = por %p47, %p48
    %s51 = sadd.s32 %s50, 1
    %p54 = scmp.eq.s32.totalorder %s9, 1
    %p55 = scmp.ne.s32.totalorder %s50, %s52
    %p56 = scmp.eq.s32.totalorder %s9, 0
    %p57 = por %p55, %p56
    %p58 = scmp.ne.s32.totalorder %s50, %s52
    %p59 = scmp.eq.s32.totalorder %s14, 1
    %p60 = por %p58, %p59
    %p61 = scmp.ne.s32.totalorder %s52, %s53
    %p62 = scmp.eq.s32.totalorder %s14, 0
    %p63 = por %p61, %p62
    %p64 = scmp.ne.s32.totalorder %s52, %s53
    %p65 = scmp.eq.s32.totalorder %s15, 1
    %p66 = por %p64, %p65
    %p68 = scmp.ne.s32.totalorder %s53, %s67
    %p69 = scmp.eq.s32.totalorder %s15, 0
    %p70 = por %p68, %p69
    %s71 = ssub.s32 %s16, %s28
    %s72 = ssub.s32 %s17, %s24
    %s73 = sor.u32 %s71, %s72
    %p74 = scmp.eq.s32.totalorder %s73, 0
    %s76 = sadd.s32 %s75, 1
    %s77 = scalar_select %p74, %s75, %s76
    %p80 = pneg %p74
    %p81 = scmp.eq.s32.totalorder %s9, 1
    %p82 = por %p80, %p81
    %p83 = scmp.ne.s32.totalorder %s75, %s78
    %p84 = scmp.eq.s32.totalorder %s9, 0
    %p85 = por %p83, %p84
    %p86 = scmp.ne.s32.totalorder %s75, %s78
    %p87 = scmp.eq.s32.totalorder %s14, 1
    %p88 = por %p86, %p87
    %p89 = scmp.ne.s32.totalorder %s78, %s79
    %p90 = scmp.eq.s32.totalorder %s14, 0
    %p91 = por %p89, %p90
    %p92 = scmp.ne.s32.totalorder %s78, %s79
    %p93 = scmp.eq.s32.totalorder %s15, 1
    %p94 = por %p92, %p93
    %p96 = scmp.ne.s32.totalorder %s79, %s95
    %p97 = scmp.eq.s32.totalorder %s15, 0
    %p98 = por %p96, %p97
    %s99 = ssub.s32 %s16, %s28
    %s100 = ssub.s32 %s17, %s24
    %s101 = sor.u32 %s99, %s100
    %p102 = scmp.eq.s32.totalorder %s101, 0
    %s104 = sadd.s32 %s103, 1
    %s105 = scalar_select %p102, %s103, %s104
    %p108 = pneg %p102
    %p109 = scmp.eq.s32.totalorder %s9, 1
    %p110 = por %p108, %p109
    %p111 = scmp.ne.s32.totalorder %s103, %s106
    %p112 = scmp.eq.s32.totalorder %s9, 0
    %p113 = por %p111, %p112
    %p114 = scmp.ne.s32.totalorder %s103, %s106
    %p115 = scmp.eq.s32.totalorder %s14, 1
    %p116 = por %p114, %p115
    %p117 = scmp.ne.s32.totalorder %s106, %s107
    %p118 = scmp.eq.s32.totalorder %s14, 0
    %p119 = por %p117, %p118
    %p120 = scmp.ne.s32.totalorder %s106, %s107
    %p121 = scmp.eq.s32.totalorder %s15, 1
    %p122 = por %p120, %p121
    %p124 = scmp.ne.s32.totalorder %s107, %s123
    %p125 = scmp.eq.s32.totalorder %s15, 0
    %p126 = por %p124, %p125
    %p127 = scmp.le.s32.totalorder 1, %s9
    %p128 = scmp.lt.s32.totalorder %s9, 3
    %p129 = pnand %p127, %p128
    %p130 = pneg %p129
    // Predicated region
    $region9: #{ifin_forward.61} parent=5 // pred_check
      _
    $region10: #{ifin_forward.61} parent=5 // pred_check_branch
      %132 = sbr.rel (%p129) target = $region12
    $region11: #{ifin_forward.61} parent=5 // pred_region
      %s133 = ssub.s32 %s9, 1
      // Predicated region
      $region13: #{ifin_forward.61} parent=11 // pred_check
        %p134 = pneg %p42
      $region14: #{ifin_forward.61} parent=11 // pred_check_branch
        %136 = sbr.rel (%p134) target = $region16
      $region15: #{ifin_forward.61} parent=11 // pred_region
        _
      $region16: #{ifin_forward.61} parent=11 // pred_fallthru
        _
      // Predicated region
      $region17: #{ifin_forward.61} parent=11 // pred_check
        %p137 = pneg %p63
      $region18: #{ifin_forward.61} parent=11 // pred_check_branch
        %139 = sbr.rel (%p137) target = $region20
      $region19: #{ifin_forward.61} parent=11 // pred_region
        _
      $region20: #{ifin_forward.61} parent=11 // pred_fallthru
        _
    $region12: #{ifin_forward.61} parent=5 // pred_fallthru
      _
    %p140 = scmp.lt.s32.totalorder %s9, 2
    // Predicated region
    $region21: #{ifin_forward.61} parent=5 // pred_check
      %p141 = pneg %p140
    $region22: #{ifin_forward.61} parent=5 // pred_check_branch
      %143 = sbr.rel (%p141) target = $region24
    $region23: #{ifin_forward.61} parent=5 // pred_region
      // Predicated region
      $region25: #{ifin_forward.61} parent=23 // pred_check
        %p144 = pneg %p85
      $region26: #{ifin_forward.61} parent=23 // pred_check_branch
        %146 = sbr.rel (%p144) target = $region28
      $region27: #{ifin_forward.61} parent=23 // pred_region
        %s147 = smul.u32 2, %s17
        %p148 = scmp.lt.s32.totalorder %s16, 1
        %s149 = scalar_select %p148, %s16, 1
        %p150 = scmp.lt.s32.totalorder %s147, 1
        %s151 = scalar_select %p150, %s147, 1
        %s152 = smul.addr %s149, 46
        %s153 = sadd.s32 %s151, %s152
        %s154 = smul.addr %s153, 4
        %s155 = scalar_lea.vmem %s2, %s154
        %s156 = smul.u32 2, %s17
      $region28: #{ifin_forward.61} parent=23 // pred_fallthru
        _
    $region24: #{ifin_forward.61} parent=5 // pred_fallthru
      _
    %p157 = scmp.le.s32.totalorder 1, %s9
    %p158 = scmp.lt.s32.totalorder %s9, 3
    %p159 = pnand %p157, %p158
    %p160 = pneg %p159
    // Predicated region
    $region29: #{ifin_forward.61} parent=5 // pred_check
      _
    $region30: #{ifin_forward.61} parent=5 // pred_check_branch
      %162 = sbr.rel (%p159) target = $region32
    $region31: #{ifin_forward.61} parent=5 // pred_region
      %s163 = ssub.s32 %s9, 1
      %p164 = pneg %p42
      %p165 = pneg %p39
      %p166 = pneg %p63
      %p167 = pneg %p60
      %s168 = smul.u32 2, %s19
      %p169 = scmp.lt.s32.totalorder %s18, 1
      %s170 = scalar_select %p169, %s18, 1
      %p171 = scmp.lt.s32.totalorder %s168, 1
      %s172 = scalar_select %p171, %s168, 1
      %s173 = smul.addr %s170, 46
      %s174 = sadd.s32 %s172, %s173
      %s175 = smul.addr %s174, 4
      %s176 = scalar_lea.vmem %s2, %s175
      %p177 = pneg %p91
      %p178 = pneg %p88
      %p179 = pneg %p119
      %p180 = pneg %p116
      %s181 = smul.u32 2, %s19
      %p182 = scmp.lt.s32.totalorder %s18, 1
      %s183 = scalar_select %p182, %s18, 1
      %p184 = scmp.lt.s32.totalorder %s181, 1
      %s185 = scalar_select %p184, %s181, 1
      %s186 = smul.addr %s183, 6
      %s187 = sadd.s32 %s185, %s186
      %s188 = smul.addr %s187, 8
      %s189 = scalar_lea.vmem %s3, %s188
      %s190 = smul.u32 2, %s19
      %p191 = scmp.lt.s32.totalorder %s18, 1
      %s192 = scalar_select %p191, %s18, 1
      %p193 = scmp.lt.s32.totalorder %s190, 1
      %s194 = scalar_select %p193, %s190, 1
      %s195 = smul.addr %s192, 46
      %s196 = sadd.s32 %s194, %s195
      %s197 = smul.addr %s196, 4
      %s198 = scalar_lea.vmem %s2, %s197
      %s199 = smul.u32 2, %s19
      %s200 = smul.u32 2, %s19
      %p201 = scmp.lt.s32.totalorder %s18, 1
      %s202 = scalar_select %p201, %s18, 1
      %p203 = scmp.lt.s32.totalorder %s200, 1
      %s204 = scalar_select %p203, %s200, 1
      %s205 = smul.addr %s202, 6
      %s206 = sadd.s32 %s204, %s205
      %s207 = smul.addr %s206, 8
      %s208 = scalar_lea.vmem %s3, %s207
      %s209 = smul.u32 2, %s19
      %v211 = vld [vmem:[%s0] sm:$0xff]
      %v212 = vld [vmem:[%s0 + $0x8] sm:$0xff]
      %v213 = vld [vmem:[%s0 + $0x10] sm:$0x33]
      %v214 = vld [vmem:[%s198] sm:$0xff]
      %v215 = vld [vmem:[%s198 + $0x8] sm:$0xff]
      %v216 = vld [vmem:[%s198 + $0x10] sm:$0xff]
      %v217 = vld [vmem:[%s198 + $0x18] sm:$0xff]
      %v218 = vld [vmem:[%s198 + $0x20] sm:$0xff]
      %v219 = vld [vmem:[%s198 + $0x28] sm:$0xff]
      %v220 = vld [vmem:[%s198 + $0x30] sm:$0xff]
      %v221 = vld [vmem:[%s198 + $0x38] sm:$0xff]
      %v222 = vld [vmem:[%s198 + $0x40] sm:$0xff]
      %v223 = vld [vmem:[%s198 + $0x48] sm:$0xff]
      %v224 = vld [vmem:[%s198 + $0x50] sm:$0xff]
      %v225 = vld [vmem:[%s198 + $0x58] sm:$0xff]
      %v226 = vld [vmem:[%s198 + $0x60] sm:$0xff]
      %v227 = vld [vmem:[%s198 + $0x68] sm:$0xff]
      %v228 = vld [vmem:[%s198 + $0x70] sm:$0xff]
      %v229 = vld [vmem:[%s198 + $0x78] sm:$0xff]
      %v230 = vld [vmem:[%s198 + $0x80] sm:$0xff]
      %v231 = vld [vmem:[%s198 + $0x88] sm:$0xff]
      %v232 = vld [vmem:[%s198 + $0x90] sm:$0xff]
      %v233 = vld [vmem:[%s198 + $0x98] sm:$0xff]
      %v234 = vld [vmem:[%s198 + $0xa0] sm:$0xff]
      %v235 = vld [vmem:[%s198 + $0xa8] sm:$0xff]
      %v236 = vld [vmem:[%s198 + $0xb0] sm:$0x33]
      %v237 = vld [vmem:[%s1] sm:$0xff]
      %v238 = vld [vmem:[%s1 + $0x8] sm:$0xff]
      %v239 = vld [vmem:[%s1 + $0x10] sm:$0xf]
      %241 = vset.pattern.permute.xlu0 0
      %242 = vperm.xlu0 %241, %v237
      %v243 = vpop.permute.xlu0 %242
      %246 = vset.pattern.permute.xlu0 0
      %247 = vperm.xlu0 %246, %v238
      %v248 = vpop.permute.xlu0 %247
      %251 = vset.pattern.permute.xlu0 0
      %252 = vperm.xlu0 %251, %v239
      %v253 = vpop.permute.xlu0 %252
      %v258 = vunpack.c.l.b16 %v211
      %v259 = vunpack.c.h.b16 %v211
      %v260 = vunpack.c.l.b16 %v212
      %v261 = vunpack.c.h.b16 %v212
      %v262 = vunpack.c.l.b16 %v213
      %v263 = vunpack.c.h.b16 %v213
      %v264 = vpack.c.b16 %v260, %v258
      %v265 = vpack.c.b16 %v261, %v259
      %v266 = vpack.c.b16 %v262, %v262
      %v267 = vpack.c.b16 %v263, %v263
      %v293 = vunpack.c.l.b16 %v214
      %v294 = vunpack.c.h.b16 %v214
      %v295 = vunpack.c.l.b16 %v215
      %v296 = vunpack.c.h.b16 %v215
      %v297 = vunpack.c.l.b16 %v216
      %v298 = vunpack.c.h.b16 %v216
      %v299 = vunpack.c.l.b16 %v217
      %v300 = vunpack.c.h.b16 %v217
      %v301 = vunpack.c.l.b16 %v218
      %v302 = vunpack.c.h.b16 %v218
      %v303 = vunpack.c.l.b16 %v219
      %v304 = vunpack.c.h.b16 %v219
      %v305 = vunpack.c.l.b16 %v220
      %v306 = vunpack.c.h.b16 %v220
      %v307 = vunpack.c.l.b16 %v221
      %v308 = vunpack.c.h.b16 %v221
      %v309 = vunpack.c.l.b16 %v222
      %v310 = vunpack.c.h.b16 %v222
      %v311 = vunpack.c.l.b16 %v223
      %v312 = vunpack.c.h.b16 %v223
      %v313 = vunpack.c.l.b16 %v224
      %v314 = vunpack.c.h.b16 %v224
      %v315 = vunpack.c.l.b16 %v225
      %v316 = vunpack.c.h.b16 %v225
      %v317 = vunpack.c.l.b16 %v226
      %v318 = vunpack.c.h.b16 %v226
      %v319 = vunpack.c.l.b16 %v227
      %v320 = vunpack.c.h.b16 %v227
      %v321 = vunpack.c.l.b16 %v228
      %v322 = vunpack.c.h.b16 %v228
      %v323 = vunpack.c.l.b16 %v229
      %v324 = vunpack.c.h.b16 %v229
      %v325 = vunpack.c.l.b16 %v230
      %v326 = vunpack.c.h.b16 %v230
      %v327 = vunpack.c.l.b16 %v231
      %v328 = vunpack.c.h.b16 %v231
      %v329 = vunpack.c.l.b16 %v232
      %v330 = vunpack.c.h.b16 %v232
      %v331 = vunpack.c.l.b16 %v233
      %v332 = vunpack.c.h.b16 %v233
      %v333 = vunpack.c.l.b16 %v234
      %v334 = vunpack.c.h.b16 %v234
      %v335 = vunpack.c.l.b16 %v235
      %v336 = vunpack.c.h.b16 %v235
      %v337 = vunpack.c.l.b16 %v236
      %v338 = vunpack.c.h.b16 %v236
      %v339 = vpack.c.b16 %v295, %v293
      %v340 = vpack.c.b16 %v296, %v294
      %v341 = vpack.c.b16 %v299, %v297
      %v342 = vpack.c.b16 %v300, %v298
      %v343 = vpack.c.b16 %v303, %v301
      %v344 = vpack.c.b16 %v304, %v302
      %v345 = vpack.c.b16 %v307, %v305
      %v346 = vpack.c.b16 %v308, %v306
      %v347 = vpack.c.b16 %v311, %v309
      %v348 = vpack.c.b16 %v312, %v310
      %v349 = vpack.c.b16 %v315, %v313
      %v350 = vpack.c.b16 %v316, %v314
      %v351 = vpack.c.b16 %v319, %v317
      %v352 = vpack.c.b16 %v320, %v318
      %v353 = vpack.c.b16 %v323, %v321
      %v354 = vpack.c.b16 %v324, %v322
      %v355 = vpack.c.b16 %v327, %v325
      %v356 = vpack.c.b16 %v328, %v326
      %v357 = vpack.c.b16 %v331, %v329
      %v358 = vpack.c.b16 %v332, %v330
      %v359 = vpack.c.b16 %v335, %v333
      %v360 = vpack.c.b16 %v336, %v334
      %v361 = vpack.c.b16 %v337, %v337
      %v362 = vpack.c.b16 %v338, %v338
      %vm385 = vcmask 424960
      %v387 = vsel %vm385, %v265, 0
      %v390 = vsel %vm385, %v267, 0
      %vm392 = vcmask 1041408
      %v394 = vsel %vm392, %v361, 0
      %v397 = vsel %vm392, %v362, 0
      %399 = vmatprep.subr.bf16.mxu0 %v354
      %400 = vmatpush1.bf16.msra.mxu0 %v353
      %401 = vmatprep.subr.bf16.mxu0 %v352
      %402 = vmatpush1.bf16.msra.mxu0 %v351
      %403 = vmatprep.subr.bf16.mxu0 %v350
      %404 = vmatpush1.bf16.msra.mxu0 %v349
      %405 = vmatprep.subr.bf16.mxu0 %v348
      %406 = vmatpush1.bf16.msra.mxu0 %v347
      %407 = vmatprep.subr.bf16.mxu0 %v346
      %408 = vmatpush1.bf16.msra.mxu0 %v345
      %409 = vmatprep.subr.bf16.mxu0 %v344
      %410 = vmatpush1.bf16.msra.mxu0 %v343
      %411 = vmatprep.subr.bf16.mxu0 %v342
      %412 = vmatpush1.bf16.msra.mxu0 %v341
      %413 = vmatprep.subr.bf16.mxu0 %v340
      %414 = vmatpush1.bf16.msra.mxu0 %v339
      %415 = vmatprep.subr.bf16.mxu0 0
      %416 = vmatpush2.bf16.msra.mxu0 0
      %417 = vmatprep.subr.bf16.mxu0 0
      %418 = vmatpush2.bf16.msra.mxu0 0
      %419 = vmatprep.subr.bf16.mxu0 0
      %420 = vmatpush2.bf16.msra.mxu0 0
      %421 = vmatprep.subr.bf16.mxu0 0
      %422 = vmatpush2.bf16.msra.mxu0 0
      %423 = vmatprep.subr.bf16.mxu0 %v397
      %424 = vmatpush2.bf16.msra.mxu0 %v394
      %425 = vmatprep.subr.bf16.mxu0 %v360
      %426 = vmatpush2.bf16.msra.mxu0 %v359
      %427 = vmatprep.subr.bf16.mxu0 %v358
      %428 = vmatpush2.bf16.msra.mxu0 %v357
      %429 = vmatprep.subr.bf16.mxu0 %v356
      %430 = vmatpush2.bf16.msra.mxu0 %v355
      %431 = vmatprep.mubr.bf16.mxu0 %v387
      %432 = vmatmul.mubr.bf16.gmra.mxu0 %v264
      %v433 = vpop.f32.mrf.mxu0
      %v434 = vadd.f32 %v243, %v433
      %v435 = vpop.f32.mrf.mxu0
      %v436 = vadd.f32 %v243, %v435
      %v437 = vpop.f32.mrf.mxu0
      %v438 = vadd.f32 %v248, %v437
      %v439 = vpop.f32.mrf.mxu0
      %v440 = vadd.f32 %v248, %v439
      %441 = vmatprep.mubr.bf16.mxu0 %v390
      %442 = vmatmul.mubr.bf16.gmra.mxu0 %v266
      %v443 = vpop.f32.mrf.mxu0
      %v444 = vadd.f32 %v253, %v443
      %v445 = vpop.f32.mrf.mxu0
      %v446 = vadd.f32 %v253, %v445
      %v447 = vpop.f32.mrf.mxu0
      %v448 = vpop.f32.mrf.mxu0
      %449 = vdwg.mxu0
      %450 = vst [vmem:[%s208] sm:$0xff] %v434
      %451 = vst [vmem:[%s208 + $0x8] sm:$0xff] %v436
      %452 = vst [vmem:[%s208 + $0x10] sm:$0xff] %v438
      %453 = vst [vmem:[%s208 + $0x18] sm:$0xff] %v440
      %454 = vst [vmem:[%s208 + $0x20] sm:$0xf] %v444
      %455 = vst [vmem:[%s208 + $0x28] sm:$0xf] %v446
      %s456 = smul.u32 2, %s19
      %p457 = scmp.lt.s32.totalorder %s18, 1
      %s458 = scalar_select %p457, %s18, 1
      %p459 = scmp.lt.s32.totalorder %s456, 1
      %s460 = scalar_select %p459, %s456, 1
      %s461 = smul.addr %s458, 6
      %s462 = sadd.s32 %s460, %s461
      %s463 = smul.addr %s462, 8
      %s464 = scalar_lea.vmem %s3, %s463
      // Predicated region
      $region33: #{ifin_forward.61} parent=31 // pred_check
        %p465 = pneg %p116
      $region34: #{ifin_forward.61} parent=31 // pred_check_branch
        %467 = sbr.rel (%p465) target = $region36
      $region35: #{ifin_forward.61} parent=31 // pred_region
        %s468 = smul.u32 2, %s19
      $region36: #{ifin_forward.61} parent=31 // pred_fallthru
        _
    $region32: #{ifin_forward.61} parent=5 // pred_fallthru
      _
    %p469 = scmp.le.s32.totalorder 2, %s9
    // Predicated region
    $region37: #{ifin_forward.61} parent=5 // pred_check
      %p470 = pneg %p469
    $region38: #{ifin_forward.61} parent=5 // pred_check_branch
      %472 = sbr.rel (%p470) target = $region40
    $region39: #{ifin_forward.61} parent=5 // pred_region
      %s473 = ssub.s32 %s9, 2
      // Predicated region
      $region41: #{ifin_forward.61} parent=39 // pred_check
        %p474 = pneg %p122
      $region42: #{ifin_forward.61} parent=39 // pred_check_branch
        %476 = sbr.rel (%p474) target = $region44
      $region43: #{ifin_forward.61} parent=39 // pred_region
        %s477 = smul.u32 2, %s21
        %p478 = scmp.lt.s32.totalorder %s20, 1
        %s479 = scalar_select %p478, %s20, 1
        %p480 = scmp.lt.s32.totalorder %s477, 1
        %s481 = scalar_select %p480, %s477, 1
        %s482 = smul.addr %s479, 6
        %s483 = sadd.s32 %s481, %s482
        %s484 = smul.addr %s483, 8
        %s485 = scalar_lea.vmem %s3, %s484
      $region44: #{ifin_forward.61} parent=39 // pred_fallthru
        _
    $region40: #{ifin_forward.61} parent=5 // pred_fallthru
      _
  $region6: #{ifin_forward.61} parent=0 // loop_footer
    %s13 = sadd.s32 1, %s9
  $region7: #{ifin_forward.61} parent=0 // loop_footer_branch
    %8 = sbr.rel target = $region3
  $region8: #{ifin_forward.61} parent=0 // loop_exit
    _

// kernel: ifin_forward.64
$region0: #{ifin_forward.64}
  #allocation0 [shape = 'u32[]', space=smem, size = 0x4, offset = 0x4, fixed_abs, tag = 'smem constant byte address 0x4 - core index']
  #allocation1 [shape = 'u32[144,128]{1,0:T(1,128)}', space=vmem, size = 0x12000, scoped, tag = 'internal scratch']
  %s0 = inlined_call_operand.vmem [shape: bf16[20,20], index: 0, kind: input, shape index: {}]
  %s1 = inlined_call_operand.vmem [shape: bf16[20,20], index: 1, kind: input, shape index: {}]
  %s2 = inlined_call_operand.vmem [shape: f32[20,1], index: 2, kind: input, shape index: {}]
  %s3 = inlined_call_operand.vmem [shape: bf16[20,20], index: 3, kind: input, shape index: {}]
  %s4 = inlined_call_operand.vmem [shape: f32[20,1], index: 4, kind: input, shape index: {}]
  %s5 = inlined_call_operand.vmem [shape: f32[2,20,256], index: 5, kind: input, shape index: {}]
  %s6 = inlined_call_operand.vmem [shape: f32[2,20,256], index: 6, kind: input, shape index: {}]
  %s7 = inlined_call_operand.vmem [shape: f32[2,20,256], index: 7, kind: output, shape index: {0}]
  %s8 = inlined_call_operand.vmem [shape: f32[2,20,256], index: 8, kind: output, shape index: {1}]
  %s9 = inlined_call_operand.vmem [shape: f32[2,20,256], index: 9, kind: output, shape index: {2}]
  %10 = xla_tuple %s7, %s8, %s9
  %s11 = sld [smem:[#allocation0]]
  $region77: #{ifin_forward.64} parent=0
    _
  %s13 = ssub.s32 1, %s11
  %s14 = scalar_select 0, %s13, %s11
  loop: start=0, step=1, limit=4
  $region2: #{ifin_forward.64} parent=0 // loop_pre_header
    _
  $region3: #{ifin_forward.64} parent=0 // loop_header
    %s16 = sphi 0, %s20
    %p17 = scmp.ge.s32.totalorder %s16, 4
    %s23 = sphi 0, %s35
    %s24 = sphi 0, %s31
    %s25 = sphi 0, %s23
    %s26 = sphi 0, %s24
    %s27 = sphi 0, %s25
    %s28 = sphi 0, %s26
    %s36 = sphi 0, %s36
    %s38 = sphi 0, %s36
    %s39 = sphi 0, %s38
    %s53 = sphi 0, %s39
    %s57 = sphi 0, %s57
    %s59 = sphi 0, %s57
    %s60 = sphi 0, %s59
    %s74 = sphi 0, %s60
    %s78 = sphi 0, %s78
    %s80 = sphi 0, %s78
    %s81 = sphi 0, %s80
    %s95 = sphi 0, %s81
    %s99 = sphi 0, %s99
    %s101 = sphi 0, %s99
    %s102 = sphi 0, %s101
    %s116 = sphi 0, %s102
    %s120 = sphi 0, %s120
    %s122 = sphi 0, %s120
    %s123 = sphi 0, %s122
    %s137 = sphi 0, %s123
    %s145 = sphi 0, %s147
    %s148 = sphi 0, %s145
    %s149 = sphi 0, %s148
    %s165 = sphi 0, %s149
    %s173 = sphi 0, %s175
    %s176 = sphi 0, %s173
    %s177 = sphi 0, %s176
    %s193 = sphi 0, %s177
    %s201 = sphi 0, %s203
    %s204 = sphi 0, %s201
    %s205 = sphi 0, %s204
    %s221 = sphi 0, %s205
    %s229 = sphi 0, %s231
    %s232 = sphi 0, %s229
    %s233 = sphi 0, %s232
    %s249 = sphi 0, %s233
    %s257 = sphi 0, %s259
    %s260 = sphi 0, %s257
    %s261 = sphi 0, %s260
    %s277 = sphi 0, %s261
  $region4: #{ifin_forward.64} parent=0 // loop_header_branch
    %19 = sbr.rel (%p17) target = $region8
  $region5: #{ifin_forward.64} parent=0 // loop_body
    %s21 = ssub.s32 %s16, 1
    %s22 = ssub.s32 %s16, 2
    %s29 = sadd.s32 1, %s24
    %p30 = scmp.ge.s32.totalorder %s29, 1
    %s31 = scalar_select %p30, 0, %s29
    %s32 = sadd.s32 1, %s23
    %s33 = scalar_select %p30, %s32, %s23
    %p34 = scmp.ge.s32.totalorder %s33, 2
    %s35 = scalar_select %p34, 0, %s33
    %s37 = sadd.s32 %s36, 1
    %p40 = scmp.eq.s32.totalorder %s16, 1
    %p41 = scmp.ne.s32.totalorder %s36, %s38
    %p42 = scmp.eq.s32.totalorder %s16, 0
    %p43 = por %p41, %p42
    %p44 = scmp.ne.s32.totalorder %s36, %s38
    %p45 = scmp.eq.s32.totalorder %s21, 1
    %p46 = por %p44, %p45
    %p47 = scmp.ne.s32.totalorder %s38, %s39
    %p48 = scmp.eq.s32.totalorder %s21, 0
    %p49 = por %p47, %p48
    %p50 = scmp.ne.s32.totalorder %s38, %s39
    %p51 = scmp.eq.s32.totalorder %s22, 1
    %p52 = por %p50, %p51
    %p54 = scmp.ne.s32.totalorder %s39, %s53
    %p55 = scmp.eq.s32.totalorder %s22, 0
    %p56 = por %p54, %p55
    %s58 = sadd.s32 %s57, 1
    %p61 = scmp.eq.s32.totalorder %s16, 1
    %p62 = scmp.ne.s32.totalorder %s57, %s59
    %p63 = scmp.eq.s32.totalorder %s16, 0
    %p64 = por %p62, %p63
    %p65 = scmp.ne.s32.totalorder %s57, %s59
    %p66 = scmp.eq.s32.totalorder %s21, 1
    %p67 = por %p65, %p66
    %p68 = scmp.ne.s32.totalorder %s59, %s60
    %p69 = scmp.eq.s32.totalorder %s21, 0
    %p70 = por %p68, %p69
    %p71 = scmp.ne.s32.totalorder %s59, %s60
    %p72 = scmp.eq.s32.totalorder %s22, 1
    %p73 = por %p71, %p72
    %p75 = scmp.ne.s32.totalorder %s60, %s74
    %p76 = scmp.eq.s32.totalorder %s22, 0
    %p77 = por %p75, %p76
    %s79 = sadd.s32 %s78, 1
    %p82 = scmp.eq.s32.totalorder %s16, 1
    %p83 = scmp.ne.s32.totalorder %s78, %s80
    %p84 = scmp.eq.s32.totalorder %s16, 0
    %p85 = por %p83, %p84
    %p86 = scmp.ne.s32.totalorder %s78, %s80
    %p87 = scmp.eq.s32.totalorder %s21, 1
    %p88 = por %p86, %p87
    %p89 = scmp.ne.s32.totalorder %s80, %s81
    %p90 = scmp.eq.s32.totalorder %s21, 0
    %p91 = por %p89, %p90
    %p92 = scmp.ne.s32.totalorder %s80, %s81
    %p93 = scmp.eq.s32.totalorder %s22, 1
    %p94 = por %p92, %p93
    %p96 = scmp.ne.s32.totalorder %s81, %s95
    %p97 = scmp.eq.s32.totalorder %s22, 0
    %p98 = por %p96, %p97
    %s100 = sadd.s32 %s99, 1
    %p103 = scmp.eq.s32.totalorder %s16, 1
    %p104 = scmp.ne.s32.totalorder %s99, %s101
    %p105 = scmp.eq.s32.totalorder %s16, 0
    %p106 = por %p104, %p105
    %p107 = scmp.ne.s32.totalorder %s99, %s101
    %p108 = scmp.eq.s32.totalorder %s21, 1
    %p109 = por %p107, %p108
    %p110 = scmp.ne.s32.totalorder %s101, %s102
    %p111 = scmp.eq.s32.totalorder %s21, 0
    %p112 = por %p110, %p111
    %p113 = scmp.ne.s32.totalorder %s101, %s102
    %p114 = scmp.eq.s32.totalorder %s22, 1
    %p115 = por %p113, %p114
    %p117 = scmp.ne.s32.totalorder %s102, %s116
    %p118 = scmp.eq.s32.totalorder %s22, 0
    %p119 = por %p117, %p118
    %s121 = sadd.s32 %s120, 1
    %p124 = scmp.eq.s32.totalorder %s16, 1
    %p125 = scmp.ne.s32.totalorder %s120, %s122
    %p126 = scmp.eq.s32.totalorder %s16, 0
    %p127 = por %p125, %p126
    %p128 = scmp.ne.s32.totalorder %s120, %s122
    %p129 = scmp.eq.s32.totalorder %s21, 1
    %p130 = por %p128, %p129
    %p131 = scmp.ne.s32.totalorder %s122, %s123
    %p132 = scmp.eq.s32.totalorder %s21, 0
    %p133 = por %p131, %p132
    %p134 = scmp.ne.s32.totalorder %s122, %s123
    %p135 = scmp.eq.s32.totalorder %s22, 1
    %p136 = por %p134, %p135
    %p138 = scmp.ne.s32.totalorder %s123, %s137
    %p139 = scmp.eq.s32.totalorder %s22, 0
    %p140 = por %p138, %p139
    %s141 = ssub.s32 %s23, %s35
    %s142 = ssub.s32 %s24, %s31
    %s143 = sor.u32 %s141, %s142
    %p144 = scmp.eq.s32.totalorder %s143, 0
    %s146 = sadd.s32 %s145, 1
    %s147 = scalar_select %p144, %s145, %s146
    %p150 = pneg %p144
    %p151 = scmp.eq.s32.totalorder %s16, 1
    %p152 = por %p150, %p151
    %p153 = scmp.ne.s32.totalorder %s145, %s148
    %p154 = scmp.eq.s32.totalorder %s16, 0
    %p155 = por %p153, %p154
    %p156 = scmp.ne.s32.totalorder %s145, %s148
    %p157 = scmp.eq.s32.totalorder %s21, 1
    %p158 = por %p156, %p157
    %p159 = scmp.ne.s32.totalorder %s148, %s149
    %p160 = scmp.eq.s32.totalorder %s21, 0
    %p161 = por %p159, %p160
    %p162 = scmp.ne.s32.totalorder %s148, %s149
    %p163 = scmp.eq.s32.totalorder %s22, 1
    %p164 = por %p162, %p163
    %p166 = scmp.ne.s32.totalorder %s149, %s165
    %p167 = scmp.eq.s32.totalorder %s22, 0
    %p168 = por %p166, %p167
    %s169 = ssub.s32 %s23, %s35
    %s170 = ssub.s32 %s24, %s31
    %s171 = sor.u32 %s169, %s170
    %p172 = scmp.eq.s32.totalorder %s171, 0
    %s174 = sadd.s32 %s173, 1
    %s175 = scalar_select %p172, %s173, %s174
    %p178 = pneg %p172
    %p179 = scmp.eq.s32.totalorder %s16, 1
    %p180 = por %p178, %p179
    %p181 = scmp.ne.s32.totalorder %s173, %s176
    %p182 = scmp.eq.s32.totalorder %s16, 0
    %p183 = por %p181, %p182
    %p184 = scmp.ne.s32.totalorder %s173, %s176
    %p185 = scmp.eq.s32.totalorder %s21, 1
    %p186 = por %p184, %p185
    %p187 = scmp.ne.s32.totalorder %s176, %s177
    %p188 = scmp.eq.s32.totalorder %s21, 0
    %p189 = por %p187, %p188
    %p190 = scmp.ne.s32.totalorder %s176, %s177
    %p191 = scmp.eq.s32.totalorder %s22, 1
    %p192 = por %p190, %p191
    %p194 = scmp.ne.s32.totalorder %s177, %s193
    %p195 = scmp.eq.s32.totalorder %s22, 0
    %p196 = por %p194, %p195
    %s197 = ssub.s32 %s23, %s35
    %s198 = ssub.s32 %s24, %s31
    %s199 = sor.u32 %s197, %s198
    %p200 = scmp.eq.s32.totalorder %s199, 0
    %s202 = sadd.s32 %s201, 1
    %s203 = scalar_select %p200, %s201, %s202
    %p206 = pneg %p200
    %p207 = scmp.eq.s32.totalorder %s16, 1
    %p208 = por %p206, %p207
    %p209 = scmp.ne.s32.totalorder %s201, %s204
    %p210 = scmp.eq.s32.totalorder %s16, 0
    %p211 = por %p209, %p210
    %p212 = scmp.ne.s32.totalorder %s201, %s204
    %p213 = scmp.eq.s32.totalorder %s21, 1
    %p214 = por %p212, %p213
    %p215 = scmp.ne.s32.totalorder %s204, %s205
    %p216 = scmp.eq.s32.totalorder %s21, 0
    %p217 = por %p215, %p216
    %p218 = scmp.ne.s32.totalorder %s204, %s205
    %p219 = scmp.eq.s32.totalorder %s22, 1
    %p220 = por %p218, %p219
    %p222 = scmp.ne.s32.totalorder %s205, %s221
    %p223 = scmp.eq.s32.totalorder %s22, 0
    %p224 = por %p222, %p223
    %s225 = ssub.s32 %s23, %s35
    %s226 = ssub.s32 %s24, %s31
    %s227 = sor.u32 %s225, %s226
    %p228 = scmp.eq.s32.totalorder %s227, 0
    %s230 = sadd.s32 %s229, 1
    %s231 = scalar_select %p228, %s229, %s230
    %p234 = pneg %p228
    %p235 = scmp.eq.s32.totalorder %s16, 1
    %p236 = por %p234, %p235
    %p237 = scmp.ne.s32.totalorder %s229, %s232
    %p238 = scmp.eq.s32.totalorder %s16, 0
    %p239 = por %p237, %p238
    %p240 = scmp.ne.s32.totalorder %s229, %s232
    %p241 = scmp.eq.s32.totalorder %s21, 1
    %p242 = por %p240, %p241
    %p243 = scmp.ne.s32.totalorder %s232, %s233
    %p244 = scmp.eq.s32.totalorder %s21, 0
    %p245 = por %p243, %p244
    %p246 = scmp.ne.s32.totalorder %s232, %s233
    %p247 = scmp.eq.s32.totalorder %s22, 1
    %p248 = por %p246, %p247
    %p250 = scmp.ne.s32.totalorder %s233, %s249
    %p251 = scmp.eq.s32.totalorder %s22, 0
    %p252 = por %p250, %p251
    %s253 = ssub.s32 %s23, %s35
    %s254 = ssub.s32 %s24, %s31
    %s255 = sor.u32 %s253, %s254
    %p256 = scmp.eq.s32.totalorder %s255, 0
    %s258 = sadd.s32 %s257, 1
    %s259 = scalar_select %p256, %s257, %s258
    %p262 = pneg %p256
    %p263 = scmp.eq.s32.totalorder %s16, 1
    %p264 = por %p262, %p263
    %p265 = scmp.ne.s32.totalorder %s257, %s260
    %p266 = scmp.eq.s32.totalorder %s16, 0
    %p267 = por %p265, %p266
    %p268 = scmp.ne.s32.totalorder %s257, %s260
    %p269 = scmp.eq.s32.totalorder %s21, 1
    %p270 = por %p268, %p269
    %p271 = scmp.ne.s32.totalorder %s260, %s261
    %p272 = scmp.eq.s32.totalorder %s21, 0
    %p273 = por %p271, %p272
    %p274 = scmp.ne.s32.totalorder %s260, %s261
    %p275 = scmp.eq.s32.totalorder %s22, 1
    %p276 = por %p274, %p275
    %p278 = scmp.ne.s32.totalorder %s261, %s277
    %p279 = scmp.eq.s32.totalorder %s22, 0
    %p280 = por %p278, %p279
    %p281 = scmp.le.s32.totalorder 1, %s16
    %p282 = scmp.lt.s32.totalorder %s16, 3
    %p283 = pnand %p281, %p282
    %p284 = pneg %p283
    // Predicated region
    $region9: #{ifin_forward.64} parent=5 // pred_check
      _
    $region10: #{ifin_forward.64} parent=5 // pred_check_branch
      %286 = sbr.rel (%p283) target = $region12
    $region11: #{ifin_forward.64} parent=5 // pred_region
      %s287 = ssub.s32 %s16, 1
      // Predicated region
      $region13: #{ifin_forward.64} parent=11 // pred_check
        %p288 = pneg %p49
      $region14: #{ifin_forward.64} parent=11 // pred_check_branch
        %290 = sbr.rel (%p288) target = $region16
      $region15: #{ifin_forward.64} parent=11 // pred_region
        _
      $region16: #{ifin_forward.64} parent=11 // pred_fallthru
        _
      // Predicated region
      $region17: #{ifin_forward.64} parent=11 // pred_check
        %p291 = pneg %p70
      $region18: #{ifin_forward.64} parent=11 // pred_check_branch
        %293 = sbr.rel (%p291) target = $region20
      $region19: #{ifin_forward.64} parent=11 // pred_region
        _
      $region20: #{ifin_forward.64} parent=11 // pred_fallthru
        _
      // Predicated region
      $region21: #{ifin_forward.64} parent=11 // pred_check
        %p294 = pneg %p91
      $region22: #{ifin_forward.64} parent=11 // pred_check_branch
        %296 = sbr.rel (%p294) target = $region24
      $region23: #{ifin_forward.64} parent=11 // pred_region
        _
      $region24: #{ifin_forward.64} parent=11 // pred_fallthru
        _
      // Predicated region
      $region25: #{ifin_forward.64} parent=11 // pred_check
        %p297 = pneg %p112
      $region26: #{ifin_forward.64} parent=11 // pred_check_branch
        %299 = sbr.rel (%p297) target = $region28
      $region27: #{ifin_forward.64} parent=11 // pred_region
        _
      $region28: #{ifin_forward.64} parent=11 // pred_fallthru
        _
      // Predicated region
      $region29: #{ifin_forward.64} parent=11 // pred_check
        %p300 = pneg %p133
      $region30: #{ifin_forward.64} parent=11 // pred_check_branch
        %302 = sbr.rel (%p300) target = $region32
      $region31: #{ifin_forward.64} parent=11 // pred_region
        _
      $region32: #{ifin_forward.64} parent=11 // pred_fallthru
        _
    $region12: #{ifin_forward.64} parent=5 // pred_fallthru
      _
    %p303 = scmp.lt.s32.totalorder %s16, 2
    // Predicated region
    $region33: #{ifin_forward.64} parent=5 // pred_check
      %p304 = pneg %p303
    $region34: #{ifin_forward.64} parent=5 // pred_check_branch
      %306 = sbr.rel (%p304) target = $region36
    $region35: #{ifin_forward.64} parent=5 // pred_region
      // Predicated region
      $region37: #{ifin_forward.64} parent=35 // pred_check
        %p307 = pneg %p155
      $region38: #{ifin_forward.64} parent=35 // pred_check_branch
        %309 = sbr.rel (%p307) target = $region40
      $region39: #{ifin_forward.64} parent=35 // pred_region
        %s310 = smul.u32 2, %s24
        %p311 = scmp.lt.s32.totalorder %s23, 1
        %s312 = scalar_select %p311, %s23, 1
        %p313 = scmp.lt.s32.totalorder %s310, 1
        %s314 = scalar_select %p313, %s310, 1
        %s315 = smul.addr %s312, 6
        %s316 = sadd.s32 %s314, %s315
        %s317 = smul.addr %s316, 8
        %s318 = scalar_lea.vmem %s5, %s317
        %s319 = smul.u32 2, %s24
      $region40: #{ifin_forward.64} parent=35 // pred_fallthru
        _
      // Predicated region
      $region41: #{ifin_forward.64} parent=35 // pred_check
        %p320 = pneg %p183
      $region42: #{ifin_forward.64} parent=35 // pred_check_branch
        %322 = sbr.rel (%p320) target = $region44
      $region43: #{ifin_forward.64} parent=35 // pred_region
        %s323 = smul.u32 2, %s24
        %p324 = scmp.lt.s32.totalorder %s23, 1
        %s325 = scalar_select %p324, %s23, 1
        %p326 = scmp.lt.s32.totalorder %s323, 1
        %s327 = scalar_select %p326, %s323, 1
        %s328 = smul.addr %s325, 6
        %s329 = sadd.s32 %s327, %s328
        %s330 = smul.addr %s329, 8
        %s331 = scalar_lea.vmem %s6, %s330
        %s332 = smul.u32 2, %s24
      $region44: #{ifin_forward.64} parent=35 // pred_fallthru
        _
    $region36: #{ifin_forward.64} parent=5 // pred_fallthru
      _
    %p333 = scmp.le.s32.totalorder 1, %s16
    %p334 = scmp.lt.s32.totalorder %s16, 3
    %p335 = pnand %p333, %p334
    %p336 = pneg %p335
    // Predicated region
    $region45: #{ifin_forward.64} parent=5 // pred_check
      _
    $region46: #{ifin_forward.64} parent=5 // pred_check_branch
      %338 = sbr.rel (%p335) target = $region48
    $region47: #{ifin_forward.64} parent=5 // pred_region
      %s339 = ssub.s32 %s16, 1
      %p340 = pneg %p49
      %p341 = pneg %p46
      %p342 = pneg %p70
      %p343 = pneg %p67
      %p344 = pneg %p91
      %p345 = pneg %p88
      %p346 = pneg %p112
      %p347 = pneg %p109
      %p348 = pneg %p133
      %p349 = pneg %p130
      %s350 = smul.u32 2, %s26
      %p351 = scmp.lt.s32.totalorder %s25, 1
      %s352 = scalar_select %p351, %s25, 1
      %p353 = scmp.lt.s32.totalorder %s350, 1
      %s354 = scalar_select %p353, %s350, 1
      %s355 = smul.addr %s352, 6
      %s356 = sadd.s32 %s354, %s355
      %s357 = smul.addr %s356, 8
      %s358 = scalar_lea.vmem %s5, %s357
      %p359 = pneg %p161
      %p360 = pneg %p158
      %s361 = smul.u32 2, %s26
      %p362 = scmp.lt.s32.totalorder %s25, 1
      %s363 = scalar_select %p362, %s25, 1
      %p364 = scmp.lt.s32.totalorder %s361, 1
      %s365 = scalar_select %p364, %s361, 1
      %s366 = smul.addr %s363, 6
      %s367 = sadd.s32 %s365, %s366
      %s368 = smul.addr %s367, 8
      %s369 = scalar_lea.vmem %s6, %s368
      %p370 = pneg %p189
      %p371 = pneg %p186
      %p372 = pneg %p217
      %p373 = pneg %p214
      %s374 = smul.u32 2, %s26
      %p375 = scmp.lt.s32.totalorder %s25, 1
      %s376 = scalar_select %p375, %s25, 1
      %p377 = scmp.lt.s32.totalorder %s374, 1
      %s378 = scalar_select %p377, %s374, 1
      %s379 = smul.addr %s376, 6
      %s380 = sadd.s32 %s378, %s379
      %s381 = smul.addr %s380, 8
      %s382 = scalar_lea.vmem %s7, %s381
      %p383 = pneg %p245
      %p384 = pneg %p242
      %s385 = smul.u32 2, %s26
      %p386 = scmp.lt.s32.totalorder %s25, 1
      %s387 = scalar_select %p386, %s25, 1
      %p388 = scmp.lt.s32.totalorder %s385, 1
      %s389 = scalar_select %p388, %s385, 1
      %s390 = smul.addr %s387, 6
      %s391 = sadd.s32 %s389, %s390
      %s392 = smul.addr %s391, 8
      %s393 = scalar_lea.vmem %s8, %s392
      %p394 = pneg %p273
      %p395 = pneg %p270
      %s396 = smul.u32 2, %s26
      %p397 = scmp.lt.s32.totalorder %s25, 1
      %s398 = scalar_select %p397, %s25, 1
      %p399 = scmp.lt.s32.totalorder %s396, 1
      %s400 = scalar_select %p399, %s396, 1
      %s401 = smul.addr %s398, 6
      %s402 = sadd.s32 %s400, %s401
      %s403 = smul.addr %s402, 8
      %s404 = scalar_lea.vmem %s9, %s403
      %s405 = smul.u32 2, %s26
      %p406 = scmp.lt.s32.totalorder %s25, 1
      %s407 = scalar_select %p406, %s25, 1
      %p408 = scmp.lt.s32.totalorder %s405, 1
      %s409 = scalar_select %p408, %s405, 1
      %s410 = smul.addr %s407, 6
      %s411 = sadd.s32 %s409, %s410
      %s412 = smul.addr %s411, 8
      %s413 = scalar_lea.vmem %s5, %s412
      %s414 = smul.u32 2, %s26
      %s415 = smul.u32 2, %s26
      %p416 = scmp.lt.s32.totalorder %s25, 1
      %s417 = scalar_select %p416, %s25, 1
      %p418 = scmp.lt.s32.totalorder %s415, 1
      %s419 = scalar_select %p418, %s415, 1
      %s420 = smul.addr %s417, 6
      %s421 = sadd.s32 %s419, %s420
      %s422 = smul.addr %s421, 8
      %s423 = scalar_lea.vmem %s6, %s422
      %s424 = smul.u32 2, %s26
      %s425 = smul.u32 2, %s26
      %p426 = scmp.lt.s32.totalorder %s25, 1
      %s427 = scalar_select %p426, %s25, 1
      %p428 = scmp.lt.s32.totalorder %s425, 1
      %s429 = scalar_select %p428, %s425, 1
      %s430 = smul.addr %s427, 6
      %s431 = sadd.s32 %s429, %s430
      %s432 = smul.addr %s431, 8
      %s433 = scalar_lea.vmem %s7, %s432
      %s434 = smul.u32 2, %s26
      %s435 = smul.u32 2, %s26
      %p436 = scmp.lt.s32.totalorder %s25, 1
      %s437 = scalar_select %p436, %s25, 1
      %p438 = scmp.lt.s32.totalorder %s435, 1
      %s439 = scalar_select %p438, %s435, 1
      %s440 = smul.addr %s437, 6
      %s441 = sadd.s32 %s439, %s440
      %s442 = smul.addr %s441, 8
      %s443 = scalar_lea.vmem %s8, %s442
      %s444 = smul.u32 2, %s26
      %s445 = smul.u32 2, %s26
      %p446 = scmp.lt.s32.totalorder %s25, 1
      %s447 = scalar_select %p446, %s25, 1
      %p448 = scmp.lt.s32.totalorder %s445, 1
      %s449 = scalar_select %p448, %s445, 1
      %s450 = smul.addr %s447, 6
      %s451 = sadd.s32 %s449, %s450
      %s452 = smul.addr %s451, 8
      %s453 = scalar_lea.vmem %s9, %s452
      %s454 = smul.u32 2, %s26
      %v456 = vld [vmem:[%s413] sm:$0xff]
      %v457 = vld [vmem:[%s413 + $0x8] sm:$0xff]
      %v458 = vld [vmem:[%s413 + $0x10] sm:$0xff]
      %v459 = vld [vmem:[%s413 + $0x18] sm:$0xff]
      %v460 = vld [vmem:[%s413 + $0x20] sm:$0xf]
      %v461 = vld [vmem:[%s413 + $0x28] sm:$0xf]
      %v462 = vpack.c.bf16 %v458, %v456
      %v463 = vpack.c.bf16 %v459, %v457
      %v464 = vpack.c.bf16 %v460, %v460
      %v465 = vpack.c.bf16 %v461, %v461
      %v466 = vld [vmem:[%s423] sm:$0xff]
      %v467 = vld [vmem:[%s423 + $0x8] sm:$0xff]
      %v468 = vld [vmem:[%s423 + $0x10] sm:$0xff]
      %v469 = vld [vmem:[%s423 + $0x18] sm:$0xff]
      %v470 = vld [vmem:[%s423 + $0x20] sm:$0xf]
      %v471 = vld [vmem:[%s423 + $0x28] sm:$0xf]
      %v472 = vpack.c.bf16 %v468, %v466
      %v473 = vpack.c.bf16 %v469, %v467
      %v474 = vpack.c.bf16 %v470, %v470
      %v475 = vpack.c.bf16 %v471, %v471
      %v476 = vld [vmem:[%s0] sm:$0xf]
      %v477 = vld [vmem:[%s0 + $0x4] sm:$0xf]
      %v478 = vld [vmem:[%s0 + $0x8] sm:$0x3]
      %v479 = vld [vmem:[%s1] sm:$0xf]
      %v480 = vld [vmem:[%s1 + $0x4] sm:$0xf]
      %v481 = vld [vmem:[%s1 + $0x8] sm:$0x3]
      %v485 = vunpack.c.l.b16 %v479
      %v486 = vunpack.c.l.b16 %v480
      %v487 = vunpack.c.l.b16 %v481
      %v488 = vpack.c.b16 %v486, %v485
      %v489 = vpack.c.b16 %v487, %v487
      %vm490 = vcmask 162816
      %v492 = vsel %vm490, %v488, 0
      %v495 = vsel %vm490, %v489, 0
      %vm497 = vcmask 1041408
      %v499 = vsel %vm497, %v474, 0
      %v502 = vsel %vm497, %v475, 0
      %504 = vmatprep.subr.bf16.mxu0 0
      %505 = vmatpush1.bf16.msra.mxu0 0
      %506 = vmatprep.subr.bf16.mxu0 0
      %507 = vmatpush1.bf16.msra.mxu0 0
      %508 = vmatprep.subr.bf16.mxu0 0
      %509 = vmatpush1.bf16.msra.mxu0 0
      %510 = vmatprep.subr.bf16.mxu0 0
      %511 = vmatpush1.bf16.msra.mxu0 0
      %512 = vmatprep.subr.bf16.mxu0 0
      %513 = vmatpush1.bf16.msra.mxu0 0
      %514 = vmatprep.subr.bf16.mxu0 0
      %515 = vmatpush1.bf16.msra.mxu0 0
      %516 = vmatprep.subr.bf16.mxu0 %v502
      %517 = vmatpush1.bf16.msra.mxu0 %v499
      %518 = vmatprep.subr.bf16.mxu0 %v473
      %519 = vmatpush1.bf16.msra.mxu0 %v472
      %520 = vmatprep.subr.bf16.mxu0 0
      %521 = vmatpush2.bf16.msra.mxu0 0
      %522 = vmatprep.subr.bf16.mxu0 0
      %523 = vmatpush2.bf16.msra.mxu0 0
      %524 = vmatprep.subr.bf16.mxu0 0
      %525 = vmatpush2.bf16.msra.mxu0 0
      %526 = vmatprep.subr.bf16.mxu0 0
      %527 = vmatpush2.bf16.msra.mxu0 0
      %528 = vmatprep.subr.bf16.mxu0 0
      %529 = vmatpush2.bf16.msra.mxu0 0
      %530 = vmatprep.subr.bf16.mxu0 0
      %531 = vmatpush2.bf16.msra.mxu0 0
      %532 = vmatprep.subr.bf16.mxu0 0
      %533 = vmatpush2.bf16.msra.mxu0 0
      %534 = vmatprep.subr.bf16.mxu0 0
      %535 = vmatpush2.bf16.msra.mxu0 0
      %536 = vmatprep.mubr.bf16.mxu0 0
      %537 = vmatmul.mubr.bf16.gmra.mxu0 %v492
      %v538 = vpop.f32.mrf.mxu0
      %v539 = vadd.f32 0.0, %v538
      %v540 = vpop.f32.mrf.mxu0
      %v541 = vadd.f32 0.0, %v540
      %v542 = vpop.f32.mrf.mxu0
      %v543 = vadd.f32 0.0, %v542
      %v544 = vpop.f32.mrf.mxu0
      %v545 = vadd.f32 0.0, %v544
      %546 = vmatprep.mubr.bf16.mxu0 0
      %547 = vmatmul.mubr.bf16.gmra.mxu0 %v495
      %v548 = vpop.f32.mrf.mxu0
      %v549 = vadd.f32 0.0, %v548
      %v550 = vpop.f32.mrf.mxu0
      %v551 = vadd.f32 0.0, %v550
      %v552 = vpop.f32.mrf.mxu0
      %v553 = vpop.f32.mrf.mxu0
      %554 = vdwg.mxu0
      %v558 = vunpack.c.l.b16 %v476
      %v559 = vunpack.c.l.b16 %v477
      %v560 = vunpack.c.l.b16 %v478
      %v561 = vpack.c.b16 %v559, %v558
      %v562 = vpack.c.b16 %v560, %v560
      %v564 = vsel %vm490, %v561, 0
      %v567 = vsel %vm490, %v562, 0
      %v570 = vsel %vm497, %v464, 0
      %v573 = vsel %vm497, %v465, 0
      %575 = vmatprep.subr.bf16.mxu0 0
      %576 = vmatpush1.bf16.msra.mxu0 0
      %577 = vmatprep.subr.bf16.mxu0 0
      %578 = vmatpush1.bf16.msra.mxu0 0
      %579 = vmatprep.subr.bf16.mxu0 0
      %580 = vmatpush1.bf16.msra.mxu0 0
      %581 = vmatprep.subr.bf16.mxu0 0
      %582 = vmatpush1.bf16.msra.mxu0 0
      %583 = vmatprep.subr.bf16.mxu0 0
      %584 = vmatpush1.bf16.msra.mxu0 0
      %585 = vmatprep.subr.bf16.mxu0 0
      %586 = vmatpush1.bf16.msra.mxu0 0
      %587 = vmatprep.subr.bf16.mxu0 %v573
      %588 = vmatpush1.bf16.msra.mxu0 %v570
      %589 = vmatprep.subr.bf16.mxu0 %v463
      %590 = vmatpush1.bf16.msra.mxu0 %v462
      %591 = vmatprep.subr.bf16.mxu0 0
      %592 = vmatpush2.bf16.msra.mxu0 0
      %593 = vmatprep.subr.bf16.mxu0 0
      %594 = vmatpush2.bf16.msra.mxu0 0
      %595 = vmatprep.subr.bf16.mxu0 0
      %596 = vmatpush2.bf16.msra.mxu0 0
      %597 = vmatprep.subr.bf16.mxu0 0
      %598 = vmatpush2.bf16.msra.mxu0 0
      %599 = vmatprep.subr.bf16.mxu0 0
      %600 = vmatpush2.bf16.msra.mxu0 0
      %601 = vmatprep.subr.bf16.mxu0 0
      %602 = vmatpush2.bf16.msra.mxu0 0
      %603 = vmatprep.subr.bf16.mxu0 0
      %604 = vmatpush2.bf16.msra.mxu0 0
      %605 = vmatprep.subr.bf16.mxu0 0
      %606 = vmatpush2.bf16.msra.mxu0 0
      %607 = vmatprep.mubr.bf16.mxu0 0
      %608 = vmatmul.mubr.bf16.gmra.mxu0 %v564
      %v609 = vpop.f32.mrf.mxu0
      %v610 = vadd.f32 %v539, %v609
      %v611 = vpop.f32.mrf.mxu0
      %v612 = vadd.f32 %v541, %v611
      %v613 = vpop.f32.mrf.mxu0
      %v614 = vadd.f32 %v543, %v613
      %v615 = vpop.f32.mrf.mxu0
      %v616 = vadd.f32 %v545, %v615
      %617 = vmatprep.mubr.bf16.mxu0 0
      %618 = vmatmul.mubr.bf16.gmra.mxu0 %v567
      %v619 = vpop.f32.mrf.mxu0
      %v620 = vadd.f32 %v549, %v619
      %v621 = vpop.f32.mrf.mxu0
      %v622 = vadd.f32 %v551, %v621
      %v623 = vpop.f32.mrf.mxu0
      %v624 = vpop.f32.mrf.mxu0
      %625 = vdwg.mxu0
      %v626 = vld [vmem:[%s2] sm:$0xff]
      %v627 = vld [vmem:[%s2 + $0x8] sm:$0xff]
      %v628 = vld [vmem:[%s2 + $0x10] sm:$0xf]
      %630 = vset.pattern.permute.xlu0 0
      %631 = vperm.xlu0 %630, %v626
      %v632 = vpop.permute.xlu0 %631
      %635 = vset.pattern.permute.xlu0 0
      %636 = vperm.xlu0 %635, %v627
      %v637 = vpop.permute.xlu0 %636
      %640 = vset.pattern.permute.xlu0 0
      %641 = vperm.xlu0 %640, %v628
      %v642 = vpop.permute.xlu0 %641
      %v644 = vadd.f32 %v610, %v632
      %v645 = vadd.f32 %v612, %v632
      %v646 = vadd.f32 %v614, %v637
      %v647 = vadd.f32 %v616, %v637
      %v648 = vadd.f32 %v620, %v642
      %v649 = vadd.f32 %v622, %v642
      %650 = vst [vmem:[%s433] sm:$0xff] %v644
      %651 = vst [vmem:[%s433 + $0x8] sm:$0xff] %v645
      %652 = vst [vmem:[%s433 + $0x10] sm:$0xff] %v646
      %653 = vst [vmem:[%s433 + $0x18] sm:$0xff] %v647
      %654 = vst [vmem:[%s433 + $0x20] sm:$0xf] %v648
      %655 = vst [vmem:[%s433 + $0x28] sm:$0xf] %v649
      %v656 = vld [vmem:[%s3] sm:$0xf]
      %v657 = vld [vmem:[%s3 + $0x4] sm:$0xf]
      %v658 = vld [vmem:[%s3 + $0x8] sm:$0x3]
      %v659 = vld [vmem:[%s4] sm:$0xff]
      %v660 = vld [vmem:[%s4 + $0x8] sm:$0xff]
      %v661 = vld [vmem:[%s4 + $0x10] sm:$0xf]
      %663 = vset.pattern.permute.xlu0 0
      %664 = vperm.xlu0 %663, %v659
      %v665 = vpop.permute.xlu0 %664
      %668 = vset.pattern.permute.xlu0 0
      %669 = vperm.xlu0 %668, %v660
      %v670 = vpop.permute.xlu0 %669
      %673 = vset.pattern.permute.xlu0 0
      %674 = vperm.xlu0 %673, %v661
      %v675 = vpop.permute.xlu0 %674
      %v680 = vunpack.c.l.b16 %v656
      %v681 = vunpack.c.l.b16 %v657
      %v682 = vunpack.c.l.b16 %v658
      %v683 = vpack.c.b16 %v681, %v680
      %v684 = vpack.c.b16 %v682, %v682
      %v686 = vsel %vm490, %v683, 0
      %v689 = vsel %vm490, %v684, 0
      %691 = vmatprep.subr.bf16.mxu0 0
      %692 = vmatpush1.bf16.msra.mxu0 0
      %693 = vmatprep.subr.bf16.mxu0 0
      %694 = vmatpush1.bf16.msra.mxu0 0
      %695 = vmatprep.subr.bf16.mxu0 0
      %696 = vmatpush1.bf16.msra.mxu0 0
      %697 = vmatprep.subr.bf16.mxu0 0
      %698 = vmatpush1.bf16.msra.mxu0 0
      %699 = vmatprep.subr.bf16.mxu0 0
      %700 = vmatpush1.bf16.msra.mxu0 0
      %701 = vmatprep.subr.bf16.mxu0 0
      %702 = vmatpush1.bf16.msra.mxu0 0
      %703 = vmatprep.subr.bf16.mxu0 %v573
      %704 = vmatpush1.bf16.msra.mxu0 %v570
      %705 = vmatprep.subr.bf16.mxu0 %v463
      %706 = vmatpush1.bf16.msra.mxu0 %v462
      %707 = vmatprep.subr.bf16.mxu0 0
      %708 = vmatpush2.bf16.msra.mxu0 0
      %709 = vmatprep.subr.bf16.mxu0 0
      %710 = vmatpush2.bf16.msra.mxu0 0
      %711 = vmatprep.subr.bf16.mxu0 0
      %712 = vmatpush2.bf16.msra.mxu0 0
      %713 = vmatprep.subr.bf16.mxu0 0
      %714 = vmatpush2.bf16.msra.mxu0 0
      %715 = vmatprep.subr.bf16.mxu0 0
      %716 = vmatpush2.bf16.msra.mxu0 0
      %717 = vmatprep.subr.bf16.mxu0 0
      %718 = vmatpush2.bf16.msra.mxu0 0
      %719 = vmatprep.subr.bf16.mxu0 0
      %720 = vmatpush2.bf16.msra.mxu0 0
      %721 = vmatprep.subr.bf16.mxu0 0
      %722 = vmatpush2.bf16.msra.mxu0 0
      %723 = vmatprep.mubr.bf16.mxu0 0
      %724 = vmatmul.mubr.bf16.gmra.mxu0 %v686
      %v725 = vpop.f32.mrf.mxu0
      %v726 = vadd.f32 %v665, %v725
      %v727 = vpop.f32.mrf.mxu0
      %v728 = vadd.f32 %v665, %v727
      %v729 = vpop.f32.mrf.mxu0
      %v730 = vadd.f32 %v670, %v729
      %v731 = vpop.f32.mrf.mxu0
      %v732 = vadd.f32 %v670, %v731
      %733 = vmatprep.mubr.bf16.mxu0 0
      %734 = vmatmul.mubr.bf16.gmra.mxu0 %v689
      %v735 = vpop.f32.mrf.mxu0
      %v736 = vadd.f32 %v675, %v735
      %v737 = vpop.f32.mrf.mxu0
      %v738 = vadd.f32 %v675, %v737
      %v739 = vpop.f32.mrf.mxu0
      %v740 = vpop.f32.mrf.mxu0
      %741 = vdwg.mxu0
      %742 = vst [vmem:[%s443] sm:$0xff] %v726
      %743 = vst [vmem:[%s443 + $0x8] sm:$0xff] %v728
      %744 = vst [vmem:[%s443 + $0x10] sm:$0xff] %v730
      %745 = vst [vmem:[%s443 + $0x18] sm:$0xff] %v732
      %746 = vst [vmem:[%s443 + $0x20] sm:$0xf] %v736
      %747 = vst [vmem:[%s443 + $0x28] sm:$0xf] %v738
      %v748 = vld [vmem:[%s3] sm:$0xf]
      %v749 = vld [vmem:[%s3 + $0x4] sm:$0xf]
      %v750 = vld [vmem:[%s3 + $0x8] sm:$0x3]
      %v751 = vld [vmem:[%s4] sm:$0xff]
      %v752 = vld [vmem:[%s4 + $0x8] sm:$0xff]
      %v753 = vld [vmem:[%s4 + $0x10] sm:$0xf]
      %755 = vset.pattern.permute.xlu0 0
      %756 = vperm.xlu0 %755, %v751
      %v757 = vpop.permute.xlu0 %756
      %760 = vset.pattern.permute.xlu0 0
      %761 = vperm.xlu0 %760, %v752
      %v762 = vpop.permute.xlu0 %761
      %765 = vset.pattern.permute.xlu0 0
      %766 = vperm.xlu0 %765, %v753
      %v767 = vpop.permute.xlu0 %766
      %v772 = vunpack.c.l.b16 %v748
      %v773 = vunpack.c.l.b16 %v749
      %v774 = vunpack.c.l.b16 %v750
      %v775 = vpack.c.b16 %v773, %v772
      %v776 = vpack.c.b16 %v774, %v774
      %v778 = vsel %vm490, %v775, 0
      %v781 = vsel %vm490, %v776, 0
      %783 = vmatprep.subr.bf16.mxu0 0
      %784 = vmatpush1.bf16.msra.mxu0 0
      %785 = vmatprep.subr.bf16.mxu0 0
      %786 = vmatpush1.bf16.msra.mxu0 0
      %787 = vmatprep.subr.bf16.mxu0 0
      %788 = vmatpush1.bf16.msra.mxu0 0
      %789 = vmatprep.subr.bf16.mxu0 0
      %790 = vmatpush1.bf16.msra.mxu0 0
      %791 = vmatprep.subr.bf16.mxu0 0
      %792 = vmatpush1.bf16.msra.mxu0 0
      %793 = vmatprep.subr.bf16.mxu0 0
      %794 = vmatpush1.bf16.msra.mxu0 0
      %795 = vmatprep.subr.bf16.mxu0 %v502
      %796 = vmatpush1.bf16.msra.mxu0 %v499
      %797 = vmatprep.subr.bf16.mxu0 %v473
      %798 = vmatpush1.bf16.msra.mxu0 %v472
      %799 = vmatprep.subr.bf16.mxu0 0
      %800 = vmatpush2.bf16.msra.mxu0 0
      %801 = vmatprep.subr.bf16.mxu0 0
      %802 = vmatpush2.bf16.msra.mxu0 0
      %803 = vmatprep.subr.bf16.mxu0 0
      %804 = vmatpush2.bf16.msra.mxu0 0
      %805 = vmatprep.subr.bf16.mxu0 0
      %806 = vmatpush2.bf16.msra.mxu0 0
      %807 = vmatprep.subr.bf16.mxu0 0
      %808 = vmatpush2.bf16.msra.mxu0 0
      %809 = vmatprep.subr.bf16.mxu0 0
      %810 = vmatpush2.bf16.msra.mxu0 0
      %811 = vmatprep.subr.bf16.mxu0 0
      %812 = vmatpush2.bf16.msra.mxu0 0
      %813 = vmatprep.subr.bf16.mxu0 0
      %814 = vmatpush2.bf16.msra.mxu0 0
      %815 = vmatprep.mubr.bf16.mxu0 0
      %816 = vmatmul.mubr.bf16.gmra.mxu0 %v778
      %v817 = vpop.f32.mrf.mxu0
      %v818 = vadd.f32 %v757, %v817
      %v819 = vpop.f32.mrf.mxu0
      %v820 = vadd.f32 %v757, %v819
      %v821 = vpop.f32.mrf.mxu0
      %v822 = vadd.f32 %v762, %v821
      %v823 = vpop.f32.mrf.mxu0
      %v824 = vadd.f32 %v762, %v823
      %825 = vmatprep.mubr.bf16.mxu0 0
      %826 = vmatmul.mubr.bf16.gmra.mxu0 %v781
      %v827 = vpop.f32.mrf.mxu0
      %v828 = vadd.f32 %v767, %v827
      %v829 = vpop.f32.mrf.mxu0
      %v830 = vadd.f32 %v767, %v829
      %v831 = vpop.f32.mrf.mxu0
      %v832 = vpop.f32.mrf.mxu0
      %833 = vdwg.mxu0
      %834 = vst [vmem:[%s453] sm:$0xff] %v818
      %835 = vst [vmem:[%s453 + $0x8] sm:$0xff] %v820
      %836 = vst [vmem:[%s453 + $0x10] sm:$0xff] %v822
      %837 = vst [vmem:[%s453 + $0x18] sm:$0xff] %v824
      %838 = vst [vmem:[%s453 + $0x20] sm:$0xf] %v828
      %839 = vst [vmem:[%s453 + $0x28] sm:$0xf] %v830
      %s840 = smul.u32 2, %s26
      %p841 = scmp.lt.s32.totalorder %s25, 1
      %s842 = scalar_select %p841, %s25, 1
      %p843 = scmp.lt.s32.totalorder %s840, 1
      %s844 = scalar_select %p843, %s840, 1
      %s845 = smul.addr %s842, 6
      %s846 = sadd.s32 %s844, %s845
      %s847 = smul.addr %s846, 8
      %s848 = scalar_lea.vmem %s7, %s847
      %s849 = smul.u32 2, %s26
      %p850 = scmp.lt.s32.totalorder %s25, 1
      %s851 = scalar_select %p850, %s25, 1
      %p852 = scmp.lt.s32.totalorder %s849, 1
      %s853 = scalar_select %p852, %s849, 1
      %s854 = smul.addr %s851, 6
      %s855 = sadd.s32 %s853, %s854
      %s856 = smul.addr %s855, 8
      %s857 = scalar_lea.vmem %s8, %s856
      %s858 = smul.u32 2, %s26
      %p859 = scmp.lt.s32.totalorder %s25, 1
      %s860 = scalar_select %p859, %s25, 1
      %p861 = scmp.lt.s32.totalorder %s858, 1
      %s862 = scalar_select %p861, %s858, 1
      %s863 = smul.addr %s860, 6
      %s864 = sadd.s32 %s862, %s863
      %s865 = smul.addr %s864, 8
      %s866 = scalar_lea.vmem %s9, %s865
      // Predicated region
      $region49: #{ifin_forward.64} parent=47 // pred_check
        %p867 = pneg %p214
      $region50: #{ifin_forward.64} parent=47 // pred_check_branch
        %869 = sbr.rel (%p867) target = $region52
      $region51: #{ifin_forward.64} parent=47 // pred_region
        %s870 = smul.u32 2, %s26
      $region52: #{ifin_forward.64} parent=47 // pred_fallthru
        _
      // Predicated region
      $region53: #{ifin_forward.64} parent=47 // pred_check
        %p871 = pneg %p242
      $region54: #{ifin_forward.64} parent=47 // pred_check_branch
        %873 = sbr.rel (%p871) target = $region56
      $region55: #{ifin_forward.64} parent=47 // pred_region
        %s874 = smul.u32 2, %s26
      $region56: #{ifin_forward.64} parent=47 // pred_fallthru
        _
      // Predicated region
      $region57: #{ifin_forward.64} parent=47 // pred_check
        %p875 = pneg %p270
      $region58: #{ifin_forward.64} parent=47 // pred_check_branch
        %877 = sbr.rel (%p875) target = $region60
      $region59: #{ifin_forward.64} parent=47 // pred_region
        %s878 = smul.u32 2, %s26
      $region60: #{ifin_forward.64} parent=47 // pred_fallthru
        _
    $region48: #{ifin_forward.64} parent=5 // pred_fallthru
      _
    %p879 = scmp.le.s32.totalorder 2, %s16
    // Predicated region
    $region61: #{ifin_forward.64} parent=5 // pred_check
      %p880 = pneg %p879
    $region62: #{ifin_forward.64} parent=5 // pred_check_branch
      %882 = sbr.rel (%p880) target = $region64
    $region63: #{ifin_forward.64} parent=5 // pred_region
      %s883 = ssub.s32 %s16, 2
      // Predicated region
      $region65: #{ifin_forward.64} parent=63 // pred_check
        %p884 = pneg %p220
      $region66: #{ifin_forward.64} parent=63 // pred_check_branch
        %886 = sbr.rel (%p884) target = $region68
      $region67: #{ifin_forward.64} parent=63 // pred_region
        %s887 = smul.u32 2, %s28
        %p888 = scmp.lt.s32.totalorder %s27, 1
        %s889 = scalar_select %p888, %s27, 1
        %p890 = scmp.lt.s32.totalorder %s887, 1
        %s891 = scalar_select %p890, %s887, 1
        %s892 = smul.addr %s889, 6
        %s893 = sadd.s32 %s891, %s892
        %s894 = smul.addr %s893, 8
        %s895 = scalar_lea.vmem %s7, %s894
      $region68: #{ifin_forward.64} parent=63 // pred_fallthru
        _
      // Predicated region
      $region69: #{ifin_forward.64} parent=63 // pred_check
        %p896 = pneg %p248
      $region70: #{ifin_forward.64} parent=63 // pred_check_branch
        %898 = sbr.rel (%p896) target = $region72
      $region71: #{ifin_forward.64} parent=63 // pred_region
        %s899 = smul.u32 2, %s28
        %p900 = scmp.lt.s32.totalorder %s27, 1
        %s901 = scalar_select %p900, %s27, 1
        %p902 = scmp.lt.s32.totalorder %s899, 1
        %s903 = scalar_select %p902, %s899, 1
        %s904 = smul.addr %s901, 6
        %s905 = sadd.s32 %s903, %s904
        %s906 = smul.addr %s905, 8
        %s907 = scalar_lea.vmem %s8, %s906
      $region72: #{ifin_forward.64} parent=63 // pred_fallthru
        _
      // Predicated region
      $region73: #{ifin_forward.64} parent=63 // pred_check
        %p908 = pneg %p276
      $region74: #{ifin_forward.64} parent=63 // pred_check_branch
        %910 = sbr.rel (%p908) target = $region76
      $region75: #{ifin_forward.64} parent=63 // pred_region
        %s911 = smul.u32 2, %s28
        %p912 = scmp.lt.s32.totalorder %s27, 1
        %s913 = scalar_select %p912, %s27, 1
        %p914 = scmp.lt.s32.totalorder %s911, 1
        %s915 = scalar_select %p914, %s911, 1
        %s916 = smul.addr %s913, 6
        %s917 = sadd.s32 %s915, %s916
        %s918 = smul.addr %s917, 8
        %s919 = scalar_lea.vmem %s9, %s918
      $region76: #{ifin_forward.64} parent=63 // pred_fallthru
        _
    $region64: #{ifin_forward.64} parent=5 // pred_fallthru
      _
  $region6: #{ifin_forward.64} parent=0 // loop_footer
    %s20 = sadd.s32 1, %s16
  $region7: #{ifin_forward.64} parent=0 // loop_footer_branch
    %15 = sbr.rel target = $region3
  $region8: #{ifin_forward.64} parent=0 // loop_exit
    _

// kernel: ifin_forward.63
$region0: #{ifin_forward.63}
  #allocation0 [shape = 'u32[]', space=smem, size = 0x4, offset = 0x4, fixed_abs, tag = 'smem constant byte address 0x4 - core index']
  #allocation1 [shape = 'u32[144,128]{1,0:T(1,128)}', space=vmem, size = 0x12000, scoped, tag = 'internal scratch']
  %s0 = inlined_call_operand.vmem [shape: bf16[20,180], index: 0, kind: input, shape index: {}]
  %s1 = inlined_call_operand.vmem [shape: f32[20,1], index: 1, kind: input, shape index: {}]
  %s2 = inlined_call_operand.vmem [shape: bf16[20,180], index: 2, kind: input, shape index: {}]
  %s3 = inlined_call_operand.vmem [shape: f32[20,1], index: 3, kind: input, shape index: {}]
  %s4 = inlined_call_operand.vmem [shape: bf16[2,180,256], index: 4, kind: input, shape index: {}]
  %s5 = inlined_call_operand.vmem [shape: bf16[2,180,256], index: 5, kind: input, shape index: {}]
  %s6 = inlined_call_operand.vmem [shape: f32[2,20,256], index: 6, kind: input, shape index: {}]
  %s7 = inlined_call_operand.vmem [shape: f32[2,20,256], index: 7, kind: output, shape index: {}]
  %s8 = sld [smem:[#allocation0]]
  $region61: #{ifin_forward.63} parent=0
    _
  %s10 = ssub.s32 1, %s8
  %s11 = scalar_select 0, %s10, %s8
  loop: start=0, step=1, limit=4
  $region2: #{ifin_forward.63} parent=0 // loop_pre_header
    _
  $region3: #{ifin_forward.63} parent=0 // loop_header
    %s13 = sphi 0, %s17
    %p14 = scmp.ge.s32.totalorder %s13, 4
    %s20 = sphi 0, %s32
    %s21 = sphi 0, %s28
    %s22 = sphi 0, %s20
    %s23 = sphi 0, %s21
    %s24 = sphi 0, %s22
    %s25 = sphi 0, %s23
    %s33 = sphi 0, %s33
    %s35 = sphi 0, %s33
    %s36 = sphi 0, %s35
    %s50 = sphi 0, %s36
    %s54 = sphi 0, %s54
    %s56 = sphi 0, %s54
    %s57 = sphi 0, %s56
    %s71 = sphi 0, %s57
    %s75 = sphi 0, %s75
    %s77 = sphi 0, %s75
    %s78 = sphi 0, %s77
    %s92 = sphi 0, %s78
    %s96 = sphi 0, %s96
    %s98 = sphi 0, %s96
    %s99 = sphi 0, %s98
    %s113 = sphi 0, %s99
    %s121 = sphi 0, %s123
    %s124 = sphi 0, %s121
    %s125 = sphi 0, %s124
    %s141 = sphi 0, %s125
    %s149 = sphi 0, %s151
    %s152 = sphi 0, %s149
    %s153 = sphi 0, %s152
    %s169 = sphi 0, %s153
    %s177 = sphi 0, %s179
    %s180 = sphi 0, %s177
    %s181 = sphi 0, %s180
    %s197 = sphi 0, %s181
    %s205 = sphi 0, %s207
    %s208 = sphi 0, %s205
    %s209 = sphi 0, %s208
    %s225 = sphi 0, %s209
  $region4: #{ifin_forward.63} parent=0 // loop_header_branch
    %16 = sbr.rel (%p14) target = $region8
  $region5: #{ifin_forward.63} parent=0 // loop_body
    %s18 = ssub.s32 %s13, 1
    %s19 = ssub.s32 %s13, 2
    %s26 = sadd.s32 1, %s21
    %p27 = scmp.ge.s32.totalorder %s26, 1
    %s28 = scalar_select %p27, 0, %s26
    %s29 = sadd.s32 1, %s20
    %s30 = scalar_select %p27, %s29, %s20
    %p31 = scmp.ge.s32.totalorder %s30, 2
    %s32 = scalar_select %p31, 0, %s30
    %s34 = sadd.s32 %s33, 1
    %p37 = scmp.eq.s32.totalorder %s13, 1
    %p38 = scmp.ne.s32.totalorder %s33, %s35
    %p39 = scmp.eq.s32.totalorder %s13, 0
    %p40 = por %p38, %p39
    %p41 = scmp.ne.s32.totalorder %s33, %s35
    %p42 = scmp.eq.s32.totalorder %s18, 1
    %p43 = por %p41, %p42
    %p44 = scmp.ne.s32.totalorder %s35, %s36
    %p45 = scmp.eq.s32.totalorder %s18, 0
    %p46 = por %p44, %p45
    %p47 = scmp.ne.s32.totalorder %s35, %s36
    %p48 = scmp.eq.s32.totalorder %s19, 1
    %p49 = por %p47, %p48
    %p51 = scmp.ne.s32.totalorder %s36, %s50
    %p52 = scmp.eq.s32.totalorder %s19, 0
    %p53 = por %p51, %p52
    %s55 = sadd.s32 %s54, 1
    %p58 = scmp.eq.s32.totalorder %s13, 1
    %p59 = scmp.ne.s32.totalorder %s54, %s56
    %p60 = scmp.eq.s32.totalorder %s13, 0
    %p61 = por %p59, %p60
    %p62 = scmp.ne.s32.totalorder %s54, %s56
    %p63 = scmp.eq.s32.totalorder %s18, 1
    %p64 = por %p62, %p63
    %p65 = scmp.ne.s32.totalorder %s56, %s57
    %p66 = scmp.eq.s32.totalorder %s18, 0
    %p67 = por %p65, %p66
    %p68 = scmp.ne.s32.totalorder %s56, %s57
    %p69 = scmp.eq.s32.totalorder %s19, 1
    %p70 = por %p68, %p69
    %p72 = scmp.ne.s32.totalorder %s57, %s71
    %p73 = scmp.eq.s32.totalorder %s19, 0
    %p74 = por %p72, %p73
    %s76 = sadd.s32 %s75, 1
    %p79 = scmp.eq.s32.totalorder %s13, 1
    %p80 = scmp.ne.s32.totalorder %s75, %s77
    %p81 = scmp.eq.s32.totalorder %s13, 0
    %p82 = por %p80, %p81
    %p83 = scmp.ne.s32.totalorder %s75, %s77
    %p84 = scmp.eq.s32.totalorder %s18, 1
    %p85 = por %p83, %p84
    %p86 = scmp.ne.s32.totalorder %s77, %s78
    %p87 = scmp.eq.s32.totalorder %s18, 0
    %p88 = por %p86, %p87
    %p89 = scmp.ne.s32.totalorder %s77, %s78
    %p90 = scmp.eq.s32.totalorder %s19, 1
    %p91 = por %p89, %p90
    %p93 = scmp.ne.s32.totalorder %s78, %s92
    %p94 = scmp.eq.s32.totalorder %s19, 0
    %p95 = por %p93, %p94
    %s97 = sadd.s32 %s96, 1
    %p100 = scmp.eq.s32.totalorder %s13, 1
    %p101 = scmp.ne.s32.totalorder %s96, %s98
    %p102 = scmp.eq.s32.totalorder %s13, 0
    %p103 = por %p101, %p102
    %p104 = scmp.ne.s32.totalorder %s96, %s98
    %p105 = scmp.eq.s32.totalorder %s18, 1
    %p106 = por %p104, %p105
    %p107 = scmp.ne.s32.totalorder %s98, %s99
    %p108 = scmp.eq.s32.totalorder %s18, 0
    %p109 = por %p107, %p108
    %p110 = scmp.ne.s32.totalorder %s98, %s99
    %p111 = scmp.eq.s32.totalorder %s19, 1
    %p112 = por %p110, %p111
    %p114 = scmp.ne.s32.totalorder %s99, %s113
    %p115 = scmp.eq.s32.totalorder %s19, 0
    %p116 = por %p114, %p115
    %s117 = ssub.s32 %s20, %s32
    %s118 = ssub.s32 %s21, %s28
    %s119 = sor.u32 %s117, %s118
    %p120 = scmp.eq.s32.totalorder %s119, 0
    %s122 = sadd.s32 %s121, 1
    %s123 = scalar_select %p120, %s121, %s122
    %p126 = pneg %p120
    %p127 = scmp.eq.s32.totalorder %s13, 1
    %p128 = por %p126, %p127
    %p129 = scmp.ne.s32.totalorder %s121, %s124
    %p130 = scmp.eq.s32.totalorder %s13, 0
    %p131 = por %p129, %p130
    %p132 = scmp.ne.s32.totalorder %s121, %s124
    %p133 = scmp.eq.s32.totalorder %s18, 1
    %p134 = por %p132, %p133
    %p135 = scmp.ne.s32.totalorder %s124, %s125
    %p136 = scmp.eq.s32.totalorder %s18, 0
    %p137 = por %p135, %p136
    %p138 = scmp.ne.s32.totalorder %s124, %s125
    %p139 = scmp.eq.s32.totalorder %s19, 1
    %p140 = por %p138, %p139
    %p142 = scmp.ne.s32.totalorder %s125, %s141
    %p143 = scmp.eq.s32.totalorder %s19, 0
    %p144 = por %p142, %p143
    %s145 = ssub.s32 %s20, %s32
    %s146 = ssub.s32 %s21, %s28
    %s147 = sor.u32 %s145, %s146
    %p148 = scmp.eq.s32.totalorder %s147, 0
    %s150 = sadd.s32 %s149, 1
    %s151 = scalar_select %p148, %s149, %s150
    %p154 = pneg %p148
    %p155 = scmp.eq.s32.totalorder %s13, 1
    %p156 = por %p154, %p155
    %p157 = scmp.ne.s32.totalorder %s149, %s152
    %p158 = scmp.eq.s32.totalorder %s13, 0
    %p159 = por %p157, %p158
    %p160 = scmp.ne.s32.totalorder %s149, %s152
    %p161 = scmp.eq.s32.totalorder %s18, 1
    %p162 = por %p160, %p161
    %p163 = scmp.ne.s32.totalorder %s152, %s153
    %p164 = scmp.eq.s32.totalorder %s18, 0
    %p165 = por %p163, %p164
    %p166 = scmp.ne.s32.totalorder %s152, %s153
    %p167 = scmp.eq.s32.totalorder %s19, 1
    %p168 = por %p166, %p167
    %p170 = scmp.ne.s32.totalorder %s153, %s169
    %p171 = scmp.eq.s32.totalorder %s19, 0
    %p172 = por %p170, %p171
    %s173 = ssub.s32 %s20, %s32
    %s174 = ssub.s32 %s21, %s28
    %s175 = sor.u32 %s173, %s174
    %p176 = scmp.eq.s32.totalorder %s175, 0
    %s178 = sadd.s32 %s177, 1
    %s179 = scalar_select %p176, %s177, %s178
    %p182 = pneg %p176
    %p183 = scmp.eq.s32.totalorder %s13, 1
    %p184 = por %p182, %p183
    %p185 = scmp.ne.s32.totalorder %s177, %s180
    %p186 = scmp.eq.s32.totalorder %s13, 0
    %p187 = por %p185, %p186
    %p188 = scmp.ne.s32.totalorder %s177, %s180
    %p189 = scmp.eq.s32.totalorder %s18, 1
    %p190 = por %p188, %p189
    %p191 = scmp.ne.s32.totalorder %s180, %s181
    %p192 = scmp.eq.s32.totalorder %s18, 0
    %p193 = por %p191, %p192
    %p194 = scmp.ne.s32.totalorder %s180, %s181
    %p195 = scmp.eq.s32.totalorder %s19, 1
    %p196 = por %p194, %p195
    %p198 = scmp.ne.s32.totalorder %s181, %s197
    %p199 = scmp.eq.s32.totalorder %s19, 0
    %p200 = por %p198, %p199
    %s201 = ssub.s32 %s20, %s32
    %s202 = ssub.s32 %s21, %s28
    %s203 = sor.u32 %s201, %s202
    %p204 = scmp.eq.s32.totalorder %s203, 0
    %s206 = sadd.s32 %s205, 1
    %s207 = scalar_select %p204, %s205, %s206
    %p210 = pneg %p204
    %p211 = scmp.eq.s32.totalorder %s13, 1
    %p212 = por %p210, %p211
    %p213 = scmp.ne.s32.totalorder %s205, %s208
    %p214 = scmp.eq.s32.totalorder %s13, 0
    %p215 = por %p213, %p214
    %p216 = scmp.ne.s32.totalorder %s205, %s208
    %p217 = scmp.eq.s32.totalorder %s18, 1
    %p218 = por %p216, %p217
    %p219 = scmp.ne.s32.totalorder %s208, %s209
    %p220 = scmp.eq.s32.totalorder %s18, 0
    %p221 = por %p219, %p220
    %p222 = scmp.ne.s32.totalorder %s208, %s209
    %p223 = scmp.eq.s32.totalorder %s19, 1
    %p224 = por %p222, %p223
    %p226 = scmp.ne.s32.totalorder %s209, %s225
    %p227 = scmp.eq.s32.totalorder %s19, 0
    %p228 = por %p226, %p227
    %p229 = scmp.le.s32.totalorder 1, %s13
    %p230 = scmp.lt.s32.totalorder %s13, 3
    %p231 = pnand %p229, %p230
    %p232 = pneg %p231
    // Predicated region
    $region9: #{ifin_forward.63} parent=5 // pred_check
      _
    $region10: #{ifin_forward.63} parent=5 // pred_check_branch
      %234 = sbr.rel (%p231) target = $region12
    $region11: #{ifin_forward.63} parent=5 // pred_region
      %s235 = ssub.s32 %s13, 1
      // Predicated region
      $region13: #{ifin_forward.63} parent=11 // pred_check
        %p236 = pneg %p46
      $region14: #{ifin_forward.63} parent=11 // pred_check_branch
        %238 = sbr.rel (%p236) target = $region16
      $region15: #{ifin_forward.63} parent=11 // pred_region
        _
      $region16: #{ifin_forward.63} parent=11 // pred_fallthru
        _
      // Predicated region
      $region17: #{ifin_forward.63} parent=11 // pred_check
        %p239 = pneg %p67
      $region18: #{ifin_forward.63} parent=11 // pred_check_branch
        %241 = sbr.rel (%p239) target = $region20
      $region19: #{ifin_forward.63} parent=11 // pred_region
        _
      $region20: #{ifin_forward.63} parent=11 // pred_fallthru
        _
      // Predicated region
      $region21: #{ifin_forward.63} parent=11 // pred_check
        %p242 = pneg %p88
      $region22: #{ifin_forward.63} parent=11 // pred_check_branch
        %244 = sbr.rel (%p242) target = $region24
      $region23: #{ifin_forward.63} parent=11 // pred_region
        _
      $region24: #{ifin_forward.63} parent=11 // pred_fallthru
        _
      // Predicated region
      $region25: #{ifin_forward.63} parent=11 // pred_check
        %p245 = pneg %p109
      $region26: #{ifin_forward.63} parent=11 // pred_check_branch
        %247 = sbr.rel (%p245) target = $region28
      $region27: #{ifin_forward.63} parent=11 // pred_region
        _
      $region28: #{ifin_forward.63} parent=11 // pred_fallthru
        _
    $region12: #{ifin_forward.63} parent=5 // pred_fallthru
      _
    %p248 = scmp.lt.s32.totalorder %s13, 2
    // Predicated region
    $region29: #{ifin_forward.63} parent=5 // pred_check
      %p249 = pneg %p248
    $region30: #{ifin_forward.63} parent=5 // pred_check_branch
      %251 = sbr.rel (%p249) target = $region32
    $region31: #{ifin_forward.63} parent=5 // pred_region
      // Predicated region
      $region33: #{ifin_forward.63} parent=31 // pred_check
        %p252 = pneg %p131
      $region34: #{ifin_forward.63} parent=31 // pred_check_branch
        %254 = sbr.rel (%p252) target = $region36
      $region35: #{ifin_forward.63} parent=31 // pred_region
        %s255 = smul.u32 2, %s21
        %p256 = scmp.lt.s32.totalorder %s20, 1
        %s257 = scalar_select %p256, %s20, 1
        %p258 = scmp.lt.s32.totalorder %s255, 1
        %s259 = scalar_select %p258, %s255, 1
        %s260 = smul.addr %s257, 46
        %s261 = sadd.s32 %s259, %s260
        %s262 = smul.addr %s261, 4
        %s263 = scalar_lea.vmem %s4, %s262
        %s264 = smul.u32 2, %s21
      $region36: #{ifin_forward.63} parent=31 // pred_fallthru
        _
      // Predicated region
      $region37: #{ifin_forward.63} parent=31 // pred_check
        %p265 = pneg %p159
      $region38: #{ifin_forward.63} parent=31 // pred_check_branch
        %267 = sbr.rel (%p265) target = $region40
      $region39: #{ifin_forward.63} parent=31 // pred_region
        %s268 = smul.u32 2, %s21
        %p269 = scmp.lt.s32.totalorder %s20, 1
        %s270 = scalar_select %p269, %s20, 1
        %p271 = scmp.lt.s32.totalorder %s268, 1
        %s272 = scalar_select %p271, %s268, 1
        %s273 = smul.addr %s270, 46
        %s274 = sadd.s32 %s272, %s273
        %s275 = smul.addr %s274, 4
        %s276 = scalar_lea.vmem %s5, %s275
        %s277 = smul.u32 2, %s21
      $region40: #{ifin_forward.63} parent=31 // pred_fallthru
        _
      // Predicated region
      $region41: #{ifin_forward.63} parent=31 // pred_check
        %p278 = pneg %p187
      $region42: #{ifin_forward.63} parent=31 // pred_check_branch
        %280 = sbr.rel (%p278) target = $region44
      $region43: #{ifin_forward.63} parent=31 // pred_region
        %s281 = smul.u32 2, %s21
        %p282 = scmp.lt.s32.totalorder %s20, 1
        %s283 = scalar_select %p282, %s20, 1
        %p284 = scmp.lt.s32.totalorder %s281, 1
        %s285 = scalar_select %p284, %s281, 1
        %s286 = smul.addr %s283, 6
        %s287 = sadd.s32 %s285, %s286
        %s288 = smul.addr %s287, 8
        %s289 = scalar_lea.vmem %s6, %s288
        %s290 = smul.u32 2, %s21
      $region44: #{ifin_forward.63} parent=31 // pred_fallthru
        _
    $region32: #{ifin_forward.63} parent=5 // pred_fallthru
      _
    %p291 = scmp.le.s32.totalorder 1, %s13
    %p292 = scmp.lt.s32.totalorder %s13, 3
    %p293 = pnand %p291, %p292
    %p294 = pneg %p293
    // Predicated region
    $region45: #{ifin_forward.63} parent=5 // pred_check
      _
    $region46: #{ifin_forward.63} parent=5 // pred_check_branch
      %296 = sbr.rel (%p293) target = $region48
    $region47: #{ifin_forward.63} parent=5 // pred_region
      %s297 = ssub.s32 %s13, 1
      %p298 = pneg %p46
      %p299 = pneg %p43
      %p300 = pneg %p67
      %p301 = pneg %p64
      %p302 = pneg %p88
      %p303 = pneg %p85
      %p304 = pneg %p109
      %p305 = pneg %p106
      %s306 = smul.u32 2, %s23
      %p307 = scmp.lt.s32.totalorder %s22, 1
      %s308 = scalar_select %p307, %s22, 1
      %p309 = scmp.lt.s32.totalorder %s306, 1
      %s310 = scalar_select %p309, %s306, 1
      %s311 = smul.addr %s308, 46
      %s312 = sadd.s32 %s310, %s311
      %s313 = smul.addr %s312, 4
      %s314 = scalar_lea.vmem %s4, %s313
      %p315 = pneg %p137
      %p316 = pneg %p134
      %s317 = smul.u32 2, %s23
      %p318 = scmp.lt.s32.totalorder %s22, 1
      %s319 = scalar_select %p318, %s22, 1
      %p320 = scmp.lt.s32.totalorder %s317, 1
      %s321 = scalar_select %p320, %s317, 1
      %s322 = smul.addr %s319, 46
      %s323 = sadd.s32 %s321, %s322
      %s324 = smul.addr %s323, 4
      %s325 = scalar_lea.vmem %s5, %s324
      %p326 = pneg %p165
      %p327 = pneg %p162
      %s328 = smul.u32 2, %s23
      %p329 = scmp.lt.s32.totalorder %s22, 1
      %s330 = scalar_select %p329, %s22, 1
      %p331 = scmp.lt.s32.totalorder %s328, 1
      %s332 = scalar_select %p331, %s328, 1
      %s333 = smul.addr %s330, 6
      %s334 = sadd.s32 %s332, %s333
      %s335 = smul.addr %s334, 8
      %s336 = scalar_lea.vmem %s6, %s335
      %p337 = pneg %p193
      %p338 = pneg %p190
      %p339 = pneg %p221
      %p340 = pneg %p218
      %s341 = smul.u32 2, %s23
      %p342 = scmp.lt.s32.totalorder %s22, 1
      %s343 = scalar_select %p342, %s22, 1
      %p344 = scmp.lt.s32.totalorder %s341, 1
      %s345 = scalar_select %p344, %s341, 1
      %s346 = smul.addr %s343, 6
      %s347 = sadd.s32 %s345, %s346
      %s348 = smul.addr %s347, 8
      %s349 = scalar_lea.vmem %s7, %s348
      %s350 = smul.u32 2, %s23
      %p351 = scmp.lt.s32.totalorder %s22, 1
      %s352 = scalar_select %p351, %s22, 1
      %p353 = scmp.lt.s32.totalorder %s350, 1
      %s354 = scalar_select %p353, %s350, 1
      %s355 = smul.addr %s352, 46
      %s356 = sadd.s32 %s354, %s355
      %s357 = smul.addr %s356, 4
      %s358 = scalar_lea.vmem %s4, %s357
      %s359 = smul.u32 2, %s23
      %s360 = smul.u32 2, %s23
      %p361 = scmp.lt.s32.totalorder %s22, 1
      %s362 = scalar_select %p361, %s22, 1
      %p363 = scmp.lt.s32.totalorder %s360, 1
      %s364 = scalar_select %p363, %s360, 1
      %s365 = smul.addr %s362, 46
      %s366 = sadd.s32 %s364, %s365
      %s367 = smul.addr %s366, 4
      %s368 = scalar_lea.vmem %s5, %s367
      %s369 = smul.u32 2, %s23
      %s370 = smul.u32 2, %s23
      %p371 = scmp.lt.s32.totalorder %s22, 1
      %s372 = scalar_select %p371, %s22, 1
      %p373 = scmp.lt.s32.totalorder %s370, 1
      %s374 = scalar_select %p373, %s370, 1
      %s375 = smul.addr %s372, 6
      %s376 = sadd.s32 %s374, %s375
      %s377 = smul.addr %s376, 8
      %s378 = scalar_lea.vmem %s6, %s377
      %s379 = smul.u32 2, %s23
      %s380 = smul.u32 2, %s23
      %p381 = scmp.lt.s32.totalorder %s22, 1
      %s382 = scalar_select %p381, %s22, 1
      %p383 = scmp.lt.s32.totalorder %s380, 1
      %s384 = scalar_select %p383, %s380, 1
      %s385 = smul.addr %s382, 6
      %s386 = sadd.s32 %s384, %s385
      %s387 = smul.addr %s386, 8
      %s388 = scalar_lea.vmem %s7, %s387
      %s389 = smul.u32 2, %s23
      %v391 = vld [vmem:[%s0] sm:$0xff]
      %v392 = vld [vmem:[%s0 + $0x8] sm:$0xff]
      %v393 = vld [vmem:[%s0 + $0x10] sm:$0x33]
      %v394 = vld [vmem:[%s358] sm:$0xff]
      %v395 = vld [vmem:[%s358 + $0x8] sm:$0xff]
      %v396 = vld [vmem:[%s358 + $0x10] sm:$0xff]
      %v397 = vld [vmem:[%s358 + $0x18] sm:$0xff]
      %v398 = vld [vmem:[%s358 + $0x20] sm:$0xff]
      %v399 = vld [vmem:[%s358 + $0x28] sm:$0xff]
      %v400 = vld [vmem:[%s358 + $0x30] sm:$0xff]
      %v401 = vld [vmem:[%s358 + $0x38] sm:$0xff]
      %v402 = vld [vmem:[%s358 + $0x40] sm:$0xff]
      %v403 = vld [vmem:[%s358 + $0x48] sm:$0xff]
      %v404 = vld [vmem:[%s358 + $0x50] sm:$0xff]
      %v405 = vld [vmem:[%s358 + $0x58] sm:$0xff]
      %v406 = vld [vmem:[%s358 + $0x60] sm:$0xff]
      %v407 = vld [vmem:[%s358 + $0x68] sm:$0xff]
      %v408 = vld [vmem:[%s358 + $0x70] sm:$0xff]
      %v409 = vld [vmem:[%s358 + $0x78] sm:$0xff]
      %v410 = vld [vmem:[%s358 + $0x80] sm:$0xff]
      %v411 = vld [vmem:[%s358 + $0x88] sm:$0xff]
      %v412 = vld [vmem:[%s358 + $0x90] sm:$0xff]
      %v413 = vld [vmem:[%s358 + $0x98] sm:$0xff]
      %v414 = vld [vmem:[%s358 + $0xa0] sm:$0xff]
      %v415 = vld [vmem:[%s358 + $0xa8] sm:$0xff]
      %v416 = vld [vmem:[%s358 + $0xb0] sm:$0x33]
      %v417 = vld [vmem:[%s1] sm:$0xff]
      %v418 = vld [vmem:[%s1 + $0x8] sm:$0xff]
      %v419 = vld [vmem:[%s1 + $0x10] sm:$0xf]
      %421 = vset.pattern.permute.xlu0 0
      %422 = vperm.xlu0 %421, %v417
      %v423 = vpop.permute.xlu0 %422
      %426 = vset.pattern.permute.xlu0 0
      %427 = vperm.xlu0 %426, %v418
      %v428 = vpop.permute.xlu0 %427
      %431 = vset.pattern.permute.xlu0 0
      %432 = vperm.xlu0 %431, %v419
      %v433 = vpop.permute.xlu0 %432
      %v438 = vunpack.c.l.b16 %v391
      %v439 = vunpack.c.h.b16 %v391
      %v440 = vunpack.c.l.b16 %v392
      %v441 = vunpack.c.h.b16 %v392
      %v442 = vunpack.c.l.b16 %v393
      %v443 = vunpack.c.h.b16 %v393
      %v444 = vpack.c.b16 %v440, %v438
      %v445 = vpack.c.b16 %v441, %v439
      %v446 = vpack.c.b16 %v442, %v442
      %v447 = vpack.c.b16 %v443, %v443
      %v473 = vunpack.c.l.b16 %v394
      %v474 = vunpack.c.h.b16 %v394
      %v475 = vunpack.c.l.b16 %v395
      %v476 = vunpack.c.h.b16 %v395
      %v477 = vunpack.c.l.b16 %v396
      %v478 = vunpack.c.h.b16 %v396
      %v479 = vunpack.c.l.b16 %v397
      %v480 = vunpack.c.h.b16 %v397
      %v481 = vunpack.c.l.b16 %v398
      %v482 = vunpack.c.h.b16 %v398
      %v483 = vunpack.c.l.b16 %v399
      %v484 = vunpack.c.h.b16 %v399
      %v485 = vunpack.c.l.b16 %v400
      %v486 = vunpack.c.h.b16 %v400
      %v487 = vunpack.c.l.b16 %v401
      %v488 = vunpack.c.h.b16 %v401
      %v489 = vunpack.c.l.b16 %v402
      %v490 = vunpack.c.h.b16 %v402
      %v491 = vunpack.c.l.b16 %v403
      %v492 = vunpack.c.h.b16 %v403
      %v493 = vunpack.c.l.b16 %v404
      %v494 = vunpack.c.h.b16 %v404
      %v495 = vunpack.c.l.b16 %v405
      %v496 = vunpack.c.h.b16 %v405
      %v497 = vunpack.c.l.b16 %v406
      %v498 = vunpack.c.h.b16 %v406
      %v499 = vunpack.c.l.b16 %v407
      %v500 = vunpack.c.h.b16 %v407
      %v501 = vunpack.c.l.b16 %v408
      %v502 = vunpack.c.h.b16 %v408
      %v503 = vunpack.c.l.b16 %v409
      %v504 = vunpack.c.h.b16 %v409
      %v505 = vunpack.c.l.b16 %v410
      %v506 = vunpack.c.h.b16 %v410
      %v507 = vunpack.c.l.b16 %v411
      %v508 = vunpack.c.h.b16 %v411
      %v509 = vunpack.c.l.b16 %v412
      %v510 = vunpack.c.h.b16 %v412
      %v511 = vunpack.c.l.b16 %v413
      %v512 = vunpack.c.h.b16 %v413
      %v513 = vunpack.c.l.b16 %v414
      %v514 = vunpack.c.h.b16 %v414
      %v515 = vunpack.c.l.b16 %v415
      %v516 = vunpack.c.h.b16 %v415
      %v517 = vunpack.c.l.b16 %v416
      %v518 = vunpack.c.h.b16 %v416
      %v519 = vpack.c.b16 %v475, %v473
      %v520 = vpack.c.b16 %v476, %v474
      %v521 = vpack.c.b16 %v479, %v477
      %v522 = vpack.c.b16 %v480, %v478
      %v523 = vpack.c.b16 %v483, %v481
      %v524 = vpack.c.b16 %v484, %v482
      %v525 = vpack.c.b16 %v487, %v485
      %v526 = vpack.c.b16 %v488, %v486
      %v527 = vpack.c.b16 %v491, %v489
      %v528 = vpack.c.b16 %v492, %v490
      %v529 = vpack.c.b16 %v495, %v493
      %v530 = vpack.c.b16 %v496, %v494
      %v531 = vpack.c.b16 %v499, %v497
      %v532 = vpack.c.b16 %v500, %v498
      %v533 = vpack.c.b16 %v503, %v501
      %v534 = vpack.c.b16 %v504, %v502
      %v535 = vpack.c.b16 %v507, %v505
      %v536 = vpack.c.b16 %v508, %v506
      %v537 = vpack.c.b16 %v511, %v509
      %v538 = vpack.c.b16 %v512, %v510
      %v539 = vpack.c.b16 %v515, %v513
      %v540 = vpack.c.b16 %v516, %v514
      %v541 = vpack.c.b16 %v517, %v517
      %v542 = vpack.c.b16 %v518, %v518
      %vm565 = vcmask 424960
      %v567 = vsel %vm565, %v445, 0
      %v570 = vsel %vm565, %v447, 0
      %vm572 = vcmask 1041408
      %v574 = vsel %vm572, %v541, 0
      %v577 = vsel %vm572, %v542, 0
      %579 = vmatprep.subr.bf16.mxu0 %v534
      %580 = vmatpush1.bf16.msra.mxu0 %v533
      %581 = vmatprep.subr.bf16.mxu0 %v532
      %582 = vmatpush1.bf16.msra.mxu0 %v531
      %583 = vmatprep.subr.bf16.mxu0 %v530
      %584 = vmatpush1.bf16.msra.mxu0 %v529
      %585 = vmatprep.subr.bf16.mxu0 %v528
      %586 = vmatpush1.bf16.msra.mxu0 %v527
      %587 = vmatprep.subr.bf16.mxu0 %v526
      %588 = vmatpush1.bf16.msra.mxu0 %v525
      %589 = vmatprep.subr.bf16.mxu0 %v524
      %590 = vmatpush1.bf16.msra.mxu0 %v523
      %591 = vmatprep.subr.bf16.mxu0 %v522
      %592 = vmatpush1.bf16.msra.mxu0 %v521
      %593 = vmatprep.subr.bf16.mxu0 %v520
      %594 = vmatpush1.bf16.msra.mxu0 %v519
      %595 = vmatprep.subr.bf16.mxu0 0
      %596 = vmatpush2.bf16.msra.mxu0 0
      %597 = vmatprep.subr.bf16.mxu0 0
      %598 = vmatpush2.bf16.msra.mxu0 0
      %599 = vmatprep.subr.bf16.mxu0 0
      %600 = vmatpush2.bf16.msra.mxu0 0
      %601 = vmatprep.subr.bf16.mxu0 0
      %602 = vmatpush2.bf16.msra.mxu0 0
      %603 = vmatprep.subr.bf16.mxu0 %v577
      %604 = vmatpush2.bf16.msra.mxu0 %v574
      %605 = vmatprep.subr.bf16.mxu0 %v540
      %606 = vmatpush2.bf16.msra.mxu0 %v539
      %607 = vmatprep.subr.bf16.mxu0 %v538
      %608 = vmatpush2.bf16.msra.mxu0 %v537
      %609 = vmatprep.subr.bf16.mxu0 %v536
      %610 = vmatpush2.bf16.msra.mxu0 %v535
      %611 = vmatprep.mubr.bf16.mxu0 %v567
      %612 = vmatmul.mubr.bf16.gmra.mxu0 %v444
      %v613 = vpop.f32.mrf.mxu0
      %v614 = vadd.f32 %v423, %v613
      %v615 = vpop.f32.mrf.mxu0
      %v616 = vadd.f32 %v423, %v615
      %v617 = vpop.f32.mrf.mxu0
      %v618 = vadd.f32 %v428, %v617
      %v619 = vpop.f32.mrf.mxu0
      %v620 = vadd.f32 %v428, %v619
      %621 = vmatprep.mubr.bf16.mxu0 %v570
      %622 = vmatmul.mubr.bf16.gmra.mxu0 %v446
      %v623 = vpop.f32.mrf.mxu0
      %v624 = vadd.f32 %v433, %v623
      %v625 = vpop.f32.mrf.mxu0
      %v626 = vadd.f32 %v433, %v625
      %v627 = vpop.f32.mrf.mxu0
      %v628 = vpop.f32.mrf.mxu0
      %629 = vdwg.mxu0
      %v630 = vld [vmem:[%s2] sm:$0xff]
      %v631 = vld [vmem:[%s2 + $0x8] sm:$0xff]
      %v632 = vld [vmem:[%s2 + $0x10] sm:$0x33]
      %v633 = vld [vmem:[%s368] sm:$0xff]
      %v634 = vld [vmem:[%s368 + $0x8] sm:$0xff]
      %v635 = vld [vmem:[%s368 + $0x10] sm:$0xff]
      %v636 = vld [vmem:[%s368 + $0x18] sm:$0xff]
      %v637 = vld [vmem:[%s368 + $0x20] sm:$0xff]
      %v638 = vld [vmem:[%s368 + $0x28] sm:$0xff]
      %v639 = vld [vmem:[%s368 + $0x30] sm:$0xff]
      %v640 = vld [vmem:[%s368 + $0x38] sm:$0xff]
      %v641 = vld [vmem:[%s368 + $0x40] sm:$0xff]
      %v642 = vld [vmem:[%s368 + $0x48] sm:$0xff]
      %v643 = vld [vmem:[%s368 + $0x50] sm:$0xff]
      %v644 = vld [vmem:[%s368 + $0x58] sm:$0xff]
      %v645 = vld [vmem:[%s368 + $0x60] sm:$0xff]
      %v646 = vld [vmem:[%s368 + $0x68] sm:$0xff]
      %v647 = vld [vmem:[%s368 + $0x70] sm:$0xff]
      %v648 = vld [vmem:[%s368 + $0x78] sm:$0xff]
      %v649 = vld [vmem:[%s368 + $0x80] sm:$0xff]
      %v650 = vld [vmem:[%s368 + $0x88] sm:$0xff]
      %v651 = vld [vmem:[%s368 + $0x90] sm:$0xff]
      %v652 = vld [vmem:[%s368 + $0x98] sm:$0xff]
      %v653 = vld [vmem:[%s368 + $0xa0] sm:$0xff]
      %v654 = vld [vmem:[%s368 + $0xa8] sm:$0xff]
      %v655 = vld [vmem:[%s368 + $0xb0] sm:$0x33]
      %v656 = vld [vmem:[%s3] sm:$0xff]
      %v657 = vld [vmem:[%s3 + $0x8] sm:$0xff]
      %v658 = vld [vmem:[%s3 + $0x10] sm:$0xf]
      %660 = vset.pattern.permute.xlu0 0
      %661 = vperm.xlu0 %660, %v656
      %v662 = vpop.permute.xlu0 %661
      %665 = vset.pattern.permute.xlu0 0
      %666 = vperm.xlu0 %665, %v657
      %v667 = vpop.permute.xlu0 %666
      %670 = vset.pattern.permute.xlu0 0
      %671 = vperm.xlu0 %670, %v658
      %v672 = vpop.permute.xlu0 %671
      %v677 = vunpack.c.l.b16 %v630
      %v678 = vunpack.c.h.b16 %v630
      %v679 = vunpack.c.l.b16 %v631
      %v680 = vunpack.c.h.b16 %v631
      %v681 = vunpack.c.l.b16 %v632
      %v682 = vunpack.c.h.b16 %v632
      %v683 = vpack.c.b16 %v679, %v677
      %v684 = vpack.c.b16 %v680, %v678
      %v685 = vpack.c.b16 %v681, %v681
      %v686 = vpack.c.b16 %v682, %v682
      %v712 = vunpack.c.l.b16 %v633
      %v713 = vunpack.c.h.b16 %v633
      %v714 = vunpack.c.l.b16 %v634
      %v715 = vunpack.c.h.b16 %v634
      %v716 = vunpack.c.l.b16 %v635
      %v717 = vunpack.c.h.b16 %v635
      %v718 = vunpack.c.l.b16 %v636
      %v719 = vunpack.c.h.b16 %v636
      %v720 = vunpack.c.l.b16 %v637
      %v721 = vunpack.c.h.b16 %v637
      %v722 = vunpack.c.l.b16 %v638
      %v723 = vunpack.c.h.b16 %v638
      %v724 = vunpack.c.l.b16 %v639
      %v725 = vunpack.c.h.b16 %v639
      %v726 = vunpack.c.l.b16 %v640
      %v727 = vunpack.c.h.b16 %v640
      %v728 = vunpack.c.l.b16 %v641
      %v729 = vunpack.c.h.b16 %v641
      %v730 = vunpack.c.l.b16 %v642
      %v731 = vunpack.c.h.b16 %v642
      %v732 = vunpack.c.l.b16 %v643
      %v733 = vunpack.c.h.b16 %v643
      %v734 = vunpack.c.l.b16 %v644
      %v735 = vunpack.c.h.b16 %v644
      %v736 = vunpack.c.l.b16 %v645
      %v737 = vunpack.c.h.b16 %v645
      %v738 = vunpack.c.l.b16 %v646
      %v739 = vunpack.c.h.b16 %v646
      %v740 = vunpack.c.l.b16 %v647
      %v741 = vunpack.c.h.b16 %v647
      %v742 = vunpack.c.l.b16 %v648
      %v743 = vunpack.c.h.b16 %v648
      %v744 = vunpack.c.l.b16 %v649
      %v745 = vunpack.c.h.b16 %v649
      %v746 = vunpack.c.l.b16 %v650
      %v747 = vunpack.c.h.b16 %v650
      %v748 = vunpack.c.l.b16 %v651
      %v749 = vunpack.c.h.b16 %v651
      %v750 = vunpack.c.l.b16 %v652
      %v751 = vunpack.c.h.b16 %v652
      %v752 = vunpack.c.l.b16 %v653
      %v753 = vunpack.c.h.b16 %v653
      %v754 = vunpack.c.l.b16 %v654
      %v755 = vunpack.c.h.b16 %v654
      %v756 = vunpack.c.l.b16 %v655
      %v757 = vunpack.c.h.b16 %v655
      %v758 = vpack.c.b16 %v714, %v712
      %v759 = vpack.c.b16 %v715, %v713
      %v760 = vpack.c.b16 %v718, %v716
      %v761 = vpack.c.b16 %v719, %v717
      %v762 = vpack.c.b16 %v722, %v720
      %v763 = vpack.c.b16 %v723, %v721
      %v764 = vpack.c.b16 %v726, %v724
      %v765 = vpack.c.b16 %v727, %v725
      %v766 = vpack.c.b16 %v730, %v728
      %v767 = vpack.c.b16 %v731, %v729
      %v768 = vpack.c.b16 %v734, %v732
      %v769 = vpack.c.b16 %v735, %v733
      %v770 = vpack.c.b16 %v738, %v736
      %v771 = vpack.c.b16 %v739, %v737
      %v772 = vpack.c.b16 %v742, %v740
      %v773 = vpack.c.b16 %v743, %v741
      %v774 = vpack.c.b16 %v746, %v744
      %v775 = vpack.c.b16 %v747, %v745
      %v776 = vpack.c.b16 %v750, %v748
      %v777 = vpack.c.b16 %v751, %v749
      %v778 = vpack.c.b16 %v754, %v752
      %v779 = vpack.c.b16 %v755, %v753
      %v780 = vpack.c.b16 %v756, %v756
      %v781 = vpack.c.b16 %v757, %v757
      %v805 = vsel %vm565, %v684, 0
      %v808 = vsel %vm565, %v686, 0
      %v811 = vsel %vm572, %v780, 0
      %v814 = vsel %vm572, %v781, 0
      %816 = vmatprep.subr.bf16.mxu0 %v773
      %817 = vmatpush1.bf16.msra.mxu0 %v772
      %818 = vmatprep.subr.bf16.mxu0 %v771
      %819 = vmatpush1.bf16.msra.mxu0 %v770
      %820 = vmatprep.subr.bf16.mxu0 %v769
      %821 = vmatpush1.bf16.msra.mxu0 %v768
      %822 = vmatprep.subr.bf16.mxu0 %v767
      %823 = vmatpush1.bf16.msra.mxu0 %v766
      %824 = vmatprep.subr.bf16.mxu0 %v765
      %825 = vmatpush1.bf16.msra.mxu0 %v764
      %826 = vmatprep.subr.bf16.mxu0 %v763
      %827 = vmatpush1.bf16.msra.mxu0 %v762
      %828 = vmatprep.subr.bf16.mxu0 %v761
      %829 = vmatpush1.bf16.msra.mxu0 %v760
      %830 = vmatprep.subr.bf16.mxu0 %v759
      %831 = vmatpush1.bf16.msra.mxu0 %v758
      %832 = vmatprep.subr.bf16.mxu0 0
      %833 = vmatpush2.bf16.msra.mxu0 0
      %834 = vmatprep.subr.bf16.mxu0 0
      %835 = vmatpush2.bf16.msra.mxu0 0
      %836 = vmatprep.subr.bf16.mxu0 0
      %837 = vmatpush2.bf16.msra.mxu0 0
      %838 = vmatprep.subr.bf16.mxu0 0
      %839 = vmatpush2.bf16.msra.mxu0 0
      %840 = vmatprep.subr.bf16.mxu0 %v814
      %841 = vmatpush2.bf16.msra.mxu0 %v811
      %842 = vmatprep.subr.bf16.mxu0 %v779
      %843 = vmatpush2.bf16.msra.mxu0 %v778
      %844 = vmatprep.subr.bf16.mxu0 %v777
      %845 = vmatpush2.bf16.msra.mxu0 %v776
      %846 = vmatprep.subr.bf16.mxu0 %v775
      %847 = vmatpush2.bf16.msra.mxu0 %v774
      %848 = vmatprep.mubr.bf16.mxu0 %v805
      %849 = vmatmul.mubr.bf16.gmra.mxu0 %v683
      %v850 = vpop.f32.mrf.mxu0
      %v851 = vadd.f32 %v662, %v850
      %v852 = vpop.f32.mrf.mxu0
      %v853 = vadd.f32 %v662, %v852
      %v854 = vpop.f32.mrf.mxu0
      %v855 = vadd.f32 %v667, %v854
      %v856 = vpop.f32.mrf.mxu0
      %v857 = vadd.f32 %v667, %v856
      %858 = vmatprep.mubr.bf16.mxu0 %v808
      %859 = vmatmul.mubr.bf16.gmra.mxu0 %v685
      %v860 = vpop.f32.mrf.mxu0
      %v861 = vadd.f32 %v672, %v860
      %v862 = vpop.f32.mrf.mxu0
      %v863 = vadd.f32 %v672, %v862
      %v864 = vpop.f32.mrf.mxu0
      %v865 = vpop.f32.mrf.mxu0
      %866 = vdwg.mxu0
      %v867 = vld [vmem:[%s378] sm:$0xff]
      %v868 = vld [vmem:[%s378 + $0x8] sm:$0xff]
      %v869 = vld [vmem:[%s378 + $0x10] sm:$0xff]
      %v870 = vld [vmem:[%s378 + $0x18] sm:$0xff]
      %v871 = vld [vmem:[%s378 + $0x20] sm:$0xf]
      %v872 = vld [vmem:[%s378 + $0x28] sm:$0xf]
      %v873 = vxor.u32 %v614, 2147483648
      %v874 = vxor.u32 %v616, 2147483648
      %v875 = vxor.u32 %v618, 2147483648
      %v876 = vxor.u32 %v620, 2147483648
      %v877 = vxor.u32 %v624, 2147483648
      %v878 = vxor.u32 %v626, 2147483648
      %v879 = vmul.f32 %v873, 1.442695
      %v880 = vpow.pop %v879
      %v881 = vmul.f32 %v874, 1.442695
      %v882 = vpow.pop %v881
      %v883 = vmul.f32 %v875, 1.442695
      %v884 = vpow.pop %v883
      %v885 = vmul.f32 %v876, 1.442695
      %v886 = vpow.pop %v885
      %v887 = vmul.f32 %v877, 1.442695
      %v888 = vpow.pop %v887
      %v889 = vmul.f32 %v878, 1.442695
      %v890 = vpow.pop %v889
      %v891 = vadd.f32 %v880, 1.0
      %v892 = vadd.f32 %v882, 1.0
      %v893 = vadd.f32 %v884, 1.0
      %v894 = vadd.f32 %v886, 1.0
      %v895 = vadd.f32 %v888, 1.0
      %v896 = vadd.f32 %v890, 1.0
      %v897 = vrcp.pop %v891
      %v898 = vmul.f32 1.0, %v897
      %v899 = vrcp.pop %v892
      %v900 = vmul.f32 1.0, %v899
      %v901 = vrcp.pop %v893
      %v902 = vmul.f32 1.0, %v901
      %v903 = vrcp.pop %v894
      %v904 = vmul.f32 1.0, %v903
      %v905 = vrcp.pop %v895
      %v906 = vmul.f32 1.0, %v905
      %v907 = vrcp.pop %v896
      %v908 = vmul.f32 1.0, %v907
      %v909 = vmul.f32 %v867, %v898
      %v910 = vmul.f32 %v868, %v900
      %v911 = vmul.f32 %v869, %v902
      %v912 = vmul.f32 %v870, %v904
      %v913 = vmul.f32 %v871, %v906
      %v914 = vmul.f32 %v872, %v908
      %v915 = vadd.f32 %v909, %v851
      %v916 = vadd.f32 %v910, %v853
      %v917 = vadd.f32 %v911, %v855
      %v918 = vadd.f32 %v912, %v857
      %v919 = vadd.f32 %v913, %v861
      %v920 = vadd.f32 %v914, %v863
      %921 = vst [vmem:[%s388] sm:$0xff] %v915
      %922 = vst [vmem:[%s388 + $0x8] sm:$0xff] %v916
      %923 = vst [vmem:[%s388 + $0x10] sm:$0xff] %v917
      %924 = vst [vmem:[%s388 + $0x18] sm:$0xff] %v918
      %925 = vst [vmem:[%s388 + $0x20] sm:$0xf] %v919
      %926 = vst [vmem:[%s388 + $0x28] sm:$0xf] %v920
      %s927 = smul.u32 2, %s23
      %p928 = scmp.lt.s32.totalorder %s22, 1
      %s929 = scalar_select %p928, %s22, 1
      %p930 = scmp.lt.s32.totalorder %s927, 1
      %s931 = scalar_select %p930, %s927, 1
      %s932 = smul.addr %s929, 6
      %s933 = sadd.s32 %s931, %s932
      %s934 = smul.addr %s933, 8
      %s935 = scalar_lea.vmem %s7, %s934
      // Predicated region
      $region49: #{ifin_forward.63} parent=47 // pred_check
        %p936 = pneg %p218
      $region50: #{ifin_forward.63} parent=47 // pred_check_branch
        %938 = sbr.rel (%p936) target = $region52
      $region51: #{ifin_forward.63} parent=47 // pred_region
        %s939 = smul.u32 2, %s23
      $region52: #{ifin_forward.63} parent=47 // pred_fallthru
        _
    $region48: #{ifin_forward.63} parent=5 // pred_fallthru
      _
    %p940 = scmp.le.s32.totalorder 2, %s13
    // Predicated region
    $region53: #{ifin_forward.63} parent=5 // pred_check
      %p941 = pneg %p940
    $region54: #{ifin_forward.63} parent=5 // pred_check_branch
      %943 = sbr.rel (%p941) target = $region56
    $region55: #{ifin_forward.63} parent=5 // pred_region
      %s944 = ssub.s32 %s13, 2
      // Predicated region
      $region57: #{ifin_forward.63} parent=55 // pred_check
        %p945 = pneg %p224
      $region58: #{ifin_forward.63} parent=55 // pred_check_branch
        %947 = sbr.rel (%p945) target = $region60
      $region59: #{ifin_forward.63} parent=55 // pred_region
        %s948 = smul.u32 2, %s25
        %p949 = scmp.lt.s32.totalorder %s24, 1
        %s950 = scalar_select %p949, %s24, 1
        %p951 = scmp.lt.s32.totalorder %s948, 1
        %s952 = scalar_select %p951, %s948, 1
        %s953 = smul.addr %s950, 6
        %s954 = sadd.s32 %s952, %s953
        %s955 = smul.addr %s954, 8
        %s956 = scalar_lea.vmem %s7, %s955
      $region60: #{ifin_forward.63} parent=55 // pred_fallthru
        _
    $region56: #{ifin_forward.63} parent=5 // pred_fallthru
      _
  $region6: #{ifin_forward.63} parent=0 // loop_footer
    %s17 = sadd.s32 1, %s13
  $region7: #{ifin_forward.63} parent=0 // loop_footer_branch
    %12 = sbr.rel target = $region3
  $region8: #{ifin_forward.63} parent=0 // loop_exit
    _

// kernel: ifin_forward.62
$region0: #{ifin_forward.62}
  #allocation0 [shape = 'u32[]', space=smem, size = 0x4, offset = 0x4, fixed_abs, tag = 'smem constant byte address 0x4 - core index']
  #allocation1 [shape = 'u32[144,128]{1,0:T(1,128)}', space=vmem, size = 0x12000, scoped, tag = 'internal scratch']
  %s0 = inlined_call_operand.vmem [shape: bf16[40,180], index: 0, kind: input, shape index: {}]
  %s1 = inlined_call_operand.vmem [shape: f32[40,1], index: 1, kind: input, shape index: {}]
  %s2 = inlined_call_operand.vmem [shape: bf16[2,180,256], index: 2, kind: input, shape index: {}]
  %s3 = inlined_call_operand.vmem [shape: f32[2,40,256], index: 3, kind: output, shape index: {}]
  %s4 = sld [smem:[#allocation0]]
  $region45: #{ifin_forward.62} parent=0
    _
  %s6 = ssub.s32 1, %s4
  %s7 = scalar_select 0, %s6, %s4
  loop: start=0, step=1, limit=4
  $region2: #{ifin_forward.62} parent=0 // loop_pre_header
    _
  $region3: #{ifin_forward.62} parent=0 // loop_header
    %s9 = sphi 0, %s13
    %p10 = scmp.ge.s32.totalorder %s9, 4
    %s16 = sphi 0, %s28
    %s17 = sphi 0, %s24
    %s18 = sphi 0, %s16
    %s19 = sphi 0, %s17
    %s20 = sphi 0, %s18
    %s21 = sphi 0, %s19
    %s29 = sphi 0, %s29
    %s31 = sphi 0, %s29
    %s32 = sphi 0, %s31
    %s46 = sphi 0, %s32
    %s50 = sphi 0, %s50
    %s52 = sphi 0, %s50
    %s53 = sphi 0, %s52
    %s67 = sphi 0, %s53
    %s75 = sphi 0, %s77
    %s78 = sphi 0, %s75
    %s79 = sphi 0, %s78
    %s95 = sphi 0, %s79
    %s103 = sphi 0, %s105
    %s106 = sphi 0, %s103
    %s107 = sphi 0, %s106
    %s123 = sphi 0, %s107
  $region4: #{ifin_forward.62} parent=0 // loop_header_branch
    %12 = sbr.rel (%p10) target = $region8
  $region5: #{ifin_forward.62} parent=0 // loop_body
    %s14 = ssub.s32 %s9, 1
    %s15 = ssub.s32 %s9, 2
    %s22 = sadd.s32 1, %s17
    %p23 = scmp.ge.s32.totalorder %s22, 1
    %s24 = scalar_select %p23, 0, %s22
    %s25 = sadd.s32 1, %s16
    %s26 = scalar_select %p23, %s25, %s16
    %p27 = scmp.ge.s32.totalorder %s26, 2
    %s28 = scalar_select %p27, 0, %s26
    %s30 = sadd.s32 %s29, 1
    %p33 = scmp.eq.s32.totalorder %s9, 1
    %p34 = scmp.ne.s32.totalorder %s29, %s31
    %p35 = scmp.eq.s32.totalorder %s9, 0
    %p36 = por %p34, %p35
    %p37 = scmp.ne.s32.totalorder %s29, %s31
    %p38 = scmp.eq.s32.totalorder %s14, 1
    %p39 = por %p37, %p38
    %p40 = scmp.ne.s32.totalorder %s31, %s32
    %p41 = scmp.eq.s32.totalorder %s14, 0
    %p42 = por %p40, %p41
    %p43 = scmp.ne.s32.totalorder %s31, %s32
    %p44 = scmp.eq.s32.totalorder %s15, 1
    %p45 = por %p43, %p44
    %p47 = scmp.ne.s32.totalorder %s32, %s46
    %p48 = scmp.eq.s32.totalorder %s15, 0
    %p49 = por %p47, %p48
    %s51 = sadd.s32 %s50, 1
    %p54 = scmp.eq.s32.totalorder %s9, 1
    %p55 = scmp.ne.s32.totalorder %s50, %s52
    %p56 = scmp.eq.s32.totalorder %s9, 0
    %p57 = por %p55, %p56
    %p58 = scmp.ne.s32.totalorder %s50, %s52
    %p59 = scmp.eq.s32.totalorder %s14, 1
    %p60 = por %p58, %p59
    %p61 = scmp.ne.s32.totalorder %s52, %s53
    %p62 = scmp.eq.s32.totalorder %s14, 0
    %p63 = por %p61, %p62
    %p64 = scmp.ne.s32.totalorder %s52, %s53
    %p65 = scmp.eq.s32.totalorder %s15, 1
    %p66 = por %p64, %p65
    %p68 = scmp.ne.s32.totalorder %s53, %s67
    %p69 = scmp.eq.s32.totalorder %s15, 0
    %p70 = por %p68, %p69
    %s71 = ssub.s32 %s16, %s28
    %s72 = ssub.s32 %s17, %s24
    %s73 = sor.u32 %s71, %s72
    %p74 = scmp.eq.s32.totalorder %s73, 0
    %s76 = sadd.s32 %s75, 1
    %s77 = scalar_select %p74, %s75, %s76
    %p80 = pneg %p74
    %p81 = scmp.eq.s32.totalorder %s9, 1
    %p82 = por %p80, %p81
    %p83 = scmp.ne.s32.totalorder %s75, %s78
    %p84 = scmp.eq.s32.totalorder %s9, 0
    %p85 = por %p83, %p84
    %p86 = scmp.ne.s32.totalorder %s75, %s78
    %p87 = scmp.eq.s32.totalorder %s14, 1
    %p88 = por %p86, %p87
    %p89 = scmp.ne.s32.totalorder %s78, %s79
    %p90 = scmp.eq.s32.totalorder %s14, 0
    %p91 = por %p89, %p90
    %p92 = scmp.ne.s32.totalorder %s78, %s79
    %p93 = scmp.eq.s32.totalorder %s15, 1
    %p94 = por %p92, %p93
    %p96 = scmp.ne.s32.totalorder %s79, %s95
    %p97 = scmp.eq.s32.totalorder %s15, 0
    %p98 = por %p96, %p97
    %s99 = ssub.s32 %s16, %s28
    %s100 = ssub.s32 %s17, %s24
    %s101 = sor.u32 %s99, %s100
    %p102 = scmp.eq.s32.totalorder %s101, 0
    %s104 = sadd.s32 %s103, 1
    %s105 = scalar_select %p102, %s103, %s104
    %p108 = pneg %p102
    %p109 = scmp.eq.s32.totalorder %s9, 1
    %p110 = por %p108, %p109
    %p111 = scmp.ne.s32.totalorder %s103, %s106
    %p112 = scmp.eq.s32.totalorder %s9, 0
    %p113 = por %p111, %p112
    %p114 = scmp.ne.s32.totalorder %s103, %s106
    %p115 = scmp.eq.s32.totalorder %s14, 1
    %p116 = por %p114, %p115
    %p117 = scmp.ne.s32.totalorder %s106, %s107
    %p118 = scmp.eq.s32.totalorder %s14, 0
    %p119 = por %p117, %p118
    %p120 = scmp.ne.s32.totalorder %s106, %s107
    %p121 = scmp.eq.s32.totalorder %s15, 1
    %p122 = por %p120, %p121
    %p124 = scmp.ne.s32.totalorder %s107, %s123
    %p125 = scmp.eq.s32.totalorder %s15, 0
    %p126 = por %p124, %p125
    %p127 = scmp.le.s32.totalorder 1, %s9
    %p128 = scmp.lt.s32.totalorder %s9, 3
    %p129 = pnand %p127, %p128
    %p130 = pneg %p129
    // Predicated region
    $region9: #{ifin_forward.62} parent=5 // pred_check
      _
    $region10: #{ifin_forward.62} parent=5 // pred_check_branch
      %132 = sbr.rel (%p129) target = $region12
    $region11: #{ifin_forward.62} parent=5 // pred_region
      %s133 = ssub.s32 %s9, 1
      // Predicated region
      $region13: #{ifin_forward.62} parent=11 // pred_check
        %p134 = pneg %p42
      $region14: #{ifin_forward.62} parent=11 // pred_check_branch
        %136 = sbr.rel (%p134) target = $region16
      $region15: #{ifin_forward.62} parent=11 // pred_region
        _
      $region16: #{ifin_forward.62} parent=11 // pred_fallthru
        _
      // Predicated region
      $region17: #{ifin_forward.62} parent=11 // pred_check
        %p137 = pneg %p63
      $region18: #{ifin_forward.62} parent=11 // pred_check_branch
        %139 = sbr.rel (%p137) target = $region20
      $region19: #{ifin_forward.62} parent=11 // pred_region
        _
      $region20: #{ifin_forward.62} parent=11 // pred_fallthru
        _
    $region12: #{ifin_forward.62} parent=5 // pred_fallthru
      _
    %p140 = scmp.lt.s32.totalorder %s9, 2
    // Predicated region
    $region21: #{ifin_forward.62} parent=5 // pred_check
      %p141 = pneg %p140
    $region22: #{ifin_forward.62} parent=5 // pred_check_branch
      %143 = sbr.rel (%p141) target = $region24
    $region23: #{ifin_forward.62} parent=5 // pred_region
      // Predicated region
      $region25: #{ifin_forward.62} parent=23 // pred_check
        %p144 = pneg %p85
      $region26: #{ifin_forward.62} parent=23 // pred_check_branch
        %146 = sbr.rel (%p144) target = $region28
      $region27: #{ifin_forward.62} parent=23 // pred_region
        %s147 = smul.u32 2, %s17
        %p148 = scmp.lt.s32.totalorder %s16, 1
        %s149 = scalar_select %p148, %s16, 1
        %p150 = scmp.lt.s32.totalorder %s147, 1
        %s151 = scalar_select %p150, %s147, 1
        %s152 = smul.addr %s149, 46
        %s153 = sadd.s32 %s151, %s152
        %s154 = smul.addr %s153, 4
        %s155 = scalar_lea.vmem %s2, %s154
        %s156 = smul.u32 2, %s17
      $region28: #{ifin_forward.62} parent=23 // pred_fallthru
        _
    $region24: #{ifin_forward.62} parent=5 // pred_fallthru
      _
    %p157 = scmp.le.s32.totalorder 1, %s9
    %p158 = scmp.lt.s32.totalorder %s9, 3
    %p159 = pnand %p157, %p158
    %p160 = pneg %p159
    // Predicated region
    $region29: #{ifin_forward.62} parent=5 // pred_check
      _
    $region30: #{ifin_forward.62} parent=5 // pred_check_branch
      %162 = sbr.rel (%p159) target = $region32
    $region31: #{ifin_forward.62} parent=5 // pred_region
      %s163 = ssub.s32 %s9, 1
      %p164 = pneg %p42
      %p165 = pneg %p39
      %p166 = pneg %p63
      %p167 = pneg %p60
      %s168 = smul.u32 2, %s19
      %p169 = scmp.lt.s32.totalorder %s18, 1
      %s170 = scalar_select %p169, %s18, 1
      %p171 = scmp.lt.s32.totalorder %s168, 1
      %s172 = scalar_select %p171, %s168, 1
      %s173 = smul.addr %s170, 46
      %s174 = sadd.s32 %s172, %s173
      %s175 = smul.addr %s174, 4
      %s176 = scalar_lea.vmem %s2, %s175
      %p177 = pneg %p91
      %p178 = pneg %p88
      %p179 = pneg %p119
      %p180 = pneg %p116
      %s181 = smul.u32 2, %s19
      %p182 = scmp.lt.s32.totalorder %s18, 1
      %s183 = scalar_select %p182, %s18, 1
      %p184 = scmp.lt.s32.totalorder %s181, 1
      %s185 = scalar_select %p184, %s181, 1
      %s186 = smul.addr %s183, 10
      %s187 = sadd.s32 %s185, %s186
      %s188 = smul.addr %s187, 8
      %s189 = scalar_lea.vmem %s3, %s188
      %s190 = smul.u32 2, %s19
      %p191 = scmp.lt.s32.totalorder %s18, 1
      %s192 = scalar_select %p191, %s18, 1
      %p193 = scmp.lt.s32.totalorder %s190, 1
      %s194 = scalar_select %p193, %s190, 1
      %s195 = smul.addr %s192, 46
      %s196 = sadd.s32 %s194, %s195
      %s197 = smul.addr %s196, 4
      %s198 = scalar_lea.vmem %s2, %s197
      %s199 = smul.u32 2, %s19
      %s200 = smul.u32 2, %s19
      %p201 = scmp.lt.s32.totalorder %s18, 1
      %s202 = scalar_select %p201, %s18, 1
      %p203 = scmp.lt.s32.totalorder %s200, 1
      %s204 = scalar_select %p203, %s200, 1
      %s205 = smul.addr %s202, 10
      %s206 = sadd.s32 %s204, %s205
      %s207 = smul.addr %s206, 8
      %s208 = scalar_lea.vmem %s3, %s207
      %s209 = smul.u32 2, %s19
      %v211 = vld [vmem:[%s0] sm:$0xff]
      %v212 = vld [vmem:[%s0 + $0x8] sm:$0xff]
      %v213 = vld [vmem:[%s0 + $0x10] sm:$0xff]
      %v214 = vld [vmem:[%s0 + $0x18] sm:$0xff]
      %v215 = vld [vmem:[%s0 + $0x20] sm:$0xff]
      %v216 = vld [vmem:[%s198] sm:$0xff]
      %v217 = vld [vmem:[%s198 + $0x8] sm:$0xff]
      %v218 = vld [vmem:[%s198 + $0x10] sm:$0xff]
      %v219 = vld [vmem:[%s198 + $0x18] sm:$0xff]
      %v220 = vld [vmem:[%s198 + $0x20] sm:$0xff]
      %v221 = vld [vmem:[%s198 + $0x28] sm:$0xff]
      %v222 = vld [vmem:[%s198 + $0x30] sm:$0xff]
      %v223 = vld [vmem:[%s198 + $0x38] sm:$0xff]
      %v224 = vld [vmem:[%s198 + $0x40] sm:$0xff]
      %v225 = vld [vmem:[%s198 + $0x48] sm:$0xff]
      %v226 = vld [vmem:[%s198 + $0x50] sm:$0xff]
      %v227 = vld [vmem:[%s198 + $0x58] sm:$0xff]
      %v228 = vld [vmem:[%s198 + $0x60] sm:$0xff]
      %v229 = vld [vmem:[%s198 + $0x68] sm:$0xff]
      %v230 = vld [vmem:[%s198 + $0x70] sm:$0xff]
      %v231 = vld [vmem:[%s198 + $0x78] sm:$0xff]
      %v232 = vld [vmem:[%s198 + $0x80] sm:$0xff]
      %v233 = vld [vmem:[%s198 + $0x88] sm:$0xff]
      %v234 = vld [vmem:[%s198 + $0x90] sm:$0xff]
      %v235 = vld [vmem:[%s198 + $0x98] sm:$0xff]
      %v236 = vld [vmem:[%s198 + $0xa0] sm:$0xff]
      %v237 = vld [vmem:[%s198 + $0xa8] sm:$0xff]
      %v238 = vld [vmem:[%s198 + $0xb0] sm:$0x33]
      %v239 = vld [vmem:[%s1] sm:$0xff]
      %v240 = vld [vmem:[%s1 + $0x8] sm:$0xff]
      %v241 = vld [vmem:[%s1 + $0x10] sm:$0xff]
      %v242 = vld [vmem:[%s1 + $0x18] sm:$0xff]
      %v243 = vld [vmem:[%s1 + $0x20] sm:$0xff]
      %245 = vset.pattern.permute.xlu0 0
      %246 = vperm.xlu0 %245, %v239
      %v247 = vpop.permute.xlu0 %246
      %250 = vset.pattern.permute.xlu0 0
      %251 = vperm.xlu0 %250, %v240
      %v252 = vpop.permute.xlu0 %251
      %255 = vset.pattern.permute.xlu0 0
      %256 = vperm.xlu0 %255, %v241
      %v257 = vpop.permute.xlu0 %256
      %260 = vset.pattern.permute.xlu0 0
      %261 = vperm.xlu0 %260, %v242
      %v262 = vpop.permute.xlu0 %261
      %265 = vset.pattern.permute.xlu0 0
      %266 = vperm.xlu0 %265, %v243
      %v267 = vpop.permute.xlu0 %266
      %v274 = vunpack.c.l.b16 %v211
      %v275 = vunpack.c.h.b16 %v211
      %v276 = vunpack.c.l.b16 %v212
      %v277 = vunpack.c.h.b16 %v212
      %v278 = vunpack.c.l.b16 %v213
      %v279 = vunpack.c.h.b16 %v213
      %v280 = vunpack.c.l.b16 %v214
      %v281 = vunpack.c.h.b16 %v214
      %v282 = vunpack.c.l.b16 %v215
      %v283 = vunpack.c.h.b16 %v215
      %v284 = vpack.c.b16 %v276, %v274
      %v285 = vpack.c.b16 %v277, %v275
      %v286 = vpack.c.b16 %v280, %v278
      %v287 = vpack.c.b16 %v281, %v279
      %v288 = vpack.c.b16 %v282, %v282
      %v289 = vpack.c.b16 %v283, %v283
      %v316 = vunpack.c.l.b16 %v216
      %v317 = vunpack.c.h.b16 %v216
      %v318 = vunpack.c.l.b16 %v217
      %v319 = vunpack.c.h.b16 %v217
      %v320 = vunpack.c.l.b16 %v218
      %v321 = vunpack.c.h.b16 %v218
      %v322 = vunpack.c.l.b16 %v219
      %v323 = vunpack.c.h.b16 %v219
      %v324 = vunpack.c.l.b16 %v220
      %v325 = vunpack.c.h.b16 %v220
      %v326 = vunpack.c.l.b16 %v221
      %v327 = vunpack.c.h.b16 %v221
      %v328 = vunpack.c.l.b16 %v222
      %v329 = vunpack.c.h.b16 %v222
      %v330 = vunpack.c.l.b16 %v223
      %v331 = vunpack.c.h.b16 %v223
      %v332 = vunpack.c.l.b16 %v224
      %v333 = vunpack.c.h.b16 %v224
      %v334 = vunpack.c.l.b16 %v225
      %v335 = vunpack.c.h.b16 %v225
      %v336 = vunpack.c.l.b16 %v226
      %v337 = vunpack.c.h.b16 %v226
      %v338 = vunpack.c.l.b16 %v227
      %v339 = vunpack.c.h.b16 %v227
      %v340 = vunpack.c.l.b16 %v228
      %v341 = vunpack.c.h.b16 %v228
      %v342 = vunpack.c.l.b16 %v229
      %v343 = vunpack.c.h.b16 %v229
      %v344 = vunpack.c.l.b16 %v230
      %v345 = vunpack.c.h.b16 %v230
      %v346 = vunpack.c.l.b16 %v231
      %v347 = vunpack.c.h.b16 %v231
      %v348 = vunpack.c.l.b16 %v232
      %v349 = vunpack.c.h.b16 %v232
      %v350 = vunpack.c.l.b16 %v233
      %v351 = vunpack.c.h.b16 %v233
      %v352 = vunpack.c.l.b16 %v234
      %v353 = vunpack.c.h.b16 %v234
      %v354 = vunpack.c.l.b16 %v235
      %v355 = vunpack.c.h.b16 %v235
      %v356 = vunpack.c.l.b16 %v236
      %v357 = vunpack.c.h.b16 %v236
      %v358 = vunpack.c.l.b16 %v237
      %v359 = vunpack.c.h.b16 %v237
      %v360 = vunpack.c.l.b16 %v238
      %v361 = vunpack.c.h.b16 %v238
      %v362 = vpack.c.b16 %v318, %v316
      %v363 = vpack.c.b16 %v319, %v317
      %v364 = vpack.c.b16 %v322, %v320
      %v365 = vpack.c.b16 %v323, %v321
      %v366 = vpack.c.b16 %v326, %v324
      %v367 = vpack.c.b16 %v327, %v325
      %v368 = vpack.c.b16 %v330, %v328
      %v369 = vpack.c.b16 %v331, %v329
      %v370 = vpack.c.b16 %v334, %v332
      %v371 = vpack.c.b16 %v335, %v333
      %v372 = vpack.c.b16 %v338, %v336
      %v373 = vpack.c.b16 %v339, %v337
      %v374 = vpack.c.b16 %v342, %v340
      %v375 = vpack.c.b16 %v343, %v341
      %v376 = vpack.c.b16 %v346, %v344
      %v377 = vpack.c.b16 %v347, %v345
      %v378 = vpack.c.b16 %v350, %v348
      %v379 = vpack.c.b16 %v351, %v349
      %v380 = vpack.c.b16 %v354, %v352
      %v381 = vpack.c.b16 %v355, %v353
      %v382 = vpack.c.b16 %v358, %v356
      %v383 = vpack.c.b16 %v359, %v357
      %v384 = vpack.c.b16 %v360, %v360
      %v385 = vpack.c.b16 %v361, %v361
      %vm408 = vcmask 424960
      %v410 = vsel %vm408, %v285, 0
      %v413 = vsel %vm408, %v287, 0
      %v416 = vsel %vm408, %v289, 0
      %vm418 = vcmask 1041408
      %v420 = vsel %vm418, %v384, 0
      %v423 = vsel %vm418, %v385, 0
      %425 = vmatprep.subr.bf16.mxu0 %v377
      %426 = vmatpush1.bf16.msra.mxu0 %v376
      %427 = vmatprep.subr.bf16.mxu0 %v375
      %428 = vmatpush1.bf16.msra.mxu0 %v374
      %429 = vmatprep.subr.bf16.mxu0 %v373
      %430 = vmatpush1.bf16.msra.mxu0 %v372
      %431 = vmatprep.subr.bf16.mxu0 %v371
      %432 = vmatpush1.bf16.msra.mxu0 %v370
      %433 = vmatprep.subr.bf16.mxu0 %v369
      %434 = vmatpush1.bf16.msra.mxu0 %v368
      %435 = vmatprep.subr.bf16.mxu0 %v367
      %436 = vmatpush1.bf16.msra.mxu0 %v366
      %437 = vmatprep.subr.bf16.mxu0 %v365
      %438 = vmatpush1.bf16.msra.mxu0 %v364
      %439 = vmatprep.subr.bf16.mxu0 %v363
      %440 = vmatpush1.bf16.msra.mxu0 %v362
      %441 = vmatprep.subr.bf16.mxu0 0
      %442 = vmatpush2.bf16.msra.mxu0 0
      %443 = vmatprep.subr.bf16.mxu0 0
      %444 = vmatpush2.bf16.msra.mxu0 0
      %445 = vmatprep.subr.bf16.mxu0 0
      %446 = vmatpush2.bf16.msra.mxu0 0
      %447 = vmatprep.subr.bf16.mxu0 0
      %448 = vmatpush2.bf16.msra.mxu0 0
      %449 = vmatprep.subr.bf16.mxu0 %v423
      %450 = vmatpush2.bf16.msra.mxu0 %v420
      %451 = vmatprep.subr.bf16.mxu0 %v383
      %452 = vmatpush2.bf16.msra.mxu0 %v382
      %453 = vmatprep.subr.bf16.mxu0 %v381
      %454 = vmatpush2.bf16.msra.mxu0 %v380
      %455 = vmatprep.subr.bf16.mxu0 %v379
      %456 = vmatpush2.bf16.msra.mxu0 %v378
      %457 = vmatprep.mubr.bf16.mxu0 %v410
      %458 = vmatmul.mubr.bf16.gmra.mxu0 %v284
      %v459 = vpop.f32.mrf.mxu0
      %v460 = vadd.f32 %v247, %v459
      %v461 = vpop.f32.mrf.mxu0
      %v462 = vadd.f32 %v247, %v461
      %v463 = vpop.f32.mrf.mxu0
      %v464 = vadd.f32 %v252, %v463
      %v465 = vpop.f32.mrf.mxu0
      %v466 = vadd.f32 %v252, %v465
      %467 = vmatprep.mubr.bf16.mxu0 %v413
      %468 = vmatmul.mubr.bf16.gmra.mxu0 %v286
      %v469 = vpop.f32.mrf.mxu0
      %v470 = vadd.f32 %v257, %v469
      %v471 = vpop.f32.mrf.mxu0
      %v472 = vadd.f32 %v257, %v471
      %v473 = vpop.f32.mrf.mxu0
      %v474 = vadd.f32 %v262, %v473
      %v475 = vpop.f32.mrf.mxu0
      %v476 = vadd.f32 %v262, %v475
      %477 = vmatprep.mubr.bf16.mxu0 %v416
      %478 = vmatmul.mubr.bf16.gmra.mxu0 %v288
      %v479 = vpop.f32.mrf.mxu0
      %v480 = vadd.f32 %v267, %v479
      %v481 = vpop.f32.mrf.mxu0
      %v482 = vadd.f32 %v267, %v481
      %v483 = vpop.f32.mrf.mxu0
      %v484 = vpop.f32.mrf.mxu0
      %485 = vdwg.mxu0
      %vm486 = vcmp.ge.f32.partialorder %v460, 0.0
      %vm487 = vcmp.ge.f32.partialorder %v462, 0.0
      %vm488 = vcmp.ge.f32.partialorder %v464, 0.0
      %vm489 = vcmp.ge.f32.partialorder %v466, 0.0
      %vm490 = vcmp.ge.f32.partialorder %v470, 0.0
      %vm491 = vcmp.ge.f32.partialorder %v472, 0.0
      %vm492 = vcmp.ge.f32.partialorder %v474, 0.0
      %vm493 = vcmp.ge.f32.partialorder %v476, 0.0
      %vm494 = vcmp.ge.f32.partialorder %v480, 0.0
      %vm495 = vcmp.ge.f32.partialorder %v482, 0.0
      %v496 = vmul.f32 %v460, 0.2
      %v497 = vmul.f32 %v462, 0.2
      %v498 = vmul.f32 %v464, 0.2
      %v499 = vmul.f32 %v466, 0.2
      %v500 = vmul.f32 %v470, 0.2
      %v501 = vmul.f32 %v472, 0.2
      %v502 = vmul.f32 %v474, 0.2
      %v503 = vmul.f32 %v476, 0.2
      %v504 = vmul.f32 %v480, 0.2
      %v505 = vmul.f32 %v482, 0.2
      %v506 = vsel %vm486, %v460, %v496
      %v507 = vsel %vm487, %v462, %v497
      %v508 = vsel %vm488, %v464, %v498
      %v509 = vsel %vm489, %v466, %v499
      %v510 = vsel %vm490, %v470, %v500
      %v511 = vsel %vm491, %v472, %v501
      %v512 = vsel %vm492, %v474, %v502
      %v513 = vsel %vm493, %v476, %v503
      %v514 = vsel %vm494, %v480, %v504
      %v515 = vsel %vm495, %v482, %v505
      %516 = vst [vmem:[%s208] sm:$0xff] %v506
      %517 = vst [vmem:[%s208 + $0x8] sm:$0xff] %v507
      %518 = vst [vmem:[%s208 + $0x10] sm:$0xff] %v508
      %519 = vst [vmem:[%s208 + $0x18] sm:$0xff] %v509
      %520 = vst [vmem:[%s208 + $0x20] sm:$0xff] %v510
      %521 = vst [vmem:[%s208 + $0x28] sm:$0xff] %v511
      %522 = vst [vmem:[%s208 + $0x30] sm:$0xff] %v512
      %523 = vst [vmem:[%s208 + $0x38] sm:$0xff] %v513
      %524 = vst [vmem:[%s208 + $0x40] sm:$0xff] %v514
      %525 = vst [vmem:[%s208 + $0x48] sm:$0xff] %v515
      %s526 = smul.u32 2, %s19
      %p527 = scmp.lt.s32.totalorder %s18, 1
      %s528 = scalar_select %p527, %s18, 1
      %p529 = scmp.lt.s32.totalorder %s526, 1
      %s530 = scalar_select %p529, %s526, 1
      %s531 = smul.addr %s528, 10
      %s532 = sadd.s32 %s530, %s531
      %s533 = smul.addr %s532, 8
      %s534 = scalar_lea.vmem %s3, %s533
      // Predicated region
      $region33: #{ifin_forward.62} parent=31 // pred_check
        %p535 = pneg %p116
      $region34: #{ifin_forward.62} parent=31 // pred_check_branch
        %537 = sbr.rel (%p535) target = $region36
      $region35: #{ifin_forward.62} parent=31 // pred_region
        %s538 = smul.u32 2, %s19
      $region36: #{ifin_forward.62} parent=31 // pred_fallthru
        _
    $region32: #{ifin_forward.62} parent=5 // pred_fallthru
      _
    %p539 = scmp.le.s32.totalorder 2, %s9
    // Predicated region
    $region37: #{ifin_forward.62} parent=5 // pred_check
      %p540 = pneg %p539
    $region38: #{ifin_forward.62} parent=5 // pred_check_branch
      %542 = sbr.rel (%p540) target = $region40
    $region39: #{ifin_forward.62} parent=5 // pred_region
      %s543 = ssub.s32 %s9, 2
      // Predicated region
      $region41: #{ifin_forward.62} parent=39 // pred_check
        %p544 = pneg %p122
      $region42: #{ifin_forward.62} parent=39 // pred_check_branch
        %546 = sbr.rel (%p544) target = $region44
      $region43: #{ifin_forward.62} parent=39 // pred_region
        %s547 = smul.u32 2, %s21
        %p548 = scmp.lt.s32.totalorder %s20, 1
        %s549 = scalar_select %p548, %s20, 1
        %p550 = scmp.lt.s32.totalorder %s547, 1
        %s551 = scalar_select %p550, %s547, 1
        %s552 = smul.addr %s549, 10
        %s553 = sadd.s32 %s551, %s552
        %s554 = smul.addr %s553, 8
        %s555 = scalar_lea.vmem %s3, %s554
      $region44: #{ifin_forward.62} parent=39 // pred_fallthru
        _
    $region40: #{ifin_forward.62} parent=5 // pred_fallthru
      _
  $region6: #{ifin_forward.62} parent=0 // loop_footer
    %s13 = sadd.s32 1, %s9
  $region7: #{ifin_forward.62} parent=0 // loop_footer_branch
    %8 = sbr.rel target = $region3
  $region8: #{ifin_forward.62} parent=0 // loop_exit
    _

// kernel: ifin_forward.66
$region0: #{ifin_forward.66}
  #allocation0 [shape = 'u32[]', space=smem, size = 0x4, offset = 0x4, fixed_abs, tag = 'smem constant byte address 0x4 - core index']
  #allocation1 [shape = 'u32[144,128]{1,0:T(1,128)}', space=vmem, size = 0x12000, scoped, tag = 'internal scratch']
  %s0 = inlined_call_operand.vmem [shape: bf16[4,180], index: 0, kind: input, shape index: {}]
  %s1 = inlined_call_operand.vmem [shape: f32[4,1], index: 1, kind: input, shape index: {}]
  %s2 = inlined_call_operand.vmem [shape: bf16[2,180,256], index: 2, kind: input, shape index: {}]
  %s3 = inlined_call_operand.vmem [shape: f32[2,4,256], index: 3, kind: output, shape index: {}]
  %s4 = sld [smem:[#allocation0]]
  $region45: #{ifin_forward.66} parent=0
    _
  %s6 = ssub.s32 1, %s4
  %s7 = scalar_select 0, %s6, %s4
  loop: start=0, step=1, limit=4
  $region2: #{ifin_forward.66} parent=0 // loop_pre_header
    _
  $region3: #{ifin_forward.66} parent=0 // loop_header
    %s9 = sphi 0, %s13
    %p10 = scmp.ge.s32.totalorder %s9, 4
    %s16 = sphi 0, %s28
    %s17 = sphi 0, %s24
    %s18 = sphi 0, %s16
    %s19 = sphi 0, %s17
    %s20 = sphi 0, %s18
    %s21 = sphi 0, %s19
    %s29 = sphi 0, %s29
    %s31 = sphi 0, %s29
    %s32 = sphi 0, %s31
    %s46 = sphi 0, %s32
    %s50 = sphi 0, %s50
    %s52 = sphi 0, %s50
    %s53 = sphi 0, %s52
    %s67 = sphi 0, %s53
    %s75 = sphi 0, %s77
    %s78 = sphi 0, %s75
    %s79 = sphi 0, %s78
    %s95 = sphi 0, %s79
    %s103 = sphi 0, %s105
    %s106 = sphi 0, %s103
    %s107 = sphi 0, %s106
    %s123 = sphi 0, %s107
  $region4: #{ifin_forward.66} parent=0 // loop_header_branch
    %12 = sbr.rel (%p10) target = $region8
  $region5: #{ifin_forward.66} parent=0 // loop_body
    %s14 = ssub.s32 %s9, 1
    %s15 = ssub.s32 %s9, 2
    %s22 = sadd.s32 1, %s17
    %p23 = scmp.ge.s32.totalorder %s22, 1
    %s24 = scalar_select %p23, 0, %s22
    %s25 = sadd.s32 1, %s16
    %s26 = scalar_select %p23, %s25, %s16
    %p27 = scmp.ge.s32.totalorder %s26, 2
    %s28 = scalar_select %p27, 0, %s26
    %s30 = sadd.s32 %s29, 1
    %p33 = scmp.eq.s32.totalorder %s9, 1
    %p34 = scmp.ne.s32.totalorder %s29, %s31
    %p35 = scmp.eq.s32.totalorder %s9, 0
    %p36 = por %p34, %p35
    %p37 = scmp.ne.s32.totalorder %s29, %s31
    %p38 = scmp.eq.s32.totalorder %s14, 1
    %p39 = por %p37, %p38
    %p40 = scmp.ne.s32.totalorder %s31, %s32
    %p41 = scmp.eq.s32.totalorder %s14, 0
    %p42 = por %p40, %p41
    %p43 = scmp.ne.s32.totalorder %s31, %s32
    %p44 = scmp.eq.s32.totalorder %s15, 1
    %p45 = por %p43, %p44
    %p47 = scmp.ne.s32.totalorder %s32, %s46
    %p48 = scmp.eq.s32.totalorder %s15, 0
    %p49 = por %p47, %p48
    %s51 = sadd.s32 %s50, 1
    %p54 = scmp.eq.s32.totalorder %s9, 1
    %p55 = scmp.ne.s32.totalorder %s50, %s52
    %p56 = scmp.eq.s32.totalorder %s9, 0
    %p57 = por %p55, %p56
    %p58 = scmp.ne.s32.totalorder %s50, %s52
    %p59 = scmp.eq.s32.totalorder %s14, 1
    %p60 = por %p58, %p59
    %p61 = scmp.ne.s32.totalorder %s52, %s53
    %p62 = scmp.eq.s32.totalorder %s14, 0
    %p63 = por %p61, %p62
    %p64 = scmp.ne.s32.totalorder %s52, %s53
    %p65 = scmp.eq.s32.totalorder %s15, 1
    %p66 = por %p64, %p65
    %p68 = scmp.ne.s32.totalorder %s53, %s67
    %p69 = scmp.eq.s32.totalorder %s15, 0
    %p70 = por %p68, %p69
    %s71 = ssub.s32 %s16, %s28
    %s72 = ssub.s32 %s17, %s24
    %s73 = sor.u32 %s71, %s72
    %p74 = scmp.eq.s32.totalorder %s73, 0
    %s76 = sadd.s32 %s75, 1
    %s77 = scalar_select %p74, %s75, %s76
    %p80 = pneg %p74
    %p81 = scmp.eq.s32.totalorder %s9, 1
    %p82 = por %p80, %p81
    %p83 = scmp.ne.s32.totalorder %s75, %s78
    %p84 = scmp.eq.s32.totalorder %s9, 0
    %p85 = por %p83, %p84
    %p86 = scmp.ne.s32.totalorder %s75, %s78
    %p87 = scmp.eq.s32.totalorder %s14, 1
    %p88 = por %p86, %p87
    %p89 = scmp.ne.s32.totalorder %s78, %s79
    %p90 = scmp.eq.s32.totalorder %s14, 0
    %p91 = por %p89, %p90
    %p92 = scmp.ne.s32.totalorder %s78, %s79
    %p93 = scmp.eq.s32.totalorder %s15, 1
    %p94 = por %p92, %p93
    %p96 = scmp.ne.s32.totalorder %s79, %s95
    %p97 = scmp.eq.s32.totalorder %s15, 0
    %p98 = por %p96, %p97
    %s99 = ssub.s32 %s16, %s28
    %s100 = ssub.s32 %s17, %s24
    %s101 = sor.u32 %s99, %s100
    %p102 = scmp.eq.s32.totalorder %s101, 0
    %s104 = sadd.s32 %s103, 1
    %s105 = scalar_select %p102, %s103, %s104
    %p108 = pneg %p102
    %p109 = scmp.eq.s32.totalorder %s9, 1
    %p110 = por %p108, %p109
    %p111 = scmp.ne.s32.totalorder %s103, %s106
    %p112 = scmp.eq.s32.totalorder %s9, 0
    %p113 = por %p111, %p112
    %p114 = scmp.ne.s32.totalorder %s103, %s106
    %p115 = scmp.eq.s32.totalorder %s14, 1
    %p116 = por %p114, %p115
    %p117 = scmp.ne.s32.totalorder %s106, %s107
    %p118 = scmp.eq.s32.totalorder %s14, 0
    %p119 = por %p117, %p118
    %p120 = scmp.ne.s32.totalorder %s106, %s107
    %p121 = scmp.eq.s32.totalorder %s15, 1
    %p122 = por %p120, %p121
    %p124 = scmp.ne.s32.totalorder %s107, %s123
    %p125 = scmp.eq.s32.totalorder %s15, 0
    %p126 = por %p124, %p125
    %p127 = scmp.le.s32.totalorder 1, %s9
    %p128 = scmp.lt.s32.totalorder %s9, 3
    %p129 = pnand %p127, %p128
    %p130 = pneg %p129
    // Predicated region
    $region9: #{ifin_forward.66} parent=5 // pred_check
      _
    $region10: #{ifin_forward.66} parent=5 // pred_check_branch
      %132 = sbr.rel (%p129) target = $region12
    $region11: #{ifin_forward.66} parent=5 // pred_region
      %s133 = ssub.s32 %s9, 1
      // Predicated region
      $region13: #{ifin_forward.66} parent=11 // pred_check
        %p134 = pneg %p42
      $region14: #{ifin_forward.66} parent=11 // pred_check_branch
        %136 = sbr.rel (%p134) target = $region16
      $region15: #{ifin_forward.66} parent=11 // pred_region
        _
      $region16: #{ifin_forward.66} parent=11 // pred_fallthru
        _
      // Predicated region
      $region17: #{ifin_forward.66} parent=11 // pred_check
        %p137 = pneg %p63
      $region18: #{ifin_forward.66} parent=11 // pred_check_branch
        %139 = sbr.rel (%p137) target = $region20
      $region19: #{ifin_forward.66} parent=11 // pred_region
        _
      $region20: #{ifin_forward.66} parent=11 // pred_fallthru
        _
    $region12: #{ifin_forward.66} parent=5 // pred_fallthru
      _
    %p140 = scmp.lt.s32.totalorder %s9, 2
    // Predicated region
    $region21: #{ifin_forward.66} parent=5 // pred_check
      %p141 = pneg %p140
    $region22: #{ifin_forward.66} parent=5 // pred_check_branch
      %143 = sbr.rel (%p141) target = $region24
    $region23: #{ifin_forward.66} parent=5 // pred_region
      // Predicated region
      $region25: #{ifin_forward.66} parent=23 // pred_check
        %p144 = pneg %p85
      $region26: #{ifin_forward.66} parent=23 // pred_check_branch
        %146 = sbr.rel (%p144) target = $region28
      $region27: #{ifin_forward.66} parent=23 // pred_region
        %s147 = smul.u32 2, %s17
        %p148 = scmp.lt.s32.totalorder %s16, 1
        %s149 = scalar_select %p148, %s16, 1
        %p150 = scmp.lt.s32.totalorder %s147, 1
        %s151 = scalar_select %p150, %s147, 1
        %s152 = smul.addr %s149, 46
        %s153 = sadd.s32 %s151, %s152
        %s154 = smul.addr %s153, 4
        %s155 = scalar_lea.vmem %s2, %s154
        %s156 = smul.u32 2, %s17
      $region28: #{ifin_forward.66} parent=23 // pred_fallthru
        _
    $region24: #{ifin_forward.66} parent=5 // pred_fallthru
      _
    %p157 = scmp.le.s32.totalorder 1, %s9
    %p158 = scmp.lt.s32.totalorder %s9, 3
    %p159 = pnand %p157, %p158
    %p160 = pneg %p159
    // Predicated region
    $region29: #{ifin_forward.66} parent=5 // pred_check
      _
    $region30: #{ifin_forward.66} parent=5 // pred_check_branch
      %162 = sbr.rel (%p159) target = $region32
    $region31: #{ifin_forward.66} parent=5 // pred_region
      %s163 = ssub.s32 %s9, 1
      %p164 = pneg %p42
      %p165 = pneg %p39
      %p166 = pneg %p63
      %p167 = pneg %p60
      %s168 = smul.u32 2, %s19
      %p169 = scmp.lt.s32.totalorder %s18, 1
      %s170 = scalar_select %p169, %s18, 1
      %p171 = scmp.lt.s32.totalorder %s168, 1
      %s172 = scalar_select %p171, %s168, 1
      %s173 = smul.addr %s170, 46
      %s174 = sadd.s32 %s172, %s173
      %s175 = smul.addr %s174, 4
      %s176 = scalar_lea.vmem %s2, %s175
      %p177 = pneg %p91
      %p178 = pneg %p88
      %p179 = pneg %p119
      %p180 = pneg %p116
      %s181 = smul.u32 2, %s19
      %p182 = scmp.lt.s32.totalorder %s18, 1
      %s183 = scalar_select %p182, %s18, 1
      %p184 = scmp.lt.s32.totalorder %s181, 1
      %s185 = scalar_select %p184, %s181, 1
      %s186 = smul.addr %s183, 2
      %s187 = sadd.s32 %s185, %s186
      %s188 = smul.addr %s187, 4
      %s189 = scalar_lea.vmem %s3, %s188
      %s190 = smul.u32 2, %s19
      %p191 = scmp.lt.s32.totalorder %s18, 1
      %s192 = scalar_select %p191, %s18, 1
      %p193 = scmp.lt.s32.totalorder %s190, 1
      %s194 = scalar_select %p193, %s190, 1
      %s195 = smul.addr %s192, 46
      %s196 = sadd.s32 %s194, %s195
      %s197 = smul.addr %s196, 4
      %s198 = scalar_lea.vmem %s2, %s197
      %s199 = smul.u32 2, %s19
      %s200 = smul.u32 2, %s19
      %p201 = scmp.lt.s32.totalorder %s18, 1
      %s202 = scalar_select %p201, %s18, 1
      %p203 = scmp.lt.s32.totalorder %s200, 1
      %s204 = scalar_select %p203, %s200, 1
      %s205 = smul.addr %s202, 2
      %s206 = sadd.s32 %s204, %s205
      %s207 = smul.addr %s206, 4
      %s208 = scalar_lea.vmem %s3, %s207
      %s209 = smul.u32 2, %s19
      %v211 = vld [vmem:[%s0] sm:$0xf]
      %v212 = vld [vmem:[%s198] sm:$0xff]
      %v213 = vld [vmem:[%s198 + $0x8] sm:$0xff]
      %v214 = vld [vmem:[%s198 + $0x10] sm:$0xff]
      %v215 = vld [vmem:[%s198 + $0x18] sm:$0xff]
      %v216 = vld [vmem:[%s198 + $0x20] sm:$0xff]
      %v217 = vld [vmem:[%s198 + $0x28] sm:$0xff]
      %v218 = vld [vmem:[%s198 + $0x30] sm:$0xff]
      %v219 = vld [vmem:[%s198 + $0x38] sm:$0xff]
      %v220 = vld [vmem:[%s198 + $0x40] sm:$0xff]
      %v221 = vld [vmem:[%s198 + $0x48] sm:$0xff]
      %v222 = vld [vmem:[%s198 + $0x50] sm:$0xff]
      %v223 = vld [vmem:[%s198 + $0x58] sm:$0xff]
      %v224 = vld [vmem:[%s198 + $0x60] sm:$0xff]
      %v225 = vld [vmem:[%s198 + $0x68] sm:$0xff]
      %v226 = vld [vmem:[%s198 + $0x70] sm:$0xff]
      %v227 = vld [vmem:[%s198 + $0x78] sm:$0xff]
      %v228 = vld [vmem:[%s198 + $0x80] sm:$0xff]
      %v229 = vld [vmem:[%s198 + $0x88] sm:$0xff]
      %v230 = vld [vmem:[%s198 + $0x90] sm:$0xff]
      %v231 = vld [vmem:[%s198 + $0x98] sm:$0xff]
      %v232 = vld [vmem:[%s198 + $0xa0] sm:$0xff]
      %v233 = vld [vmem:[%s198 + $0xa8] sm:$0xff]
      %v234 = vld [vmem:[%s198 + $0xb0] sm:$0x33]
      %v235 = vld [vmem:[%s1] sm:$0xf]
      %237 = vset.pattern.permute.xlu0 0
      %238 = vperm.xlu0 %237, %v235
      %v239 = vpop.permute.xlu0 %238
      %v243 = vunpack.c.l.s4 1983009808
      %v244 = vunpack.c.0.s8 %v243
      %v245 = vlaneseq
      %v246 = vshrl.u32 %v245, 7
      %v247 = vsub.s32 %v244, %v246
      %v248 = vrot.slane %v211, %v247
      %v249 = vcombine.high %v248, %v248
      %v274 = vunpack.c.l.b16 %v212
      %v275 = vunpack.c.h.b16 %v212
      %v276 = vunpack.c.l.b16 %v213
      %v277 = vunpack.c.h.b16 %v213
      %v278 = vunpack.c.l.b16 %v214
      %v279 = vunpack.c.h.b16 %v214
      %v280 = vunpack.c.l.b16 %v215
      %v281 = vunpack.c.h.b16 %v215
      %v282 = vunpack.c.l.b16 %v216
      %v283 = vunpack.c.h.b16 %v216
      %v284 = vunpack.c.l.b16 %v217
      %v285 = vunpack.c.h.b16 %v217
      %v286 = vunpack.c.l.b16 %v218
      %v287 = vunpack.c.h.b16 %v218
      %v288 = vunpack.c.l.b16 %v219
      %v289 = vunpack.c.h.b16 %v219
      %v290 = vunpack.c.l.b16 %v220
      %v291 = vunpack.c.h.b16 %v220
      %v292 = vunpack.c.l.b16 %v221
      %v293 = vunpack.c.h.b16 %v221
      %v294 = vunpack.c.l.b16 %v222
      %v295 = vunpack.c.h.b16 %v222
      %v296 = vunpack.c.l.b16 %v223
      %v297 = vunpack.c.h.b16 %v223
      %v298 = vunpack.c.l.b16 %v224
      %v299 = vunpack.c.h.b16 %v224
      %v300 = vunpack.c.l.b16 %v225
      %v301 = vunpack.c.h.b16 %v225
      %v302 = vunpack.c.l.b16 %v226
      %v303 = vunpack.c.h.b16 %v226
      %v304 = vunpack.c.l.b16 %v227
      %v305 = vunpack.c.h.b16 %v227
      %v306 = vunpack.c.l.b16 %v228
      %v307 = vunpack.c.h.b16 %v228
      %v308 = vunpack.c.l.b16 %v229
      %v309 = vunpack.c.h.b16 %v229
      %v310 = vunpack.c.l.b16 %v230
      %v311 = vunpack.c.h.b16 %v230
      %v312 = vunpack.c.l.b16 %v231
      %v313 = vunpack.c.h.b16 %v231
      %v314 = vunpack.c.l.b16 %v232
      %v315 = vunpack.c.h.b16 %v232
      %v316 = vunpack.c.l.b16 %v233
      %v317 = vunpack.c.h.b16 %v233
      %v318 = vunpack.c.l.b16 %v234
      %v319 = vunpack.c.h.b16 %v234
      %v320 = vpack.c.b16 %v276, %v274
      %v321 = vpack.c.b16 %v277, %v275
      %v322 = vpack.c.b16 %v280, %v278
      %v323 = vpack.c.b16 %v281, %v279
      %v324 = vpack.c.b16 %v284, %v282
      %v325 = vpack.c.b16 %v285, %v283
      %v326 = vpack.c.b16 %v288, %v286
      %v327 = vpack.c.b16 %v289, %v287
      %v328 = vpack.c.b16 %v292, %v290
      %v329 = vpack.c.b16 %v293, %v291
      %v330 = vpack.c.b16 %v296, %v294
      %v331 = vpack.c.b16 %v297, %v295
      %v332 = vpack.c.b16 %v300, %v298
      %v333 = vpack.c.b16 %v301, %v299
      %v334 = vpack.c.b16 %v304, %v302
      %v335 = vpack.c.b16 %v305, %v303
      %v336 = vpack.c.b16 %v308, %v306
      %v337 = vpack.c.b16 %v309, %v307
      %v338 = vpack.c.b16 %v312, %v310
      %v339 = vpack.c.b16 %v313, %v311
      %v340 = vpack.c.b16 %v316, %v314
      %v341 = vpack.c.b16 %v317, %v315
      %v342 = vpack.c.b16 %v318, %v318
      %v343 = vpack.c.b16 %v319, %v319
      %vm366 = vcmask 424960
      %v368 = vsel %vm366, %v249, 0
      %vm370 = vcmask 1041408
      %v372 = vsel %vm370, %v342, 0
      %v375 = vsel %vm370, %v343, 0
      %377 = vmatprep.subr.bf16.mxu0 %v335
      %378 = vmatpush1.bf16.msra.mxu0 %v334
      %379 = vmatprep.subr.bf16.mxu0 %v333
      %380 = vmatpush1.bf16.msra.mxu0 %v332
      %381 = vmatprep.subr.bf16.mxu0 %v331
      %382 = vmatpush1.bf16.msra.mxu0 %v330
      %383 = vmatprep.subr.bf16.mxu0 %v329
      %384 = vmatpush1.bf16.msra.mxu0 %v328
      %385 = vmatprep.subr.bf16.mxu0 %v327
      %386 = vmatpush1.bf16.msra.mxu0 %v326
      %387 = vmatprep.subr.bf16.mxu0 %v325
      %388 = vmatpush1.bf16.msra.mxu0 %v324
      %389 = vmatprep.subr.bf16.mxu0 %v323
      %390 = vmatpush1.bf16.msra.mxu0 %v322
      %391 = vmatprep.subr.bf16.mxu0 %v321
      %392 = vmatpush1.bf16.msra.mxu0 %v320
      %393 = vmatprep.subr.bf16.mxu0 0
      %394 = vmatpush2.bf16.msra.mxu0 0
      %395 = vmatprep.subr.bf16.mxu0 0
      %396 = vmatpush2.bf16.msra.mxu0 0
      %397 = vmatprep.subr.bf16.mxu0 0
      %398 = vmatpush2.bf16.msra.mxu0 0
      %399 = vmatprep.subr.bf16.mxu0 0
      %400 = vmatpush2.bf16.msra.mxu0 0
      %401 = vmatprep.subr.bf16.mxu0 %v375
      %402 = vmatpush2.bf16.msra.mxu0 %v372
      %403 = vmatprep.subr.bf16.mxu0 %v341
      %404 = vmatpush2.bf16.msra.mxu0 %v340
      %405 = vmatprep.subr.bf16.mxu0 %v339
      %406 = vmatpush2.bf16.msra.mxu0 %v338
      %407 = vmatprep.subr.bf16.mxu0 %v337
      %408 = vmatpush2.bf16.msra.mxu0 %v336
      %409 = vmatprep.mubr.bf16.mxu0 %v368
      %410 = vmatmul.mubr.bf16.gmra.mxu0 %v248
      %v411 = vpop.f32.mrf.mxu0
      %v412 = vadd.f32 %v239, %v411
      %v413 = vpop.f32.mrf.mxu0
      %v414 = vadd.f32 %v239, %v413
      %v415 = vpop.f32.mrf.mxu0
      %v416 = vpop.f32.mrf.mxu0
      %417 = vdwg.mxu0
      %v418 = vmax.f32 %v412, 0.0
      %v419 = vmax.f32 %v414, 0.0
      %v422 = vcombine.low %v418, %v419
      %424 = vst [vmem:[%s208] sm:$0xff] %v422
      %s425 = smul.u32 2, %s19
      %p426 = scmp.lt.s32.totalorder %s18, 1
      %s427 = scalar_select %p426, %s18, 1
      %p428 = scmp.lt.s32.totalorder %s425, 1
      %s429 = scalar_select %p428, %s425, 1
      %s430 = smul.addr %s427, 2
      %s431 = sadd.s32 %s429, %s430
      %s432 = smul.addr %s431, 4
      %s433 = scalar_lea.vmem %s3, %s432
      // Predicated region
      $region33: #{ifin_forward.66} parent=31 // pred_check
        %p434 = pneg %p116
      $region34: #{ifin_forward.66} parent=31 // pred_check_branch
        %436 = sbr.rel (%p434) target = $region36
      $region35: #{ifin_forward.66} parent=31 // pred_region
        %s437 = smul.u32 2, %s19
      $region36: #{ifin_forward.66} parent=31 // pred_fallthru
        _
    $region32: #{ifin_forward.66} parent=5 // pred_fallthru
      _
    %p438 = scmp.le.s32.totalorder 2, %s9
    // Predicated region
    $region37: #{ifin_forward.66} parent=5 // pred_check
      %p439 = pneg %p438
    $region38: #{ifin_forward.66} parent=5 // pred_check_branch
      %441 = sbr.rel (%p439) target = $region40
    $region39: #{ifin_forward.66} parent=5 // pred_region
      %s442 = ssub.s32 %s9, 2
      // Predicated region
      $region41: #{ifin_forward.66} parent=39 // pred_check
        %p443 = pneg %p122
      $region42: #{ifin_forward.66} parent=39 // pred_check_branch
        %445 = sbr.rel (%p443) target = $region44
      $region43: #{ifin_forward.66} parent=39 // pred_region
        %s446 = smul.u32 2, %s21
        %p447 = scmp.lt.s32.totalorder %s20, 1
        %s448 = scalar_select %p447, %s20, 1
        %p449 = scmp.lt.s32.totalorder %s446, 1
        %s450 = scalar_select %p449, %s446, 1
        %s451 = smul.addr %s448, 2
        %s452 = sadd.s32 %s450, %s451
        %s453 = smul.addr %s452, 4
        %s454 = scalar_lea.vmem %s3, %s453
      $region44: #{ifin_forward.66} parent=39 // pred_fallthru
        _
    $region40: #{ifin_forward.66} parent=5 // pred_fallthru
      _
  $region6: #{ifin_forward.66} parent=0 // loop_footer
    %s13 = sadd.s32 1, %s9
  $region7: #{ifin_forward.66} parent=0 // loop_footer_branch
    %8 = sbr.rel target = $region3
  $region8: #{ifin_forward.66} parent=0 // loop_exit
    _

// kernel: ifin_forward.65
$region0: #{ifin_forward.65}
  #allocation0 [shape = 'u32[]', space=smem, size = 0x4, offset = 0x4, fixed_abs, tag = 'smem constant byte address 0x4 - core index']
  #allocation1 [shape = 'u32[144,128]{1,0:T(1,128)}', space=vmem, size = 0x12000, scoped, tag = 'internal scratch']
  %s0 = inlined_call_operand.vmem [shape: f32[2,20,256], index: 0, kind: input, shape index: {}]
  %s1 = inlined_call_operand.vmem [shape: f32[2,20,1], index: 1, kind: output, shape index: {0}]
  %s2 = inlined_call_operand.vmem [shape: f32[2,20,1], index: 2, kind: output, shape index: {1}]
  %3 = xla_tuple %s1, %s2
  %s4 = sld [smem:[#allocation0]]
  $region45: #{ifin_forward.65} parent=0
    _
  %s6 = ssub.s32 1, %s4
  %s7 = scalar_select 0, %s6, %s4
  loop: start=0, step=1, limit=4
  $region2: #{ifin_forward.65} parent=0 // loop_pre_header
    _
  $region3: #{ifin_forward.65} parent=0 // loop_header
    %s9 = sphi 0, %s13
    %p10 = scmp.ge.s32.totalorder %s9, 4
    %s19 = sphi 0, %s21
    %s22 = sphi 0, %s19
    %s23 = sphi 0, %s22
    %s39 = sphi 0, %s23
    %s45 = sphi 0, %s47
    %s48 = sphi 0, %s45
    %s49 = sphi 0, %s48
    %s65 = sphi 0, %s49
    %s71 = sphi 0, %s73
    %s74 = sphi 0, %s71
    %s75 = sphi 0, %s74
    %s91 = sphi 0, %s75
  $region4: #{ifin_forward.65} parent=0 // loop_header_branch
    %12 = sbr.rel (%p10) target = $region8
  $region5: #{ifin_forward.65} parent=0 // loop_body
    %s14 = ssub.s32 %s9, 1
    %s15 = ssub.s32 %s9, 2
    %s16 = sadd.s32 %s9, 1
    %s17 = ssub.s32 %s9, %s16
    %p18 = scmp.eq.s32.totalorder %s17, 0
    %s20 = sadd.s32 %s19, 1
    %s21 = scalar_select %p18, %s19, %s20
    %p24 = pneg %p18
    %p25 = scmp.eq.s32.totalorder %s9, 1
    %p26 = por %p24, %p25
    %p27 = scmp.ne.s32.totalorder %s19, %s22
    %p28 = scmp.eq.s32.totalorder %s9, 0
    %p29 = por %p27, %p28
    %p30 = scmp.ne.s32.totalorder %s19, %s22
    %p31 = scmp.eq.s32.totalorder %s14, 1
    %p32 = por %p30, %p31
    %p33 = scmp.ne.s32.totalorder %s22, %s23
    %p34 = scmp.eq.s32.totalorder %s14, 0
    %p35 = por %p33, %p34
    %p36 = scmp.ne.s32.totalorder %s22, %s23
    %p37 = scmp.eq.s32.totalorder %s15, 1
    %p38 = por %p36, %p37
    %p40 = scmp.ne.s32.totalorder %s23, %s39
    %p41 = scmp.eq.s32.totalorder %s15, 0
    %p42 = por %p40, %p41
    %s43 = ssub.s32 %s9, %s16
    %p44 = scmp.eq.s32.totalorder %s43, 0
    %s46 = sadd.s32 %s45, 1
    %s47 = scalar_select %p44, %s45, %s46
    %p50 = pneg %p44
    %p51 = scmp.eq.s32.totalorder %s9, 1
    %p52 = por %p50, %p51
    %p53 = scmp.ne.s32.totalorder %s45, %s48
    %p54 = scmp.eq.s32.totalorder %s9, 0
    %p55 = por %p53, %p54
    %p56 = scmp.ne.s32.totalorder %s45, %s48
    %p57 = scmp.eq.s32.totalorder %s14, 1
    %p58 = por %p56, %p57
    %p59 = scmp.ne.s32.totalorder %s48, %s49
    %p60 = scmp.eq.s32.totalorder %s14, 0
    %p61 = por %p59, %p60
    %p62 = scmp.ne.s32.totalorder %s48, %s49
    %p63 = scmp.eq.s32.totalorder %s15, 1
    %p64 = por %p62, %p63
    %p66 = scmp.ne.s32.totalorder %s49, %s65
    %p67 = scmp.eq.s32.totalorder %s15, 0
    %p68 = por %p66, %p67
    %s69 = ssub.s32 %s9, %s16
    %p70 = scmp.eq.s32.totalorder %s69, 0
    %s72 = sadd.s32 %s71, 1
    %s73 = scalar_select %p70, %s71, %s72
    %p76 = pneg %p70
    %p77 = scmp.eq.s32.totalorder %s9, 1
    %p78 = por %p76, %p77
    %p79 = scmp.ne.s32.totalorder %s71, %s74
    %p80 = scmp.eq.s32.totalorder %s9, 0
    %p81 = por %p79, %p80
    %p82 = scmp.ne.s32.totalorder %s71, %s74
    %p83 = scmp.eq.s32.totalorder %s14, 1
    %p84 = por %p82, %p83
    %p85 = scmp.ne.s32.totalorder %s74, %s75
    %p86 = scmp.eq.s32.totalorder %s14, 0
    %p87 = por %p85, %p86
    %p88 = scmp.ne.s32.totalorder %s74, %s75
    %p89 = scmp.eq.s32.totalorder %s15, 1
    %p90 = por %p88, %p89
    %p92 = scmp.ne.s32.totalorder %s75, %s91
    %p93 = scmp.eq.s32.totalorder %s15, 0
    %p94 = por %p92, %p93
    %p95 = scmp.le.s32.totalorder 1, %s9
    %p96 = scmp.lt.s32.totalorder %s9, 3
    %p97 = pnand %p95, %p96
    %p98 = pneg %p97
    // Predicated region
    $region9: #{ifin_forward.65} parent=5 // pred_check
      _
    $region10: #{ifin_forward.65} parent=5 // pred_check_branch
      %100 = sbr.rel (%p97) target = $region12
    $region11: #{ifin_forward.65} parent=5 // pred_region
      %s101 = ssub.s32 %s9, 1
    $region12: #{ifin_forward.65} parent=5 // pred_fallthru
      _
    %p102 = scmp.lt.s32.totalorder %s9, 2
    // Predicated region
    $region13: #{ifin_forward.65} parent=5 // pred_check
      %p103 = pneg %p102
    $region14: #{ifin_forward.65} parent=5 // pred_check_branch
      %105 = sbr.rel (%p103) target = $region16
    $region15: #{ifin_forward.65} parent=5 // pred_region
      // Predicated region
      $region17: #{ifin_forward.65} parent=15 // pred_check
        %p106 = pneg %p29
      $region18: #{ifin_forward.65} parent=15 // pred_check_branch
        %108 = sbr.rel (%p106) target = $region20
      $region19: #{ifin_forward.65} parent=15 // pred_region
        %p109 = scmp.lt.s32.totalorder %s9, 1
        %s110 = scalar_select %p109, %s9, 1
        %s111 = smul.addr %s110, 6
        %s112 = smul.addr %s111, 8
        %s113 = scalar_lea.vmem %s0, %s112
      $region20: #{ifin_forward.65} parent=15 // pred_fallthru
        _
    $region16: #{ifin_forward.65} parent=5 // pred_fallthru
      _
    %p114 = scmp.le.s32.totalorder 1, %s9
    %p115 = scmp.lt.s32.totalorder %s9, 3
    %p116 = pnand %p114, %p115
    %p117 = pneg %p116
    // Predicated region
    $region21: #{ifin_forward.65} parent=5 // pred_check
      _
    $region22: #{ifin_forward.65} parent=5 // pred_check_branch
      %119 = sbr.rel (%p116) target = $region24
    $region23: #{ifin_forward.65} parent=5 // pred_region
      %s120 = ssub.s32 %s9, 1
      %p121 = scmp.lt.s32.totalorder %s14, 1
      %s122 = scalar_select %p121, %s14, 1
      %s123 = smul.addr %s122, 6
      %s124 = smul.addr %s123, 8
      %s125 = scalar_lea.vmem %s0, %s124
      %p126 = pneg %p35
      %p127 = pneg %p32
      %p128 = pneg %p61
      %p129 = pneg %p58
      %p130 = scmp.lt.s32.totalorder %s14, 1
      %s131 = scalar_select %p130, %s14, 1
      %s132 = smul.addr %s131, 3
      %s133 = smul.addr %s132, 8
      %s134 = scalar_lea.vmem %s1, %s133
      %p135 = pneg %p87
      %p136 = pneg %p84
      %p137 = scmp.lt.s32.totalorder %s14, 1
      %s138 = scalar_select %p137, %s14, 1
      %s139 = smul.addr %s138, 3
      %s140 = smul.addr %s139, 8
      %s141 = scalar_lea.vmem %s2, %s140
      %p142 = scmp.lt.s32.totalorder %s14, 1
      %s143 = scalar_select %p142, %s14, 1
      %s144 = smul.addr %s143, 6
      %s145 = smul.addr %s144, 8
      %s146 = scalar_lea.vmem %s0, %s145
      %p147 = scmp.lt.s32.totalorder %s14, 1
      %s148 = scalar_select %p147, %s14, 1
      %s149 = smul.addr %s148, 3
      %s150 = smul.addr %s149, 8
      %s151 = scalar_lea.vmem %s1, %s150
      %p152 = scmp.lt.s32.totalorder %s14, 1
      %s153 = scalar_select %p152, %s14, 1
      %s154 = smul.addr %s153, 3
      %s155 = smul.addr %s154, 8
      %s156 = scalar_lea.vmem %s2, %s155
      %v157 = vld [vmem:[%s146] sm:$0xff]
      %v158 = vld [vmem:[%s146 + $0x8] sm:$0xff]
      %v159 = vld [vmem:[%s146 + $0x10] sm:$0xff]
      %v160 = vld [vmem:[%s146 + $0x18] sm:$0xff]
      %v161 = vld [vmem:[%s146 + $0x20] sm:$0xf]
      %v162 = vld [vmem:[%s146 + $0x28] sm:$0xf]
      %v163 = vadd.f32 %v157, %v158
      %164 = vadd.xlane.f32.xlu0 %v163
      %v165 = vpop.xlane.xlu0 %164
      %v166 = vadd.f32 %v159, %v160
      %167 = vadd.xlane.f32.xlu0 %v166
      %v168 = vpop.xlane.xlu0 %167
      %vm169 = vcmask 1043456
      %v170 = vsel %vm169, %v161, 0.0
      %v171 = vsel %vm169, %v162, 0.0
      %v172 = vadd.f32 %v170, %v171
      %173 = vadd.xlane.f32.xlu0 %v172
      %v174 = vpop.xlane.xlu0 %173
      %v175 = vrcp.pop 256.0
      %v176 = vmul.f32 %v165, %v175
      %v177 = vmul.f32 %v168, %v175
      %v178 = vmul.f32 %v174, %v175
      %v179 = vsub.f32 %v157, %v176
      %v180 = vsub.f32 %v158, %v176
      %v181 = vsub.f32 %v159, %v177
      %v182 = vsub.f32 %v160, %v177
      %v183 = vsub.f32 %v161, %v178
      %v184 = vsub.f32 %v162, %v178
      %v185 = vmul.f32 %v179, %v179
      %v186 = vmul.f32 %v180, %v180
      %v187 = vmul.f32 %v181, %v181
      %v188 = vmul.f32 %v182, %v182
      %v189 = vmul.f32 %v183, %v183
      %v190 = vmul.f32 %v184, %v184
      %v191 = vadd.f32 %v185, %v186
      %192 = vadd.xlane.f32.xlu0 %v191
      %v193 = vpop.xlane.xlu0 %192
      %v194 = vadd.f32 %v187, %v188
      %195 = vadd.xlane.f32.xlu0 %v194
      %v196 = vpop.xlane.xlu0 %195
      %v197 = vsel %vm169, %v189, 0.0
      %v198 = vsel %vm169, %v190, 0.0
      %v199 = vadd.f32 %v197, %v198
      %200 = vadd.xlane.f32.xlu0 %v199
      %v201 = vpop.xlane.xlu0 %200
      %v202 = vrcp.pop 255.0
      %v203 = vmul.f32 %v193, %v202
      %v204 = vmul.f32 %v196, %v202
      %v205 = vmul.f32 %v201, %v202
      %vm206 = vcmask 7168
      %207 = vst.msk [vmem:[%s151] sm:$0xff] %vm206, %v176
      %208 = vst.msk [vmem:[%s151 + $0x8] sm:$0xff] %vm206, %v177
      %vm209 = vcmask 3072
      %210 = vst.msk [vmem:[%s151 + $0x10] sm:$0xf] %vm209, %v178
      %v211 = vrsqrt.pop %v203
      %v212 = vmul.f32 %v203, %v211
      %vm213 = vcmp.eq.f32.partialorder %v203, inf
      %v214 = vsel %vm213, %v203, %v212
      %vm215 = vcmp.eq.f32.partialorder %v203, 0.0
      %v216 = vand.u32 %v203, 2147483648
      %v217 = vsel %vm215, %v216, %v214
      %v218 = vrsqrt.pop %v204
      %v219 = vmul.f32 %v204, %v218
      %vm220 = vcmp.eq.f32.partialorder %v204, inf
      %v221 = vsel %vm220, %v204, %v219
      %vm222 = vcmp.eq.f32.partialorder %v204, 0.0
      %v223 = vand.u32 %v204, 2147483648
      %v224 = vsel %vm222, %v223, %v221
      %v225 = vrsqrt.pop %v205
      %v226 = vmul.f32 %v205, %v225
      %vm227 = vcmp.eq.f32.partialorder %v205, inf
      %v228 = vsel %vm227, %v205, %v226
      %vm229 = vcmp.eq.f32.partialorder %v205, 0.0
      %v230 = vand.u32 %v205, 2147483648
      %v231 = vsel %vm229, %v230, %v228
      %232 = vst.msk [vmem:[%s156] sm:$0xff] %vm206, %v217
      %233 = vst.msk [vmem:[%s156 + $0x8] sm:$0xff] %vm206, %v224
      %234 = vst.msk [vmem:[%s156 + $0x10] sm:$0xf] %vm209, %v231
      %p235 = scmp.lt.s32.totalorder %s14, 1
      %s236 = scalar_select %p235, %s14, 1
      %s237 = smul.addr %s236, 3
      %s238 = smul.addr %s237, 8
      %s239 = scalar_lea.vmem %s1, %s238
      %p240 = scmp.lt.s32.totalorder %s14, 1
      %s241 = scalar_select %p240, %s14, 1
      %s242 = smul.addr %s241, 3
      %s243 = smul.addr %s242, 8
      %s244 = scalar_lea.vmem %s2, %s243
      // Predicated region
      $region25: #{ifin_forward.65} parent=23 // pred_check
        %p245 = pneg %p58
      $region26: #{ifin_forward.65} parent=23 // pred_check_branch
        %247 = sbr.rel (%p245) target = $region28
      $region27: #{ifin_forward.65} parent=23 // pred_region
        _
      $region28: #{ifin_forward.65} parent=23 // pred_fallthru
        _
      // Predicated region
      $region29: #{ifin_forward.65} parent=23 // pred_check
        %p248 = pneg %p84
      $region30: #{ifin_forward.65} parent=23 // pred_check_branch
        %250 = sbr.rel (%p248) target = $region32
      $region31: #{ifin_forward.65} parent=23 // pred_region
        _
      $region32: #{ifin_forward.65} parent=23 // pred_fallthru
        _
    $region24: #{ifin_forward.65} parent=5 // pred_fallthru
      _
    %p251 = scmp.le.s32.totalorder 2, %s9
    // Predicated region
    $region33: #{ifin_forward.65} parent=5 // pred_check
      %p252 = pneg %p251
    $region34: #{ifin_forward.65} parent=5 // pred_check_branch
      %254 = sbr.rel (%p252) target = $region36
    $region35: #{ifin_forward.65} parent=5 // pred_region
      %s255 = ssub.s32 %s9, 2
      // Predicated region
      $region37: #{ifin_forward.65} parent=35 // pred_check
        %p256 = pneg %p64
      $region38: #{ifin_forward.65} parent=35 // pred_check_branch
        %258 = sbr.rel (%p256) target = $region40
      $region39: #{ifin_forward.65} parent=35 // pred_region
        %p259 = scmp.lt.s32.totalorder %s15, 1
        %s260 = scalar_select %p259, %s15, 1
        %s261 = smul.addr %s260, 3
        %s262 = smul.addr %s261, 8
        %s263 = scalar_lea.vmem %s1, %s262
      $region40: #{ifin_forward.65} parent=35 // pred_fallthru
        _
      // Predicated region
      $region41: #{ifin_forward.65} parent=35 // pred_check
        %p264 = pneg %p90
      $region42: #{ifin_forward.65} parent=35 // pred_check_branch
        %266 = sbr.rel (%p264) target = $region44
      $region43: #{ifin_forward.65} parent=35 // pred_region
        %p267 = scmp.lt.s32.totalorder %s15, 1
        %s268 = scalar_select %p267, %s15, 1
        %s269 = smul.addr %s268, 3
        %s270 = smul.addr %s269, 8
        %s271 = scalar_lea.vmem %s2, %s270
      $region44: #{ifin_forward.65} parent=35 // pred_fallthru
        _
    $region36: #{ifin_forward.65} parent=5 // pred_fallthru
      _
  $region6: #{ifin_forward.65} parent=0 // loop_footer
    %s13 = sadd.s32 1, %s9
  $region7: #{ifin_forward.65} parent=0 // loop_footer_branch
    %8 = sbr.rel target = $region3
  $region8: #{ifin_forward.65} parent=0 // loop_exit
    _

// kernel: ifin_forward.67
$region0: #{ifin_forward.67}
  #allocation0 [shape = 'u32[]', space=smem, size = 0x4, offset = 0x4, fixed_abs, tag = 'smem constant byte address 0x4 - core index']
  #allocation1 [shape = 'u32[144,128]{1,0:T(1,128)}', space=vmem, size = 0x12000, scoped, tag = 'internal scratch']
  %s0 = inlined_call_operand.vmem [shape: bf16[20,36], index: 0, kind: input, shape index: {}]
  %s1 = inlined_call_operand.vmem [shape: f32[20,1], index: 1, kind: input, shape index: {}]
  %s2 = inlined_call_operand.vmem [shape: bf16[20,36], index: 2, kind: input, shape index: {}]
  %s3 = inlined_call_operand.vmem [shape: f32[20,1], index: 3, kind: input, shape index: {}]
  %s4 = inlined_call_operand.vmem [shape: bf16[2,36,256], index: 4, kind: input, shape index: {}]
  %s5 = inlined_call_operand.vmem [shape: f32[2,20,256], index: 5, kind: input, shape index: {}]
  %s6 = inlined_call_operand.vmem [shape: f32[2,20,1], index: 6, kind: input, shape index: {}]
  %s7 = inlined_call_operand.vmem [shape: f32[2,20,1], index: 7, kind: input, shape index: {}]
  %s8 = inlined_call_operand.vmem [shape: f32[2,20,256], index: 8, kind: output, shape index: {}]
  %s9 = sld [smem:[#allocation0]]
  $region65: #{ifin_forward.67} parent=0
    _
  %s11 = ssub.s32 1, %s9
  %s12 = scalar_select 0, %s11, %s9
  loop: start=0, step=1, limit=4
  $region2: #{ifin_forward.67} parent=0 // loop_pre_header
    _
  $region3: #{ifin_forward.67} parent=0 // loop_header
    %s14 = sphi 0, %s18
    %p15 = scmp.ge.s32.totalorder %s14, 4
    %s21 = sphi 0, %s33
    %s22 = sphi 0, %s29
    %s23 = sphi 0, %s21
    %s24 = sphi 0, %s22
    %s25 = sphi 0, %s23
    %s26 = sphi 0, %s24
    %s34 = sphi 0, %s34
    %s36 = sphi 0, %s34
    %s37 = sphi 0, %s36
    %s51 = sphi 0, %s37
    %s55 = sphi 0, %s55
    %s57 = sphi 0, %s55
    %s58 = sphi 0, %s57
    %s72 = sphi 0, %s58
    %s76 = sphi 0, %s76
    %s78 = sphi 0, %s76
    %s79 = sphi 0, %s78
    %s93 = sphi 0, %s79
    %s97 = sphi 0, %s97
    %s99 = sphi 0, %s97
    %s100 = sphi 0, %s99
    %s114 = sphi 0, %s100
    %s122 = sphi 0, %s124
    %s125 = sphi 0, %s122
    %s126 = sphi 0, %s125
    %s142 = sphi 0, %s126
    %s150 = sphi 0, %s152
    %s153 = sphi 0, %s150
    %s154 = sphi 0, %s153
    %s170 = sphi 0, %s154
    %s176 = sphi 0, %s178
    %s179 = sphi 0, %s176
    %s180 = sphi 0, %s179
    %s196 = sphi 0, %s180
    %s202 = sphi 0, %s204
    %s205 = sphi 0, %s202
    %s206 = sphi 0, %s205
    %s222 = sphi 0, %s206
    %s230 = sphi 0, %s232
    %s233 = sphi 0, %s230
    %s234 = sphi 0, %s233
    %s250 = sphi 0, %s234
  $region4: #{ifin_forward.67} parent=0 // loop_header_branch
    %17 = sbr.rel (%p15) target = $region8
  $region5: #{ifin_forward.67} parent=0 // loop_body
    %s19 = ssub.s32 %s14, 1
    %s20 = ssub.s32 %s14, 2
    %s27 = sadd.s32 1, %s22
    %p28 = scmp.ge.s32.totalorder %s27, 1
    %s29 = scalar_select %p28, 0, %s27
    %s30 = sadd.s32 1, %s21
    %s31 = scalar_select %p28, %s30, %s21
    %p32 = scmp.ge.s32.totalorder %s31, 2
    %s33 = scalar_select %p32, 0, %s31
    %s35 = sadd.s32 %s34, 1
    %p38 = scmp.eq.s32.totalorder %s14, 1
    %p39 = scmp.ne.s32.totalorder %s34, %s36
    %p40 = scmp.eq.s32.totalorder %s14, 0
    %p41 = por %p39, %p40
    %p42 = scmp.ne.s32.totalorder %s34, %s36
    %p43 = scmp.eq.s32.totalorder %s19, 1
    %p44 = por %p42, %p43
    %p45 = scmp.ne.s32.totalorder %s36, %s37
    %p46 = scmp.eq.s32.totalorder %s19, 0
    %p47 = por %p45, %p46
    %p48 = scmp.ne.s32.totalorder %s36, %s37
    %p49 = scmp.eq.s32.totalorder %s20, 1
    %p50 = por %p48, %p49
    %p52 = scmp.ne.s32.totalorder %s37, %s51
    %p53 = scmp.eq.s32.totalorder %s20, 0
    %p54 = por %p52, %p53
    %s56 = sadd.s32 %s55, 1
    %p59 = scmp.eq.s32.totalorder %s14, 1
    %p60 = scmp.ne.s32.totalorder %s55, %s57
    %p61 = scmp.eq.s32.totalorder %s14, 0
    %p62 = por %p60, %p61
    %p63 = scmp.ne.s32.totalorder %s55, %s57
    %p64 = scmp.eq.s32.totalorder %s19, 1
    %p65 = por %p63, %p64
    %p66 = scmp.ne.s32.totalorder %s57, %s58
    %p67 = scmp.eq.s32.totalorder %s19, 0
    %p68 = por %p66, %p67
    %p69 = scmp.ne.s32.totalorder %s57, %s58
    %p70 = scmp.eq.s32.totalorder %s20, 1
    %p71 = por %p69, %p70
    %p73 = scmp.ne.s32.totalorder %s58, %s72
    %p74 = scmp.eq.s32.totalorder %s20, 0
    %p75 = por %p73, %p74
    %s77 = sadd.s32 %s76, 1
    %p80 = scmp.eq.s32.totalorder %s14, 1
    %p81 = scmp.ne.s32.totalorder %s76, %s78
    %p82 = scmp.eq.s32.totalorder %s14, 0
    %p83 = por %p81, %p82
    %p84 = scmp.ne.s32.totalorder %s76, %s78
    %p85 = scmp.eq.s32.totalorder %s19, 1
    %p86 = por %p84, %p85
    %p87 = scmp.ne.s32.totalorder %s78, %s79
    %p88 = scmp.eq.s32.totalorder %s19, 0
    %p89 = por %p87, %p88
    %p90 = scmp.ne.s32.totalorder %s78, %s79
    %p91 = scmp.eq.s32.totalorder %s20, 1
    %p92 = por %p90, %p91
    %p94 = scmp.ne.s32.totalorder %s79, %s93
    %p95 = scmp.eq.s32.totalorder %s20, 0
    %p96 = por %p94, %p95
    %s98 = sadd.s32 %s97, 1
    %p101 = scmp.eq.s32.totalorder %s14, 1
    %p102 = scmp.ne.s32.totalorder %s97, %s99
    %p103 = scmp.eq.s32.totalorder %s14, 0
    %p104 = por %p102, %p103
    %p105 = scmp.ne.s32.totalorder %s97, %s99
    %p106 = scmp.eq.s32.totalorder %s19, 1
    %p107 = por %p105, %p106
    %p108 = scmp.ne.s32.totalorder %s99, %s100
    %p109 = scmp.eq.s32.totalorder %s19, 0
    %p110 = por %p108, %p109
    %p111 = scmp.ne.s32.totalorder %s99, %s100
    %p112 = scmp.eq.s32.totalorder %s20, 1
    %p113 = por %p111, %p112
    %p115 = scmp.ne.s32.totalorder %s100, %s114
    %p116 = scmp.eq.s32.totalorder %s20, 0
    %p117 = por %p115, %p116
    %s118 = ssub.s32 %s21, %s33
    %s119 = ssub.s32 %s22, %s29
    %s120 = sor.u32 %s118, %s119
    %p121 = scmp.eq.s32.totalorder %s120, 0
    %s123 = sadd.s32 %s122, 1
    %s124 = scalar_select %p121, %s122, %s123
    %p127 = pneg %p121
    %p128 = scmp.eq.s32.totalorder %s14, 1
    %p129 = por %p127, %p128
    %p130 = scmp.ne.s32.totalorder %s122, %s125
    %p131 = scmp.eq.s32.totalorder %s14, 0
    %p132 = por %p130, %p131
    %p133 = scmp.ne.s32.totalorder %s122, %s125
    %p134 = scmp.eq.s32.totalorder %s19, 1
    %p135 = por %p133, %p134
    %p136 = scmp.ne.s32.totalorder %s125, %s126
    %p137 = scmp.eq.s32.totalorder %s19, 0
    %p138 = por %p136, %p137
    %p139 = scmp.ne.s32.totalorder %s125, %s126
    %p140 = scmp.eq.s32.totalorder %s20, 1
    %p141 = por %p139, %p140
    %p143 = scmp.ne.s32.totalorder %s126, %s142
    %p144 = scmp.eq.s32.totalorder %s20, 0
    %p145 = por %p143, %p144
    %s146 = ssub.s32 %s21, %s33
    %s147 = ssub.s32 %s22, %s29
    %s148 = sor.u32 %s146, %s147
    %p149 = scmp.eq.s32.totalorder %s148, 0
    %s151 = sadd.s32 %s150, 1
    %s152 = scalar_select %p149, %s150, %s151
    %p155 = pneg %p149
    %p156 = scmp.eq.s32.totalorder %s14, 1
    %p157 = por %p155, %p156
    %p158 = scmp.ne.s32.totalorder %s150, %s153
    %p159 = scmp.eq.s32.totalorder %s14, 0
    %p160 = por %p158, %p159
    %p161 = scmp.ne.s32.totalorder %s150, %s153
    %p162 = scmp.eq.s32.totalorder %s19, 1
    %p163 = por %p161, %p162
    %p164 = scmp.ne.s32.totalorder %s153, %s154
    %p165 = scmp.eq.s32.totalorder %s19, 0
    %p166 = por %p164, %p165
    %p167 = scmp.ne.s32.totalorder %s153, %s154
    %p168 = scmp.eq.s32.totalorder %s20, 1
    %p169 = por %p167, %p168
    %p171 = scmp.ne.s32.totalorder %s154, %s170
    %p172 = scmp.eq.s32.totalorder %s20, 0
    %p173 = por %p171, %p172
    %s174 = ssub.s32 %s21, %s33
    %p175 = scmp.eq.s32.totalorder %s174, 0
    %s177 = sadd.s32 %s176, 1
    %s178 = scalar_select %p175, %s176, %s177
    %p181 = pneg %p175
    %p182 = scmp.eq.s32.totalorder %s14, 1
    %p183 = por %p181, %p182
    %p184 = scmp.ne.s32.totalorder %s176, %s179
    %p185 = scmp.eq.s32.totalorder %s14, 0
    %p186 = por %p184, %p185
    %p187 = scmp.ne.s32.totalorder %s176, %s179
    %p188 = scmp.eq.s32.totalorder %s19, 1
    %p189 = por %p187, %p188
    %p190 = scmp.ne.s32.totalorder %s179, %s180
    %p191 = scmp.eq.s32.totalorder %s19, 0
    %p192 = por %p190, %p191
    %p193 = scmp.ne.s32.totalorder %s179, %s180
    %p194 = scmp.eq.s32.totalorder %s20, 1
    %p195 = por %p193, %p194
    %p197 = scmp.ne.s32.totalorder %s180, %s196
    %p198 = scmp.eq.s32.totalorder %s20, 0
    %p199 = por %p197, %p198
    %s200 = ssub.s32 %s21, %s33
    %p201 = scmp.eq.s32.totalorder %s200, 0
    %s203 = sadd.s32 %s202, 1
    %s204 = scalar_select %p201, %s202, %s203
    %p207 = pneg %p201
    %p208 = scmp.eq.s32.totalorder %s14, 1
    %p209 = por %p207, %p208
    %p210 = scmp.ne.s32.totalorder %s202, %s205
    %p211 = scmp.eq.s32.totalorder %s14, 0
    %p212 = por %p210, %p211
    %p213 = scmp.ne.s32.totalorder %s202, %s205
    %p214 = scmp.eq.s32.totalorder %s19, 1
    %p215 = por %p213, %p214
    %p216 = scmp.ne.s32.totalorder %s205, %s206
    %p217 = scmp.eq.s32.totalorder %s19, 0
    %p218 = por %p216, %p217
    %p219 = scmp.ne.s32.totalorder %s205, %s206
    %p220 = scmp.eq.s32.totalorder %s20, 1
    %p221 = por %p219, %p220
    %p223 = scmp.ne.s32.totalorder %s206, %s222
    %p224 = scmp.eq.s32.totalorder %s20, 0
    %p225 = por %p223, %p224
    %s226 = ssub.s32 %s21, %s33
    %s227 = ssub.s32 %s22, %s29
    %s228 = sor.u32 %s226, %s227
    %p229 = scmp.eq.s32.totalorder %s228, 0
    %s231 = sadd.s32 %s230, 1
    %s232 = scalar_select %p229, %s230, %s231
    %p235 = pneg %p229
    %p236 = scmp.eq.s32.totalorder %s14, 1
    %p237 = por %p235, %p236
    %p238 = scmp.ne.s32.totalorder %s230, %s233
    %p239 = scmp.eq.s32.totalorder %s14, 0
    %p240 = por %p238, %p239
    %p241 = scmp.ne.s32.totalorder %s230, %s233
    %p242 = scmp.eq.s32.totalorder %s19, 1
    %p243 = por %p241, %p242
    %p244 = scmp.ne.s32.totalorder %s233, %s234
    %p245 = scmp.eq.s32.totalorder %s19, 0
    %p246 = por %p244, %p245
    %p247 = scmp.ne.s32.totalorder %s233, %s234
    %p248 = scmp.eq.s32.totalorder %s20, 1
    %p249 = por %p247, %p248
    %p251 = scmp.ne.s32.totalorder %s234, %s250
    %p252 = scmp.eq.s32.totalorder %s20, 0
    %p253 = por %p251, %p252
    %p254 = scmp.le.s32.totalorder 1, %s14
    %p255 = scmp.lt.s32.totalorder %s14, 3
    %p256 = pnand %p254, %p255
    %p257 = pneg %p256
    // Predicated region
    $region9: #{ifin_forward.67} parent=5 // pred_check
      _
    $region10: #{ifin_forward.67} parent=5 // pred_check_branch
      %259 = sbr.rel (%p256) target = $region12
    $region11: #{ifin_forward.67} parent=5 // pred_region
      %s260 = ssub.s32 %s14, 1
      // Predicated region
      $region13: #{ifin_forward.67} parent=11 // pred_check
        %p261 = pneg %p47
      $region14: #{ifin_forward.67} parent=11 // pred_check_branch
        %263 = sbr.rel (%p261) target = $region16
      $region15: #{ifin_forward.67} parent=11 // pred_region
        _
      $region16: #{ifin_forward.67} parent=11 // pred_fallthru
        _
      // Predicated region
      $region17: #{ifin_forward.67} parent=11 // pred_check
        %p264 = pneg %p68
      $region18: #{ifin_forward.67} parent=11 // pred_check_branch
        %266 = sbr.rel (%p264) target = $region20
      $region19: #{ifin_forward.67} parent=11 // pred_region
        _
      $region20: #{ifin_forward.67} parent=11 // pred_fallthru
        _
      // Predicated region
      $region21: #{ifin_forward.67} parent=11 // pred_check
        %p267 = pneg %p89
      $region22: #{ifin_forward.67} parent=11 // pred_check_branch
        %269 = sbr.rel (%p267) target = $region24
      $region23: #{ifin_forward.67} parent=11 // pred_region
        _
      $region24: #{ifin_forward.67} parent=11 // pred_fallthru
        _
      // Predicated region
      $region25: #{ifin_forward.67} parent=11 // pred_check
        %p270 = pneg %p110
      $region26: #{ifin_forward.67} parent=11 // pred_check_branch
        %272 = sbr.rel (%p270) target = $region28
      $region27: #{ifin_forward.67} parent=11 // pred_region
        _
      $region28: #{ifin_forward.67} parent=11 // pred_fallthru
        _
    $region12: #{ifin_forward.67} parent=5 // pred_fallthru
      _
    %p273 = scmp.lt.s32.totalorder %s14, 2
    // Predicated region
    $region29: #{ifin_forward.67} parent=5 // pred_check
      %p274 = pneg %p273
    $region30: #{ifin_forward.67} parent=5 // pred_check_branch
      %276 = sbr.rel (%p274) target = $region32
    $region31: #{ifin_forward.67} parent=5 // pred_region
      // Predicated region
      $region33: #{ifin_forward.67} parent=31 // pred_check
        %p277 = pneg %p132
      $region34: #{ifin_forward.67} parent=31 // pred_check_branch
        %279 = sbr.rel (%p277) target = $region36
      $region35: #{ifin_forward.67} parent=31 // pred_region
        %s280 = smul.u32 2, %s22
        %p281 = scmp.lt.s32.totalorder %s21, 1
        %s282 = scalar_select %p281, %s21, 1
        %p283 = scmp.lt.s32.totalorder %s280, 1
        %s284 = scalar_select %p283, %s280, 1
        %s285 = smul.addr %s282, 10
        %s286 = sadd.s32 %s284, %s285
        %s287 = smul.addr %s286, 4
        %s288 = scalar_lea.vmem %s4, %s287
        %s289 = smul.u32 2, %s22
      $region36: #{ifin_forward.67} parent=31 // pred_fallthru
        _
      // Predicated region
      $region37: #{ifin_forward.67} parent=31 // pred_check
        %p290 = pneg %p160
      $region38: #{ifin_forward.67} parent=31 // pred_check_branch
        %292 = sbr.rel (%p290) target = $region40
      $region39: #{ifin_forward.67} parent=31 // pred_region
        %s293 = smul.u32 2, %s22
        %p294 = scmp.lt.s32.totalorder %s21, 1
        %s295 = scalar_select %p294, %s21, 1
        %p296 = scmp.lt.s32.totalorder %s293, 1
        %s297 = scalar_select %p296, %s293, 1
        %s298 = smul.addr %s295, 6
        %s299 = sadd.s32 %s297, %s298
        %s300 = smul.addr %s299, 8
        %s301 = scalar_lea.vmem %s5, %s300
        %s302 = smul.u32 2, %s22
      $region40: #{ifin_forward.67} parent=31 // pred_fallthru
        _
      // Predicated region
      $region41: #{ifin_forward.67} parent=31 // pred_check
        %p303 = pneg %p186
      $region42: #{ifin_forward.67} parent=31 // pred_check_branch
        %305 = sbr.rel (%p303) target = $region44
      $region43: #{ifin_forward.67} parent=31 // pred_region
        %p306 = scmp.lt.s32.totalorder %s21, 1
        %s307 = scalar_select %p306, %s21, 1
        %s308 = smul.addr %s307, 3
        %s309 = smul.addr %s308, 8
        %s310 = scalar_lea.vmem %s6, %s309
      $region44: #{ifin_forward.67} parent=31 // pred_fallthru
        _
      // Predicated region
      $region45: #{ifin_forward.67} parent=31 // pred_check
        %p311 = pneg %p212
      $region46: #{ifin_forward.67} parent=31 // pred_check_branch
        %313 = sbr.rel (%p311) target = $region48
      $region47: #{ifin_forward.67} parent=31 // pred_region
        %p314 = scmp.lt.s32.totalorder %s21, 1
        %s315 = scalar_select %p314, %s21, 1
        %s316 = smul.addr %s315, 3
        %s317 = smul.addr %s316, 8
        %s318 = scalar_lea.vmem %s7, %s317
      $region48: #{ifin_forward.67} parent=31 // pred_fallthru
        _
    $region32: #{ifin_forward.67} parent=5 // pred_fallthru
      _
    %p319 = scmp.le.s32.totalorder 1, %s14
    %p320 = scmp.lt.s32.totalorder %s14, 3
    %p321 = pnand %p319, %p320
    %p322 = pneg %p321
    // Predicated region
    $region49: #{ifin_forward.67} parent=5 // pred_check
      _
    $region50: #{ifin_forward.67} parent=5 // pred_check_branch
      %324 = sbr.rel (%p321) target = $region52
    $region51: #{ifin_forward.67} parent=5 // pred_region
      %s325 = ssub.s32 %s14, 1
      %p326 = pneg %p47
      %p327 = pneg %p44
      %p328 = pneg %p68
      %p329 = pneg %p65
      %p330 = pneg %p89
      %p331 = pneg %p86
      %p332 = pneg %p110
      %p333 = pneg %p107
      %s334 = smul.u32 2, %s24
      %p335 = scmp.lt.s32.totalorder %s23, 1
      %s336 = scalar_select %p335, %s23, 1
      %p337 = scmp.lt.s32.totalorder %s334, 1
      %s338 = scalar_select %p337, %s334, 1
      %s339 = smul.addr %s336, 10
      %s340 = sadd.s32 %s338, %s339
      %s341 = smul.addr %s340, 4
      %s342 = scalar_lea.vmem %s4, %s341
      %p343 = pneg %p138
      %p344 = pneg %p135
      %s345 = smul.u32 2, %s24
      %p346 = scmp.lt.s32.totalorder %s23, 1
      %s347 = scalar_select %p346, %s23, 1
      %p348 = scmp.lt.s32.totalorder %s345, 1
      %s349 = scalar_select %p348, %s345, 1
      %s350 = smul.addr %s347, 6
      %s351 = sadd.s32 %s349, %s350
      %s352 = smul.addr %s351, 8
      %s353 = scalar_lea.vmem %s5, %s352
      %p354 = pneg %p166
      %p355 = pneg %p163
      %p356 = scmp.lt.s32.totalorder %s23, 1
      %s357 = scalar_select %p356, %s23, 1
      %s358 = smul.addr %s357, 3
      %s359 = smul.addr %s358, 8
      %s360 = scalar_lea.vmem %s6, %s359
      %p361 = pneg %p192
      %p362 = pneg %p189
      %p363 = scmp.lt.s32.totalorder %s23, 1
      %s364 = scalar_select %p363, %s23, 1
      %s365 = smul.addr %s364, 3
      %s366 = smul.addr %s365, 8
      %s367 = scalar_lea.vmem %s7, %s366
      %p368 = pneg %p218
      %p369 = pneg %p215
      %p370 = pneg %p246
      %p371 = pneg %p243
      %s372 = smul.u32 2, %s24
      %p373 = scmp.lt.s32.totalorder %s23, 1
      %s374 = scalar_select %p373, %s23, 1
      %p375 = scmp.lt.s32.totalorder %s372, 1
      %s376 = scalar_select %p375, %s372, 1
      %s377 = smul.addr %s374, 6
      %s378 = sadd.s32 %s376, %s377
      %s379 = smul.addr %s378, 8
      %s380 = scalar_lea.vmem %s8, %s379
      %s381 = smul.u32 2, %s24
      %p382 = scmp.lt.s32.totalorder %s23, 1
      %s383 = scalar_select %p382, %s23, 1
      %p384 = scmp.lt.s32.totalorder %s381, 1
      %s385 = scalar_select %p384, %s381, 1
      %s386 = smul.addr %s383, 10
      %s387 = sadd.s32 %s385, %s386
      %s388 = smul.addr %s387, 4
      %s389 = scalar_lea.vmem %s4, %s388
      %s390 = smul.u32 2, %s24
      %s391 = smul.u32 2, %s24
      %p392 = scmp.lt.s32.totalorder %s23, 1
      %s393 = scalar_select %p392, %s23, 1
      %p394 = scmp.lt.s32.totalorder %s391, 1
      %s395 = scalar_select %p394, %s391, 1
      %s396 = smul.addr %s393, 6
      %s397 = sadd.s32 %s395, %s396
      %s398 = smul.addr %s397, 8
      %s399 = scalar_lea.vmem %s5, %s398
      %s400 = smul.u32 2, %s24
      %p401 = scmp.lt.s32.totalorder %s23, 1
      %s402 = scalar_select %p401, %s23, 1
      %s403 = smul.addr %s402, 3
      %s404 = smul.addr %s403, 8
      %s405 = scalar_lea.vmem %s6, %s404
      %p406 = scmp.lt.s32.totalorder %s23, 1
      %s407 = scalar_select %p406, %s23, 1
      %s408 = smul.addr %s407, 3
      %s409 = smul.addr %s408, 8
      %s410 = scalar_lea.vmem %s7, %s409
      %s411 = smul.u32 2, %s24
      %p412 = scmp.lt.s32.totalorder %s23, 1
      %s413 = scalar_select %p412, %s23, 1
      %p414 = scmp.lt.s32.totalorder %s411, 1
      %s415 = scalar_select %p414, %s411, 1
      %s416 = smul.addr %s413, 6
      %s417 = sadd.s32 %s415, %s416
      %s418 = smul.addr %s417, 8
      %s419 = scalar_lea.vmem %s8, %s418
      %s420 = smul.u32 2, %s24
      %v422 = vld [vmem:[%s0] sm:$0xf]
      %v423 = vld [vmem:[%s0 + $0x4] sm:$0xf]
      %v424 = vld [vmem:[%s0 + $0x8] sm:$0x3]
      %v425 = vld [vmem:[%s389] sm:$0xff]
      %v426 = vld [vmem:[%s389 + $0x8] sm:$0xff]
      %v427 = vld [vmem:[%s389 + $0x10] sm:$0xff]
      %v428 = vld [vmem:[%s389 + $0x18] sm:$0xff]
      %v429 = vld [vmem:[%s389 + $0x20] sm:$0x33]
      %v430 = vld [vmem:[%s2] sm:$0xf]
      %v431 = vld [vmem:[%s2 + $0x4] sm:$0xf]
      %v432 = vld [vmem:[%s2 + $0x8] sm:$0x3]
      %v433 = vld [vmem:[%s1] sm:$0xff]
      %v434 = vld [vmem:[%s1 + $0x8] sm:$0xff]
      %v435 = vld [vmem:[%s1 + $0x10] sm:$0xf]
      %437 = vset.pattern.permute.xlu0 0
      %438 = vperm.xlu0 %437, %v433
      %v439 = vpop.permute.xlu0 %438
      %442 = vset.pattern.permute.xlu0 0
      %443 = vperm.xlu0 %442, %v434
      %v444 = vpop.permute.xlu0 %443
      %447 = vset.pattern.permute.xlu0 0
      %448 = vperm.xlu0 %447, %v435
      %v449 = vpop.permute.xlu0 %448
      %v454 = vunpack.c.l.b16 %v422
      %v455 = vunpack.c.l.b16 %v423
      %v456 = vunpack.c.l.b16 %v424
      %v457 = vpack.c.b16 %v455, %v454
      %v458 = vpack.c.b16 %v456, %v456
      %v464 = vunpack.c.l.b16 %v425
      %v465 = vunpack.c.h.b16 %v425
      %v466 = vunpack.c.l.b16 %v426
      %v467 = vunpack.c.h.b16 %v426
      %v468 = vunpack.c.l.b16 %v427
      %v469 = vunpack.c.h.b16 %v427
      %v470 = vunpack.c.l.b16 %v428
      %v471 = vunpack.c.h.b16 %v428
      %v472 = vunpack.c.l.b16 %v429
      %v473 = vunpack.c.h.b16 %v429
      %v474 = vpack.c.b16 %v466, %v464
      %v475 = vpack.c.b16 %v467, %v465
      %v476 = vpack.c.b16 %v470, %v468
      %v477 = vpack.c.b16 %v471, %v469
      %v478 = vpack.c.b16 %v472, %v472
      %v479 = vpack.c.b16 %v473, %v473
      %vm484 = vcmask 293888
      %v486 = vsel %vm484, %v457, 0
      %v489 = vsel %vm484, %v458, 0
      %vm491 = vcmask 1041408
      %v493 = vsel %vm491, %v478, 0
      %v496 = vsel %vm491, %v479, 0
      %498 = vmatprep.subr.bf16.mxu0 0
      %499 = vmatpush1.bf16.msra.mxu0 0
      %500 = vmatprep.subr.bf16.mxu0 0
      %501 = vmatpush1.bf16.msra.mxu0 0
      %502 = vmatprep.subr.bf16.mxu0 0
      %503 = vmatpush1.bf16.msra.mxu0 0
      %504 = vmatprep.subr.bf16.mxu0 0
      %505 = vmatpush1.bf16.msra.mxu0 0
      %506 = vmatprep.subr.bf16.mxu0 0
      %507 = vmatpush1.bf16.msra.mxu0 0
      %508 = vmatprep.subr.bf16.mxu0 %v496
      %509 = vmatpush1.bf16.msra.mxu0 %v493
      %510 = vmatprep.subr.bf16.mxu0 %v477
      %511 = vmatpush1.bf16.msra.mxu0 %v476
      %512 = vmatprep.subr.bf16.mxu0 %v475
      %513 = vmatpush1.bf16.msra.mxu0 %v474
      %514 = vmatprep.subr.bf16.mxu0 0
      %515 = vmatpush2.bf16.msra.mxu0 0
      %516 = vmatprep.subr.bf16.mxu0 0
      %517 = vmatpush2.bf16.msra.mxu0 0
      %518 = vmatprep.subr.bf16.mxu0 0
      %519 = vmatpush2.bf16.msra.mxu0 0
      %520 = vmatprep.subr.bf16.mxu0 0
      %521 = vmatpush2.bf16.msra.mxu0 0
      %522 = vmatprep.subr.bf16.mxu0 0
      %523 = vmatpush2.bf16.msra.mxu0 0
      %524 = vmatprep.subr.bf16.mxu0 0
      %525 = vmatpush2.bf16.msra.mxu0 0
      %526 = vmatprep.subr.bf16.mxu0 0
      %527 = vmatpush2.bf16.msra.mxu0 0
      %528 = vmatprep.subr.bf16.mxu0 0
      %529 = vmatpush2.bf16.msra.mxu0 0
      %530 = vmatprep.mubr.bf16.mxu0 0
      %531 = vmatmul.mubr.bf16.gmra.mxu0 %v486
      %v532 = vpop.f32.mrf.mxu0
      %v533 = vadd.f32 %v439, %v532
      %v534 = vpop.f32.mrf.mxu0
      %v535 = vadd.f32 %v439, %v534
      %v536 = vpop.f32.mrf.mxu0
      %v537 = vadd.f32 %v444, %v536
      %v538 = vpop.f32.mrf.mxu0
      %v539 = vadd.f32 %v444, %v538
      %540 = vmatprep.mubr.bf16.mxu0 0
      %541 = vmatmul.mubr.bf16.gmra.mxu0 %v489
      %v542 = vpop.f32.mrf.mxu0
      %v543 = vadd.f32 %v449, %v542
      %v544 = vpop.f32.mrf.mxu0
      %v545 = vadd.f32 %v449, %v544
      %v546 = vpop.f32.mrf.mxu0
      %v547 = vpop.f32.mrf.mxu0
      %548 = vdwg.mxu0
      %v549 = vld [vmem:[%s410] sm:$0xff]
      %v550 = vld [vmem:[%s410 + $0x8] sm:$0xff]
      %v551 = vld [vmem:[%s410 + $0x10] sm:$0xf]
      %553 = vset.pattern.permute.xlu0 0
      %554 = vperm.xlu0 %553, %v549
      %v555 = vpop.permute.xlu0 %554
      %558 = vset.pattern.permute.xlu0 0
      %559 = vperm.xlu0 %558, %v550
      %v560 = vpop.permute.xlu0 %559
      %563 = vset.pattern.permute.xlu0 0
      %564 = vperm.xlu0 %563, %v551
      %v565 = vpop.permute.xlu0 %564
      %v567 = vadd.f32 %v533, %v555
      %v568 = vadd.f32 %v535, %v555
      %v569 = vadd.f32 %v537, %v560
      %v570 = vadd.f32 %v539, %v560
      %v571 = vadd.f32 %v543, %v565
      %v572 = vadd.f32 %v545, %v565
      %v573 = vld [vmem:[%s3] sm:$0xff]
      %v574 = vld [vmem:[%s3 + $0x8] sm:$0xff]
      %v575 = vld [vmem:[%s3 + $0x10] sm:$0xf]
      %577 = vset.pattern.permute.xlu0 0
      %578 = vperm.xlu0 %577, %v573
      %v579 = vpop.permute.xlu0 %578
      %582 = vset.pattern.permute.xlu0 0
      %583 = vperm.xlu0 %582, %v574
      %v584 = vpop.permute.xlu0 %583
      %587 = vset.pattern.permute.xlu0 0
      %588 = vperm.xlu0 %587, %v575
      %v589 = vpop.permute.xlu0 %588
      %v594 = vunpack.c.l.b16 %v430
      %v595 = vunpack.c.l.b16 %v431
      %v596 = vunpack.c.l.b16 %v432
      %v597 = vpack.c.b16 %v595, %v594
      %v598 = vpack.c.b16 %v596, %v596
      %v600 = vsel %vm484, %v597, 0
      %v603 = vsel %vm484, %v598, 0
      %605 = vmatprep.subr.bf16.mxu0 0
      %606 = vmatpush1.bf16.msra.mxu0 0
      %607 = vmatprep.subr.bf16.mxu0 0
      %608 = vmatpush1.bf16.msra.mxu0 0
      %609 = vmatprep.subr.bf16.mxu0 0
      %610 = vmatpush1.bf16.msra.mxu0 0
      %611 = vmatprep.subr.bf16.mxu0 0
      %612 = vmatpush1.bf16.msra.mxu0 0
      %613 = vmatprep.subr.bf16.mxu0 0
      %614 = vmatpush1.bf16.msra.mxu0 0
      %615 = vmatprep.subr.bf16.mxu0 %v496
      %616 = vmatpush1.bf16.msra.mxu0 %v493
      %617 = vmatprep.subr.bf16.mxu0 %v477
      %618 = vmatpush1.bf16.msra.mxu0 %v476
      %619 = vmatprep.subr.bf16.mxu0 %v475
      %620 = vmatpush1.bf16.msra.mxu0 %v474
      %621 = vmatprep.subr.bf16.mxu0 0
      %622 = vmatpush2.bf16.msra.mxu0 0
      %623 = vmatprep.subr.bf16.mxu0 0
      %624 = vmatpush2.bf16.msra.mxu0 0
      %625 = vmatprep.subr.bf16.mxu0 0
      %626 = vmatpush2.bf16.msra.mxu0 0
      %627 = vmatprep.subr.bf16.mxu0 0
      %628 = vmatpush2.bf16.msra.mxu0 0
      %629 = vmatprep.subr.bf16.mxu0 0
      %630 = vmatpush2.bf16.msra.mxu0 0
      %631 = vmatprep.subr.bf16.mxu0 0
      %632 = vmatpush2.bf16.msra.mxu0 0
      %633 = vmatprep.subr.bf16.mxu0 0
      %634 = vmatpush2.bf16.msra.mxu0 0
      %635 = vmatprep.subr.bf16.mxu0 0
      %636 = vmatpush2.bf16.msra.mxu0 0
      %637 = vmatprep.mubr.bf16.mxu0 0
      %638 = vmatmul.mubr.bf16.gmra.mxu0 %v600
      %v639 = vpop.f32.mrf.mxu0
      %v640 = vadd.f32 %v579, %v639
      %v641 = vpop.f32.mrf.mxu0
      %v642 = vadd.f32 %v579, %v641
      %v643 = vpop.f32.mrf.mxu0
      %v644 = vadd.f32 %v584, %v643
      %v645 = vpop.f32.mrf.mxu0
      %v646 = vadd.f32 %v584, %v645
      %647 = vmatprep.mubr.bf16.mxu0 0
      %648 = vmatmul.mubr.bf16.gmra.mxu0 %v603
      %v649 = vpop.f32.mrf.mxu0
      %v650 = vadd.f32 %v589, %v649
      %v651 = vpop.f32.mrf.mxu0
      %v652 = vadd.f32 %v589, %v651
      %v653 = vpop.f32.mrf.mxu0
      %v654 = vpop.f32.mrf.mxu0
      %655 = vdwg.mxu0
      %v656 = vld [vmem:[%s405] sm:$0xff]
      %v657 = vld [vmem:[%s405 + $0x8] sm:$0xff]
      %v658 = vld [vmem:[%s405 + $0x10] sm:$0xf]
      %660 = vset.pattern.permute.xlu0 0
      %661 = vperm.xlu0 %660, %v656
      %v662 = vpop.permute.xlu0 %661
      %665 = vset.pattern.permute.xlu0 0
      %666 = vperm.xlu0 %665, %v657
      %v667 = vpop.permute.xlu0 %666
      %670 = vset.pattern.permute.xlu0 0
      %671 = vperm.xlu0 %670, %v658
      %v672 = vpop.permute.xlu0 %671
      %v674 = vadd.f32 %v640, %v662
      %v675 = vadd.f32 %v642, %v662
      %v676 = vadd.f32 %v644, %v667
      %v677 = vadd.f32 %v646, %v667
      %v678 = vadd.f32 %v650, %v672
      %v679 = vadd.f32 %v652, %v672
      %v680 = vld [vmem:[%s399] sm:$0xff]
      %v681 = vld [vmem:[%s399 + $0x8] sm:$0xff]
      %v682 = vld [vmem:[%s399 + $0x10] sm:$0xff]
      %v683 = vld [vmem:[%s399 + $0x18] sm:$0xff]
      %v684 = vld [vmem:[%s399 + $0x20] sm:$0xf]
      %v685 = vld [vmem:[%s399 + $0x28] sm:$0xf]
      %v686 = vxor.u32 %v567, 2147483648
      %v687 = vxor.u32 %v568, 2147483648
      %v688 = vxor.u32 %v569, 2147483648
      %v689 = vxor.u32 %v570, 2147483648
      %v690 = vxor.u32 %v571, 2147483648
      %v691 = vxor.u32 %v572, 2147483648
      %v692 = vmul.f32 %v686, 1.442695
      %v693 = vpow.pop %v692
      %v694 = vmul.f32 %v687, 1.442695
      %v695 = vpow.pop %v694
      %v696 = vmul.f32 %v688, 1.442695
      %v697 = vpow.pop %v696
      %v698 = vmul.f32 %v689, 1.442695
      %v699 = vpow.pop %v698
      %v700 = vmul.f32 %v690, 1.442695
      %v701 = vpow.pop %v700
      %v702 = vmul.f32 %v691, 1.442695
      %v703 = vpow.pop %v702
      %v704 = vadd.f32 %v693, 1.0
      %v705 = vadd.f32 %v695, 1.0
      %v706 = vadd.f32 %v697, 1.0
      %v707 = vadd.f32 %v699, 1.0
      %v708 = vadd.f32 %v701, 1.0
      %v709 = vadd.f32 %v703, 1.0
      %v710 = vrcp.pop %v704
      %v711 = vmul.f32 1.0, %v710
      %v712 = vrcp.pop %v705
      %v713 = vmul.f32 1.0, %v712
      %v714 = vrcp.pop %v706
      %v715 = vmul.f32 1.0, %v714
      %v716 = vrcp.pop %v707
      %v717 = vmul.f32 1.0, %v716
      %v718 = vrcp.pop %v708
      %v719 = vmul.f32 1.0, %v718
      %v720 = vrcp.pop %v709
      %v721 = vmul.f32 1.0, %v720
      %v722 = vmul.f32 %v680, %v711
      %v723 = vmul.f32 %v681, %v713
      %v724 = vmul.f32 %v682, %v715
      %v725 = vmul.f32 %v683, %v717
      %v726 = vmul.f32 %v684, %v719
      %v727 = vmul.f32 %v685, %v721
      %v728 = vadd.f32 %v722, %v674
      %v729 = vadd.f32 %v723, %v675
      %v730 = vadd.f32 %v724, %v676
      %v731 = vadd.f32 %v725, %v677
      %v732 = vadd.f32 %v726, %v678
      %v733 = vadd.f32 %v727, %v679
      %734 = vst [vmem:[%s419] sm:$0xff] %v728
      %735 = vst [vmem:[%s419 + $0x8] sm:$0xff] %v729
      %736 = vst [vmem:[%s419 + $0x10] sm:$0xff] %v730
      %737 = vst [vmem:[%s419 + $0x18] sm:$0xff] %v731
      %738 = vst [vmem:[%s419 + $0x20] sm:$0xf] %v732
      %739 = vst [vmem:[%s419 + $0x28] sm:$0xf] %v733
      %s740 = smul.u32 2, %s24
      %p741 = scmp.lt.s32.totalorder %s23, 1
      %s742 = scalar_select %p741, %s23, 1
      %p743 = scmp.lt.s32.totalorder %s740, 1
      %s744 = scalar_select %p743, %s740, 1
      %s745 = smul.addr %s742, 6
      %s746 = sadd.s32 %s744, %s745
      %s747 = smul.addr %s746, 8
      %s748 = scalar_lea.vmem %s8, %s747
      // Predicated region
      $region53: #{ifin_forward.67} parent=51 // pred_check
        %p749 = pneg %p243
      $region54: #{ifin_forward.67} parent=51 // pred_check_branch
        %751 = sbr.rel (%p749) target = $region56
      $region55: #{ifin_forward.67} parent=51 // pred_region
        %s752 = smul.u32 2, %s24
      $region56: #{ifin_forward.67} parent=51 // pred_fallthru
        _
    $region52: #{ifin_forward.67} parent=5 // pred_fallthru
      _
    %p753 = scmp.le.s32.totalorder 2, %s14
    // Predicated region
    $region57: #{ifin_forward.67} parent=5 // pred_check
      %p754 = pneg %p753
    $region58: #{ifin_forward.67} parent=5 // pred_check_branch
      %756 = sbr.rel (%p754) target = $region60
    $region59: #{ifin_forward.67} parent=5 // pred_region
      %s757 = ssub.s32 %s14, 2
      // Predicated region
      $region61: #{ifin_forward.67} parent=59 // pred_check
        %p758 = pneg %p249
      $region62: #{ifin_forward.67} parent=59 // pred_check_branch
        %760 = sbr.rel (%p758) target = $region64
      $region63: #{ifin_forward.67} parent=59 // pred_region
        %s761 = smul.u32 2, %s26
        %p762 = scmp.lt.s32.totalorder %s25, 1
        %s763 = scalar_select %p762, %s25, 1
        %p764 = scmp.lt.s32.totalorder %s761, 1
        %s765 = scalar_select %p764, %s761, 1
        %s766 = smul.addr %s763, 6
        %s767 = sadd.s32 %s765, %s766
        %s768 = smul.addr %s767, 8
        %s769 = scalar_lea.vmem %s8, %s768
      $region64: #{ifin_forward.67} parent=59 // pred_fallthru
        _
    $region60: #{ifin_forward.67} parent=5 // pred_fallthru
      _
  $region6: #{ifin_forward.67} parent=0 // loop_footer
    %s18 = sadd.s32 1, %s14
  $region7: #{ifin_forward.67} parent=0 // loop_footer_branch
    %13 = sbr.rel target = $region3
  $region8: #{ifin_forward.67} parent=0 // loop_exit
    _

// kernel: ifin_forward.115
$region0: #{ifin_forward.115}
  #allocation0 [shape = 'u32[]', space=smem, size = 0x4, offset = 0x4, fixed_abs, tag = 'smem constant byte address 0x4 - core index']
  #allocation1 [shape = 'u32[144,128]{1,0:T(1,128)}', space=vmem, size = 0x12000, scoped, tag = 'internal scratch']
  %s0 = inlined_call_operand.vmem [shape: bf16[12,180], index: 0, kind: input, shape index: {}]
  %s1 = inlined_call_operand.vmem [shape: f32[12,1], index: 1, kind: input, shape index: {}]
  %s2 = inlined_call_operand.vmem [shape: f32[12,1], index: 2, kind: input, shape index: {}]
  %s3 = inlined_call_operand.vmem [shape: bf16[2,180,256], index: 3, kind: input, shape index: {}]
  %s4 = inlined_call_operand.vmem [shape: f32[2,12,256], index: 4, kind: input, shape index: {}]
  %s5 = inlined_call_operand.vmem [shape: f32[2,12,256], index: 5, kind: output, shape index: {}]
  %s6 = sld [smem:[#allocation0]]
  $region53: #{ifin_forward.115} parent=0
    _
  %s8 = ssub.s32 1, %s6
  %s9 = scalar_select 0, %s8, %s6
  loop: start=0, step=1, limit=4
  $region2: #{ifin_forward.115} parent=0 // loop_pre_header
    _
  $region3: #{ifin_forward.115} parent=0 // loop_header
    %s11 = sphi 0, %s15
    %p12 = scmp.ge.s32.totalorder %s11, 4
    %s18 = sphi 0, %s30
    %s19 = sphi 0, %s26
    %s20 = sphi 0, %s18
    %s21 = sphi 0, %s19
    %s22 = sphi 0, %s20
    %s23 = sphi 0, %s21
    %s31 = sphi 0, %s31
    %s33 = sphi 0, %s31
    %s34 = sphi 0, %s33
    %s48 = sphi 0, %s34
    %s52 = sphi 0, %s52
    %s54 = sphi 0, %s52
    %s55 = sphi 0, %s54
    %s69 = sphi 0, %s55
    %s73 = sphi 0, %s73
    %s75 = sphi 0, %s73
    %s76 = sphi 0, %s75
    %s90 = sphi 0, %s76
    %s98 = sphi 0, %s100
    %s101 = sphi 0, %s98
    %s102 = sphi 0, %s101
    %s118 = sphi 0, %s102
    %s126 = sphi 0, %s128
    %s129 = sphi 0, %s126
    %s130 = sphi 0, %s129
    %s146 = sphi 0, %s130
    %s154 = sphi 0, %s156
    %s157 = sphi 0, %s154
    %s158 = sphi 0, %s157
    %s174 = sphi 0, %s158
  $region4: #{ifin_forward.115} parent=0 // loop_header_branch
    %14 = sbr.rel (%p12) target = $region8
  $region5: #{ifin_forward.115} parent=0 // loop_body
    %s16 = ssub.s32 %s11, 1
    %s17 = ssub.s32 %s11, 2
    %s24 = sadd.s32 1, %s19
    %p25 = scmp.ge.s32.totalorder %s24, 1
    %s26 = scalar_select %p25, 0, %s24
    %s27 = sadd.s32 1, %s18
    %s28 = scalar_select %p25, %s27, %s18
    %p29 = scmp.ge.s32.totalorder %s28, 2
    %s30 = scalar_select %p29, 0, %s28
    %s32 = sadd.s32 %s31, 1
    %p35 = scmp.eq.s32.totalorder %s11, 1
    %p36 = scmp.ne.s32.totalorder %s31, %s33
    %p37 = scmp.eq.s32.totalorder %s11, 0
    %p38 = por %p36, %p37
    %p39 = scmp.ne.s32.totalorder %s31, %s33
    %p40 = scmp.eq.s32.totalorder %s16, 1
    %p41 = por %p39, %p40
    %p42 = scmp.ne.s32.totalorder %s33, %s34
    %p43 = scmp.eq.s32.totalorder %s16, 0
    %p44 = por %p42, %p43
    %p45 = scmp.ne.s32.totalorder %s33, %s34
    %p46 = scmp.eq.s32.totalorder %s17, 1
    %p47 = por %p45, %p46
    %p49 = scmp.ne.s32.totalorder %s34, %s48
    %p50 = scmp.eq.s32.totalorder %s17, 0
    %p51 = por %p49, %p50
    %s53 = sadd.s32 %s52, 1
    %p56 = scmp.eq.s32.totalorder %s11, 1
    %p57 = scmp.ne.s32.totalorder %s52, %s54
    %p58 = scmp.eq.s32.totalorder %s11, 0
    %p59 = por %p57, %p58
    %p60 = scmp.ne.s32.totalorder %s52, %s54
    %p61 = scmp.eq.s32.totalorder %s16, 1
    %p62 = por %p60, %p61
    %p63 = scmp.ne.s32.totalorder %s54, %s55
    %p64 = scmp.eq.s32.totalorder %s16, 0
    %p65 = por %p63, %p64
    %p66 = scmp.ne.s32.totalorder %s54, %s55
    %p67 = scmp.eq.s32.totalorder %s17, 1
    %p68 = por %p66, %p67
    %p70 = scmp.ne.s32.totalorder %s55, %s69
    %p71 = scmp.eq.s32.totalorder %s17, 0
    %p72 = por %p70, %p71
    %s74 = sadd.s32 %s73, 1
    %p77 = scmp.eq.s32.totalorder %s11, 1
    %p78 = scmp.ne.s32.totalorder %s73, %s75
    %p79 = scmp.eq.s32.totalorder %s11, 0
    %p80 = por %p78, %p79
    %p81 = scmp.ne.s32.totalorder %s73, %s75
    %p82 = scmp.eq.s32.totalorder %s16, 1
    %p83 = por %p81, %p82
    %p84 = scmp.ne.s32.totalorder %s75, %s76
    %p85 = scmp.eq.s32.totalorder %s16, 0
    %p86 = por %p84, %p85
    %p87 = scmp.ne.s32.totalorder %s75, %s76
    %p88 = scmp.eq.s32.totalorder %s17, 1
    %p89 = por %p87, %p88
    %p91 = scmp.ne.s32.totalorder %s76, %s90
    %p92 = scmp.eq.s32.totalorder %s17, 0
    %p93 = por %p91, %p92
    %s94 = ssub.s32 %s18, %s30
    %s95 = ssub.s32 %s19, %s26
    %s96 = sor.u32 %s94, %s95
    %p97 = scmp.eq.s32.totalorder %s96, 0
    %s99 = sadd.s32 %s98, 1
    %s100 = scalar_select %p97, %s98, %s99
    %p103 = pneg %p97
    %p104 = scmp.eq.s32.totalorder %s11, 1
    %p105 = por %p103, %p104
    %p106 = scmp.ne.s32.totalorder %s98, %s101
    %p107 = scmp.eq.s32.totalorder %s11, 0
    %p108 = por %p106, %p107
    %p109 = scmp.ne.s32.totalorder %s98, %s101
    %p110 = scmp.eq.s32.totalorder %s16, 1
    %p111 = por %p109, %p110
    %p112 = scmp.ne.s32.totalorder %s101, %s102
    %p113 = scmp.eq.s32.totalorder %s16, 0
    %p114 = por %p112, %p113
    %p115 = scmp.ne.s32.totalorder %s101, %s102
    %p116 = scmp.eq.s32.totalorder %s17, 1
    %p117 = por %p115, %p116
    %p119 = scmp.ne.s32.totalorder %s102, %s118
    %p120 = scmp.eq.s32.totalorder %s17, 0
    %p121 = por %p119, %p120
    %s122 = ssub.s32 %s18, %s30
    %s123 = ssub.s32 %s19, %s26
    %s124 = sor.u32 %s122, %s123
    %p125 = scmp.eq.s32.totalorder %s124, 0
    %s127 = sadd.s32 %s126, 1
    %s128 = scalar_select %p125, %s126, %s127
    %p131 = pneg %p125
    %p132 = scmp.eq.s32.totalorder %s11, 1
    %p133 = por %p131, %p132
    %p134 = scmp.ne.s32.totalorder %s126, %s129
    %p135 = scmp.eq.s32.totalorder %s11, 0
    %p136 = por %p134, %p135
    %p137 = scmp.ne.s32.totalorder %s126, %s129
    %p138 = scmp.eq.s32.totalorder %s16, 1
    %p139 = por %p137, %p138
    %p140 = scmp.ne.s32.totalorder %s129, %s130
    %p141 = scmp.eq.s32.totalorder %s16, 0
    %p142 = por %p140, %p141
    %p143 = scmp.ne.s32.totalorder %s129, %s130
    %p144 = scmp.eq.s32.totalorder %s17, 1
    %p145 = por %p143, %p144
    %p147 = scmp.ne.s32.totalorder %s130, %s146
    %p148 = scmp.eq.s32.totalorder %s17, 0
    %p149 = por %p147, %p148
    %s150 = ssub.s32 %s18, %s30
    %s151 = ssub.s32 %s19, %s26
    %s152 = sor.u32 %s150, %s151
    %p153 = scmp.eq.s32.totalorder %s152, 0
    %s155 = sadd.s32 %s154, 1
    %s156 = scalar_select %p153, %s154, %s155
    %p159 = pneg %p153
    %p160 = scmp.eq.s32.totalorder %s11, 1
    %p161 = por %p159, %p160
    %p162 = scmp.ne.s32.totalorder %s154, %s157
    %p163 = scmp.eq.s32.totalorder %s11, 0
    %p164 = por %p162, %p163
    %p165 = scmp.ne.s32.totalorder %s154, %s157
    %p166 = scmp.eq.s32.totalorder %s16, 1
    %p167 = por %p165, %p166
    %p168 = scmp.ne.s32.totalorder %s157, %s158
    %p169 = scmp.eq.s32.totalorder %s16, 0
    %p170 = por %p168, %p169
    %p171 = scmp.ne.s32.totalorder %s157, %s158
    %p172 = scmp.eq.s32.totalorder %s17, 1
    %p173 = por %p171, %p172
    %p175 = scmp.ne.s32.totalorder %s158, %s174
    %p176 = scmp.eq.s32.totalorder %s17, 0
    %p177 = por %p175, %p176
    %p178 = scmp.le.s32.totalorder 1, %s11
    %p179 = scmp.lt.s32.totalorder %s11, 3
    %p180 = pnand %p178, %p179
    %p181 = pneg %p180
    // Predicated region
    $region9: #{ifin_forward.115} parent=5 // pred_check
      _
    $region10: #{ifin_forward.115} parent=5 // pred_check_branch
      %183 = sbr.rel (%p180) target = $region12
    $region11: #{ifin_forward.115} parent=5 // pred_region
      %s184 = ssub.s32 %s11, 1
      // Predicated region
      $region13: #{ifin_forward.115} parent=11 // pred_check
        %p185 = pneg %p44
      $region14: #{ifin_forward.115} parent=11 // pred_check_branch
        %187 = sbr.rel (%p185) target = $region16
      $region15: #{ifin_forward.115} parent=11 // pred_region
        _
      $region16: #{ifin_forward.115} parent=11 // pred_fallthru
        _
      // Predicated region
      $region17: #{ifin_forward.115} parent=11 // pred_check
        %p188 = pneg %p65
      $region18: #{ifin_forward.115} parent=11 // pred_check_branch
        %190 = sbr.rel (%p188) target = $region20
      $region19: #{ifin_forward.115} parent=11 // pred_region
        _
      $region20: #{ifin_forward.115} parent=11 // pred_fallthru
        _
      // Predicated region
      $region21: #{ifin_forward.115} parent=11 // pred_check
        %p191 = pneg %p86
      $region22: #{ifin_forward.115} parent=11 // pred_check_branch
        %193 = sbr.rel (%p191) target = $region24
      $region23: #{ifin_forward.115} parent=11 // pred_region
        _
      $region24: #{ifin_forward.115} parent=11 // pred_fallthru
        _
    $region12: #{ifin_forward.115} parent=5 // pred_fallthru
      _
    %p194 = scmp.lt.s32.totalorder %s11, 2
    // Predicated region
    $region25: #{ifin_forward.115} parent=5 // pred_check
      %p195 = pneg %p194
    $region26: #{ifin_forward.115} parent=5 // pred_check_branch
      %197 = sbr.rel (%p195) target = $region28
    $region27: #{ifin_forward.115} parent=5 // pred_region
      // Predicated region
      $region29: #{ifin_forward.115} parent=27 // pred_check
        %p198 = pneg %p108
      $region30: #{ifin_forward.115} parent=27 // pred_check_branch
        %200 = sbr.rel (%p198) target = $region32
      $region31: #{ifin_forward.115} parent=27 // pred_region
        %s201 = smul.u32 2, %s19
        %p202 = scmp.lt.s32.totalorder %s18, 1
        %s203 = scalar_select %p202, %s18, 1
        %p204 = scmp.lt.s32.totalorder %s201, 1
        %s205 = scalar_select %p204, %s201, 1
        %s206 = smul.addr %s203, 46
        %s207 = sadd.s32 %s205, %s206
        %s208 = smul.addr %s207, 4
        %s209 = scalar_lea.vmem %s3, %s208
        %s210 = smul.u32 2, %s19
      $region32: #{ifin_forward.115} parent=27 // pred_fallthru
        _
      // Predicated region
      $region33: #{ifin_forward.115} parent=27 // pred_check
        %p211 = pneg %p136
      $region34: #{ifin_forward.115} parent=27 // pred_check_branch
        %213 = sbr.rel (%p211) target = $region36
      $region35: #{ifin_forward.115} parent=27 // pred_region
        %s214 = smul.u32 2, %s19
        %p215 = scmp.lt.s32.totalorder %s18, 1
        %s216 = scalar_select %p215, %s18, 1
        %p217 = scmp.lt.s32.totalorder %s214, 1
        %s218 = scalar_select %p217, %s214, 1
        %s219 = smul.addr %s216, 4
        %s220 = sadd.s32 %s218, %s219
        %s221 = smul.addr %s220, 8
        %s222 = scalar_lea.vmem %s4, %s221
        %s223 = smul.u32 2, %s19
      $region36: #{ifin_forward.115} parent=27 // pred_fallthru
        _
    $region28: #{ifin_forward.115} parent=5 // pred_fallthru
      _
    %p224 = scmp.le.s32.totalorder 1, %s11
    %p225 = scmp.lt.s32.totalorder %s11, 3
    %p226 = pnand %p224, %p225
    %p227 = pneg %p226
    // Predicated region
    $region37: #{ifin_forward.115} parent=5 // pred_check
      _
    $region38: #{ifin_forward.115} parent=5 // pred_check_branch
      %229 = sbr.rel (%p226) target = $region40
    $region39: #{ifin_forward.115} parent=5 // pred_region
      %s230 = ssub.s32 %s11, 1
      %p231 = pneg %p44
      %p232 = pneg %p41
      %p233 = pneg %p65
      %p234 = pneg %p62
      %p235 = pneg %p86
      %p236 = pneg %p83
      %s237 = smul.u32 2, %s21
      %p238 = scmp.lt.s32.totalorder %s20, 1
      %s239 = scalar_select %p238, %s20, 1
      %p240 = scmp.lt.s32.totalorder %s237, 1
      %s241 = scalar_select %p240, %s237, 1
      %s242 = smul.addr %s239, 46
      %s243 = sadd.s32 %s241, %s242
      %s244 = smul.addr %s243, 4
      %s245 = scalar_lea.vmem %s3, %s244
      %p246 = pneg %p114
      %p247 = pneg %p111
      %s248 = smul.u32 2, %s21
      %p249 = scmp.lt.s32.totalorder %s20, 1
      %s250 = scalar_select %p249, %s20, 1
      %p251 = scmp.lt.s32.totalorder %s248, 1
      %s252 = scalar_select %p251, %s248, 1
      %s253 = smul.addr %s250, 4
      %s254 = sadd.s32 %s252, %s253
      %s255 = smul.addr %s254, 8
      %s256 = scalar_lea.vmem %s4, %s255
      %p257 = pneg %p142
      %p258 = pneg %p139
      %p259 = pneg %p170
      %p260 = pneg %p167
      %s261 = smul.u32 2, %s21
      %p262 = scmp.lt.s32.totalorder %s20, 1
      %s263 = scalar_select %p262, %s20, 1
      %p264 = scmp.lt.s32.totalorder %s261, 1
      %s265 = scalar_select %p264, %s261, 1
      %s266 = smul.addr %s263, 4
      %s267 = sadd.s32 %s265, %s266
      %s268 = smul.addr %s267, 8
      %s269 = scalar_lea.vmem %s5, %s268
      %s270 = smul.u32 2, %s21
      %p271 = scmp.lt.s32.totalorder %s20, 1
      %s272 = scalar_select %p271, %s20, 1
      %p273 = scmp.lt.s32.totalorder %s270, 1
      %s274 = scalar_select %p273, %s270, 1
      %s275 = smul.addr %s272, 46
      %s276 = sadd.s32 %s274, %s275
      %s277 = smul.addr %s276, 4
      %s278 = scalar_lea.vmem %s3, %s277
      %s279 = smul.u32 2, %s21
      %s280 = smul.u32 2, %s21
      %p281 = scmp.lt.s32.totalorder %s20, 1
      %s282 = scalar_select %p281, %s20, 1
      %p283 = scmp.lt.s32.totalorder %s280, 1
      %s284 = scalar_select %p283, %s280, 1
      %s285 = smul.addr %s282, 4
      %s286 = sadd.s32 %s284, %s285
      %s287 = smul.addr %s286, 8
      %s288 = scalar_lea.vmem %s4, %s287
      %s289 = smul.u32 2, %s21
      %s290 = smul.u32 2, %s21
      %p291 = scmp.lt.s32.totalorder %s20, 1
      %s292 = scalar_select %p291, %s20, 1
      %p293 = scmp.lt.s32.totalorder %s290, 1
      %s294 = scalar_select %p293, %s290, 1
      %s295 = smul.addr %s292, 4
      %s296 = sadd.s32 %s294, %s295
      %s297 = smul.addr %s296, 8
      %s298 = scalar_lea.vmem %s5, %s297
      %s299 = smul.u32 2, %s21
      %v301 = vld [vmem:[%s0] sm:$0xff]
      %v302 = vld [vmem:[%s0 + $0x8] sm:$0x33]
      %v303 = vld [vmem:[%s278] sm:$0xff]
      %v304 = vld [vmem:[%s278 + $0x8] sm:$0xff]
      %v305 = vld [vmem:[%s278 + $0x10] sm:$0xff]
      %v306 = vld [vmem:[%s278 + $0x18] sm:$0xff]
      %v307 = vld [vmem:[%s278 + $0x20] sm:$0xff]
      %v308 = vld [vmem:[%s278 + $0x28] sm:$0xff]
      %v309 = vld [vmem:[%s278 + $0x30] sm:$0xff]
      %v310 = vld [vmem:[%s278 + $0x38] sm:$0xff]
      %v311 = vld [vmem:[%s278 + $0x40] sm:$0xff]
      %v312 = vld [vmem:[%s278 + $0x48] sm:$0xff]
      %v313 = vld [vmem:[%s278 + $0x50] sm:$0xff]
      %v314 = vld [vmem:[%s278 + $0x58] sm:$0xff]
      %v315 = vld [vmem:[%s278 + $0x60] sm:$0xff]
      %v316 = vld [vmem:[%s278 + $0x68] sm:$0xff]
      %v317 = vld [vmem:[%s278 + $0x70] sm:$0xff]
      %v318 = vld [vmem:[%s278 + $0x78] sm:$0xff]
      %v319 = vld [vmem:[%s278 + $0x80] sm:$0xff]
      %v320 = vld [vmem:[%s278 + $0x88] sm:$0xff]
      %v321 = vld [vmem:[%s278 + $0x90] sm:$0xff]
      %v322 = vld [vmem:[%s278 + $0x98] sm:$0xff]
      %v323 = vld [vmem:[%s278 + $0xa0] sm:$0xff]
      %v324 = vld [vmem:[%s278 + $0xa8] sm:$0xff]
      %v325 = vld [vmem:[%s278 + $0xb0] sm:$0x33]
      %v326 = vld [vmem:[%s1] sm:$0xff]
      %v327 = vld [vmem:[%s1 + $0x8] sm:$0xf]
      %329 = vset.pattern.permute.xlu0 0
      %330 = vperm.xlu0 %329, %v326
      %v331 = vpop.permute.xlu0 %330
      %334 = vset.pattern.permute.xlu0 0
      %335 = vperm.xlu0 %334, %v327
      %v336 = vpop.permute.xlu0 %335
      %v340 = vunpack.c.l.b16 %v301
      %v341 = vunpack.c.h.b16 %v301
      %v342 = vunpack.c.l.b16 %v302
      %v343 = vunpack.c.h.b16 %v302
      %v344 = vpack.c.b16 %v342, %v340
      %v345 = vpack.c.b16 %v343, %v341
      %v370 = vunpack.c.l.b16 %v303
      %v371 = vunpack.c.h.b16 %v303
      %v372 = vunpack.c.l.b16 %v304
      %v373 = vunpack.c.h.b16 %v304
      %v374 = vunpack.c.l.b16 %v305
      %v375 = vunpack.c.h.b16 %v305
      %v376 = vunpack.c.l.b16 %v306
      %v377 = vunpack.c.h.b16 %v306
      %v378 = vunpack.c.l.b16 %v307
      %v379 = vunpack.c.h.b16 %v307
      %v380 = vunpack.c.l.b16 %v308
      %v381 = vunpack.c.h.b16 %v308
      %v382 = vunpack.c.l.b16 %v309
      %v383 = vunpack.c.h.b16 %v309
      %v384 = vunpack.c.l.b16 %v310
      %v385 = vunpack.c.h.b16 %v310
      %v386 = vunpack.c.l.b16 %v311
      %v387 = vunpack.c.h.b16 %v311
      %v388 = vunpack.c.l.b16 %v312
      %v389 = vunpack.c.h.b16 %v312
      %v390 = vunpack.c.l.b16 %v313
      %v391 = vunpack.c.h.b16 %v313
      %v392 = vunpack.c.l.b16 %v314
      %v393 = vunpack.c.h.b16 %v314
      %v394 = vunpack.c.l.b16 %v315
      %v395 = vunpack.c.h.b16 %v315
      %v396 = vunpack.c.l.b16 %v316
      %v397 = vunpack.c.h.b16 %v316
      %v398 = vunpack.c.l.b16 %v317
      %v399 = vunpack.c.h.b16 %v317
      %v400 = vunpack.c.l.b16 %v318
      %v401 = vunpack.c.h.b16 %v318
      %v402 = vunpack.c.l.b16 %v319
      %v403 = vunpack.c.h.b16 %v319
      %v404 = vunpack.c.l.b16 %v320
      %v405 = vunpack.c.h.b16 %v320
      %v406 = vunpack.c.l.b16 %v321
      %v407 = vunpack.c.h.b16 %v321
      %v408 = vunpack.c.l.b16 %v322
      %v409 = vunpack.c.h.b16 %v322
      %v410 = vunpack.c.l.b16 %v323
      %v411 = vunpack.c.h.b16 %v323
      %v412 = vunpack.c.l.b16 %v324
      %v413 = vunpack.c.h.b16 %v324
      %v414 = vunpack.c.l.b16 %v325
      %v415 = vunpack.c.h.b16 %v325
      %v416 = vpack.c.b16 %v372, %v370
      %v417 = vpack.c.b16 %v373, %v371
      %v418 = vpack.c.b16 %v376, %v374
      %v419 = vpack.c.b16 %v377, %v375
      %v420 = vpack.c.b16 %v380, %v378
      %v421 = vpack.c.b16 %v381, %v379
      %v422 = vpack.c.b16 %v384, %v382
      %v423 = vpack.c.b16 %v385, %v383
      %v424 = vpack.c.b16 %v388, %v386
      %v425 = vpack.c.b16 %v389, %v387
      %v426 = vpack.c.b16 %v392, %v390
      %v427 = vpack.c.b16 %v393, %v391
      %v428 = vpack.c.b16 %v396, %v394
      %v429 = vpack.c.b16 %v397, %v395
      %v430 = vpack.c.b16 %v400, %v398
      %v431 = vpack.c.b16 %v401, %v399
      %v432 = vpack.c.b16 %v404, %v402
      %v433 = vpack.c.b16 %v405, %v403
      %v434 = vpack.c.b16 %v408, %v406
      %v435 = vpack.c.b16 %v409, %v407
      %v436 = vpack.c.b16 %v412, %v410
      %v437 = vpack.c.b16 %v413, %v411
      %v438 = vpack.c.b16 %v414, %v414
      %v439 = vpack.c.b16 %v415, %v415
      %vm462 = vcmask 424960
      %v464 = vsel %vm462, %v345, 0
      %vm466 = vcmask 1041408
      %v468 = vsel %vm466, %v438, 0
      %v471 = vsel %vm466, %v439, 0
      %473 = vmatprep.subr.bf16.mxu0 %v431
      %474 = vmatpush1.bf16.msra.mxu0 %v430
      %475 = vmatprep.subr.bf16.mxu0 %v429
      %476 = vmatpush1.bf16.msra.mxu0 %v428
      %477 = vmatprep.subr.bf16.mxu0 %v427
      %478 = vmatpush1.bf16.msra.mxu0 %v426
      %479 = vmatprep.subr.bf16.mxu0 %v425
      %480 = vmatpush1.bf16.msra.mxu0 %v424
      %481 = vmatprep.subr.bf16.mxu0 %v423
      %482 = vmatpush1.bf16.msra.mxu0 %v422
      %483 = vmatprep.subr.bf16.mxu0 %v421
      %484 = vmatpush1.bf16.msra.mxu0 %v420
      %485 = vmatprep.subr.bf16.mxu0 %v419
      %486 = vmatpush1.bf16.msra.mxu0 %v418
      %487 = vmatprep.subr.bf16.mxu0 %v417
      %488 = vmatpush1.bf16.msra.mxu0 %v416
      %489 = vmatprep.subr.bf16.mxu0 0
      %490 = vmatpush2.bf16.msra.mxu0 0
      %491 = vmatprep.subr.bf16.mxu0 0
      %492 = vmatpush2.bf16.msra.mxu0 0
      %493 = vmatprep.subr.bf16.mxu0 0
      %494 = vmatpush2.bf16.msra.mxu0 0
      %495 = vmatprep.subr.bf16.mxu0 0
      %496 = vmatpush2.bf16.msra.mxu0 0
      %497 = vmatprep.subr.bf16.mxu0 %v471
      %498 = vmatpush2.bf16.msra.mxu0 %v468
      %499 = vmatprep.subr.bf16.mxu0 %v437
      %500 = vmatpush2.bf16.msra.mxu0 %v436
      %501 = vmatprep.subr.bf16.mxu0 %v435
      %502 = vmatpush2.bf16.msra.mxu0 %v434
      %503 = vmatprep.subr.bf16.mxu0 %v433
      %504 = vmatpush2.bf16.msra.mxu0 %v432
      %505 = vmatprep.mubr.bf16.mxu0 %v464
      %506 = vmatmul.mubr.bf16.gmra.mxu0 %v344
      %v507 = vpop.f32.mrf.mxu0
      %v508 = vadd.f32 %v331, %v507
      %v509 = vpop.f32.mrf.mxu0
      %v510 = vadd.f32 %v331, %v509
      %v511 = vpop.f32.mrf.mxu0
      %v512 = vadd.f32 %v336, %v511
      %v513 = vpop.f32.mrf.mxu0
      %v514 = vadd.f32 %v336, %v513
      %515 = vdwg.mxu0
      %v516 = vld [vmem:[%s288] sm:$0xff]
      %v517 = vld [vmem:[%s288 + $0x8] sm:$0xff]
      %v518 = vld [vmem:[%s288 + $0x10] sm:$0xf]
      %v519 = vld [vmem:[%s288 + $0x18] sm:$0xf]
      %v520 = vadd.f32 %v508, %v516
      %v521 = vadd.f32 %v510, %v517
      %v522 = vadd.f32 %v512, %v518
      %v523 = vadd.f32 %v514, %v519
      %v524 = vmul.f32 %v520, 127.5
      %v525 = vmul.f32 %v521, 127.5
      %v526 = vmul.f32 %v522, 127.5
      %v527 = vmul.f32 %v523, 127.5
      %v528 = vld [vmem:[%s2] sm:$0xff]
      %v529 = vld [vmem:[%s2 + $0x8] sm:$0xf]
      %531 = vset.pattern.permute.xlu0 0
      %532 = vperm.xlu0 %531, %v528
      %v533 = vpop.permute.xlu0 %532
      %536 = vset.pattern.permute.xlu0 0
      %537 = vperm.xlu0 %536, %v529
      %v538 = vpop.permute.xlu0 %537
      %v540 = vadd.f32 %v524, %v533
      %v541 = vadd.f32 %v525, %v533
      %v542 = vadd.f32 %v526, %v538
      %v543 = vadd.f32 %v527, %v538
      %544 = vst [vmem:[%s298] sm:$0xff] %v540
      %545 = vst [vmem:[%s298 + $0x8] sm:$0xff] %v541
      %546 = vst [vmem:[%s298 + $0x10] sm:$0xf] %v542
      %547 = vst [vmem:[%s298 + $0x18] sm:$0xf] %v543
      %s548 = smul.u32 2, %s21
      %p549 = scmp.lt.s32.totalorder %s20, 1
      %s550 = scalar_select %p549, %s20, 1
      %p551 = scmp.lt.s32.totalorder %s548, 1
      %s552 = scalar_select %p551, %s548, 1
      %s553 = smul.addr %s550, 4
      %s554 = sadd.s32 %s552, %s553
      %s555 = smul.addr %s554, 8
      %s556 = scalar_lea.vmem %s5, %s555
      // Predicated region
      $region41: #{ifin_forward.115} parent=39 // pred_check
        %p557 = pneg %p167
      $region42: #{ifin_forward.115} parent=39 // pred_check_branch
        %559 = sbr.rel (%p557) target = $region44
      $region43: #{ifin_forward.115} parent=39 // pred_region
        %s560 = smul.u32 2, %s21
      $region44: #{ifin_forward.115} parent=39 // pred_fallthru
        _
    $region40: #{ifin_forward.115} parent=5 // pred_fallthru
      _
    %p561 = scmp.le.s32.totalorder 2, %s11
    // Predicated region
    $region45: #{ifin_forward.115} parent=5 // pred_check
      %p562 = pneg %p561
    $region46: #{ifin_forward.115} parent=5 // pred_check_branch
      %564 = sbr.rel (%p562) target = $region48
    $region47: #{ifin_forward.115} parent=5 // pred_region
      %s565 = ssub.s32 %s11, 2
      // Predicated region
      $region49: #{ifin_forward.115} parent=47 // pred_check
        %p566 = pneg %p173
      $region50: #{ifin_forward.115} parent=47 // pred_check_branch
        %568 = sbr.rel (%p566) target = $region52
      $region51: #{ifin_forward.115} parent=47 // pred_region
        %s569 = smul.u32 2, %s23
        %p570 = scmp.lt.s32.totalorder %s22, 1
        %s571 = scalar_select %p570, %s22, 1
        %p572 = scmp.lt.s32.totalorder %s569, 1
        %s573 = scalar_select %p572, %s569, 1
        %s574 = smul.addr %s571, 4
        %s575 = sadd.s32 %s573, %s574
        %s576 = smul.addr %s575, 8
        %s577 = scalar_lea.vmem %s5, %s576
      $region52: #{ifin_forward.115} parent=47 // pred_fallthru
        _
    $region48: #{ifin_forward.115} parent=5 // pred_fallthru
      _
  $region6: #{ifin_forward.115} parent=0 // loop_footer
    %s15 = sadd.s32 1, %s11
  $region7: #{ifin_forward.115} parent=0 // loop_footer_branch
    %10 = sbr.rel target = $region3
  $region8: #{ifin_forward.115} parent=0 // loop_exit
    _

</llo_original>
